<compile_context>
chip_gen: v7x
topology: tpu7x:2x2x1
jax: 0.10.0
libtpu: 0.0.40
codegen_flags: <defaults>
</compile_context>

<pallas_src>
import functools

import jax
import jax.numpy as jnp
from jax.experimental import pallas as pl
from jax.experimental.pallas import tpu as pltpu

BN_EPS = 1e-5


# ---------------------------------------------------------------------------
# Helpers
# ---------------------------------------------------------------------------
def _round_up(x, m):
    return -(-x // m) * m


def _tile(dim, target, align):
    """Largest multiple of `align` <= target that divides dim, else full dim.

    Full-dim blocks are always legal; divisors avoid partial (garbage-padded)
    blocks on the accumulation (K) and channel (N) axes.
    """
    if dim <= target or dim % align != 0:
        return dim
    t = (target // align) * align
    while t >= align:
        if dim % t == 0:
            return t
        t -= align
    return dim


def _pick_vmem_limit():
    """Per-generation scoped-VMEM limit (None -> compiler default)."""
    try:
        kind = jax.devices()[0].device_kind.lower()
    except Exception:  # pragma: no cover - never fatal
        return None
    if "v5" in kind or "v6" in kind:
        return 96 * 1024 * 1024          # 128 MiB physical VMEM
    if "v7" in kind or "7x" in kind:
        return 48 * 1024 * 1024          # 64 MiB physical per TensorCore
    return None                          # unknown generation: stay default


VMEM_LIMIT = _pick_vmem_limit()
_BIG_VMEM = (VMEM_LIMIT or 0) >= 64 * 1024 * 1024
_TM_TARGET = 512 if _BIG_VMEM else 256   # row tile (bf16 A, 128-aligned)
_TK_TARGET = 1024 if _BIG_VMEM else 512  # K tile target
_TN_TARGET = 256                         # matches the 256-wide MXU tile


# ---------------------------------------------------------------------------
# Pallas kernels
# ---------------------------------------------------------------------------
def _mm_bn_kernel(a_ref, w_ref, shift_ref, o_ref, acc_ref, *, relu):
    k = pl.program_id(2)

    @pl.when(k == 0)
    def _init():
        acc_ref[...] = jnp.zeros_like(acc_ref)

    acc_ref[...] += jnp.dot(a_ref[...], w_ref[...],
                            preferred_element_type=jnp.float32)

    @pl.when(k == pl.num_programs(2) - 1)
    def _finalize():
        y = acc_ref[...] + shift_ref[...]
        if relu:
            y = jnp.maximum(y, 0.0)
        o_ref[...] = y.astype(o_ref.dtype)


def _mm_bn_res_kernel(a_ref, w_ref, shift_ref, r_ref, o_ref, acc_ref, *, relu):
    k = pl.program_id(2)

    @pl.when(k == 0)
    def _init():
        acc_ref[...] = jnp.zeros_like(acc_ref)

    acc_ref[...] += jnp.dot(a_ref[...], w_ref[...],
                            preferred_element_type=jnp.float32)

    @pl.when(k == pl.num_programs(2) - 1)
    def _finalize():
        y = acc_ref[...] + shift_ref[...] + r_ref[...].astype(jnp.float32)
        if relu:
            y = jnp.maximum(y, 0.0)
        o_ref[...] = y.astype(o_ref.dtype)


def _maxpool_kernel(*refs):
    """Elementwise max over the 9 pooling-tap slabs (VPU)."""
    out_ref = refs[-1]
    m = refs[0][...]
    for r in refs[1:-1]:
        m = jnp.maximum(m, r[...])
    out_ref[...] = m


# ---------------------------------------------------------------------------
# Fused matmul + folded-BN (+ residual) + ReLU wrapper
# ---------------------------------------------------------------------------
def fused_matmul_bn(a, w, shift, *, relu, residual=None,
                    out_dtype=jnp.bfloat16):
    """out = act((a @ w) + shift [+ residual]); relu is a trace-time flag."""
    M, K = a.shape
    K2, N = w.shape
    assert K == K2
    a = a.astype(jnp.bfloat16)
    w = w.astype(jnp.bfloat16)
    shift2 = shift.reshape(1, N).astype(jnp.float32)

    # Row tile: bounded target; pad M instead of falling back to huge blocks.
    tm = _TM_TARGET if M >= _TM_TARGET else M
    Mp = _round_up(M, tm)
    if Mp != M:
        a = jnp.pad(a, ((0, Mp - M), (0, 0)))
    tn = _tile(N, _TN_TARGET, 128)
    tk = _tile(K, _TK_TARGET, 128)
    grid = (Mp // tm, N // tn, K // tk)

    inputs = [a, w, shift2]
    in_specs = [
        pl.BlockSpec((tm, tk), lambda i, j, k: (i, k)),
        pl.BlockSpec((tk, tn), lambda i, j, k: (k, j)),
        pl.BlockSpec((1, tn), lambda i, j, k: (0, j)),
    ]
    if residual is not None:
        r = residual.astype(jnp.bfloat16)
        if Mp != M:
            r = jnp.pad(r, ((0, Mp - M), (0, 0)))
        inputs.append(r)
        in_specs.append(pl.BlockSpec((tm, tn), lambda i, j, k: (i, j)))
        kern = functools.partial(_mm_bn_res_kernel, relu=relu)
    else:
        kern = functools.partial(_mm_bn_kernel, relu=relu)

    bytes_accessed = (Mp * K * 2 + K * N * 2 + 4 * N
                      + Mp * N * jnp.dtype(out_dtype).itemsize
                      + (Mp * N * 2 if residual is not None else 0))
    out = pl.pallas_call(
        kern,
        grid=grid,
        in_specs=in_specs,
        out_specs=pl.BlockSpec((tm, tn), lambda i, j, k: (i, j)),
        out_shape=jax.ShapeDtypeStruct((Mp, N), out_dtype),
        scratch_shapes=[pltpu.VMEM((tm, tn), jnp.float32)],
        compiler_params=pltpu.CompilerParams(
            dimension_semantics=("parallel", "parallel", "arbitrary"),
            vmem_limit_bytes=VMEM_LIMIT),
        cost_estimate=pl.CostEstimate(
            flops=2 * Mp * N * K, transcendentals=0,
            bytes_accessed=int(bytes_accessed)),
    )(*inputs)
    return out[:M] if Mp != M else out


# ---------------------------------------------------------------------------
# MaxPool2d(kernel=3, stride=2, padding=1) — tiled 2-D slab reduction
# ---------------------------------------------------------------------------
def maxpool_3x3_s2_p1(x_nhwc):
    N, H, W, C = x_nhwc.shape
    Ho = (H - 1) // 2 + 1
    Wo = (W - 1) // 2 + 1
    xp = jnp.pad(x_nhwc, ((0, 0), (1, 1), (1, 1), (0, 0)),
                 constant_values=float("-inf"))
    rows = N * Ho
    lanes = Wo * C
    taps = []
    for di in range(3):
        for dj in range(3):
            t = xp[:, di:di + 2 * (Ho - 1) + 1:2,
                   dj:dj + 2 * (Wo - 1) + 1:2, :]
            taps.append(t.reshape(rows, lanes))

    # Row block bounded by a VMEM budget: (9 inputs + 1 output) x 2 buffers.
    itemsize = jnp.dtype(x_nhwc.dtype).itemsize
    budget = 8 * 1024 * 1024
    cap = max(8, budget // (20 * lanes * itemsize))
    if rows <= cap:
        br = rows
    else:
        br = max(8, (min(rows, cap) // 8) * 8)
    rows_p = _round_up(rows, br)
    if rows_p != rows:
        taps = [jnp.pad(t, ((0, rows_p - rows), (0, 0))) for t in taps]

    out = pl.pallas_call(
        _maxpool_kernel,
        grid=(rows_p // br,),
        in_specs=[pl.BlockSpec((br, lanes), lambda i: (i, 0)) for _ in taps],
        out_specs=pl.BlockSpec((br, lanes), lambda i: (i, 0)),
        out_shape=jax.ShapeDtypeStruct((rows_p, lanes), x_nhwc.dtype),
        compiler_params=pltpu.CompilerParams(
            dimension_semantics=("parallel",),
            vmem_limit_bytes=VMEM_LIMIT),
    )(*taps)
    return out[:rows].reshape(N, Ho, Wo, C)


# ---------------------------------------------------------------------------
# Conv (im2col) + folded BN glue
# ---------------------------------------------------------------------------
def _im2col(x_nhwc, kh, kw, stride, padding):
    N, H, W, C = x_nhwc.shape
    Ho = (H + 2 * padding - kh) // stride + 1
    Wo = (W + 2 * padding - kw) // stride + 1
    xp = jnp.pad(x_nhwc, ((0, 0), (padding, padding), (padding, padding), (0, 0)))
    cols = []
    for di in range(kh):
        for dj in range(kw):
            cols.append(xp[:, di:di + stride * (Ho - 1) + 1:stride,
                           dj:dj + stride * (Wo - 1) + 1:stride, :])
    patches = jnp.concatenate(cols, axis=-1)          # (N, Ho, Wo, kh*kw*C)
    return patches.reshape(N * Ho * Wo, kh * kw * C), (N, Ho, Wo)


def _bn_fold(p):
    scale = p["gamma"] * jax.lax.rsqrt(p["var"] + BN_EPS)
    shift = p["beta"] - p["mean"] * scale
    return scale, shift


def _w2d(w_oihw):
    co, ci, kh, kw = w_oihw.shape
    return jnp.transpose(w_oihw, (2, 3, 1, 0)).reshape(kh * kw * ci, co)


def conv_bn_act(x_nhwc, p, stride, padding, residual=None, relu=True,
                out_dtype=jnp.bfloat16):
    kh, kw = p["w"].shape[2], p["w"].shape[3]
    a, (N, Ho, Wo) = _im2col(x_nhwc, kh, kw, stride, padding)
    scale, shift = _bn_fold(p)
    w2 = _w2d(p["w"]) * scale[None, :]                # BN scale folded into W
    out = fused_matmul_bn(a, w2, shift, relu=relu, residual=residual,
                          out_dtype=out_dtype)
    return out, (N, Ho, Wo)


def conv1x1_bn(x_nhwc, p, stride, relu=False, out_dtype=jnp.bfloat16):
    """1x1 (downsample) conv + folded BN as a K=C_in matmul (no im2col)."""
    N, H, W, C = x_nhwc.shape
    Ho = (H - 1) // stride + 1
    Wo = (W - 1) // stride + 1
    xs = x_nhwc[:, 0:stride * (Ho - 1) + 1:stride,
                0:stride * (Wo - 1) + 1:stride, :]
    a = xs.reshape(N * Ho * Wo, C)
    scale, shift = _bn_fold(p)
    w2 = p["w"].reshape(p["w"].shape[0], C).T * scale[None, :]   # (C, Co)
    out = fused_matmul_bn(a, w2, shift, relu=relu, out_dtype=out_dtype)
    return out, (N, Ho, Wo)


# ---------------------------------------------------------------------------
# Deterministic parameter init (matches module.init_weights semantics)
# ---------------------------------------------------------------------------
def _conv_params(key, c_out, c_in, k):
    fan_out = c_out * k * k
    std = (2.0 / fan_out) ** 0.5  # kaiming_normal_, fan_out, relu
    w = std * jax.random.normal(key, (c_out, c_in, k, k), jnp.float32)
    return dict(
        w=w,
        gamma=jnp.ones((c_out,), jnp.float32),
        beta=jnp.zeros((c_out,), jnp.float32),
        mean=jnp.zeros((c_out,), jnp.float32),
        var=jnp.ones((c_out,), jnp.float32),
    )


def init_params(key, in_chans=3, channels=(64, 128, 256, 512), layers=(1, 1, 1, 1)):
    keys = iter(jax.random.split(key, 128))
    params = {"stem": _conv_params(next(keys), 64, in_chans, 7)}
    inplanes = 64
    stage_strides = (1, 2, 2, 1)  # stem gives /4; total downsample ratio = 16
    stages = []
    for planes, nblocks, stride in zip(channels, layers, stage_strides):
        blocks = []
        for b in range(nblocks):
            s = stride if b == 0 else 1
            blk = {
                "stride": s,
                "conv1": _conv_params(next(keys), planes, inplanes, 3),
                "conv2": _conv_params(next(keys), planes, planes, 3),
            }
            if s != 1 or inplanes != planes:
                blk["down"] = _conv_params(next(keys), planes, inplanes, 1)
            blocks.append(blk)
            inplanes = planes
        stages.append(blocks)
    params["stages"] = stages
    return params


# ---------------------------------------------------------------------------
# Forward (hierarchical=True path of ResNetDownsample16Base.forward)
# ---------------------------------------------------------------------------
def forward_hierarchical(params, inp_nchw):
    x = jnp.transpose(inp_nchw, (0, 2, 3, 1)).astype(jnp.bfloat16)  # -> NHWC
    # stem: conv1(7x7, s2, p3) + bn1 + relu (fused, bf16 out), then maxpool
    out2d, (N, Ho, Wo) = conv_bn_act(x, params["stem"], stride=2, padding=3,
                                     relu=True)
    x = maxpool_3x3_s2_p1(out2d.reshape(N, Ho, Wo, -1))             # bf16

    feats = []
    for blocks in params["stages"]:
        for blk in blocks:
            s = blk["stride"]
            planes = blk["conv1"]["w"].shape[0]
            if "down" in blk:
                ident_2d, _ = conv1x1_bn(x, blk["down"], s, relu=False)
            else:  # identity shortcut: s == 1 and inplanes == planes
                Nx, Hx, Wx, Cx = x.shape
                ident_2d = x.reshape(Nx * Hx * Wx, Cx)
            # conv1 + bn1 + relu
            y1_2d, (N, Ho, Wo) = conv_bn_act(x, blk["conv1"],
                                             stride=s, padding=1, relu=True)
            # conv2 + bn2 + residual add + relu, fused in one call
            out2d, _ = conv_bn_act(y1_2d.reshape(N, Ho, Wo, planes),
                                   blk["conv2"], stride=1, padding=1,
                                   residual=ident_2d, relu=True)
            x = out2d.reshape(N, Ho, Wo, planes)
        feats.append(jnp.transpose(x, (0, 3, 1, 2)).astype(jnp.float32))
    return feats


# ---------------------------------------------------------------------------
# Pure-JAX reference (f32) for a numerical sanity check
# ---------------------------------------------------------------------------
def _ref_conv(x, w_oihw, stride, padding):
    return jax.lax.conv_general_dilated(
        x, jnp.transpose(w_oihw, (2, 3, 1, 0)),  # OIHW -> HWIO
        window_strides=(stride, stride),
        padding=[(padding, padding), (padding, padding)],
        dimension_numbers=("NHWC", "HWIO", "NHWC"))


def _ref_forward(params, inp_nchw):
    # BN is identity under the deterministic init (gamma=1, beta=0, mean=0, var=1).
    x = jnp.transpose(inp_nchw, (0, 2, 3, 1))
    x = jax.nn.relu(_ref_conv(x, params["stem"]["w"], 2, 3))
    x = jax.lax.reduce_window(x, -jnp.inf, jax.lax.max,
                              (1, 3, 3, 1), (1, 2, 2, 1),
                              [(0, 0), (1, 1), (1, 1), (0, 0)])
    feats = []
    for blocks in params["stages"]:
        for blk in blocks:
            s = blk["stride"]
            ident = x
            y = jax.nn.relu(_ref_conv(x, blk["conv1"]["w"], s, 1))
            if "down" in blk:
                ident = _ref_conv(x, blk["down"]["w"], s, 0)
            x = jax.nn.relu(_ref_conv(y, blk["conv2"]["w"], 1, 1) + ident)
        feats.append(jnp.transpose(x, (0, 3, 1, 2)))
    return feats


if __name__ == "__main__":
    key = jax.random.PRNGKey(0)
    k_inp, k_par = jax.random.split(key)

    # small input consistent with the module: (B, in_chans, H, W) = (2, 3, 32, 32)
    x = jax.random.normal(k_inp, (2, 3, 32, 32), jnp.float32)
    params = init_params(k_par, in_chans=3,
                         channels=(64, 128, 256, 512), layers=(1, 1, 1, 1))

    fwd = jax.jit(lambda inp: forward_hierarchical(params, inp))
    feats = jax.block_until_ready(fwd(x))

    expected = [(2, 64, 8, 8), (2, 128, 4, 4), (2, 256, 2, 2), (2, 512, 2, 2)]
    got = [tuple(int(d) for d in f.shape) for f in feats]
    assert got == expected, f"shape mismatch: {got} vs {expected}"
    assert all(bool(jnp.all(jnp.isfinite(f))) for f in feats)

    # Numerical check vs. a pure-JAX f32 reference (bf16 MXU inputs -> loose tol).
    refs = jax.jit(lambda inp: _ref_forward(params, inp))(x)
    for f, r in zip(feats, refs):
        err = float(jnp.linalg.norm(f - r) / (jnp.linalg.norm(r) + 1e-6))
        assert err < 0.1, f"numerical mismatch: rel L2 err {err}"

    print("KERNEL_OK")
</pallas_src>

<mosaic_0001>
module attributes {stable_mosaic.version = 11 : i64} {
  func.func @_mm_bn_kernel(%arg0: i32, %arg1: i32, %arg2: i32, %arg3: memref<256x147xbf16, #tpu.memory_space<vmem>>, %arg4: memref<147x64xbf16, #tpu.memory_space<vmem>>, %arg5: memref<1x64xf32, #tpu.memory_space<vmem>>, %arg6: memref<256x64xbf16, #tpu.memory_space<vmem>>, %arg7: memref<256x64xf32, #tpu.memory_space<vmem>>) attributes {dimension_semantics = [#tpu.dimension_semantics<parallel>, #tpu.dimension_semantics<parallel>, #tpu.dimension_semantics<arbitrary>], iteration_bounds = array<i64: 2, 1, 1>, scalar_prefetch = 0 : i64, scratch_operands = 1 : i64, tpu.core_type = #tpu.core_type<tc>, window_params = [{transform_indices = @transform_0, window_bounds = array<i64: 256, 147>}, {transform_indices = @transform_1, window_bounds = array<i64: 147, 64>}, {transform_indices = @transform_2, window_bounds = array<i64: 1, 64>}, {transform_indices = @transform_3, window_bounds = array<i64: 256, 64>}]} {
    %c0_i32 = arith.constant 0 : i32
    %0 = arith.cmpi eq, %arg2, %c0_i32 : i32
    %1 = arith.extui %0 : i1 to i32
    %c0_i32_0 = arith.constant 0 : i32
    %2 = arith.cmpi ne, %1, %c0_i32_0 : i32
    scf.if %2 {
      %cst_10 = arith.constant 0.000000e+00 : f32
      %12 = vector.broadcast %cst_10 : f32 to vector<256x64xf32>
      %c0_11 = arith.constant 0 : index
      %c0_12 = arith.constant 0 : index
      %13 = vector.load %arg7[%c0_11, %c0_12] : memref<256x64xf32, #tpu.memory_space<vmem>>, vector<256x64xf32>
      tpu.vector_store %arg7[%c0_11, %c0_12], %12 {strides = array<i32>} : memref<256x64xf32, #tpu.memory_space<vmem>>, vector<256x64xf32>,
    } else {
    }
    %c0 = arith.constant 0 : index
    %c0_1 = arith.constant 0 : index
    %3 = vector.load %arg7[%c0, %c0_1] : memref<256x64xf32, #tpu.memory_space<vmem>>, vector<256x64xf32>
    %c0_2 = arith.constant 0 : index
    %c0_3 = arith.constant 0 : index
    %4 = vector.load %arg3[%c0_2, %c0_3] : memref<256x147xbf16, #tpu.memory_space<vmem>>, vector<256x147xbf16>
    %c0_4 = arith.constant 0 : index
    %c0_5 = arith.constant 0 : index
    %5 = vector.load %arg4[%c0_4, %c0_5] : memref<147x64xbf16, #tpu.memory_space<vmem>>, vector<147x64xbf16>
    %cst = arith.constant dense<0.000000e+00> : vector<256x64xf32>
    %6 = tpu.matmul %4, %5, %cst {dimension_numbers = #tpu.dot_dimension_numbers<[1], [0], [0], [1], [0, 0, 1, 1], [], []>} : vector<256x147xbf16>, vector<147x64xbf16>, vector<256x64xf32> -> vector<256x64xf32>
    %7 = arith.addf %3, %6 : vector<256x64xf32>
    %c0_6 = arith.constant 0 : index
    %c0_7 = arith.constant 0 : index
    %8 = vector.load %arg7[%c0_6, %c0_7] : memref<256x64xf32, #tpu.memory_space<vmem>>, vector<256x64xf32>
    tpu.vector_store %arg7[%c0_6, %c0_7], %7 {strides = array<i32>} : memref<256x64xf32, #tpu.memory_space<vmem>>, vector<256x64xf32>,
    %c0_i32_8 = arith.constant 0 : i32
    %9 = arith.cmpi eq, %arg2, %c0_i32_8 : i32
    %10 = arith.extui %9 : i1 to i32
    %c0_i32_9 = arith.constant 0 : i32
    %11 = arith.cmpi ne, %10, %c0_i32_9 : i32
    scf.if %11 {
      %c0_10 = arith.constant 0 : index
      %c0_11 = arith.constant 0 : index
      %12 = vector.load %arg7[%c0_10, %c0_11] : memref<256x64xf32, #tpu.memory_space<vmem>>, vector<256x64xf32>
      %c0_12 = arith.constant 0 : index
      %c0_13 = arith.constant 0 : index
      %13 = vector.load %arg5[%c0_12, %c0_13] : memref<1x64xf32, #tpu.memory_space<vmem>>, vector<1x64xf32>
      %14 = vector.broadcast %13 : vector<1x64xf32> to vector<256x64xf32>
      %15 = arith.addf %12, %14 : vector<256x64xf32>
      %cst_14 = arith.constant 0.000000e+00 : f32
      %16 = vector.broadcast %cst_14 : f32 to vector<256x64xf32>
      %17 = arith.maximumf %15, %16 : vector<256x64xf32>
      %18 = arith.truncf %17 : vector<256x64xf32> to vector<256x64xbf16>
      %c0_15 = arith.constant 0 : index
      %c0_16 = arith.constant 0 : index
      %19 = vector.load %arg6[%c0_15, %c0_16] : memref<256x64xbf16, #tpu.memory_space<vmem>>, vector<256x64xbf16>
      tpu.vector_store %arg6[%c0_15, %c0_16], %18 {strides = array<i32>} : memref<256x64xbf16, #tpu.memory_space<vmem>>, vector<256x64xbf16>,
    } else {
    }
    return
  }
  func.func @transform_0(%arg0: i32, %arg1: i32, %arg2: i32) -> (i32, i32) {
    %c0_i32 = arith.constant 0 : i32
    return %arg0, %arg2 : i32, i32
  }
  func.func @transform_1(%arg0: i32, %arg1: i32, %arg2: i32) -> (i32, i32) {
    %c0_i32 = arith.constant 0 : i32
    return %arg2, %arg1 : i32, i32
  }
  func.func @transform_2(%arg0: i32, %arg1: i32, %arg2: i32) -> (i32, i32) {
    %c0_i32 = arith.constant 0 : i32
    %c0_i32_0 = arith.constant 0 : i32
    return %c0_i32, %arg1 : i32, i32
  }
  func.func @transform_3(%arg0: i32, %arg1: i32, %arg2: i32) -> (i32, i32) {
    %c0_i32 = arith.constant 0 : i32
    return %arg0, %arg1 : i32, i32
  }
}

module attributes {stable_mosaic.version = 11 : i64} {
  func.func @_maxpool_kernel(%arg0: i32, %arg1: memref<16x512xbf16, #tpu.memory_space<vmem>>, %arg2: memref<16x512xbf16, #tpu.memory_space<vmem>>, %arg3: memref<16x512xbf16, #tpu.memory_space<vmem>>, %arg4: memref<16x512xbf16, #tpu.memory_space<vmem>>, %arg5: memref<16x512xbf16, #tpu.memory_space<vmem>>, %arg6: memref<16x512xbf16, #tpu.memory_space<vmem>>, %arg7: memref<16x512xbf16, #tpu.memory_space<vmem>>, %arg8: memref<16x512xbf16, #tpu.memory_space<vmem>>, %arg9: memref<16x512xbf16, #tpu.memory_space<vmem>>, %arg10: memref<16x512xbf16, #tpu.memory_space<vmem>>) attributes {dimension_semantics = [#tpu.dimension_semantics<parallel>], iteration_bounds = array<i64: 1>, scalar_prefetch = 0 : i64, scratch_operands = 0 : i64, tpu.core_type = #tpu.core_type<tc>, window_params = [{transform_indices = @transform_0, window_bounds = array<i64: 16, 512>}, {transform_indices = @transform_1, window_bounds = array<i64: 16, 512>}, {transform_indices = @transform_2, window_bounds = array<i64: 16, 512>}, {transform_indices = @transform_3, window_bounds = array<i64: 16, 512>}, {transform_indices = @transform_4, window_bounds = array<i64: 16, 512>}, {transform_indices = @transform_5, window_bounds = array<i64: 16, 512>}, {transform_indices = @transform_6, window_bounds = array<i64: 16, 512>}, {transform_indices = @transform_7, window_bounds = array<i64: 16, 512>}, {transform_indices = @transform_8, window_bounds = array<i64: 16, 512>}, {transform_indices = @transform_9, window_bounds = array<i64: 16, 512>}]} {
    %c0 = arith.constant 0 : index
    %c0_0 = arith.constant 0 : index
    %0 = vector.load %arg1[%c0, %c0_0] : memref<16x512xbf16, #tpu.memory_space<vmem>>, vector<16x512xbf16>
    %c0_1 = arith.constant 0 : index
    %c0_2 = arith.constant 0 : index
    %1 = vector.load %arg2[%c0_1, %c0_2] : memref<16x512xbf16, #tpu.memory_space<vmem>>, vector<16x512xbf16>
    %2 = arith.maximumf %0, %1 : vector<16x512xbf16>
    %c0_3 = arith.constant 0 : index
    %c0_4 = arith.constant 0 : index
    %3 = vector.load %arg3[%c0_3, %c0_4] : memref<16x512xbf16, #tpu.memory_space<vmem>>, vector<16x512xbf16>
    %4 = arith.maximumf %2, %3 : vector<16x512xbf16>
    %c0_5 = arith.constant 0 : index
    %c0_6 = arith.constant 0 : index
    %5 = vector.load %arg4[%c0_5, %c0_6] : memref<16x512xbf16, #tpu.memory_space<vmem>>, vector<16x512xbf16>
    %6 = arith.maximumf %4, %5 : vector<16x512xbf16>
    %c0_7 = arith.constant 0 : index
    %c0_8 = arith.constant 0 : index
    %7 = vector.load %arg5[%c0_7, %c0_8] : memref<16x512xbf16, #tpu.memory_space<vmem>>, vector<16x512xbf16>
    %8 = arith.maximumf %6, %7 : vector<16x512xbf16>
    %c0_9 = arith.constant 0 : index
    %c0_10 = arith.constant 0 : index
    %9 = vector.load %arg6[%c0_9, %c0_10] : memref<16x512xbf16, #tpu.memory_space<vmem>>, vector<16x512xbf16>
    %10 = arith.maximumf %8, %9 : vector<16x512xbf16>
    %c0_11 = arith.constant 0 : index
    %c0_12 = arith.constant 0 : index
    %11 = vector.load %arg7[%c0_11, %c0_12] : memref<16x512xbf16, #tpu.memory_space<vmem>>, vector<16x512xbf16>
    %12 = arith.maximumf %10, %11 : vector<16x512xbf16>
    %c0_13 = arith.constant 0 : index
    %c0_14 = arith.constant 0 : index
    %13 = vector.load %arg8[%c0_13, %c0_14] : memref<16x512xbf16, #tpu.memory_space<vmem>>, vector<16x512xbf16>
    %14 = arith.maximumf %12, %13 : vector<16x512xbf16>
    %c0_15 = arith.constant 0 : index
    %c0_16 = arith.constant 0 : index
    %15 = vector.load %arg9[%c0_15, %c0_16] : memref<16x512xbf16, #tpu.memory_space<vmem>>, vector<16x512xbf16>
    %16 = arith.maximumf %14, %15 : vector<16x512xbf16>
    %c0_17 = arith.constant 0 : index
    %c0_18 = arith.constant 0 : index
    %17 = vector.load %arg10[%c0_17, %c0_18] : memref<16x512xbf16, #tpu.memory_space<vmem>>, vector<16x512xbf16>
    tpu.vector_store %arg10[%c0_17, %c0_18], %16 {strides = array<i32>} : memref<16x512xbf16, #tpu.memory_space<vmem>>, vector<16x512xbf16>,
    return
  }
  func.func @transform_0(%arg0: i32) -> (i32, i32) {
    %c0_i32 = arith.constant 0 : i32
    %c0_i32_0 = arith.constant 0 : i32
    return %arg0, %c0_i32 : i32, i32
  }
  func.func @transform_1(%arg0: i32) -> (i32, i32) {
    %c0_i32 = arith.constant 0 : i32
    %c0_i32_0 = arith.constant 0 : i32
    return %arg0, %c0_i32 : i32, i32
  }
  func.func @transform_2(%arg0: i32) -> (i32, i32) {
    %c0_i32 = arith.constant 0 : i32
    %c0_i32_0 = arith.constant 0 : i32
    return %arg0, %c0_i32 : i32, i32
  }
  func.func @transform_3(%arg0: i32) -> (i32, i32) {
    %c0_i32 = arith.constant 0 : i32
    %c0_i32_0 = arith.constant 0 : i32
    return %arg0, %c0_i32 : i32, i32
  }
  func.func @transform_4(%arg0: i32) -> (i32, i32) {
    %c0_i32 = arith.constant 0 : i32
    %c0_i32_0 = arith.constant 0 : i32
    return %arg0, %c0_i32 : i32, i32
  }
  func.func @transform_5(%arg0: i32) -> (i32, i32) {
    %c0_i32 = arith.constant 0 : i32
    %c0_i32_0 = arith.constant 0 : i32
    return %arg0, %c0_i32 : i32, i32
  }
  func.func @transform_6(%arg0: i32) -> (i32, i32) {
    %c0_i32 = arith.constant 0 : i32
    %c0_i32_0 = arith.constant 0 : i32
    return %arg0, %c0_i32 : i32, i32
  }
  func.func @transform_7(%arg0: i32) -> (i32, i32) {
    %c0_i32 = arith.constant 0 : i32
    %c0_i32_0 = arith.constant 0 : i32
    return %arg0, %c0_i32 : i32, i32
  }
  func.func @transform_8(%arg0: i32) -> (i32, i32) {
    %c0_i32 = arith.constant 0 : i32
    %c0_i32_0 = arith.constant 0 : i32
    return %arg0, %c0_i32 : i32, i32
  }
  func.func @transform_9(%arg0: i32) -> (i32, i32) {
    %c0_i32 = arith.constant 0 : i32
    %c0_i32_0 = arith.constant 0 : i32
    return %arg0, %c0_i32 : i32, i32
  }
}

module attributes {stable_mosaic.version = 11 : i64} {
  func.func @_mm_bn_kernel(%arg0: i32, %arg1: i32, %arg2: i32, %arg3: memref<128x576xbf16, #tpu.memory_space<vmem>>, %arg4: memref<576x64xbf16, #tpu.memory_space<vmem>>, %arg5: memref<1x64xf32, #tpu.memory_space<vmem>>, %arg6: memref<128x64xbf16, #tpu.memory_space<vmem>>, %arg7: memref<128x64xf32, #tpu.memory_space<vmem>>) attributes {dimension_semantics = [#tpu.dimension_semantics<parallel>, #tpu.dimension_semantics<parallel>, #tpu.dimension_semantics<arbitrary>], iteration_bounds = array<i64: 1, 1, 1>, scalar_prefetch = 0 : i64, scratch_operands = 1 : i64, tpu.core_type = #tpu.core_type<tc>, window_params = [{transform_indices = @transform_0, window_bounds = array<i64: 128, 576>}, {transform_indices = @transform_1, window_bounds = array<i64: 576, 64>}, {transform_indices = @transform_2, window_bounds = array<i64: 1, 64>}, {transform_indices = @transform_3, window_bounds = array<i64: 128, 64>}]} {
    %c0_i32 = arith.constant 0 : i32
    %0 = arith.cmpi eq, %arg2, %c0_i32 : i32
    %1 = arith.extui %0 : i1 to i32
    %c0_i32_0 = arith.constant 0 : i32
    %2 = arith.cmpi ne, %1, %c0_i32_0 : i32
    scf.if %2 {
      %cst_10 = arith.constant 0.000000e+00 : f32
      %12 = vector.broadcast %cst_10 : f32 to vector<128x64xf32>
      %c0_11 = arith.constant 0 : index
      %c0_12 = arith.constant 0 : index
      %13 = vector.load %arg7[%c0_11, %c0_12] : memref<128x64xf32, #tpu.memory_space<vmem>>, vector<128x64xf32>
      tpu.vector_store %arg7[%c0_11, %c0_12], %12 {strides = array<i32>} : memref<128x64xf32, #tpu.memory_space<vmem>>, vector<128x64xf32>,
    } else {
    }
    %c0 = arith.constant 0 : index
    %c0_1 = arith.constant 0 : index
    %3 = vector.load %arg7[%c0, %c0_1] : memref<128x64xf32, #tpu.memory_space<vmem>>, vector<128x64xf32>
    %c0_2 = arith.constant 0 : index
    %c0_3 = arith.constant 0 : index
    %4 = vector.load %arg3[%c0_2, %c0_3] : memref<128x576xbf16, #tpu.memory_space<vmem>>, vector<128x576xbf16>
    %c0_4 = arith.constant 0 : index
    %c0_5 = arith.constant 0 : index
    %5 = vector.load %arg4[%c0_4, %c0_5] : memref<576x64xbf16, #tpu.memory_space<vmem>>, vector<576x64xbf16>
    %cst = arith.constant dense<0.000000e+00> : vector<128x64xf32>
    %6 = tpu.matmul %4, %5, %cst {dimension_numbers = #tpu.dot_dimension_numbers<[1], [0], [0], [1], [0, 0, 1, 1], [], []>} : vector<128x576xbf16>, vector<576x64xbf16>, vector<128x64xf32> -> vector<128x64xf32>
    %7 = arith.addf %3, %6 : vector<128x64xf32>
    %c0_6 = arith.constant 0 : index
    %c0_7 = arith.constant 0 : index
    %8 = vector.load %arg7[%c0_6, %c0_7] : memref<128x64xf32, #tpu.memory_space<vmem>>, vector<128x64xf32>
    tpu.vector_store %arg7[%c0_6, %c0_7], %7 {strides = array<i32>} : memref<128x64xf32, #tpu.memory_space<vmem>>, vector<128x64xf32>,
    %c0_i32_8 = arith.constant 0 : i32
    %9 = arith.cmpi eq, %arg2, %c0_i32_8 : i32
    %10 = arith.extui %9 : i1 to i32
    %c0_i32_9 = arith.constant 0 : i32
    %11 = arith.cmpi ne, %10, %c0_i32_9 : i32
    scf.if %11 {
      %c0_10 = arith.constant 0 : index
      %c0_11 = arith.constant 0 : index
      %12 = vector.load %arg7[%c0_10, %c0_11] : memref<128x64xf32, #tpu.memory_space<vmem>>, vector<128x64xf32>
      %c0_12 = arith.constant 0 : index
      %c0_13 = arith.constant 0 : index
      %13 = vector.load %arg5[%c0_12, %c0_13] : memref<1x64xf32, #tpu.memory_space<vmem>>, vector<1x64xf32>
      %14 = vector.broadcast %13 : vector<1x64xf32> to vector<128x64xf32>
      %15 = arith.addf %12, %14 : vector<128x64xf32>
      %cst_14 = arith.constant 0.000000e+00 : f32
      %16 = vector.broadcast %cst_14 : f32 to vector<128x64xf32>
      %17 = arith.maximumf %15, %16 : vector<128x64xf32>
      %18 = arith.truncf %17 : vector<128x64xf32> to vector<128x64xbf16>
      %c0_15 = arith.constant 0 : index
      %c0_16 = arith.constant 0 : index
      %19 = vector.load %arg6[%c0_15, %c0_16] : memref<128x64xbf16, #tpu.memory_space<vmem>>, vector<128x64xbf16>
      tpu.vector_store %arg6[%c0_15, %c0_16], %18 {strides = array<i32>} : memref<128x64xbf16, #tpu.memory_space<vmem>>, vector<128x64xbf16>,
    } else {
    }
    return
  }
  func.func @transform_0(%arg0: i32, %arg1: i32, %arg2: i32) -> (i32, i32) {
    %c0_i32 = arith.constant 0 : i32
    return %arg0, %arg2 : i32, i32
  }
  func.func @transform_1(%arg0: i32, %arg1: i32, %arg2: i32) -> (i32, i32) {
    %c0_i32 = arith.constant 0 : i32
    return %arg2, %arg1 : i32, i32
  }
  func.func @transform_2(%arg0: i32, %arg1: i32, %arg2: i32) -> (i32, i32) {
    %c0_i32 = arith.constant 0 : i32
    %c0_i32_0 = arith.constant 0 : i32
    return %c0_i32, %arg1 : i32, i32
  }
  func.func @transform_3(%arg0: i32, %arg1: i32, %arg2: i32) -> (i32, i32) {
    %c0_i32 = arith.constant 0 : i32
    return %arg0, %arg1 : i32, i32
  }
}

module attributes {stable_mosaic.version = 11 : i64} {
  func.func @_mm_bn_res_kernel(%arg0: i32, %arg1: i32, %arg2: i32, %arg3: memref<128x576xbf16, #tpu.memory_space<vmem>>, %arg4: memref<576x64xbf16, #tpu.memory_space<vmem>>, %arg5: memref<1x64xf32, #tpu.memory_space<vmem>>, %arg6: memref<128x64xbf16, #tpu.memory_space<vmem>>, %arg7: memref<128x64xbf16, #tpu.memory_space<vmem>>, %arg8: memref<128x64xf32, #tpu.memory_space<vmem>>) attributes {dimension_semantics = [#tpu.dimension_semantics<parallel>, #tpu.dimension_semantics<parallel>, #tpu.dimension_semantics<arbitrary>], iteration_bounds = array<i64: 1, 1, 1>, scalar_prefetch = 0 : i64, scratch_operands = 1 : i64, tpu.core_type = #tpu.core_type<tc>, window_params = [{transform_indices = @transform_0, window_bounds = array<i64: 128, 576>}, {transform_indices = @transform_1, window_bounds = array<i64: 576, 64>}, {transform_indices = @transform_2, window_bounds = array<i64: 1, 64>}, {transform_indices = @transform_3, window_bounds = array<i64: 128, 64>}, {transform_indices = @transform_4, window_bounds = array<i64: 128, 64>}]} {
    %c0_i32 = arith.constant 0 : i32
    %0 = arith.cmpi eq, %arg2, %c0_i32 : i32
    %1 = arith.extui %0 : i1 to i32
    %c0_i32_0 = arith.constant 0 : i32
    %2 = arith.cmpi ne, %1, %c0_i32_0 : i32
    scf.if %2 {
      %cst_10 = arith.constant 0.000000e+00 : f32
      %12 = vector.broadcast %cst_10 : f32 to vector<128x64xf32>
      %c0_11 = arith.constant 0 : index
      %c0_12 = arith.constant 0 : index
      %13 = vector.load %arg8[%c0_11, %c0_12] : memref<128x64xf32, #tpu.memory_space<vmem>>, vector<128x64xf32>
      tpu.vector_store %arg8[%c0_11, %c0_12], %12 {strides = array<i32>} : memref<128x64xf32, #tpu.memory_space<vmem>>, vector<128x64xf32>,
    } else {
    }
    %c0 = arith.constant 0 : index
    %c0_1 = arith.constant 0 : index
    %3 = vector.load %arg8[%c0, %c0_1] : memref<128x64xf32, #tpu.memory_space<vmem>>, vector<128x64xf32>
    %c0_2 = arith.constant 0 : index
    %c0_3 = arith.constant 0 : index
    %4 = vector.load %arg3[%c0_2, %c0_3] : memref<128x576xbf16, #tpu.memory_space<vmem>>, vector<128x576xbf16>
    %c0_4 = arith.constant 0 : index
    %c0_5 = arith.constant 0 : index
    %5 = vector.load %arg4[%c0_4, %c0_5] : memref<576x64xbf16, #tpu.memory_space<vmem>>, vector<576x64xbf16>
    %cst = arith.constant dense<0.000000e+00> : vector<128x64xf32>
    %6 = tpu.matmul %4, %5, %cst {dimension_numbers = #tpu.dot_dimension_numbers<[1], [0], [0], [1], [0, 0, 1, 1], [], []>} : vector<128x576xbf16>, vector<576x64xbf16>, vector<128x64xf32> -> vector<128x64xf32>
    %7 = arith.addf %3, %6 : vector<128x64xf32>
    %c0_6 = arith.constant 0 : index
    %c0_7 = arith.constant 0 : index
    %8 = vector.load %arg8[%c0_6, %c0_7] : memref<128x64xf32, #tpu.memory_space<vmem>>, vector<128x64xf32>
    tpu.vector_store %arg8[%c0_6, %c0_7], %7 {strides = array<i32>} : memref<128x64xf32, #tpu.memory_space<vmem>>, vector<128x64xf32>,
    %c0_i32_8 = arith.constant 0 : i32
    %9 = arith.cmpi eq, %arg2, %c0_i32_8 : i32
    %10 = arith.extui %9 : i1 to i32
    %c0_i32_9 = arith.constant 0 : i32
    %11 = arith.cmpi ne, %10, %c0_i32_9 : i32
    scf.if %11 {
      %c0_10 = arith.constant 0 : index
      %c0_11 = arith.constant 0 : index
      %12 = vector.load %arg8[%c0_10, %c0_11] : memref<128x64xf32, #tpu.memory_space<vmem>>, vector<128x64xf32>
      %c0_12 = arith.constant 0 : index
      %c0_13 = arith.constant 0 : index
      %13 = vector.load %arg5[%c0_12, %c0_13] : memref<1x64xf32, #tpu.memory_space<vmem>>, vector<1x64xf32>
      %14 = vector.broadcast %13 : vector<1x64xf32> to vector<128x64xf32>
      %15 = arith.addf %12, %14 : vector<128x64xf32>
      %c0_14 = arith.constant 0 : index
      %c0_15 = arith.constant 0 : index
      %16 = vector.load %arg6[%c0_14, %c0_15] : memref<128x64xbf16, #tpu.memory_space<vmem>>, vector<128x64xbf16>
      %17 = arith.extf %16 : vector<128x64xbf16> to vector<128x64xf32>
      %18 = arith.addf %15, %17 : vector<128x64xf32>
      %cst_16 = arith.constant 0.000000e+00 : f32
      %19 = vector.broadcast %cst_16 : f32 to vector<128x64xf32>
      %20 = arith.maximumf %18, %19 : vector<128x64xf32>
      %21 = arith.truncf %20 : vector<128x64xf32> to vector<128x64xbf16>
      %c0_17 = arith.constant 0 : index
      %c0_18 = arith.constant 0 : index
      %22 = vector.load %arg7[%c0_17, %c0_18] : memref<128x64xbf16, #tpu.memory_space<vmem>>, vector<128x64xbf16>
      tpu.vector_store %arg7[%c0_17, %c0_18], %21 {strides = array<i32>} : memref<128x64xbf16, #tpu.memory_space<vmem>>, vector<128x64xbf16>,
    } else {
    }
    return
  }
  func.func @transform_0(%arg0: i32, %arg1: i32, %arg2: i32) -> (i32, i32) {
    %c0_i32 = arith.constant 0 : i32
    return %arg0, %arg2 : i32, i32
  }
  func.func @transform_1(%arg0: i32, %arg1: i32, %arg2: i32) -> (i32, i32) {
    %c0_i32 = arith.constant 0 : i32
    return %arg2, %arg1 : i32, i32
  }
  func.func @transform_2(%arg0: i32, %arg1: i32, %arg2: i32) -> (i32, i32) {
    %c0_i32 = arith.constant 0 : i32
    %c0_i32_0 = arith.constant 0 : i32
    return %c0_i32, %arg1 : i32, i32
  }
  func.func @transform_3(%arg0: i32, %arg1: i32, %arg2: i32) -> (i32, i32) {
    %c0_i32 = arith.constant 0 : i32
    return %arg0, %arg1 : i32, i32
  }
  func.func @transform_4(%arg0: i32, %arg1: i32, %arg2: i32) -> (i32, i32) {
    %c0_i32 = arith.constant 0 : i32
    return %arg0, %arg1 : i32, i32
  }
}

module attributes {stable_mosaic.version = 11 : i64} {
  func.func @_mm_bn_kernel(%arg0: i32, %arg1: i32, %arg2: i32, %arg3: memref<32x576xbf16, #tpu.memory_space<vmem>>, %arg4: memref<576x128xbf16, #tpu.memory_space<vmem>>, %arg5: memref<1x128xf32, #tpu.memory_space<vmem>>, %arg6: memref<32x128xbf16, #tpu.memory_space<vmem>>, %arg7: memref<32x128xf32, #tpu.memory_space<vmem>>) attributes {dimension_semantics = [#tpu.dimension_semantics<parallel>, #tpu.dimension_semantics<parallel>, #tpu.dimension_semantics<arbitrary>], iteration_bounds = array<i64: 1, 1, 1>, scalar_prefetch = 0 : i64, scratch_operands = 1 : i64, tpu.core_type = #tpu.core_type<tc>, window_params = [{transform_indices = @transform_0, window_bounds = array<i64: 32, 576>}, {transform_indices = @transform_1, window_bounds = array<i64: 576, 128>}, {transform_indices = @transform_2, window_bounds = array<i64: 1, 128>}, {transform_indices = @transform_3, window_bounds = array<i64: 32, 128>}]} {
    %c0_i32 = arith.constant 0 : i32
    %0 = arith.cmpi eq, %arg2, %c0_i32 : i32
    %1 = arith.extui %0 : i1 to i32
    %c0_i32_0 = arith.constant 0 : i32
    %2 = arith.cmpi ne, %1, %c0_i32_0 : i32
    scf.if %2 {
      %cst_10 = arith.constant 0.000000e+00 : f32
      %12 = vector.broadcast %cst_10 : f32 to vector<32x128xf32>
      %c0_11 = arith.constant 0 : index
      %c0_12 = arith.constant 0 : index
      %13 = vector.load %arg7[%c0_11, %c0_12] : memref<32x128xf32, #tpu.memory_space<vmem>>, vector<32x128xf32>
      tpu.vector_store %arg7[%c0_11, %c0_12], %12 {strides = array<i32>} : memref<32x128xf32, #tpu.memory_space<vmem>>, vector<32x128xf32>,
    } else {
    }
    %c0 = arith.constant 0 : index
    %c0_1 = arith.constant 0 : index
    %3 = vector.load %arg7[%c0, %c0_1] : memref<32x128xf32, #tpu.memory_space<vmem>>, vector<32x128xf32>
    %c0_2 = arith.constant 0 : index
    %c0_3 = arith.constant 0 : index
    %4 = vector.load %arg3[%c0_2, %c0_3] : memref<32x576xbf16, #tpu.memory_space<vmem>>, vector<32x576xbf16>
    %c0_4 = arith.constant 0 : index
    %c0_5 = arith.constant 0 : index
    %5 = vector.load %arg4[%c0_4, %c0_5] : memref<576x128xbf16, #tpu.memory_space<vmem>>, vector<576x128xbf16>
    %cst = arith.constant dense<0.000000e+00> : vector<32x128xf32>
    %6 = tpu.matmul %4, %5, %cst {dimension_numbers = #tpu.dot_dimension_numbers<[1], [0], [0], [1], [0, 0, 1, 1], [], []>} : vector<32x576xbf16>, vector<576x128xbf16>, vector<32x128xf32> -> vector<32x128xf32>
    %7 = arith.addf %3, %6 : vector<32x128xf32>
    %c0_6 = arith.constant 0 : index
    %c0_7 = arith.constant 0 : index
    %8 = vector.load %arg7[%c0_6, %c0_7] : memref<32x128xf32, #tpu.memory_space<vmem>>, vector<32x128xf32>
    tpu.vector_store %arg7[%c0_6, %c0_7], %7 {strides = array<i32>} : memref<32x128xf32, #tpu.memory_space<vmem>>, vector<32x128xf32>,
    %c0_i32_8 = arith.constant 0 : i32
    %9 = arith.cmpi eq, %arg2, %c0_i32_8 : i32
    %10 = arith.extui %9 : i1 to i32
    %c0_i32_9 = arith.constant 0 : i32
    %11 = arith.cmpi ne, %10, %c0_i32_9 : i32
    scf.if %11 {
      %c0_10 = arith.constant 0 : index
      %c0_11 = arith.constant 0 : index
      %12 = vector.load %arg7[%c0_10, %c0_11] : memref<32x128xf32, #tpu.memory_space<vmem>>, vector<32x128xf32>
      %c0_12 = arith.constant 0 : index
      %c0_13 = arith.constant 0 : index
      %13 = vector.load %arg5[%c0_12, %c0_13] : memref<1x128xf32, #tpu.memory_space<vmem>>, vector<1x128xf32>
      %14 = vector.broadcast %13 : vector<1x128xf32> to vector<32x128xf32>
      %15 = arith.addf %12, %14 : vector<32x128xf32>
      %cst_14 = arith.constant 0.000000e+00 : f32
      %16 = vector.broadcast %cst_14 : f32 to vector<32x128xf32>
      %17 = arith.maximumf %15, %16 : vector<32x128xf32>
      %18 = arith.truncf %17 : vector<32x128xf32> to vector<32x128xbf16>
      %c0_15 = arith.constant 0 : index
      %c0_16 = arith.constant 0 : index
      %19 = vector.load %arg6[%c0_15, %c0_16] : memref<32x128xbf16, #tpu.memory_space<vmem>>, vector<32x128xbf16>
      tpu.vector_store %arg6[%c0_15, %c0_16], %18 {strides = array<i32>} : memref<32x128xbf16, #tpu.memory_space<vmem>>, vector<32x128xbf16>,
    } else {
    }
    return
  }
  func.func @transform_0(%arg0: i32, %arg1: i32, %arg2: i32) -> (i32, i32) {
    %c0_i32 = arith.constant 0 : i32
    return %arg0, %arg2 : i32, i32
  }
  func.func @transform_1(%arg0: i32, %arg1: i32, %arg2: i32) -> (i32, i32) {
    %c0_i32 = arith.constant 0 : i32
    return %arg2, %arg1 : i32, i32
  }
  func.func @transform_2(%arg0: i32, %arg1: i32, %arg2: i32) -> (i32, i32) {
    %c0_i32 = arith.constant 0 : i32
    %c0_i32_0 = arith.constant 0 : i32
    return %c0_i32, %arg1 : i32, i32
  }
  func.func @transform_3(%arg0: i32, %arg1: i32, %arg2: i32) -> (i32, i32) {
    %c0_i32 = arith.constant 0 : i32
    return %arg0, %arg1 : i32, i32
  }
}

module attributes {stable_mosaic.version = 11 : i64} {
  func.func @_mm_bn_kernel(%arg0: i32, %arg1: i32, %arg2: i32, %arg3: memref<32x64xbf16, #tpu.memory_space<vmem>>, %arg4: memref<64x128xbf16, #tpu.memory_space<vmem>>, %arg5: memref<1x128xf32, #tpu.memory_space<vmem>>, %arg6: memref<32x128xbf16, #tpu.memory_space<vmem>>, %arg7: memref<32x128xf32, #tpu.memory_space<vmem>>) attributes {dimension_semantics = [#tpu.dimension_semantics<parallel>, #tpu.dimension_semantics<parallel>, #tpu.dimension_semantics<arbitrary>], iteration_bounds = array<i64: 1, 1, 1>, scalar_prefetch = 0 : i64, scratch_operands = 1 : i64, tpu.core_type = #tpu.core_type<tc>, window_params = [{transform_indices = @transform_0, window_bounds = array<i64: 32, 64>}, {transform_indices = @transform_1, window_bounds = array<i64: 64, 128>}, {transform_indices = @transform_2, window_bounds = array<i64: 1, 128>}, {transform_indices = @transform_3, window_bounds = array<i64: 32, 128>}]} {
    %c0_i32 = arith.constant 0 : i32
    %0 = arith.cmpi eq, %arg2, %c0_i32 : i32
    %1 = arith.extui %0 : i1 to i32
    %c0_i32_0 = arith.constant 0 : i32
    %2 = arith.cmpi ne, %1, %c0_i32_0 : i32
    scf.if %2 {
      %cst_10 = arith.constant 0.000000e+00 : f32
      %12 = vector.broadcast %cst_10 : f32 to vector<32x128xf32>
      %c0_11 = arith.constant 0 : index
      %c0_12 = arith.constant 0 : index
      %13 = vector.load %arg7[%c0_11, %c0_12] : memref<32x128xf32, #tpu.memory_space<vmem>>, vector<32x128xf32>
      tpu.vector_store %arg7[%c0_11, %c0_12], %12 {strides = array<i32>} : memref<32x128xf32, #tpu.memory_space<vmem>>, vector<32x128xf32>,
    } else {
    }
    %c0 = arith.constant 0 : index
    %c0_1 = arith.constant 0 : index
    %3 = vector.load %arg7[%c0, %c0_1] : memref<32x128xf32, #tpu.memory_space<vmem>>, vector<32x128xf32>
    %c0_2 = arith.constant 0 : index
    %c0_3 = arith.constant 0 : index
    %4 = vector.load %arg3[%c0_2, %c0_3] : memref<32x64xbf16, #tpu.memory_space<vmem>>, vector<32x64xbf16>
    %c0_4 = arith.constant 0 : index
    %c0_5 = arith.constant 0 : index
    %5 = vector.load %arg4[%c0_4, %c0_5] : memref<64x128xbf16, #tpu.memory_space<vmem>>, vector<64x128xbf16>
    %cst = arith.constant dense<0.000000e+00> : vector<32x128xf32>
    %6 = tpu.matmul %4, %5, %cst {dimension_numbers = #tpu.dot_dimension_numbers<[1], [0], [0], [1], [0, 0, 1, 1], [], []>} : vector<32x64xbf16>, vector<64x128xbf16>, vector<32x128xf32> -> vector<32x128xf32>
    %7 = arith.addf %3, %6 : vector<32x128xf32>
    %c0_6 = arith.constant 0 : index
    %c0_7 = arith.constant 0 : index
    %8 = vector.load %arg7[%c0_6, %c0_7] : memref<32x128xf32, #tpu.memory_space<vmem>>, vector<32x128xf32>
    tpu.vector_store %arg7[%c0_6, %c0_7], %7 {strides = array<i32>} : memref<32x128xf32, #tpu.memory_space<vmem>>, vector<32x128xf32>,
    %c0_i32_8 = arith.constant 0 : i32
    %9 = arith.cmpi eq, %arg2, %c0_i32_8 : i32
    %10 = arith.extui %9 : i1 to i32
    %c0_i32_9 = arith.constant 0 : i32
    %11 = arith.cmpi ne, %10, %c0_i32_9 : i32
    scf.if %11 {
      %c0_10 = arith.constant 0 : index
      %c0_11 = arith.constant 0 : index
      %12 = vector.load %arg7[%c0_10, %c0_11] : memref<32x128xf32, #tpu.memory_space<vmem>>, vector<32x128xf32>
      %c0_12 = arith.constant 0 : index
      %c0_13 = arith.constant 0 : index
      %13 = vector.load %arg5[%c0_12, %c0_13] : memref<1x128xf32, #tpu.memory_space<vmem>>, vector<1x128xf32>
      %14 = vector.broadcast %13 : vector<1x128xf32> to vector<32x128xf32>
      %15 = arith.addf %12, %14 : vector<32x128xf32>
      %16 = arith.truncf %15 : vector<32x128xf32> to vector<32x128xbf16>
      %c0_14 = arith.constant 0 : index
      %c0_15 = arith.constant 0 : index
      %17 = vector.load %arg6[%c0_14, %c0_15] : memref<32x128xbf16, #tpu.memory_space<vmem>>, vector<32x128xbf16>
      tpu.vector_store %arg6[%c0_14, %c0_15], %16 {strides = array<i32>} : memref<32x128xbf16, #tpu.memory_space<vmem>>, vector<32x128xbf16>,
    } else {
    }
    return
  }
  func.func @transform_0(%arg0: i32, %arg1: i32, %arg2: i32) -> (i32, i32) {
    %c0_i32 = arith.constant 0 : i32
    return %arg0, %arg2 : i32, i32
  }
  func.func @transform_1(%arg0: i32, %arg1: i32, %arg2: i32) -> (i32, i32) {
    %c0_i32 = arith.constant 0 : i32
    return %arg2, %arg1 : i32, i32
  }
  func.func @transform_2(%arg0: i32, %arg1: i32, %arg2: i32) -> (i32, i32) {
    %c0_i32 = arith.constant 0 : i32
    %c0_i32_0 = arith.constant 0 : i32
    return %c0_i32, %arg1 : i32, i32
  }
  func.func @transform_3(%arg0: i32, %arg1: i32, %arg2: i32) -> (i32, i32) {
    %c0_i32 = arith.constant 0 : i32
    return %arg0, %arg1 : i32, i32
  }
}

module attributes {stable_mosaic.version = 11 : i64} {
  func.func @_mm_bn_res_kernel(%arg0: i32, %arg1: i32, %arg2: i32, %arg3: memref<32x384xbf16, #tpu.memory_space<vmem>>, %arg4: memref<384x128xbf16, #tpu.memory_space<vmem>>, %arg5: memref<1x128xf32, #tpu.memory_space<vmem>>, %arg6: memref<32x128xbf16, #tpu.memory_space<vmem>>, %arg7: memref<32x128xbf16, #tpu.memory_space<vmem>>, %arg8: memref<32x128xf32, #tpu.memory_space<vmem>>) attributes {dimension_semantics = [#tpu.dimension_semantics<parallel>, #tpu.dimension_semantics<parallel>, #tpu.dimension_semantics<arbitrary>], iteration_bounds = array<i64: 1, 1, 3>, scalar_prefetch = 0 : i64, scratch_operands = 1 : i64, tpu.core_type = #tpu.core_type<tc>, window_params = [{transform_indices = @transform_0, window_bounds = array<i64: 32, 384>}, {transform_indices = @transform_1, window_bounds = array<i64: 384, 128>}, {transform_indices = @transform_2, window_bounds = array<i64: 1, 128>}, {transform_indices = @transform_3, window_bounds = array<i64: 32, 128>}, {transform_indices = @transform_4, window_bounds = array<i64: 32, 128>}]} {
    %c0_i32 = arith.constant 0 : i32
    %0 = arith.cmpi eq, %arg2, %c0_i32 : i32
    %1 = arith.extui %0 : i1 to i32
    %c0_i32_0 = arith.constant 0 : i32
    %2 = arith.cmpi ne, %1, %c0_i32_0 : i32
    scf.if %2 {
      %cst_9 = arith.constant 0.000000e+00 : f32
      %12 = vector.broadcast %cst_9 : f32 to vector<32x128xf32>
      %c0_10 = arith.constant 0 : index
      %c0_11 = arith.constant 0 : index
      %13 = vector.load %arg8[%c0_10, %c0_11] : memref<32x128xf32, #tpu.memory_space<vmem>>, vector<32x128xf32>
      tpu.vector_store %arg8[%c0_10, %c0_11], %12 {strides = array<i32>} : memref<32x128xf32, #tpu.memory_space<vmem>>, vector<32x128xf32>,
    } else {
    }
    %c0 = arith.constant 0 : index
    %c0_1 = arith.constant 0 : index
    %3 = vector.load %arg8[%c0, %c0_1] : memref<32x128xf32, #tpu.memory_space<vmem>>, vector<32x128xf32>
    %c0_2 = arith.constant 0 : index
    %c0_3 = arith.constant 0 : index
    %4 = vector.load %arg3[%c0_2, %c0_3] : memref<32x384xbf16, #tpu.memory_space<vmem>>, vector<32x384xbf16>
    %c0_4 = arith.constant 0 : index
    %c0_5 = arith.constant 0 : index
    %5 = vector.load %arg4[%c0_4, %c0_5] : memref<384x128xbf16, #tpu.memory_space<vmem>>, vector<384x128xbf16>
    %cst = arith.constant dense<0.000000e+00> : vector<32x128xf32>
    %6 = tpu.matmul %4, %5, %cst {dimension_numbers = #tpu.dot_dimension_numbers<[1], [0], [0], [1], [0, 0, 1, 1], [], []>} : vector<32x384xbf16>, vector<384x128xbf16>, vector<32x128xf32> -> vector<32x128xf32>
    %7 = arith.addf %3, %6 : vector<32x128xf32>
    %c0_6 = arith.constant 0 : index
    %c0_7 = arith.constant 0 : index
    %8 = vector.load %arg8[%c0_6, %c0_7] : memref<32x128xf32, #tpu.memory_space<vmem>>, vector<32x128xf32>
    tpu.vector_store %arg8[%c0_6, %c0_7], %7 {strides = array<i32>} : memref<32x128xf32, #tpu.memory_space<vmem>>, vector<32x128xf32>,
    %c2_i32 = arith.constant 2 : i32
    %9 = arith.cmpi eq, %arg2, %c2_i32 : i32
    %10 = arith.extui %9 : i1 to i32
    %c0_i32_8 = arith.constant 0 : i32
    %11 = arith.cmpi ne, %10, %c0_i32_8 : i32
    scf.if %11 {
      %c0_9 = arith.constant 0 : index
      %c0_10 = arith.constant 0 : index
      %12 = vector.load %arg8[%c0_9, %c0_10] : memref<32x128xf32, #tpu.memory_space<vmem>>, vector<32x128xf32>
      %c0_11 = arith.constant 0 : index
      %c0_12 = arith.constant 0 : index
      %13 = vector.load %arg5[%c0_11, %c0_12] : memref<1x128xf32, #tpu.memory_space<vmem>>, vector<1x128xf32>
      %14 = vector.broadcast %13 : vector<1x128xf32> to vector<32x128xf32>
      %15 = arith.addf %12, %14 : vector<32x128xf32>
      %c0_13 = arith.constant 0 : index
      %c0_14 = arith.constant 0 : index
      %16 = vector.load %arg6[%c0_13, %c0_14] : memref<32x128xbf16, #tpu.memory_space<vmem>>, vector<32x128xbf16>
      %17 = arith.extf %16 : vector<32x128xbf16> to vector<32x128xf32>
      %18 = arith.addf %15, %17 : vector<32x128xf32>
      %cst_15 = arith.constant 0.000000e+00 : f32
      %19 = vector.broadcast %cst_15 : f32 to vector<32x128xf32>
      %20 = arith.maximumf %18, %19 : vector<32x128xf32>
      %21 = arith.truncf %20 : vector<32x128xf32> to vector<32x128xbf16>
      %c0_16 = arith.constant 0 : index
      %c0_17 = arith.constant 0 : index
      %22 = vector.load %arg7[%c0_16, %c0_17] : memref<32x128xbf16, #tpu.memory_space<vmem>>, vector<32x128xbf16>
      tpu.vector_store %arg7[%c0_16, %c0_17], %21 {strides = array<i32>} : memref<32x128xbf16, #tpu.memory_space<vmem>>, vector<32x128xbf16>,
    } else {
    }
    return
  }
  func.func @transform_0(%arg0: i32, %arg1: i32, %arg2: i32) -> (i32, i32) {
    %c0_i32 = arith.constant 0 : i32
    return %arg0, %arg2 : i32, i32
  }
  func.func @transform_1(%arg0: i32, %arg1: i32, %arg2: i32) -> (i32, i32) {
    %c0_i32 = arith.constant 0 : i32
    return %arg2, %arg1 : i32, i32
  }
  func.func @transform_2(%arg0: i32, %arg1: i32, %arg2: i32) -> (i32, i32) {
    %c0_i32 = arith.constant 0 : i32
    %c0_i32_0 = arith.constant 0 : i32
    return %c0_i32, %arg1 : i32, i32
  }
  func.func @transform_3(%arg0: i32, %arg1: i32, %arg2: i32) -> (i32, i32) {
    %c0_i32 = arith.constant 0 : i32
    return %arg0, %arg1 : i32, i32
  }
  func.func @transform_4(%arg0: i32, %arg1: i32, %arg2: i32) -> (i32, i32) {
    %c0_i32 = arith.constant 0 : i32
    return %arg0, %arg1 : i32, i32
  }
}

module attributes {stable_mosaic.version = 11 : i64} {
  func.func @_mm_bn_kernel(%arg0: i32, %arg1: i32, %arg2: i32, %arg3: memref<8x384xbf16, #tpu.memory_space<vmem>>, %arg4: memref<384x256xbf16, #tpu.memory_space<vmem>>, %arg5: memref<1x256xf32, #tpu.memory_space<vmem>>, %arg6: memref<8x256xbf16, #tpu.memory_space<vmem>>, %arg7: memref<8x256xf32, #tpu.memory_space<vmem>>) attributes {dimension_semantics = [#tpu.dimension_semantics<parallel>, #tpu.dimension_semantics<parallel>, #tpu.dimension_semantics<arbitrary>], iteration_bounds = array<i64: 1, 1, 3>, scalar_prefetch = 0 : i64, scratch_operands = 1 : i64, tpu.core_type = #tpu.core_type<tc>, window_params = [{transform_indices = @transform_0, window_bounds = array<i64: 8, 384>}, {transform_indices = @transform_1, window_bounds = array<i64: 384, 256>}, {transform_indices = @transform_2, window_bounds = array<i64: 1, 256>}, {transform_indices = @transform_3, window_bounds = array<i64: 8, 256>}]} {
    %c0_i32 = arith.constant 0 : i32
    %0 = arith.cmpi eq, %arg2, %c0_i32 : i32
    %1 = arith.extui %0 : i1 to i32
    %c0_i32_0 = arith.constant 0 : i32
    %2 = arith.cmpi ne, %1, %c0_i32_0 : i32
    scf.if %2 {
      %cst_9 = arith.constant 0.000000e+00 : f32
      %12 = vector.broadcast %cst_9 : f32 to vector<8x256xf32>
      %c0_10 = arith.constant 0 : index
      %c0_11 = arith.constant 0 : index
      %13 = vector.load %arg7[%c0_10, %c0_11] : memref<8x256xf32, #tpu.memory_space<vmem>>, vector<8x256xf32>
      tpu.vector_store %arg7[%c0_10, %c0_11], %12 {strides = array<i32>} : memref<8x256xf32, #tpu.memory_space<vmem>>, vector<8x256xf32>,
    } else {
    }
    %c0 = arith.constant 0 : index
    %c0_1 = arith.constant 0 : index
    %3 = vector.load %arg7[%c0, %c0_1] : memref<8x256xf32, #tpu.memory_space<vmem>>, vector<8x256xf32>
    %c0_2 = arith.constant 0 : index
    %c0_3 = arith.constant 0 : index
    %4 = vector.load %arg3[%c0_2, %c0_3] : memref<8x384xbf16, #tpu.memory_space<vmem>>, vector<8x384xbf16>
    %c0_4 = arith.constant 0 : index
    %c0_5 = arith.constant 0 : index
    %5 = vector.load %arg4[%c0_4, %c0_5] : memref<384x256xbf16, #tpu.memory_space<vmem>>, vector<384x256xbf16>
    %cst = arith.constant dense<0.000000e+00> : vector<8x256xf32>
    %6 = tpu.matmul %4, %5, %cst {dimension_numbers = #tpu.dot_dimension_numbers<[1], [0], [0], [1], [0, 0, 1, 1], [], []>} : vector<8x384xbf16>, vector<384x256xbf16>, vector<8x256xf32> -> vector<8x256xf32>
    %7 = arith.addf %3, %6 : vector<8x256xf32>
    %c0_6 = arith.constant 0 : index
    %c0_7 = arith.constant 0 : index
    %8 = vector.load %arg7[%c0_6, %c0_7] : memref<8x256xf32, #tpu.memory_space<vmem>>, vector<8x256xf32>
    tpu.vector_store %arg7[%c0_6, %c0_7], %7 {strides = array<i32>} : memref<8x256xf32, #tpu.memory_space<vmem>>, vector<8x256xf32>,
    %c2_i32 = arith.constant 2 : i32
    %9 = arith.cmpi eq, %arg2, %c2_i32 : i32
    %10 = arith.extui %9 : i1 to i32
    %c0_i32_8 = arith.constant 0 : i32
    %11 = arith.cmpi ne, %10, %c0_i32_8 : i32
    scf.if %11 {
      %c0_9 = arith.constant 0 : index
      %c0_10 = arith.constant 0 : index
      %12 = vector.load %arg7[%c0_9, %c0_10] : memref<8x256xf32, #tpu.memory_space<vmem>>, vector<8x256xf32>
      %c0_11 = arith.constant 0 : index
      %c0_12 = arith.constant 0 : index
      %13 = vector.load %arg5[%c0_11, %c0_12] : memref<1x256xf32, #tpu.memory_space<vmem>>, vector<1x256xf32>
      %14 = vector.broadcast %13 : vector<1x256xf32> to vector<8x256xf32>
      %15 = arith.addf %12, %14 : vector<8x256xf32>
      %cst_13 = arith.constant 0.000000e+00 : f32
      %16 = vector.broadcast %cst_13 : f32 to vector<8x256xf32>
      %17 = arith.maximumf %15, %16 : vector<8x256xf32>
      %18 = arith.truncf %17 : vector<8x256xf32> to vector<8x256xbf16>
      %c0_14 = arith.constant 0 : index
      %c0_15 = arith.constant 0 : index
      %19 = vector.load %arg6[%c0_14, %c0_15] : memref<8x256xbf16, #tpu.memory_space<vmem>>, vector<8x256xbf16>
      tpu.vector_store %arg6[%c0_14, %c0_15], %18 {strides = array<i32>} : memref<8x256xbf16, #tpu.memory_space<vmem>>, vector<8x256xbf16>,
    } else {
    }
    return
  }
  func.func @transform_0(%arg0: i32, %arg1: i32, %arg2: i32) -> (i32, i32) {
    %c0_i32 = arith.constant 0 : i32
    return %arg0, %arg2 : i32, i32
  }
  func.func @transform_1(%arg0: i32, %arg1: i32, %arg2: i32) -> (i32, i32) {
    %c0_i32 = arith.constant 0 : i32
    return %arg2, %arg1 : i32, i32
  }
  func.func @transform_2(%arg0: i32, %arg1: i32, %arg2: i32) -> (i32, i32) {
    %c0_i32 = arith.constant 0 : i32
    %c0_i32_0 = arith.constant 0 : i32
    return %c0_i32, %arg1 : i32, i32
  }
  func.func @transform_3(%arg0: i32, %arg1: i32, %arg2: i32) -> (i32, i32) {
    %c0_i32 = arith.constant 0 : i32
    return %arg0, %arg1 : i32, i32
  }
}

module attributes {stable_mosaic.version = 11 : i64} {
  func.func @_mm_bn_res_kernel(%arg0: i32, %arg1: i32, %arg2: i32, %arg3: memref<8x384xbf16, #tpu.memory_space<vmem>>, %arg4: memref<384x256xbf16, #tpu.memory_space<vmem>>, %arg5: memref<1x256xf32, #tpu.memory_space<vmem>>, %arg6: memref<8x256xbf16, #tpu.memory_space<vmem>>, %arg7: memref<8x256xbf16, #tpu.memory_space<vmem>>, %arg8: memref<8x256xf32, #tpu.memory_space<vmem>>) attributes {dimension_semantics = [#tpu.dimension_semantics<parallel>, #tpu.dimension_semantics<parallel>, #tpu.dimension_semantics<arbitrary>], iteration_bounds = array<i64: 1, 1, 6>, scalar_prefetch = 0 : i64, scratch_operands = 1 : i64, tpu.core_type = #tpu.core_type<tc>, window_params = [{transform_indices = @transform_0, window_bounds = array<i64: 8, 384>}, {transform_indices = @transform_1, window_bounds = array<i64: 384, 256>}, {transform_indices = @transform_2, window_bounds = array<i64: 1, 256>}, {transform_indices = @transform_3, window_bounds = array<i64: 8, 256>}, {transform_indices = @transform_4, window_bounds = array<i64: 8, 256>}]} {
    %c0_i32 = arith.constant 0 : i32
    %0 = arith.cmpi eq, %arg2, %c0_i32 : i32
    %1 = arith.extui %0 : i1 to i32
    %c0_i32_0 = arith.constant 0 : i32
    %2 = arith.cmpi ne, %1, %c0_i32_0 : i32
    scf.if %2 {
      %cst_9 = arith.constant 0.000000e+00 : f32
      %12 = vector.broadcast %cst_9 : f32 to vector<8x256xf32>
      %c0_10 = arith.constant 0 : index
      %c0_11 = arith.constant 0 : index
      %13 = vector.load %arg8[%c0_10, %c0_11] : memref<8x256xf32, #tpu.memory_space<vmem>>, vector<8x256xf32>
      tpu.vector_store %arg8[%c0_10, %c0_11], %12 {strides = array<i32>} : memref<8x256xf32, #tpu.memory_space<vmem>>, vector<8x256xf32>,
    } else {
    }
    %c0 = arith.constant 0 : index
    %c0_1 = arith.constant 0 : index
    %3 = vector.load %arg8[%c0, %c0_1] : memref<8x256xf32, #tpu.memory_space<vmem>>, vector<8x256xf32>
    %c0_2 = arith.constant 0 : index
    %c0_3 = arith.constant 0 : index
    %4 = vector.load %arg3[%c0_2, %c0_3] : memref<8x384xbf16, #tpu.memory_space<vmem>>, vector<8x384xbf16>
    %c0_4 = arith.constant 0 : index
    %c0_5 = arith.constant 0 : index
    %5 = vector.load %arg4[%c0_4, %c0_5] : memref<384x256xbf16, #tpu.memory_space<vmem>>, vector<384x256xbf16>
    %cst = arith.constant dense<0.000000e+00> : vector<8x256xf32>
    %6 = tpu.matmul %4, %5, %cst {dimension_numbers = #tpu.dot_dimension_numbers<[1], [0], [0], [1], [0, 0, 1, 1], [], []>} : vector<8x384xbf16>, vector<384x256xbf16>, vector<8x256xf32> -> vector<8x256xf32>
    %7 = arith.addf %3, %6 : vector<8x256xf32>
    %c0_6 = arith.constant 0 : index
    %c0_7 = arith.constant 0 : index
    %8 = vector.load %arg8[%c0_6, %c0_7] : memref<8x256xf32, #tpu.memory_space<vmem>>, vector<8x256xf32>
    tpu.vector_store %arg8[%c0_6, %c0_7], %7 {strides = array<i32>} : memref<8x256xf32, #tpu.memory_space<vmem>>, vector<8x256xf32>,
    %c5_i32 = arith.constant 5 : i32
    %9 = arith.cmpi eq, %arg2, %c5_i32 : i32
    %10 = arith.extui %9 : i1 to i32
    %c0_i32_8 = arith.constant 0 : i32
    %11 = arith.cmpi ne, %10, %c0_i32_8 : i32
    scf.if %11 {
      %c0_9 = arith.constant 0 : index
      %c0_10 = arith.constant 0 : index
      %12 = vector.load %arg8[%c0_9, %c0_10] : memref<8x256xf32, #tpu.memory_space<vmem>>, vector<8x256xf32>
      %c0_11 = arith.constant 0 : index
      %c0_12 = arith.constant 0 : index
      %13 = vector.load %arg5[%c0_11, %c0_12] : memref<1x256xf32, #tpu.memory_space<vmem>>, vector<1x256xf32>
      %14 = vector.broadcast %13 : vector<1x256xf32> to vector<8x256xf32>
      %15 = arith.addf %12, %14 : vector<8x256xf32>
      %c0_13 = arith.constant 0 : index
      %c0_14 = arith.constant 0 : index
      %16 = vector.load %arg6[%c0_13, %c0_14] : memref<8x256xbf16, #tpu.memory_space<vmem>>, vector<8x256xbf16>
      %17 = arith.extf %16 : vector<8x256xbf16> to vector<8x256xf32>
      %18 = arith.addf %15, %17 : vector<8x256xf32>
      %cst_15 = arith.constant 0.000000e+00 : f32
      %19 = vector.broadcast %cst_15 : f32 to vector<8x256xf32>
      %20 = arith.maximumf %18, %19 : vector<8x256xf32>
      %21 = arith.truncf %20 : vector<8x256xf32> to vector<8x256xbf16>
      %c0_16 = arith.constant 0 : index
      %c0_17 = arith.constant 0 : index
      %22 = vector.load %arg7[%c0_16, %c0_17] : memref<8x256xbf16, #tpu.memory_space<vmem>>, vector<8x256xbf16>
      tpu.vector_store %arg7[%c0_16, %c0_17], %21 {strides = array<i32>} : memref<8x256xbf16, #tpu.memory_space<vmem>>, vector<8x256xbf16>,
    } else {
    }
    return
  }
  func.func @transform_0(%arg0: i32, %arg1: i32, %arg2: i32) -> (i32, i32) {
    %c0_i32 = arith.constant 0 : i32
    return %arg0, %arg2 : i32, i32
  }
  func.func @transform_1(%arg0: i32, %arg1: i32, %arg2: i32) -> (i32, i32) {
    %c0_i32 = arith.constant 0 : i32
    return %arg2, %arg1 : i32, i32
  }
  func.func @transform_2(%arg0: i32, %arg1: i32, %arg2: i32) -> (i32, i32) {
    %c0_i32 = arith.constant 0 : i32
    %c0_i32_0 = arith.constant 0 : i32
    return %c0_i32, %arg1 : i32, i32
  }
  func.func @transform_3(%arg0: i32, %arg1: i32, %arg2: i32) -> (i32, i32) {
    %c0_i32 = arith.constant 0 : i32
    return %arg0, %arg1 : i32, i32
  }
  func.func @transform_4(%arg0: i32, %arg1: i32, %arg2: i32) -> (i32, i32) {
    %c0_i32 = arith.constant 0 : i32
    return %arg0, %arg1 : i32, i32
  }
}

module attributes {stable_mosaic.version = 11 : i64} {
  func.func @_mm_bn_kernel(%arg0: i32, %arg1: i32, %arg2: i32, %arg3: memref<8x128xbf16, #tpu.memory_space<vmem>>, %arg4: memref<128x256xbf16, #tpu.memory_space<vmem>>, %arg5: memref<1x256xf32, #tpu.memory_space<vmem>>, %arg6: memref<8x256xbf16, #tpu.memory_space<vmem>>, %arg7: memref<8x256xf32, #tpu.memory_space<vmem>>) attributes {dimension_semantics = [#tpu.dimension_semantics<parallel>, #tpu.dimension_semantics<parallel>, #tpu.dimension_semantics<arbitrary>], iteration_bounds = array<i64: 1, 1, 1>, scalar_prefetch = 0 : i64, scratch_operands = 1 : i64, tpu.core_type = #tpu.core_type<tc>, window_params = [{transform_indices = @transform_0, window_bounds = array<i64: 8, 128>}, {transform_indices = @transform_1, window_bounds = array<i64: 128, 256>}, {transform_indices = @transform_2, window_bounds = array<i64: 1, 256>}, {transform_indices = @transform_3, window_bounds = array<i64: 8, 256>}]} {
    %c0_i32 = arith.constant 0 : i32
    %0 = arith.cmpi eq, %arg2, %c0_i32 : i32
    %1 = arith.extui %0 : i1 to i32
    %c0_i32_0 = arith.constant 0 : i32
    %2 = arith.cmpi ne, %1, %c0_i32_0 : i32
    scf.if %2 {
      %cst_10 = arith.constant 0.000000e+00 : f32
      %12 = vector.broadcast %cst_10 : f32 to vector<8x256xf32>
      %c0_11 = arith.constant 0 : index
      %c0_12 = arith.constant 0 : index
      %13 = vector.load %arg7[%c0_11, %c0_12] : memref<8x256xf32, #tpu.memory_space<vmem>>, vector<8x256xf32>
      tpu.vector_store %arg7[%c0_11, %c0_12], %12 {strides = array<i32>} : memref<8x256xf32, #tpu.memory_space<vmem>>, vector<8x256xf32>,
    } else {
    }
    %c0 = arith.constant 0 : index
    %c0_1 = arith.constant 0 : index
    %3 = vector.load %arg7[%c0, %c0_1] : memref<8x256xf32, #tpu.memory_space<vmem>>, vector<8x256xf32>
    %c0_2 = arith.constant 0 : index
    %c0_3 = arith.constant 0 : index
    %4 = vector.load %arg3[%c0_2, %c0_3] : memref<8x128xbf16, #tpu.memory_space<vmem>>, vector<8x128xbf16>
    %c0_4 = arith.constant 0 : index
    %c0_5 = arith.constant 0 : index
    %5 = vector.load %arg4[%c0_4, %c0_5] : memref<128x256xbf16, #tpu.memory_space<vmem>>, vector<128x256xbf16>
    %cst = arith.constant dense<0.000000e+00> : vector<8x256xf32>
    %6 = tpu.matmul %4, %5, %cst {dimension_numbers = #tpu.dot_dimension_numbers<[1], [0], [0], [1], [0, 0, 1, 1], [], []>} : vector<8x128xbf16>, vector<128x256xbf16>, vector<8x256xf32> -> vector<8x256xf32>
    %7 = arith.addf %3, %6 : vector<8x256xf32>
    %c0_6 = arith.constant 0 : index
    %c0_7 = arith.constant 0 : index
    %8 = vector.load %arg7[%c0_6, %c0_7] : memref<8x256xf32, #tpu.memory_space<vmem>>, vector<8x256xf32>
    tpu.vector_store %arg7[%c0_6, %c0_7], %7 {strides = array<i32>} : memref<8x256xf32, #tpu.memory_space<vmem>>, vector<8x256xf32>,
    %c0_i32_8 = arith.constant 0 : i32
    %9 = arith.cmpi eq, %arg2, %c0_i32_8 : i32
    %10 = arith.extui %9 : i1 to i32
    %c0_i32_9 = arith.constant 0 : i32
    %11 = arith.cmpi ne, %10, %c0_i32_9 : i32
    scf.if %11 {
      %c0_10 = arith.constant 0 : index
      %c0_11 = arith.constant 0 : index
      %12 = vector.load %arg7[%c0_10, %c0_11] : memref<8x256xf32, #tpu.memory_space<vmem>>, vector<8x256xf32>
      %c0_12 = arith.constant 0 : index
      %c0_13 = arith.constant 0 : index
      %13 = vector.load %arg5[%c0_12, %c0_13] : memref<1x256xf32, #tpu.memory_space<vmem>>, vector<1x256xf32>
      %14 = vector.broadcast %13 : vector<1x256xf32> to vector<8x256xf32>
      %15 = arith.addf %12, %14 : vector<8x256xf32>
      %16 = arith.truncf %15 : vector<8x256xf32> to vector<8x256xbf16>
      %c0_14 = arith.constant 0 : index
      %c0_15 = arith.constant 0 : index
      %17 = vector.load %arg6[%c0_14, %c0_15] : memref<8x256xbf16, #tpu.memory_space<vmem>>, vector<8x256xbf16>
      tpu.vector_store %arg6[%c0_14, %c0_15], %16 {strides = array<i32>} : memref<8x256xbf16, #tpu.memory_space<vmem>>, vector<8x256xbf16>,
    } else {
    }
    return
  }
  func.func @transform_0(%arg0: i32, %arg1: i32, %arg2: i32) -> (i32, i32) {
    %c0_i32 = arith.constant 0 : i32
    return %arg0, %arg2 : i32, i32
  }
  func.func @transform_1(%arg0: i32, %arg1: i32, %arg2: i32) -> (i32, i32) {
    %c0_i32 = arith.constant 0 : i32
    return %arg2, %arg1 : i32, i32
  }
  func.func @transform_2(%arg0: i32, %arg1: i32, %arg2: i32) -> (i32, i32) {
    %c0_i32 = arith.constant 0 : i32
    %c0_i32_0 = arith.constant 0 : i32
    return %c0_i32, %arg1 : i32, i32
  }
  func.func @transform_3(%arg0: i32, %arg1: i32, %arg2: i32) -> (i32, i32) {
    %c0_i32 = arith.constant 0 : i32
    return %arg0, %arg1 : i32, i32
  }
}

module attributes {stable_mosaic.version = 11 : i64} {
  func.func @_mm_bn_kernel(%arg0: i32, %arg1: i32, %arg2: i32, %arg3: memref<8x384xbf16, #tpu.memory_space<vmem>>, %arg4: memref<384x256xbf16, #tpu.memory_space<vmem>>, %arg5: memref<1x256xf32, #tpu.memory_space<vmem>>, %arg6: memref<8x256xbf16, #tpu.memory_space<vmem>>, %arg7: memref<8x256xf32, #tpu.memory_space<vmem>>) attributes {dimension_semantics = [#tpu.dimension_semantics<parallel>, #tpu.dimension_semantics<parallel>, #tpu.dimension_semantics<arbitrary>], iteration_bounds = array<i64: 1, 2, 6>, scalar_prefetch = 0 : i64, scratch_operands = 1 : i64, tpu.core_type = #tpu.core_type<tc>, window_params = [{transform_indices = @transform_0, window_bounds = array<i64: 8, 384>}, {transform_indices = @transform_1, window_bounds = array<i64: 384, 256>}, {transform_indices = @transform_2, window_bounds = array<i64: 1, 256>}, {transform_indices = @transform_3, window_bounds = array<i64: 8, 256>}]} {
    %c0_i32 = arith.constant 0 : i32
    %0 = arith.cmpi eq, %arg2, %c0_i32 : i32
    %1 = arith.extui %0 : i1 to i32
    %c0_i32_0 = arith.constant 0 : i32
    %2 = arith.cmpi ne, %1, %c0_i32_0 : i32
    scf.if %2 {
      %cst_9 = arith.constant 0.000000e+00 : f32
      %12 = vector.broadcast %cst_9 : f32 to vector<8x256xf32>
      %c0_10 = arith.constant 0 : index
      %c0_11 = arith.constant 0 : index
      %13 = vector.load %arg7[%c0_10, %c0_11] : memref<8x256xf32, #tpu.memory_space<vmem>>, vector<8x256xf32>
      tpu.vector_store %arg7[%c0_10, %c0_11], %12 {strides = array<i32>} : memref<8x256xf32, #tpu.memory_space<vmem>>, vector<8x256xf32>,
    } else {
    }
    %c0 = arith.constant 0 : index
    %c0_1 = arith.constant 0 : index
    %3 = vector.load %arg7[%c0, %c0_1] : memref<8x256xf32, #tpu.memory_space<vmem>>, vector<8x256xf32>
    %c0_2 = arith.constant 0 : index
    %c0_3 = arith.constant 0 : index
    %4 = vector.load %arg3[%c0_2, %c0_3] : memref<8x384xbf16, #tpu.memory_space<vmem>>, vector<8x384xbf16>
    %c0_4 = arith.constant 0 : index
    %c0_5 = arith.constant 0 : index
    %5 = vector.load %arg4[%c0_4, %c0_5] : memref<384x256xbf16, #tpu.memory_space<vmem>>, vector<384x256xbf16>
    %cst = arith.constant dense<0.000000e+00> : vector<8x256xf32>
    %6 = tpu.matmul %4, %5, %cst {dimension_numbers = #tpu.dot_dimension_numbers<[1], [0], [0], [1], [0, 0, 1, 1], [], []>} : vector<8x384xbf16>, vector<384x256xbf16>, vector<8x256xf32> -> vector<8x256xf32>
    %7 = arith.addf %3, %6 : vector<8x256xf32>
    %c0_6 = arith.constant 0 : index
    %c0_7 = arith.constant 0 : index
    %8 = vector.load %arg7[%c0_6, %c0_7] : memref<8x256xf32, #tpu.memory_space<vmem>>, vector<8x256xf32>
    tpu.vector_store %arg7[%c0_6, %c0_7], %7 {strides = array<i32>} : memref<8x256xf32, #tpu.memory_space<vmem>>, vector<8x256xf32>,
    %c5_i32 = arith.constant 5 : i32
    %9 = arith.cmpi eq, %arg2, %c5_i32 : i32
    %10 = arith.extui %9 : i1 to i32
    %c0_i32_8 = arith.constant 0 : i32
    %11 = arith.cmpi ne, %10, %c0_i32_8 : i32
    scf.if %11 {
      %c0_9 = arith.constant 0 : index
      %c0_10 = arith.constant 0 : index
      %12 = vector.load %arg7[%c0_9, %c0_10] : memref<8x256xf32, #tpu.memory_space<vmem>>, vector<8x256xf32>
      %c0_11 = arith.constant 0 : index
      %c0_12 = arith.constant 0 : index
      %13 = vector.load %arg5[%c0_11, %c0_12] : memref<1x256xf32, #tpu.memory_space<vmem>>, vector<1x256xf32>
      %14 = vector.broadcast %13 : vector<1x256xf32> to vector<8x256xf32>
      %15 = arith.addf %12, %14 : vector<8x256xf32>
      %cst_13 = arith.constant 0.000000e+00 : f32
      %16 = vector.broadcast %cst_13 : f32 to vector<8x256xf32>
      %17 = arith.maximumf %15, %16 : vector<8x256xf32>
      %18 = arith.truncf %17 : vector<8x256xf32> to vector<8x256xbf16>
      %c0_14 = arith.constant 0 : index
      %c0_15 = arith.constant 0 : index
      %19 = vector.load %arg6[%c0_14, %c0_15] : memref<8x256xbf16, #tpu.memory_space<vmem>>, vector<8x256xbf16>
      tpu.vector_store %arg6[%c0_14, %c0_15], %18 {strides = array<i32>} : memref<8x256xbf16, #tpu.memory_space<vmem>>, vector<8x256xbf16>,
    } else {
    }
    return
  }
  func.func @transform_0(%arg0: i32, %arg1: i32, %arg2: i32) -> (i32, i32) {
    %c0_i32 = arith.constant 0 : i32
    return %arg0, %arg2 : i32, i32
  }
  func.func @transform_1(%arg0: i32, %arg1: i32, %arg2: i32) -> (i32, i32) {
    %c0_i32 = arith.constant 0 : i32
    return %arg2, %arg1 : i32, i32
  }
  func.func @transform_2(%arg0: i32, %arg1: i32, %arg2: i32) -> (i32, i32) {
    %c0_i32 = arith.constant 0 : i32
    %c0_i32_0 = arith.constant 0 : i32
    return %c0_i32, %arg1 : i32, i32
  }
  func.func @transform_3(%arg0: i32, %arg1: i32, %arg2: i32) -> (i32, i32) {
    %c0_i32 = arith.constant 0 : i32
    return %arg0, %arg1 : i32, i32
  }
}

module attributes {stable_mosaic.version = 11 : i64} {
  func.func @_mm_bn_kernel(%arg0: i32, %arg1: i32, %arg2: i32, %arg3: memref<8x256xbf16, #tpu.memory_space<vmem>>, %arg4: memref<256x256xbf16, #tpu.memory_space<vmem>>, %arg5: memref<1x256xf32, #tpu.memory_space<vmem>>, %arg6: memref<8x256xbf16, #tpu.memory_space<vmem>>, %arg7: memref<8x256xf32, #tpu.memory_space<vmem>>) attributes {dimension_semantics = [#tpu.dimension_semantics<parallel>, #tpu.dimension_semantics<parallel>, #tpu.dimension_semantics<arbitrary>], iteration_bounds = array<i64: 1, 2, 1>, scalar_prefetch = 0 : i64, scratch_operands = 1 : i64, tpu.core_type = #tpu.core_type<tc>, window_params = [{transform_indices = @transform_0, window_bounds = array<i64: 8, 256>}, {transform_indices = @transform_1, window_bounds = array<i64: 256, 256>}, {transform_indices = @transform_2, window_bounds = array<i64: 1, 256>}, {transform_indices = @transform_3, window_bounds = array<i64: 8, 256>}]} {
    %c0_i32 = arith.constant 0 : i32
    %0 = arith.cmpi eq, %arg2, %c0_i32 : i32
    %1 = arith.extui %0 : i1 to i32
    %c0_i32_0 = arith.constant 0 : i32
    %2 = arith.cmpi ne, %1, %c0_i32_0 : i32
    scf.if %2 {
      %cst_10 = arith.constant 0.000000e+00 : f32
      %12 = vector.broadcast %cst_10 : f32 to vector<8x256xf32>
      %c0_11 = arith.constant 0 : index
      %c0_12 = arith.constant 0 : index
      %13 = vector.load %arg7[%c0_11, %c0_12] : memref<8x256xf32, #tpu.memory_space<vmem>>, vector<8x256xf32>
      tpu.vector_store %arg7[%c0_11, %c0_12], %12 {strides = array<i32>} : memref<8x256xf32, #tpu.memory_space<vmem>>, vector<8x256xf32>,
    } else {
    }
    %c0 = arith.constant 0 : index
    %c0_1 = arith.constant 0 : index
    %3 = vector.load %arg7[%c0, %c0_1] : memref<8x256xf32, #tpu.memory_space<vmem>>, vector<8x256xf32>
    %c0_2 = arith.constant 0 : index
    %c0_3 = arith.constant 0 : index
    %4 = vector.load %arg3[%c0_2, %c0_3] : memref<8x256xbf16, #tpu.memory_space<vmem>>, vector<8x256xbf16>
    %c0_4 = arith.constant 0 : index
    %c0_5 = arith.constant 0 : index
    %5 = vector.load %arg4[%c0_4, %c0_5] : memref<256x256xbf16, #tpu.memory_space<vmem>>, vector<256x256xbf16>
    %cst = arith.constant dense<0.000000e+00> : vector<8x256xf32>
    %6 = tpu.matmul %4, %5, %cst {dimension_numbers = #tpu.dot_dimension_numbers<[1], [0], [0], [1], [0, 0, 1, 1], [], []>} : vector<8x256xbf16>, vector<256x256xbf16>, vector<8x256xf32> -> vector<8x256xf32>
    %7 = arith.addf %3, %6 : vector<8x256xf32>
    %c0_6 = arith.constant 0 : index
    %c0_7 = arith.constant 0 : index
    %8 = vector.load %arg7[%c0_6, %c0_7] : memref<8x256xf32, #tpu.memory_space<vmem>>, vector<8x256xf32>
    tpu.vector_store %arg7[%c0_6, %c0_7], %7 {strides = array<i32>} : memref<8x256xf32, #tpu.memory_space<vmem>>, vector<8x256xf32>,
    %c0_i32_8 = arith.constant 0 : i32
    %9 = arith.cmpi eq, %arg2, %c0_i32_8 : i32
    %10 = arith.extui %9 : i1 to i32
    %c0_i32_9 = arith.constant 0 : i32
    %11 = arith.cmpi ne, %10, %c0_i32_9 : i32
    scf.if %11 {
      %c0_10 = arith.constant 0 : index
      %c0_11 = arith.constant 0 : index
      %12 = vector.load %arg7[%c0_10, %c0_11] : memref<8x256xf32, #tpu.memory_space<vmem>>, vector<8x256xf32>
      %c0_12 = arith.constant 0 : index
      %c0_13 = arith.constant 0 : index
      %13 = vector.load %arg5[%c0_12, %c0_13] : memref<1x256xf32, #tpu.memory_space<vmem>>, vector<1x256xf32>
      %14 = vector.broadcast %13 : vector<1x256xf32> to vector<8x256xf32>
      %15 = arith.addf %12, %14 : vector<8x256xf32>
      %16 = arith.truncf %15 : vector<8x256xf32> to vector<8x256xbf16>
      %c0_14 = arith.constant 0 : index
      %c0_15 = arith.constant 0 : index
      %17 = vector.load %arg6[%c0_14, %c0_15] : memref<8x256xbf16, #tpu.memory_space<vmem>>, vector<8x256xbf16>
      tpu.vector_store %arg6[%c0_14, %c0_15], %16 {strides = array<i32>} : memref<8x256xbf16, #tpu.memory_space<vmem>>, vector<8x256xbf16>,
    } else {
    }
    return
  }
  func.func @transform_0(%arg0: i32, %arg1: i32, %arg2: i32) -> (i32, i32) {
    %c0_i32 = arith.constant 0 : i32
    return %arg0, %arg2 : i32, i32
  }
  func.func @transform_1(%arg0: i32, %arg1: i32, %arg2: i32) -> (i32, i32) {
    %c0_i32 = arith.constant 0 : i32
    return %arg2, %arg1 : i32, i32
  }
  func.func @transform_2(%arg0: i32, %arg1: i32, %arg2: i32) -> (i32, i32) {
    %c0_i32 = arith.constant 0 : i32
    %c0_i32_0 = arith.constant 0 : i32
    return %c0_i32, %arg1 : i32, i32
  }
  func.func @transform_3(%arg0: i32, %arg1: i32, %arg2: i32) -> (i32, i32) {
    %c0_i32 = arith.constant 0 : i32
    return %arg0, %arg1 : i32, i32
  }
}

module attributes {stable_mosaic.version = 11 : i64} {
  func.func @_mm_bn_res_kernel(%arg0: i32, %arg1: i32, %arg2: i32, %arg3: memref<8x512xbf16, #tpu.memory_space<vmem>>, %arg4: memref<512x256xbf16, #tpu.memory_space<vmem>>, %arg5: memref<1x256xf32, #tpu.memory_space<vmem>>, %arg6: memref<8x256xbf16, #tpu.memory_space<vmem>>, %arg7: memref<8x256xbf16, #tpu.memory_space<vmem>>, %arg8: memref<8x256xf32, #tpu.memory_space<vmem>>) attributes {dimension_semantics = [#tpu.dimension_semantics<parallel>, #tpu.dimension_semantics<parallel>, #tpu.dimension_semantics<arbitrary>], iteration_bounds = array<i64: 1, 2, 9>, scalar_prefetch = 0 : i64, scratch_operands = 1 : i64, tpu.core_type = #tpu.core_type<tc>, window_params = [{transform_indices = @transform_0, window_bounds = array<i64: 8, 512>}, {transform_indices = @transform_1, window_bounds = array<i64: 512, 256>}, {transform_indices = @transform_2, window_bounds = array<i64: 1, 256>}, {transform_indices = @transform_3, window_bounds = array<i64: 8, 256>}, {transform_indices = @transform_4, window_bounds = array<i64: 8, 256>}]} {
    %c0_i32 = arith.constant 0 : i32
    %0 = arith.cmpi eq, %arg2, %c0_i32 : i32
    %1 = arith.extui %0 : i1 to i32
    %c0_i32_0 = arith.constant 0 : i32
    %2 = arith.cmpi ne, %1, %c0_i32_0 : i32
    scf.if %2 {
      %cst_9 = arith.constant 0.000000e+00 : f32
      %12 = vector.broadcast %cst_9 : f32 to vector<8x256xf32>
      %c0_10 = arith.constant 0 : index
      %c0_11 = arith.constant 0 : index
      %13 = vector.load %arg8[%c0_10, %c0_11] : memref<8x256xf32, #tpu.memory_space<vmem>>, vector<8x256xf32>
      tpu.vector_store %arg8[%c0_10, %c0_11], %12 {strides = array<i32>} : memref<8x256xf32, #tpu.memory_space<vmem>>, vector<8x256xf32>,
    } else {
    }
    %c0 = arith.constant 0 : index
    %c0_1 = arith.constant 0 : index
    %3 = vector.load %arg8[%c0, %c0_1] : memref<8x256xf32, #tpu.memory_space<vmem>>, vector<8x256xf32>
    %c0_2 = arith.constant 0 : index
    %c0_3 = arith.constant 0 : index
    %4 = vector.load %arg3[%c0_2, %c0_3] : memref<8x512xbf16, #tpu.memory_space<vmem>>, vector<8x512xbf16>
    %c0_4 = arith.constant 0 : index
    %c0_5 = arith.constant 0 : index
    %5 = vector.load %arg4[%c0_4, %c0_5] : memref<512x256xbf16, #tpu.memory_space<vmem>>, vector<512x256xbf16>
    %cst = arith.constant dense<0.000000e+00> : vector<8x256xf32>
    %6 = tpu.matmul %4, %5, %cst {dimension_numbers = #tpu.dot_dimension_numbers<[1], [0], [0], [1], [0, 0, 1, 1], [], []>} : vector<8x512xbf16>, vector<512x256xbf16>, vector<8x256xf32> -> vector<8x256xf32>
    %7 = arith.addf %3, %6 : vector<8x256xf32>
    %c0_6 = arith.constant 0 : index
    %c0_7 = arith.constant 0 : index
    %8 = vector.load %arg8[%c0_6, %c0_7] : memref<8x256xf32, #tpu.memory_space<vmem>>, vector<8x256xf32>
    tpu.vector_store %arg8[%c0_6, %c0_7], %7 {strides = array<i32>} : memref<8x256xf32, #tpu.memory_space<vmem>>, vector<8x256xf32>,
    %c8_i32 = arith.constant 8 : i32
    %9 = arith.cmpi eq, %arg2, %c8_i32 : i32
    %10 = arith.extui %9 : i1 to i32
    %c0_i32_8 = arith.constant 0 : i32
    %11 = arith.cmpi ne, %10, %c0_i32_8 : i32
    scf.if %11 {
      %c0_9 = arith.constant 0 : index
      %c0_10 = arith.constant 0 : index
      %12 = vector.load %arg8[%c0_9, %c0_10] : memref<8x256xf32, #tpu.memory_space<vmem>>, vector<8x256xf32>
      %c0_11 = arith.constant 0 : index
      %c0_12 = arith.constant 0 : index
      %13 = vector.load %arg5[%c0_11, %c0_12] : memref<1x256xf32, #tpu.memory_space<vmem>>, vector<1x256xf32>
      %14 = vector.broadcast %13 : vector<1x256xf32> to vector<8x256xf32>
      %15 = arith.addf %12, %14 : vector<8x256xf32>
      %c0_13 = arith.constant 0 : index
      %c0_14 = arith.constant 0 : index
      %16 = vector.load %arg6[%c0_13, %c0_14] : memref<8x256xbf16, #tpu.memory_space<vmem>>, vector<8x256xbf16>
      %17 = arith.extf %16 : vector<8x256xbf16> to vector<8x256xf32>
      %18 = arith.addf %15, %17 : vector<8x256xf32>
      %cst_15 = arith.constant 0.000000e+00 : f32
      %19 = vector.broadcast %cst_15 : f32 to vector<8x256xf32>
      %20 = arith.maximumf %18, %19 : vector<8x256xf32>
      %21 = arith.truncf %20 : vector<8x256xf32> to vector<8x256xbf16>
      %c0_16 = arith.constant 0 : index
      %c0_17 = arith.constant 0 : index
      %22 = vector.load %arg7[%c0_16, %c0_17] : memref<8x256xbf16, #tpu.memory_space<vmem>>, vector<8x256xbf16>
      tpu.vector_store %arg7[%c0_16, %c0_17], %21 {strides = array<i32>} : memref<8x256xbf16, #tpu.memory_space<vmem>>, vector<8x256xbf16>,
    } else {
    }
    return
  }
  func.func @transform_0(%arg0: i32, %arg1: i32, %arg2: i32) -> (i32, i32) {
    %c0_i32 = arith.constant 0 : i32
    return %arg0, %arg2 : i32, i32
  }
  func.func @transform_1(%arg0: i32, %arg1: i32, %arg2: i32) -> (i32, i32) {
    %c0_i32 = arith.constant 0 : i32
    return %arg2, %arg1 : i32, i32
  }
  func.func @transform_2(%arg0: i32, %arg1: i32, %arg2: i32) -> (i32, i32) {
    %c0_i32 = arith.constant 0 : i32
    %c0_i32_0 = arith.constant 0 : i32
    return %c0_i32, %arg1 : i32, i32
  }
  func.func @transform_3(%arg0: i32, %arg1: i32, %arg2: i32) -> (i32, i32) {
    %c0_i32 = arith.constant 0 : i32
    return %arg0, %arg1 : i32, i32
  }
  func.func @transform_4(%arg0: i32, %arg1: i32, %arg2: i32) -> (i32, i32) {
    %c0_i32 = arith.constant 0 : i32
    return %arg0, %arg1 : i32, i32
  }
}

</mosaic_0001>

<llo_original>
// kernel: _lambda_.13
$region0: #{_lambda_.13}
  #allocation0 [shape = 'u32[]', space=smem, size = 0x4, offset = 0x4, fixed_abs, tag = 'smem constant byte address 0x4 - core index']
  #allocation1 [shape = 'u32[144,128]{1,0:T(1,128)}', space=vmem, size = 0x12000, scoped, tag = 'internal scratch']
  #allocation2 [shape = 'f32[256,64]{1,0:T(8,128)}', space=vmem, size = 0x20000, scoped, tag = 'scratch operand']
  %s0 = inlined_call_operand.vmem [shape: bf16[512,147], index: 0, kind: input, shape index: {}]
  %s1 = inlined_call_operand.vmem [shape: bf16[147,64], index: 1, kind: input, shape index: {}]
  %s2 = inlined_call_operand.vmem [shape: f32[1,64], index: 2, kind: input, shape index: {}]
  %s3 = inlined_call_operand.vmem [shape: bf16[512,64], index: 3, kind: output, shape index: {}]
  %s4 = sld [smem:[#allocation0]]
  $region53: #{_lambda_.13} parent=0
    _
  %s6 = ssub.s32 1, %s4
  %s7 = scalar_select 0, %s6, %s4
  loop: start=0, step=1, limit=4
  $region2: #{_lambda_.13} parent=0 // loop_pre_header
    _
  $region3: #{_lambda_.13} parent=0 // loop_header
    %s9 = sphi 0, %s13
    %p10 = scmp.ge.s32.totalorder %s9, 4
    %s16 = sphi 0, %s35
    %s17 = sphi 0, %s31
    %s18 = sphi 0, %s27
    %s19 = sphi 0, %s16
    %s20 = sphi 0, %s17
    %s21 = sphi 0, %s18
    %s22 = sphi 0, %s19
    %s23 = sphi 0, %s20
    %s24 = sphi 0, %s21
    %s40 = sphi 0, %s42
    %s43 = sphi 0, %s40
    %s44 = sphi 0, %s43
    %s60 = sphi 0, %s44
    %s68 = sphi 0, %s70
    %s71 = sphi 0, %s68
    %s72 = sphi 0, %s71
    %s88 = sphi 0, %s72
    %s94 = sphi 0, %s96
    %s97 = sphi 0, %s94
    %s98 = sphi 0, %s97
    %s114 = sphi 0, %s98
    %s122 = sphi 0, %s124
    %s125 = sphi 0, %s122
    %s126 = sphi 0, %s125
    %s142 = sphi 0, %s126
  $region4: #{_lambda_.13} parent=0 // loop_header_branch
    %12 = sbr.rel (%p10) target = $region8
  $region5: #{_lambda_.13} parent=0 // loop_body
    %s14 = ssub.s32 %s9, 1
    %s15 = ssub.s32 %s9, 2
    %s25 = sadd.s32 1, %s18
    %p26 = scmp.ge.s32.totalorder %s25, 1
    %s27 = scalar_select %p26, 0, %s25
    %s28 = sadd.s32 1, %s17
    %s29 = scalar_select %p26, %s28, %s17
    %p30 = scmp.ge.s32.totalorder %s29, 1
    %s31 = scalar_select %p30, 0, %s29
    %s32 = sadd.s32 1, %s16
    %s33 = scalar_select %p30, %s32, %s16
    %p34 = scmp.ge.s32.totalorder %s33, 2
    %s35 = scalar_select %p34, 0, %s33
    %s36 = ssub.s32 %s16, %s35
    %s37 = ssub.s32 %s18, %s27
    %s38 = sor.u32 %s36, %s37
    %p39 = scmp.eq.s32.totalorder %s38, 0
    %s41 = sadd.s32 %s40, 1
    %s42 = scalar_select %p39, %s40, %s41
    %p45 = pneg %p39
    %p46 = scmp.eq.s32.totalorder %s9, 1
    %p47 = por %p45, %p46
    %p48 = scmp.ne.s32.totalorder %s40, %s43
    %p49 = scmp.eq.s32.totalorder %s9, 0
    %p50 = por %p48, %p49
    %p51 = scmp.ne.s32.totalorder %s40, %s43
    %p52 = scmp.eq.s32.totalorder %s14, 1
    %p53 = por %p51, %p52
    %p54 = scmp.ne.s32.totalorder %s43, %s44
    %p55 = scmp.eq.s32.totalorder %s14, 0
    %p56 = por %p54, %p55
    %p57 = scmp.ne.s32.totalorder %s43, %s44
    %p58 = scmp.eq.s32.totalorder %s15, 1
    %p59 = por %p57, %p58
    %p61 = scmp.ne.s32.totalorder %s44, %s60
    %p62 = scmp.eq.s32.totalorder %s15, 0
    %p63 = por %p61, %p62
    %s64 = ssub.s32 %s18, %s27
    %s65 = ssub.s32 %s17, %s31
    %s66 = sor.u32 %s64, %s65
    %p67 = scmp.eq.s32.totalorder %s66, 0
    %s69 = sadd.s32 %s68, 1
    %s70 = scalar_select %p67, %s68, %s69
    %p73 = pneg %p67
    %p74 = scmp.eq.s32.totalorder %s9, 1
    %p75 = por %p73, %p74
    %p76 = scmp.ne.s32.totalorder %s68, %s71
    %p77 = scmp.eq.s32.totalorder %s9, 0
    %p78 = por %p76, %p77
    %p79 = scmp.ne.s32.totalorder %s68, %s71
    %p80 = scmp.eq.s32.totalorder %s14, 1
    %p81 = por %p79, %p80
    %p82 = scmp.ne.s32.totalorder %s71, %s72
    %p83 = scmp.eq.s32.totalorder %s14, 0
    %p84 = por %p82, %p83
    %p85 = scmp.ne.s32.totalorder %s71, %s72
    %p86 = scmp.eq.s32.totalorder %s15, 1
    %p87 = por %p85, %p86
    %p89 = scmp.ne.s32.totalorder %s72, %s88
    %p90 = scmp.eq.s32.totalorder %s15, 0
    %p91 = por %p89, %p90
    %s92 = ssub.s32 %s17, %s31
    %p93 = scmp.eq.s32.totalorder %s92, 0
    %s95 = sadd.s32 %s94, 1
    %s96 = scalar_select %p93, %s94, %s95
    %p99 = pneg %p93
    %p100 = scmp.eq.s32.totalorder %s9, 1
    %p101 = por %p99, %p100
    %p102 = scmp.ne.s32.totalorder %s94, %s97
    %p103 = scmp.eq.s32.totalorder %s9, 0
    %p104 = por %p102, %p103
    %p105 = scmp.ne.s32.totalorder %s94, %s97
    %p106 = scmp.eq.s32.totalorder %s14, 1
    %p107 = por %p105, %p106
    %p108 = scmp.ne.s32.totalorder %s97, %s98
    %p109 = scmp.eq.s32.totalorder %s14, 0
    %p110 = por %p108, %p109
    %p111 = scmp.ne.s32.totalorder %s97, %s98
    %p112 = scmp.eq.s32.totalorder %s15, 1
    %p113 = por %p111, %p112
    %p115 = scmp.ne.s32.totalorder %s98, %s114
    %p116 = scmp.eq.s32.totalorder %s15, 0
    %p117 = por %p115, %p116
    %s118 = ssub.s32 %s16, %s35
    %s119 = ssub.s32 %s17, %s31
    %s120 = sor.u32 %s118, %s119
    %p121 = scmp.eq.s32.totalorder %s120, 0
    %s123 = sadd.s32 %s122, 1
    %s124 = scalar_select %p121, %s122, %s123
    %p127 = pneg %p121
    %p128 = scmp.eq.s32.totalorder %s9, 1
    %p129 = por %p127, %p128
    %p130 = scmp.ne.s32.totalorder %s122, %s125
    %p131 = scmp.eq.s32.totalorder %s9, 0
    %p132 = por %p130, %p131
    %p133 = scmp.ne.s32.totalorder %s122, %s125
    %p134 = scmp.eq.s32.totalorder %s14, 1
    %p135 = por %p133, %p134
    %p136 = scmp.ne.s32.totalorder %s125, %s126
    %p137 = scmp.eq.s32.totalorder %s14, 0
    %p138 = por %p136, %p137
    %p139 = scmp.ne.s32.totalorder %s125, %s126
    %p140 = scmp.eq.s32.totalorder %s15, 1
    %p141 = por %p139, %p140
    %p143 = scmp.ne.s32.totalorder %s126, %s142
    %p144 = scmp.eq.s32.totalorder %s15, 0
    %p145 = por %p143, %p144
    %p146 = scmp.le.s32.totalorder 1, %s9
    %p147 = scmp.lt.s32.totalorder %s9, 3
    %p148 = pnand %p146, %p147
    %p149 = pneg %p148
    // Predicated region
    $region9: #{_lambda_.13} parent=5 // pred_check
      _
    $region10: #{_lambda_.13} parent=5 // pred_check_branch
      %151 = sbr.rel (%p148) target = $region12
    $region11: #{_lambda_.13} parent=5 // pred_region
      %s152 = ssub.s32 %s9, 1
      // Predicated region
      $region13: #{_lambda_.13} parent=11 // pred_check
        %p153 = pneg %p84
      $region14: #{_lambda_.13} parent=11 // pred_check_branch
        %155 = sbr.rel (%p153) target = $region16
      $region15: #{_lambda_.13} parent=11 // pred_region
        %s156 = smul.u32 19, %s21
        %p157 = scmp.lt.s32.totalorder %s156, 18
        %s158 = scalar_select %p157, %s156, 18
        %p159 = scmp.lt.s32.totalorder %s20, 0
        %s160 = scalar_select %p159, %s20, 0
        %s161 = sadd.s32 %s160, %s158
        %s162 = smul.addr %s161, 4
        %s163 = scalar_lea.vmem %s1, %s162
        %s164 = smul.u32 19, %s21
      $region16: #{_lambda_.13} parent=11 // pred_fallthru
        _
      // Predicated region
      $region17: #{_lambda_.13} parent=11 // pred_check
        %p165 = pneg %p110
      $region18: #{_lambda_.13} parent=11 // pred_check_branch
        %167 = sbr.rel (%p165) target = $region20
      $region19: #{_lambda_.13} parent=11 // pred_region
        %p168 = scmp.lt.s32.totalorder %s20, 0
        %s169 = scalar_select %p168, %s20, 0
        %s170 = scalar_lea.vmem %s2, %s169
      $region20: #{_lambda_.13} parent=11 // pred_fallthru
        _
    $region12: #{_lambda_.13} parent=5 // pred_fallthru
      _
    %p171 = scmp.lt.s32.totalorder %s9, 2
    // Predicated region
    $region21: #{_lambda_.13} parent=5 // pred_check
      %p172 = pneg %p171
    $region22: #{_lambda_.13} parent=5 // pred_check_branch
      %174 = sbr.rel (%p172) target = $region24
    $region23: #{_lambda_.13} parent=5 // pred_region
      // Predicated region
      $region25: #{_lambda_.13} parent=23 // pred_check
        %p175 = pneg %p50
      $region26: #{_lambda_.13} parent=23 // pred_check_branch
        %177 = sbr.rel (%p175) target = $region28
      $region27: #{_lambda_.13} parent=23 // pred_region
        %s178 = smul.u32 32, %s16
        %s179 = smul.u32 2, %s18
        %p180 = scmp.lt.s32.totalorder %s178, 63
        %s181 = scalar_select %p180, %s178, 63
        %p182 = scmp.lt.s32.totalorder %s179, 1
        %s183 = scalar_select %p182, %s179, 1
        %s184 = smul.addr %s181, 2
        %s185 = sadd.s32 %s183, %s184
        %s186 = smul.addr %s185, 4
        %s187 = scalar_lea.vmem %s0, %s186
        %s188 = smul.u32 32, %s16
        %s189 = smul.u32 2, %s18
      $region28: #{_lambda_.13} parent=23 // pred_fallthru
        _
    $region24: #{_lambda_.13} parent=5 // pred_fallthru
      _
    %p190 = scmp.le.s32.totalorder 1, %s9
    %p191 = scmp.lt.s32.totalorder %s9, 3
    %p192 = pnand %p190, %p191
    %p193 = pneg %p192
    // Predicated region
    $region29: #{_lambda_.13} parent=5 // pred_check
      _
    $region30: #{_lambda_.13} parent=5 // pred_check_branch
      %195 = sbr.rel (%p192) target = $region32
    $region31: #{_lambda_.13} parent=5 // pred_region
      %s196 = ssub.s32 %s9, 1
      %s197 = smul.u32 32, %s19
      %s198 = smul.u32 2, %s21
      %p199 = scmp.lt.s32.totalorder %s197, 63
      %s200 = scalar_select %p199, %s197, 63
      %p201 = scmp.lt.s32.totalorder %s198, 1
      %s202 = scalar_select %p201, %s198, 1
      %s203 = smul.addr %s200, 2
      %s204 = sadd.s32 %s202, %s203
      %s205 = smul.addr %s204, 4
      %s206 = scalar_lea.vmem %s0, %s205
      %p207 = pneg %p56
      %p208 = pneg %p53
      %s209 = smul.u32 19, %s21
      %p210 = scmp.lt.s32.totalorder %s209, 18
      %s211 = scalar_select %p210, %s209, 18
      %p212 = scmp.lt.s32.totalorder %s20, 0
      %s213 = scalar_select %p212, %s20, 0
      %s214 = sadd.s32 %s213, %s211
      %s215 = smul.addr %s214, 4
      %s216 = scalar_lea.vmem %s1, %s215
      %p217 = pneg %p84
      %p218 = pneg %p81
      %p219 = scmp.lt.s32.totalorder %s20, 0
      %s220 = scalar_select %p219, %s20, 0
      %s221 = scalar_lea.vmem %s2, %s220
      %p222 = pneg %p110
      %p223 = pneg %p107
      %p224 = pneg %p138
      %p225 = pneg %p135
      %s226 = smul.u32 32, %s19
      %p227 = scmp.lt.s32.totalorder %s226, 63
      %s228 = scalar_select %p227, %s226, 63
      %p229 = scmp.lt.s32.totalorder %s20, 0
      %s230 = scalar_select %p229, %s20, 0
      %s231 = sadd.s32 %s230, %s228
      %s232 = smul.addr %s231, 4
      %s233 = scalar_lea.vmem %s3, %s232
      %s234 = smul.u32 32, %s19
      %s235 = smul.u32 2, %s21
      %p236 = scmp.lt.s32.totalorder %s234, 63
      %s237 = scalar_select %p236, %s234, 63
      %p238 = scmp.lt.s32.totalorder %s235, 1
      %s239 = scalar_select %p238, %s235, 1
      %s240 = smul.addr %s237, 2
      %s241 = sadd.s32 %s239, %s240
      %s242 = smul.addr %s241, 4
      %s243 = scalar_lea.vmem %s0, %s242
      %s244 = smul.u32 32, %s19
      %s245 = smul.u32 2, %s21
      %s246 = smul.u32 19, %s21
      %p247 = scmp.lt.s32.totalorder %s246, 18
      %s248 = scalar_select %p247, %s246, 18
      %p249 = scmp.lt.s32.totalorder %s20, 0
      %s250 = scalar_select %p249, %s20, 0
      %s251 = sadd.s32 %s250, %s248
      %s252 = smul.addr %s251, 4
      %s253 = scalar_lea.vmem %s1, %s252
      %s254 = smul.u32 19, %s21
      %p255 = scmp.lt.s32.totalorder %s20, 0
      %s256 = scalar_select %p255, %s20, 0
      %s257 = scalar_lea.vmem %s2, %s256
      %s258 = smul.u32 32, %s19
      %p259 = scmp.lt.s32.totalorder %s258, 63
      %s260 = scalar_select %p259, %s258, 63
      %p261 = scmp.lt.s32.totalorder %s20, 0
      %s262 = scalar_select %p261, %s20, 0
      %s263 = sadd.s32 %s262, %s260
      %s264 = smul.addr %s263, 4
      %s265 = scalar_lea.vmem %s3, %s264
      %s266 = smul.u32 32, %s19
      %p268 = scmp.eq.s32.totalorder %s21, 0
      // Predicated region
      $region33: #{_lambda_.13} parent=31 // pred_check
        %p269 = pneg %p268
      $region34: #{_lambda_.13} parent=31 // pred_check_branch
        %271 = sbr.rel (%p269) target = $region36
      $region35: #{_lambda_.13} parent=31 // pred_region
        %vm272 = vcmask 523264
        %273 = vst.msk [vmem:[#allocation2] sm:$0xff] %vm272, 0.0
        %274 = vst.msk [vmem:[#allocation2 + $0x8] sm:$0xff] %vm272, 0.0
        %275 = vst.msk [vmem:[#allocation2 + $0x10] sm:$0xff] %vm272, 0.0
        %276 = vst.msk [vmem:[#allocation2 + $0x18] sm:$0xff] %vm272, 0.0
        %277 = vst.msk [vmem:[#allocation2 + $0x20] sm:$0xff] %vm272, 0.0
        %278 = vst.msk [vmem:[#allocation2 + $0x28] sm:$0xff] %vm272, 0.0
        %279 = vst.msk [vmem:[#allocation2 + $0x30] sm:$0xff] %vm272, 0.0
        %280 = vst.msk [vmem:[#allocation2 + $0x38] sm:$0xff] %vm272, 0.0
        %281 = vst.msk [vmem:[#allocation2 + $0x40] sm:$0xff] %vm272, 0.0
        %282 = vst.msk [vmem:[#allocation2 + $0x48] sm:$0xff] %vm272, 0.0
        %283 = vst.msk [vmem:[#allocation2 + $0x50] sm:$0xff] %vm272, 0.0
        %284 = vst.msk [vmem:[#allocation2 + $0x58] sm:$0xff] %vm272, 0.0
        %285 = vst.msk [vmem:[#allocation2 + $0x60] sm:$0xff] %vm272, 0.0
        %286 = vst.msk [vmem:[#allocation2 + $0x68] sm:$0xff] %vm272, 0.0
        %287 = vst.msk [vmem:[#allocation2 + $0x70] sm:$0xff] %vm272, 0.0
        %288 = vst.msk [vmem:[#allocation2 + $0x78] sm:$0xff] %vm272, 0.0
        %289 = vst.msk [vmem:[#allocation2 + $0x80] sm:$0xff] %vm272, 0.0
        %290 = vst.msk [vmem:[#allocation2 + $0x88] sm:$0xff] %vm272, 0.0
        %291 = vst.msk [vmem:[#allocation2 + $0x90] sm:$0xff] %vm272, 0.0
        %292 = vst.msk [vmem:[#allocation2 + $0x98] sm:$0xff] %vm272, 0.0
        %293 = vst.msk [vmem:[#allocation2 + $0xa0] sm:$0xff] %vm272, 0.0
        %294 = vst.msk [vmem:[#allocation2 + $0xa8] sm:$0xff] %vm272, 0.0
        %295 = vst.msk [vmem:[#allocation2 + $0xb0] sm:$0xff] %vm272, 0.0
        %296 = vst.msk [vmem:[#allocation2 + $0xb8] sm:$0xff] %vm272, 0.0
        %297 = vst.msk [vmem:[#allocation2 + $0xc0] sm:$0xff] %vm272, 0.0
        %298 = vst.msk [vmem:[#allocation2 + $0xc8] sm:$0xff] %vm272, 0.0
        %299 = vst.msk [vmem:[#allocation2 + $0xd0] sm:$0xff] %vm272, 0.0
        %300 = vst.msk [vmem:[#allocation2 + $0xd8] sm:$0xff] %vm272, 0.0
        %301 = vst.msk [vmem:[#allocation2 + $0xe0] sm:$0xff] %vm272, 0.0
        %302 = vst.msk [vmem:[#allocation2 + $0xe8] sm:$0xff] %vm272, 0.0
        %303 = vst.msk [vmem:[#allocation2 + $0xf0] sm:$0xff] %vm272, 0.0
        %304 = vst.msk [vmem:[#allocation2 + $0xf8] sm:$0xff] %vm272, 0.0
      $region36: #{_lambda_.13} parent=31 // pred_fallthru
        _
      %v305 = vld [vmem:[#allocation2] sm:$0xff]
      %v306 = vld [vmem:[#allocation2 + $0x8] sm:$0xff]
      %v307 = vld [vmem:[#allocation2 + $0x10] sm:$0xff]
      %v308 = vld [vmem:[#allocation2 + $0x18] sm:$0xff]
      %v309 = vld [vmem:[#allocation2 + $0x20] sm:$0xff]
      %v310 = vld [vmem:[#allocation2 + $0x28] sm:$0xff]
      %v311 = vld [vmem:[#allocation2 + $0x30] sm:$0xff]
      %v312 = vld [vmem:[#allocation2 + $0x38] sm:$0xff]
      %v313 = vld [vmem:[#allocation2 + $0x40] sm:$0xff]
      %v314 = vld [vmem:[#allocation2 + $0x48] sm:$0xff]
      %v315 = vld [vmem:[#allocation2 + $0x50] sm:$0xff]
      %v316 = vld [vmem:[#allocation2 + $0x58] sm:$0xff]
      %v317 = vld [vmem:[#allocation2 + $0x60] sm:$0xff]
      %v318 = vld [vmem:[#allocation2 + $0x68] sm:$0xff]
      %v319 = vld [vmem:[#allocation2 + $0x70] sm:$0xff]
      %v320 = vld [vmem:[#allocation2 + $0x78] sm:$0xff]
      %v321 = vld [vmem:[#allocation2 + $0x80] sm:$0xff]
      %v322 = vld [vmem:[#allocation2 + $0x88] sm:$0xff]
      %v323 = vld [vmem:[#allocation2 + $0x90] sm:$0xff]
      %v324 = vld [vmem:[#allocation2 + $0x98] sm:$0xff]
      %v325 = vld [vmem:[#allocation2 + $0xa0] sm:$0xff]
      %v326 = vld [vmem:[#allocation2 + $0xa8] sm:$0xff]
      %v327 = vld [vmem:[#allocation2 + $0xb0] sm:$0xff]
      %v328 = vld [vmem:[#allocation2 + $0xb8] sm:$0xff]
      %v329 = vld [vmem:[#allocation2 + $0xc0] sm:$0xff]
      %v330 = vld [vmem:[#allocation2 + $0xc8] sm:$0xff]
      %v331 = vld [vmem:[#allocation2 + $0xd0] sm:$0xff]
      %v332 = vld [vmem:[#allocation2 + $0xd8] sm:$0xff]
      %v333 = vld [vmem:[#allocation2 + $0xe0] sm:$0xff]
      %v334 = vld [vmem:[#allocation2 + $0xe8] sm:$0xff]
      %v335 = vld [vmem:[#allocation2 + $0xf0] sm:$0xff]
      %v336 = vld [vmem:[#allocation2 + $0xf8] sm:$0xff]
      %v337 = vld [vmem:[%s243] sm:$0xff]
      %v338 = vld [vmem:[%s243 + $0x8] sm:$0xff]
      %v339 = vld [vmem:[%s243 + $0x10] sm:$0xff]
      %v340 = vld [vmem:[%s243 + $0x18] sm:$0xff]
      %v341 = vld [vmem:[%s243 + $0x20] sm:$0xff]
      %v342 = vld [vmem:[%s243 + $0x28] sm:$0xff]
      %v343 = vld [vmem:[%s243 + $0x30] sm:$0xff]
      %v344 = vld [vmem:[%s243 + $0x38] sm:$0xff]
      %v345 = vld [vmem:[%s243 + $0x40] sm:$0xff]
      %v346 = vld [vmem:[%s243 + $0x48] sm:$0xff]
      %v347 = vld [vmem:[%s243 + $0x50] sm:$0xff]
      %v348 = vld [vmem:[%s243 + $0x58] sm:$0xff]
      %v349 = vld [vmem:[%s243 + $0x60] sm:$0xff]
      %v350 = vld [vmem:[%s243 + $0x68] sm:$0xff]
      %v351 = vld [vmem:[%s243 + $0x70] sm:$0xff]
      %v352 = vld [vmem:[%s243 + $0x78] sm:$0xff]
      %v353 = vld [vmem:[%s243 + $0x80] sm:$0xff]
      %v354 = vld [vmem:[%s243 + $0x88] sm:$0xff]
      %v355 = vld [vmem:[%s243 + $0x90] sm:$0xff]
      %v356 = vld [vmem:[%s243 + $0x98] sm:$0xff]
      %v357 = vld [vmem:[%s243 + $0xa0] sm:$0xff]
      %v358 = vld [vmem:[%s243 + $0xa8] sm:$0xff]
      %v359 = vld [vmem:[%s243 + $0xb0] sm:$0xff]
      %v360 = vld [vmem:[%s243 + $0xb8] sm:$0xff]
      %v361 = vld [vmem:[%s243 + $0xc0] sm:$0xff]
      %v362 = vld [vmem:[%s243 + $0xc8] sm:$0xff]
      %v363 = vld [vmem:[%s243 + $0xd0] sm:$0xff]
      %v364 = vld [vmem:[%s243 + $0xd8] sm:$0xff]
      %v365 = vld [vmem:[%s243 + $0xe0] sm:$0xff]
      %v366 = vld [vmem:[%s243 + $0xe8] sm:$0xff]
      %v367 = vld [vmem:[%s243 + $0xf0] sm:$0xff]
      %v368 = vld [vmem:[%s243 + $0xf8] sm:$0xff]
      %v369 = vld [vmem:[%s253] sm:$0xf]
      %v370 = vld [vmem:[%s253 + $0x4] sm:$0xf]
      %v371 = vld [vmem:[%s253 + $0x8] sm:$0xf]
      %v372 = vld [vmem:[%s253 + $0xc] sm:$0xf]
      %v373 = vld [vmem:[%s253 + $0x10] sm:$0xf]
      %v374 = vld [vmem:[%s253 + $0x14] sm:$0xf]
      %v375 = vld [vmem:[%s253 + $0x18] sm:$0xf]
      %v376 = vld [vmem:[%s253 + $0x1c] sm:$0xf]
      %v377 = vld [vmem:[%s253 + $0x20] sm:$0xf]
      %v378 = vld [vmem:[%s253 + $0x24] sm:$0xf]
      %v379 = vld [vmem:[%s253 + $0x28] sm:$0xf]
      %v380 = vld [vmem:[%s253 + $0x2c] sm:$0xf]
      %v381 = vld [vmem:[%s253 + $0x30] sm:$0xf]
      %v382 = vld [vmem:[%s253 + $0x34] sm:$0xf]
      %v383 = vld [vmem:[%s253 + $0x38] sm:$0xf]
      %v384 = vld [vmem:[%s253 + $0x3c] sm:$0xf]
      %v385 = vld [vmem:[%s253 + $0x40] sm:$0xf]
      %v386 = vld [vmem:[%s253 + $0x44] sm:$0xf]
      %v387 = vld [vmem:[%s253 + $0x48] sm:$0x3]
      %v420 = vunpack.c.l.b16 %v337
      %v421 = vunpack.c.h.b16 %v337
      %v422 = vunpack.c.l.b16 %v338
      %v423 = vunpack.c.h.b16 %v338
      %v424 = vunpack.c.l.b16 %v339
      %v425 = vunpack.c.h.b16 %v339
      %v426 = vunpack.c.l.b16 %v340
      %v427 = vunpack.c.h.b16 %v340
      %v428 = vunpack.c.l.b16 %v341
      %v429 = vunpack.c.h.b16 %v341
      %v430 = vunpack.c.l.b16 %v342
      %v431 = vunpack.c.h.b16 %v342
      %v432 = vunpack.c.l.b16 %v343
      %v433 = vunpack.c.h.b16 %v343
      %v434 = vunpack.c.l.b16 %v344
      %v435 = vunpack.c.h.b16 %v344
      %v436 = vunpack.c.l.b16 %v345
      %v437 = vunpack.c.h.b16 %v345
      %v438 = vunpack.c.l.b16 %v346
      %v439 = vunpack.c.h.b16 %v346
      %v440 = vunpack.c.l.b16 %v347
      %v441 = vunpack.c.h.b16 %v347
      %v442 = vunpack.c.l.b16 %v348
      %v443 = vunpack.c.h.b16 %v348
      %v444 = vunpack.c.l.b16 %v349
      %v445 = vunpack.c.h.b16 %v349
      %v446 = vunpack.c.l.b16 %v350
      %v447 = vunpack.c.h.b16 %v350
      %v448 = vunpack.c.l.b16 %v351
      %v449 = vunpack.c.h.b16 %v351
      %v450 = vunpack.c.l.b16 %v352
      %v451 = vunpack.c.h.b16 %v352
      %v452 = vunpack.c.l.b16 %v353
      %v453 = vunpack.c.h.b16 %v353
      %v454 = vunpack.c.l.b16 %v354
      %v455 = vunpack.c.h.b16 %v354
      %v456 = vunpack.c.l.b16 %v355
      %v457 = vunpack.c.h.b16 %v355
      %v458 = vunpack.c.l.b16 %v356
      %v459 = vunpack.c.h.b16 %v356
      %v460 = vunpack.c.l.b16 %v357
      %v461 = vunpack.c.h.b16 %v357
      %v462 = vunpack.c.l.b16 %v358
      %v463 = vunpack.c.h.b16 %v358
      %v464 = vunpack.c.l.b16 %v359
      %v465 = vunpack.c.h.b16 %v359
      %v466 = vunpack.c.l.b16 %v360
      %v467 = vunpack.c.h.b16 %v360
      %v468 = vunpack.c.l.b16 %v361
      %v469 = vunpack.c.h.b16 %v361
      %v470 = vunpack.c.l.b16 %v362
      %v471 = vunpack.c.h.b16 %v362
      %v472 = vunpack.c.l.b16 %v363
      %v473 = vunpack.c.h.b16 %v363
      %v474 = vunpack.c.l.b16 %v364
      %v475 = vunpack.c.h.b16 %v364
      %v476 = vunpack.c.l.b16 %v365
      %v477 = vunpack.c.h.b16 %v365
      %v478 = vunpack.c.l.b16 %v366
      %v479 = vunpack.c.h.b16 %v366
      %v480 = vunpack.c.l.b16 %v367
      %v481 = vunpack.c.h.b16 %v367
      %v482 = vunpack.c.l.b16 %v368
      %v483 = vunpack.c.h.b16 %v368
      %v484 = vpack.c.b16 %v422, %v420
      %v485 = vpack.c.b16 %v423, %v421
      %v486 = vpack.c.b16 %v426, %v424
      %v487 = vpack.c.b16 %v427, %v425
      %v488 = vpack.c.b16 %v430, %v428
      %v489 = vpack.c.b16 %v431, %v429
      %v490 = vpack.c.b16 %v434, %v432
      %v491 = vpack.c.b16 %v435, %v433
      %v492 = vpack.c.b16 %v438, %v436
      %v493 = vpack.c.b16 %v439, %v437
      %v494 = vpack.c.b16 %v442, %v440
      %v495 = vpack.c.b16 %v443, %v441
      %v496 = vpack.c.b16 %v446, %v444
      %v497 = vpack.c.b16 %v447, %v445
      %v498 = vpack.c.b16 %v450, %v448
      %v499 = vpack.c.b16 %v451, %v449
      %v500 = vpack.c.b16 %v454, %v452
      %v501 = vpack.c.b16 %v455, %v453
      %v502 = vpack.c.b16 %v458, %v456
      %v503 = vpack.c.b16 %v459, %v457
      %v504 = vpack.c.b16 %v462, %v460
      %v505 = vpack.c.b16 %v463, %v461
      %v506 = vpack.c.b16 %v466, %v464
      %v507 = vpack.c.b16 %v467, %v465
      %v508 = vpack.c.b16 %v470, %v468
      %v509 = vpack.c.b16 %v471, %v469
      %v510 = vpack.c.b16 %v474, %v472
      %v511 = vpack.c.b16 %v475, %v473
      %v512 = vpack.c.b16 %v478, %v476
      %v513 = vpack.c.b16 %v479, %v477
      %v514 = vpack.c.b16 %v482, %v480
      %v515 = vpack.c.b16 %v483, %v481
      %v551 = vunpack.c.l.b16 %v369
      %v552 = vunpack.c.l.b16 %v370
      %v553 = vunpack.c.l.b16 %v371
      %v554 = vunpack.c.l.b16 %v372
      %v555 = vunpack.c.l.b16 %v373
      %v556 = vunpack.c.l.b16 %v374
      %v557 = vunpack.c.l.b16 %v375
      %v558 = vunpack.c.l.b16 %v376
      %v559 = vunpack.c.l.b16 %v377
      %v560 = vunpack.c.l.b16 %v378
      %v561 = vunpack.c.l.b16 %v379
      %v562 = vunpack.c.l.b16 %v380
      %v563 = vunpack.c.l.b16 %v381
      %v564 = vunpack.c.l.b16 %v382
      %v565 = vunpack.c.l.b16 %v383
      %v566 = vunpack.c.l.b16 %v384
      %v567 = vunpack.c.l.b16 %v385
      %v568 = vunpack.c.l.b16 %v386
      %v569 = vunpack.c.l.b16 %v387
      %v570 = vpack.c.b16 %v552, %v551
      %v571 = vpack.c.b16 %v554, %v553
      %v572 = vpack.c.b16 %v556, %v555
      %v573 = vpack.c.b16 %v558, %v557
      %v574 = vpack.c.b16 %v560, %v559
      %v575 = vpack.c.b16 %v562, %v561
      %v576 = vpack.c.b16 %v564, %v563
      %v577 = vpack.c.b16 %v566, %v565
      %v578 = vpack.c.b16 %v568, %v567
      %v579 = vpack.c.b16 %v569, %v569
      %vm589 = vcmask 154624
      %v591 = vsel %vm589, %v485, 0
      %v594 = vsel %vm589, %v487, 0
      %v597 = vsel %vm589, %v489, 0
      %v600 = vsel %vm589, %v491, 0
      %v603 = vsel %vm589, %v493, 0
      %v606 = vsel %vm589, %v495, 0
      %v609 = vsel %vm589, %v497, 0
      %v612 = vsel %vm589, %v499, 0
      %v615 = vsel %vm589, %v501, 0
      %v618 = vsel %vm589, %v503, 0
      %v621 = vsel %vm589, %v505, 0
      %v624 = vsel %vm589, %v507, 0
      %v627 = vsel %vm589, %v509, 0
      %v630 = vsel %vm589, %v511, 0
      %v633 = vsel %vm589, %v513, 0
      %v636 = vsel %vm589, %v515, 0
      %vm638 = vcmask 1040384
      %vm639 = vcmask 1041408
      %v640 = vsel %vm638, 4294967295, 65535
      %v641 = vsel %vm639, %v640, 0
      %v643 = vand.u32 %v579, %v641
      %645 = vmatprep.subr.bf16.mxu0 0
      %646 = vmatpush1.bf16.msra.mxu0 %v570
      %647 = vmatprep.subr.bf16.mxu0 0
      %648 = vmatpush1.bf16.msra.mxu0 %v571
      %649 = vmatprep.subr.bf16.mxu0 0
      %650 = vmatpush1.bf16.msra.mxu0 %v572
      %651 = vmatprep.subr.bf16.mxu0 0
      %652 = vmatpush1.bf16.msra.mxu0 %v573
      %653 = vmatprep.subr.bf16.mxu0 0
      %654 = vmatpush1.bf16.msra.mxu0 %v574
      %655 = vmatprep.subr.bf16.mxu0 0
      %656 = vmatpush1.bf16.msra.mxu0 %v575
      %657 = vmatprep.subr.bf16.mxu0 0
      %658 = vmatpush1.bf16.msra.mxu0 %v576
      %659 = vmatprep.subr.bf16.mxu0 0
      %660 = vmatpush1.bf16.msra.mxu0 %v577
      %661 = vmatprep.subr.bf16.mxu0 0
      %662 = vmatpush1.bf16.msra.mxu0 %v578
      %663 = vmatprep.subr.bf16.mxu0 0
      %664 = vmatpush1.bf16.msra.mxu0 %v643
      %665 = vmatprep.subr.bf16.mxu0 0
      %666 = vmatpush1.bf16.msra.mxu0 0
      %667 = vmatprep.subr.bf16.mxu0 0
      %668 = vmatpush1.bf16.msra.mxu0 0
      %669 = vmatprep.subr.bf16.mxu0 0
      %670 = vmatpush1.bf16.msra.mxu0 0
      %671 = vmatprep.subr.bf16.mxu0 0
      %672 = vmatpush1.bf16.msra.mxu0 0
      %673 = vmatprep.subr.bf16.mxu0 0
      %674 = vmatpush1.bf16.msra.mxu0 0
      %675 = vmatprep.subr.bf16.mxu0 0
      %676 = vmatpush1.bf16.msra.mxu0 0
      %677 = vmatprep.mubr.bf16.mxu0 %v591
      %678 = vmatmul.mubr.bf16.gmra.mrb[0].mxu0 %v484
      %v679 = vpop.f32.mrb[0].mxu0
      %v680 = vadd.f32 0.0, %v679
      %v681 = vpop.f32.mrb[0].mxu0
      %v682 = vpop.f32.mrb[0].mxu0
      %v683 = vadd.f32 0.0, %v682
      %v684 = vpop.f32.mrb[0].mxu0
      %685 = vmatprep.mubr.bf16.mxu0 %v594
      %686 = vmatmul.mubr.bf16.gmra.mrb[0].mxu0 %v486
      %v687 = vpop.f32.mrb[0].mxu0
      %v688 = vadd.f32 0.0, %v687
      %v689 = vpop.f32.mrb[0].mxu0
      %v690 = vpop.f32.mrb[0].mxu0
      %v691 = vadd.f32 0.0, %v690
      %v692 = vpop.f32.mrb[0].mxu0
      %693 = vmatprep.mubr.bf16.mxu0 %v597
      %694 = vmatmul.mubr.bf16.gmra.mrb[0].mxu0 %v488
      %v695 = vpop.f32.mrb[0].mxu0
      %v696 = vadd.f32 0.0, %v695
      %v697 = vpop.f32.mrb[0].mxu0
      %v698 = vpop.f32.mrb[0].mxu0
      %v699 = vadd.f32 0.0, %v698
      %v700 = vpop.f32.mrb[0].mxu0
      %701 = vmatprep.mubr.bf16.mxu0 %v600
      %702 = vmatmul.mubr.bf16.gmra.mrb[0].mxu0 %v490
      %v703 = vpop.f32.mrb[0].mxu0
      %v704 = vadd.f32 0.0, %v703
      %v705 = vpop.f32.mrb[0].mxu0
      %v706 = vpop.f32.mrb[0].mxu0
      %v707 = vadd.f32 0.0, %v706
      %v708 = vpop.f32.mrb[0].mxu0
      %709 = vmatprep.mubr.bf16.mxu0 %v603
      %710 = vmatmul.mubr.bf16.gmra.mrb[0].mxu0 %v492
      %v711 = vpop.f32.mrb[0].mxu0
      %v712 = vadd.f32 0.0, %v711
      %v713 = vpop.f32.mrb[0].mxu0
      %v714 = vpop.f32.mrb[0].mxu0
      %v715 = vadd.f32 0.0, %v714
      %v716 = vpop.f32.mrb[0].mxu0
      %717 = vmatprep.mubr.bf16.mxu0 %v606
      %718 = vmatmul.mubr.bf16.gmra.mrb[0].mxu0 %v494
      %v719 = vpop.f32.mrb[0].mxu0
      %v720 = vadd.f32 0.0, %v719
      %v721 = vpop.f32.mrb[0].mxu0
      %v722 = vpop.f32.mrb[0].mxu0
      %v723 = vadd.f32 0.0, %v722
      %v724 = vpop.f32.mrb[0].mxu0
      %725 = vmatprep.mubr.bf16.mxu0 %v609
      %726 = vmatmul.mubr.bf16.gmra.mrb[0].mxu0 %v496
      %v727 = vpop.f32.mrb[0].mxu0
      %v728 = vadd.f32 0.0, %v727
      %v729 = vpop.f32.mrb[0].mxu0
      %v730 = vpop.f32.mrb[0].mxu0
      %v731 = vadd.f32 0.0, %v730
      %v732 = vpop.f32.mrb[0].mxu0
      %733 = vmatprep.mubr.bf16.mxu0 %v612
      %734 = vmatmul.mubr.bf16.gmra.mrb[0].mxu0 %v498
      %v735 = vpop.f32.mrb[0].mxu0
      %v736 = vadd.f32 0.0, %v735
      %v737 = vpop.f32.mrb[0].mxu0
      %v738 = vpop.f32.mrb[0].mxu0
      %v739 = vadd.f32 0.0, %v738
      %v740 = vpop.f32.mrb[0].mxu0
      %741 = vmatprep.mubr.bf16.mxu0 %v615
      %742 = vmatmul.mubr.bf16.gmra.mrb[0].mxu0 %v500
      %v743 = vpop.f32.mrb[0].mxu0
      %v744 = vadd.f32 0.0, %v743
      %v745 = vpop.f32.mrb[0].mxu0
      %v746 = vpop.f32.mrb[0].mxu0
      %v747 = vadd.f32 0.0, %v746
      %v748 = vpop.f32.mrb[0].mxu0
      %749 = vmatprep.mubr.bf16.mxu0 %v618
      %750 = vmatmul.mubr.bf16.gmra.mrb[0].mxu0 %v502
      %v751 = vpop.f32.mrb[0].mxu0
      %v752 = vadd.f32 0.0, %v751
      %v753 = vpop.f32.mrb[0].mxu0
      %v754 = vpop.f32.mrb[0].mxu0
      %v755 = vadd.f32 0.0, %v754
      %v756 = vpop.f32.mrb[0].mxu0
      %757 = vmatprep.mubr.bf16.mxu0 %v621
      %758 = vmatmul.mubr.bf16.gmra.mrb[0].mxu0 %v504
      %v759 = vpop.f32.mrb[0].mxu0
      %v760 = vadd.f32 0.0, %v759
      %v761 = vpop.f32.mrb[0].mxu0
      %v762 = vpop.f32.mrb[0].mxu0
      %v763 = vadd.f32 0.0, %v762
      %v764 = vpop.f32.mrb[0].mxu0
      %765 = vmatprep.mubr.bf16.mxu0 %v624
      %766 = vmatmul.mubr.bf16.gmra.mrb[0].mxu0 %v506
      %v767 = vpop.f32.mrb[0].mxu0
      %v768 = vadd.f32 0.0, %v767
      %v769 = vpop.f32.mrb[0].mxu0
      %v770 = vpop.f32.mrb[0].mxu0
      %v771 = vadd.f32 0.0, %v770
      %v772 = vpop.f32.mrb[0].mxu0
      %773 = vmatprep.mubr.bf16.mxu0 %v627
      %774 = vmatmul.mubr.bf16.gmra.mrb[0].mxu0 %v508
      %v775 = vpop.f32.mrb[0].mxu0
      %v776 = vadd.f32 0.0, %v775
      %v777 = vpop.f32.mrb[0].mxu0
      %v778 = vpop.f32.mrb[0].mxu0
      %v779 = vadd.f32 0.0, %v778
      %v780 = vpop.f32.mrb[0].mxu0
      %781 = vmatprep.mubr.bf16.mxu0 %v630
      %782 = vmatmul.mubr.bf16.gmra.mrb[0].mxu0 %v510
      %v783 = vpop.f32.mrb[0].mxu0
      %v784 = vadd.f32 0.0, %v783
      %v785 = vpop.f32.mrb[0].mxu0
      %v786 = vpop.f32.mrb[0].mxu0
      %v787 = vadd.f32 0.0, %v786
      %v788 = vpop.f32.mrb[0].mxu0
      %789 = vmatprep.mubr.bf16.mxu0 %v633
      %790 = vmatmul.mubr.bf16.gmra.mrb[0].mxu0 %v512
      %v791 = vpop.f32.mrb[0].mxu0
      %v792 = vadd.f32 0.0, %v791
      %v793 = vpop.f32.mrb[0].mxu0
      %v794 = vpop.f32.mrb[0].mxu0
      %v795 = vadd.f32 0.0, %v794
      %v796 = vpop.f32.mrb[0].mxu0
      %797 = vmatprep.mubr.bf16.mxu0 %v636
      %798 = vmatmul.mubr.bf16.gmra.mrb[0].mxu0 %v514
      %v799 = vpop.f32.mrb[0].mxu0
      %v800 = vadd.f32 0.0, %v799
      %v801 = vpop.f32.mrb[0].mxu0
      %v802 = vpop.f32.mrb[0].mxu0
      %v803 = vadd.f32 0.0, %v802
      %v804 = vpop.f32.mrb[0].mxu0
      %805 = vdwg.mxu0
      %v806 = vadd.f32 %v305, %v680
      %v807 = vadd.f32 %v306, %v683
      %v808 = vadd.f32 %v307, %v688
      %v809 = vadd.f32 %v308, %v691
      %v810 = vadd.f32 %v309, %v696
      %v811 = vadd.f32 %v310, %v699
      %v812 = vadd.f32 %v311, %v704
      %v813 = vadd.f32 %v312, %v707
      %v814 = vadd.f32 %v313, %v712
      %v815 = vadd.f32 %v314, %v715
      %v816 = vadd.f32 %v315, %v720
      %v817 = vadd.f32 %v316, %v723
      %v818 = vadd.f32 %v317, %v728
      %v819 = vadd.f32 %v318, %v731
      %v820 = vadd.f32 %v319, %v736
      %v821 = vadd.f32 %v320, %v739
      %v822 = vadd.f32 %v321, %v744
      %v823 = vadd.f32 %v322, %v747
      %v824 = vadd.f32 %v323, %v752
      %v825 = vadd.f32 %v324, %v755
      %v826 = vadd.f32 %v325, %v760
      %v827 = vadd.f32 %v326, %v763
      %v828 = vadd.f32 %v327, %v768
      %v829 = vadd.f32 %v328, %v771
      %v830 = vadd.f32 %v329, %v776
      %v831 = vadd.f32 %v330, %v779
      %v832 = vadd.f32 %v331, %v784
      %v833 = vadd.f32 %v332, %v787
      %v834 = vadd.f32 %v333, %v792
      %v835 = vadd.f32 %v334, %v795
      %v836 = vadd.f32 %v335, %v800
      %v837 = vadd.f32 %v336, %v803
      %vm838 = vcmask 523264
      %839 = vst.msk [vmem:[#allocation2] sm:$0xff] %vm838, %v806
      %840 = vst.msk [vmem:[#allocation2 + $0x8] sm:$0xff] %vm838, %v807
      %841 = vst.msk [vmem:[#allocation2 + $0x10] sm:$0xff] %vm838, %v808
      %842 = vst.msk [vmem:[#allocation2 + $0x18] sm:$0xff] %vm838, %v809
      %843 = vst.msk [vmem:[#allocation2 + $0x20] sm:$0xff] %vm838, %v810
      %844 = vst.msk [vmem:[#allocation2 + $0x28] sm:$0xff] %vm838, %v811
      %845 = vst.msk [vmem:[#allocation2 + $0x30] sm:$0xff] %vm838, %v812
      %846 = vst.msk [vmem:[#allocation2 + $0x38] sm:$0xff] %vm838, %v813
      %847 = vst.msk [vmem:[#allocation2 + $0x40] sm:$0xff] %vm838, %v814
      %848 = vst.msk [vmem:[#allocation2 + $0x48] sm:$0xff] %vm838, %v815
      %849 = vst.msk [vmem:[#allocation2 + $0x50] sm:$0xff] %vm838, %v816
      %850 = vst.msk [vmem:[#allocation2 + $0x58] sm:$0xff] %vm838, %v817
      %851 = vst.msk [vmem:[#allocation2 + $0x60] sm:$0xff] %vm838, %v818
      %852 = vst.msk [vmem:[#allocation2 + $0x68] sm:$0xff] %vm838, %v819
      %853 = vst.msk [vmem:[#allocation2 + $0x70] sm:$0xff] %vm838, %v820
      %854 = vst.msk [vmem:[#allocation2 + $0x78] sm:$0xff] %vm838, %v821
      %855 = vst.msk [vmem:[#allocation2 + $0x80] sm:$0xff] %vm838, %v822
      %856 = vst.msk [vmem:[#allocation2 + $0x88] sm:$0xff] %vm838, %v823
      %857 = vst.msk [vmem:[#allocation2 + $0x90] sm:$0xff] %vm838, %v824
      %858 = vst.msk [vmem:[#allocation2 + $0x98] sm:$0xff] %vm838, %v825
      %859 = vst.msk [vmem:[#allocation2 + $0xa0] sm:$0xff] %vm838, %v826
      %860 = vst.msk [vmem:[#allocation2 + $0xa8] sm:$0xff] %vm838, %v827
      %861 = vst.msk [vmem:[#allocation2 + $0xb0] sm:$0xff] %vm838, %v828
      %862 = vst.msk [vmem:[#allocation2 + $0xb8] sm:$0xff] %vm838, %v829
      %863 = vst.msk [vmem:[#allocation2 + $0xc0] sm:$0xff] %vm838, %v830
      %864 = vst.msk [vmem:[#allocation2 + $0xc8] sm:$0xff] %vm838, %v831
      %865 = vst.msk [vmem:[#allocation2 + $0xd0] sm:$0xff] %vm838, %v832
      %866 = vst.msk [vmem:[#allocation2 + $0xd8] sm:$0xff] %vm838, %v833
      %867 = vst.msk [vmem:[#allocation2 + $0xe0] sm:$0xff] %vm838, %v834
      %868 = vst.msk [vmem:[#allocation2 + $0xe8] sm:$0xff] %vm838, %v835
      %869 = vst.msk [vmem:[#allocation2 + $0xf0] sm:$0xff] %vm838, %v836
      %870 = vst.msk [vmem:[#allocation2 + $0xf8] sm:$0xff] %vm838, %v837
      // Predicated region
      $region37: #{_lambda_.13} parent=31 // pred_check
        %p871 = pneg %p268
      $region38: #{_lambda_.13} parent=31 // pred_check_branch
        %873 = sbr.rel (%p871) target = $region40
      $region39: #{_lambda_.13} parent=31 // pred_region
        %v874 = vld [vmem:[#allocation2] sm:$0xff]
        %v875 = vld [vmem:[#allocation2 + $0x8] sm:$0xff]
        %v876 = vld [vmem:[#allocation2 + $0x10] sm:$0xff]
        %v877 = vld [vmem:[#allocation2 + $0x18] sm:$0xff]
        %v878 = vld [vmem:[#allocation2 + $0x20] sm:$0xff]
        %v879 = vld [vmem:[#allocation2 + $0x28] sm:$0xff]
        %v880 = vld [vmem:[#allocation2 + $0x30] sm:$0xff]
        %v881 = vld [vmem:[#allocation2 + $0x38] sm:$0xff]
        %v882 = vld [vmem:[#allocation2 + $0x40] sm:$0xff]
        %v883 = vld [vmem:[#allocation2 + $0x48] sm:$0xff]
        %v884 = vld [vmem:[#allocation2 + $0x50] sm:$0xff]
        %v885 = vld [vmem:[#allocation2 + $0x58] sm:$0xff]
        %v886 = vld [vmem:[#allocation2 + $0x60] sm:$0xff]
        %v887 = vld [vmem:[#allocation2 + $0x68] sm:$0xff]
        %v888 = vld [vmem:[#allocation2 + $0x70] sm:$0xff]
        %v889 = vld [vmem:[#allocation2 + $0x78] sm:$0xff]
        %v890 = vld [vmem:[#allocation2 + $0x80] sm:$0xff]
        %v891 = vld [vmem:[#allocation2 + $0x88] sm:$0xff]
        %v892 = vld [vmem:[#allocation2 + $0x90] sm:$0xff]
        %v893 = vld [vmem:[#allocation2 + $0x98] sm:$0xff]
        %v894 = vld [vmem:[#allocation2 + $0xa0] sm:$0xff]
        %v895 = vld [vmem:[#allocation2 + $0xa8] sm:$0xff]
        %v896 = vld [vmem:[#allocation2 + $0xb0] sm:$0xff]
        %v897 = vld [vmem:[#allocation2 + $0xb8] sm:$0xff]
        %v898 = vld [vmem:[#allocation2 + $0xc0] sm:$0xff]
        %v899 = vld [vmem:[#allocation2 + $0xc8] sm:$0xff]
        %v900 = vld [vmem:[#allocation2 + $0xd0] sm:$0xff]
        %v901 = vld [vmem:[#allocation2 + $0xd8] sm:$0xff]
        %v902 = vld [vmem:[#allocation2 + $0xe0] sm:$0xff]
        %v903 = vld [vmem:[#allocation2 + $0xe8] sm:$0xff]
        %v904 = vld [vmem:[#allocation2 + $0xf0] sm:$0xff]
        %v905 = vld [vmem:[#allocation2 + $0xf8] sm:$0xff]
        %v906 = vld [vmem:[%s257] sm:$0x1]
        %v908 = vlaneseq
        %v909 = vshrl.u32 %v908, 7
        %v910 = vsub.s32 0, %v909
        %v911 = vrot.slane %v906, %v910
        %v913 = vadd.f32 %v874, %v911
        %v914 = vadd.f32 %v875, %v911
        %v915 = vadd.f32 %v876, %v911
        %v916 = vadd.f32 %v877, %v911
        %v917 = vadd.f32 %v878, %v911
        %v918 = vadd.f32 %v879, %v911
        %v919 = vadd.f32 %v880, %v911
        %v920 = vadd.f32 %v881, %v911
        %v921 = vadd.f32 %v882, %v911
        %v922 = vadd.f32 %v883, %v911
        %v923 = vadd.f32 %v884, %v911
        %v924 = vadd.f32 %v885, %v911
        %v925 = vadd.f32 %v886, %v911
        %v926 = vadd.f32 %v887, %v911
        %v927 = vadd.f32 %v888, %v911
        %v928 = vadd.f32 %v889, %v911
        %v929 = vadd.f32 %v890, %v911
        %v930 = vadd.f32 %v891, %v911
        %v931 = vadd.f32 %v892, %v911
        %v932 = vadd.f32 %v893, %v911
        %v933 = vadd.f32 %v894, %v911
        %v934 = vadd.f32 %v895, %v911
        %v935 = vadd.f32 %v896, %v911
        %v936 = vadd.f32 %v897, %v911
        %v937 = vadd.f32 %v898, %v911
        %v938 = vadd.f32 %v899, %v911
        %v939 = vadd.f32 %v900, %v911
        %v940 = vadd.f32 %v901, %v911
        %v941 = vadd.f32 %v902, %v911
        %v942 = vadd.f32 %v903, %v911
        %v943 = vadd.f32 %v904, %v911
        %v944 = vadd.f32 %v905, %v911
        %v945 = vmax.f32 %v913, 0.0
        %v946 = vmax.f32 %v914, 0.0
        %v947 = vmax.f32 %v915, 0.0
        %v948 = vmax.f32 %v916, 0.0
        %v949 = vmax.f32 %v917, 0.0
        %v950 = vmax.f32 %v918, 0.0
        %v951 = vmax.f32 %v919, 0.0
        %v952 = vmax.f32 %v920, 0.0
        %v953 = vmax.f32 %v921, 0.0
        %v954 = vmax.f32 %v922, 0.0
        %v955 = vmax.f32 %v923, 0.0
        %v956 = vmax.f32 %v924, 0.0
        %v957 = vmax.f32 %v925, 0.0
        %v958 = vmax.f32 %v926, 0.0
        %v959 = vmax.f32 %v927, 0.0
        %v960 = vmax.f32 %v928, 0.0
        %v961 = vmax.f32 %v929, 0.0
        %v962 = vmax.f32 %v930, 0.0
        %v963 = vmax.f32 %v931, 0.0
        %v964 = vmax.f32 %v932, 0.0
        %v965 = vmax.f32 %v933, 0.0
        %v966 = vmax.f32 %v934, 0.0
        %v967 = vmax.f32 %v935, 0.0
        %v968 = vmax.f32 %v936, 0.0
        %v969 = vmax.f32 %v937, 0.0
        %v970 = vmax.f32 %v938, 0.0
        %v971 = vmax.f32 %v939, 0.0
        %v972 = vmax.f32 %v940, 0.0
        %v973 = vmax.f32 %v941, 0.0
        %v974 = vmax.f32 %v942, 0.0
        %v975 = vmax.f32 %v943, 0.0
        %v976 = vmax.f32 %v944, 0.0
        %v977 = vpack.c.bf16 %v946, %v945
        %v978 = vpack.c.bf16 %v948, %v947
        %v979 = vpack.c.bf16 %v950, %v949
        %v980 = vpack.c.bf16 %v952, %v951
        %v981 = vpack.c.bf16 %v954, %v953
        %v982 = vpack.c.bf16 %v956, %v955
        %v983 = vpack.c.bf16 %v958, %v957
        %v984 = vpack.c.bf16 %v960, %v959
        %v985 = vpack.c.bf16 %v962, %v961
        %v986 = vpack.c.bf16 %v964, %v963
        %v987 = vpack.c.bf16 %v966, %v965
        %v988 = vpack.c.bf16 %v968, %v967
        %v989 = vpack.c.bf16 %v970, %v969
        %v990 = vpack.c.bf16 %v972, %v971
        %v991 = vpack.c.bf16 %v974, %v973
        %v992 = vpack.c.bf16 %v976, %v975
        %v1009 = vunpack.c.l.b16 %v977
        %v1010 = vunpack.c.h.b16 %v977
        %v1011 = vunpack.c.l.b16 %v978
        %v1012 = vunpack.c.h.b16 %v978
        %v1013 = vunpack.c.l.b16 %v979
        %v1014 = vunpack.c.h.b16 %v979
        %v1015 = vunpack.c.l.b16 %v980
        %v1016 = vunpack.c.h.b16 %v980
        %v1017 = vunpack.c.l.b16 %v981
        %v1018 = vunpack.c.h.b16 %v981
        %v1019 = vunpack.c.l.b16 %v982
        %v1020 = vunpack.c.h.b16 %v982
        %v1021 = vunpack.c.l.b16 %v983
        %v1022 = vunpack.c.h.b16 %v983
        %v1023 = vunpack.c.l.b16 %v984
        %v1024 = vunpack.c.h.b16 %v984
        %v1025 = vunpack.c.l.b16 %v985
        %v1026 = vunpack.c.h.b16 %v985
        %v1027 = vunpack.c.l.b16 %v986
        %v1028 = vunpack.c.h.b16 %v986
        %v1029 = vunpack.c.l.b16 %v987
        %v1030 = vunpack.c.h.b16 %v987
        %v1031 = vunpack.c.l.b16 %v988
        %v1032 = vunpack.c.h.b16 %v988
        %v1033 = vunpack.c.l.b16 %v989
        %v1034 = vunpack.c.h.b16 %v989
        %v1035 = vunpack.c.l.b16 %v990
        %v1036 = vunpack.c.h.b16 %v990
        %v1037 = vunpack.c.l.b16 %v991
        %v1038 = vunpack.c.h.b16 %v991
        %v1039 = vunpack.c.l.b16 %v992
        %v1040 = vunpack.c.h.b16 %v992
        %v1041 = vpack.c.b16 %v1009, %v1009
        %v1042 = vpack.c.b16 %v1010, %v1010
        %v1043 = vpack.c.b16 %v1011, %v1011
        %v1044 = vpack.c.b16 %v1012, %v1012
        %v1045 = vpack.c.b16 %v1013, %v1013
        %v1046 = vpack.c.b16 %v1014, %v1014
        %v1047 = vpack.c.b16 %v1015, %v1015
        %v1048 = vpack.c.b16 %v1016, %v1016
        %v1049 = vpack.c.b16 %v1017, %v1017
        %v1050 = vpack.c.b16 %v1018, %v1018
        %v1051 = vpack.c.b16 %v1019, %v1019
        %v1052 = vpack.c.b16 %v1020, %v1020
        %v1053 = vpack.c.b16 %v1021, %v1021
        %v1054 = vpack.c.b16 %v1022, %v1022
        %v1055 = vpack.c.b16 %v1023, %v1023
        %v1056 = vpack.c.b16 %v1024, %v1024
        %v1057 = vpack.c.b16 %v1025, %v1025
        %v1058 = vpack.c.b16 %v1026, %v1026
        %v1059 = vpack.c.b16 %v1027, %v1027
        %v1060 = vpack.c.b16 %v1028, %v1028
        %v1061 = vpack.c.b16 %v1029, %v1029
        %v1062 = vpack.c.b16 %v1030, %v1030
        %v1063 = vpack.c.b16 %v1031, %v1031
        %v1064 = vpack.c.b16 %v1032, %v1032
        %v1065 = vpack.c.b16 %v1033, %v1033
        %v1066 = vpack.c.b16 %v1034, %v1034
        %v1067 = vpack.c.b16 %v1035, %v1035
        %v1068 = vpack.c.b16 %v1036, %v1036
        %v1069 = vpack.c.b16 %v1037, %v1037
        %v1070 = vpack.c.b16 %v1038, %v1038
        %v1071 = vpack.c.b16 %v1039, %v1039
        %v1072 = vpack.c.b16 %v1040, %v1040
        %vm1105 = vcmask 519168
        %1106 = vst.msk [vmem:[%s265] sm:$0xf] %vm1105, %v1041
        %1107 = vst.msk [vmem:[%s265 + $0x4] sm:$0xf] %vm1105, %v1042
        %1108 = vst.msk [vmem:[%s265 + $0x8] sm:$0xf] %vm1105, %v1043
        %1109 = vst.msk [vmem:[%s265 + $0xc] sm:$0xf] %vm1105, %v1044
        %1110 = vst.msk [vmem:[%s265 + $0x10] sm:$0xf] %vm1105, %v1045
        %1111 = vst.msk [vmem:[%s265 + $0x14] sm:$0xf] %vm1105, %v1046
        %1112 = vst.msk [vmem:[%s265 + $0x18] sm:$0xf] %vm1105, %v1047
        %1113 = vst.msk [vmem:[%s265 + $0x1c] sm:$0xf] %vm1105, %v1048
        %1114 = vst.msk [vmem:[%s265 + $0x20] sm:$0xf] %vm1105, %v1049
        %1115 = vst.msk [vmem:[%s265 + $0x24] sm:$0xf] %vm1105, %v1050
        %1116 = vst.msk [vmem:[%s265 + $0x28] sm:$0xf] %vm1105, %v1051
        %1117 = vst.msk [vmem:[%s265 + $0x2c] sm:$0xf] %vm1105, %v1052
        %1118 = vst.msk [vmem:[%s265 + $0x30] sm:$0xf] %vm1105, %v1053
        %1119 = vst.msk [vmem:[%s265 + $0x34] sm:$0xf] %vm1105, %v1054
        %1120 = vst.msk [vmem:[%s265 + $0x38] sm:$0xf] %vm1105, %v1055
        %1121 = vst.msk [vmem:[%s265 + $0x3c] sm:$0xf] %vm1105, %v1056
        %1122 = vst.msk [vmem:[%s265 + $0x40] sm:$0xf] %vm1105, %v1057
        %1123 = vst.msk [vmem:[%s265 + $0x44] sm:$0xf] %vm1105, %v1058
        %1124 = vst.msk [vmem:[%s265 + $0x48] sm:$0xf] %vm1105, %v1059
        %1125 = vst.msk [vmem:[%s265 + $0x4c] sm:$0xf] %vm1105, %v1060
        %1126 = vst.msk [vmem:[%s265 + $0x50] sm:$0xf] %vm1105, %v1061
        %1127 = vst.msk [vmem:[%s265 + $0x54] sm:$0xf] %vm1105, %v1062
        %1128 = vst.msk [vmem:[%s265 + $0x58] sm:$0xf] %vm1105, %v1063
        %1129 = vst.msk [vmem:[%s265 + $0x5c] sm:$0xf] %vm1105, %v1064
        %1130 = vst.msk [vmem:[%s265 + $0x60] sm:$0xf] %vm1105, %v1065
        %1131 = vst.msk [vmem:[%s265 + $0x64] sm:$0xf] %vm1105, %v1066
        %1132 = vst.msk [vmem:[%s265 + $0x68] sm:$0xf] %vm1105, %v1067
        %1133 = vst.msk [vmem:[%s265 + $0x6c] sm:$0xf] %vm1105, %v1068
        %1134 = vst.msk [vmem:[%s265 + $0x70] sm:$0xf] %vm1105, %v1069
        %1135 = vst.msk [vmem:[%s265 + $0x74] sm:$0xf] %vm1105, %v1070
        %1136 = vst.msk [vmem:[%s265 + $0x78] sm:$0xf] %vm1105, %v1071
        %1137 = vst.msk [vmem:[%s265 + $0x7c] sm:$0xf] %vm1105, %v1072
      $region40: #{_lambda_.13} parent=31 // pred_fallthru
        _
      %s1138 = smul.u32 32, %s19
      %p1139 = scmp.lt.s32.totalorder %s1138, 63
      %s1140 = scalar_select %p1139, %s1138, 63
      %p1141 = scmp.lt.s32.totalorder %s20, 0
      %s1142 = scalar_select %p1141, %s20, 0
      %s1143 = sadd.s32 %s1142, %s1140
      %s1144 = smul.addr %s1143, 4
      %s1145 = scalar_lea.vmem %s3, %s1144
      // Predicated region
      $region41: #{_lambda_.13} parent=31 // pred_check
        %p1146 = pneg %p135
      $region42: #{_lambda_.13} parent=31 // pred_check_branch
        %1148 = sbr.rel (%p1146) target = $region44
      $region43: #{_lambda_.13} parent=31 // pred_region
        %s1149 = smul.u32 32, %s19
      $region44: #{_lambda_.13} parent=31 // pred_fallthru
        _
    $region32: #{_lambda_.13} parent=5 // pred_fallthru
      _
    %p1150 = scmp.le.s32.totalorder 2, %s9
    // Predicated region
    $region45: #{_lambda_.13} parent=5 // pred_check
      %p1151 = pneg %p1150
    $region46: #{_lambda_.13} parent=5 // pred_check_branch
      %1153 = sbr.rel (%p1151) target = $region48
    $region47: #{_lambda_.13} parent=5 // pred_region
      %s1154 = ssub.s32 %s9, 2
      // Predicated region
      $region49: #{_lambda_.13} parent=47 // pred_check
        %p1155 = pneg %p141
      $region50: #{_lambda_.13} parent=47 // pred_check_branch
        %1157 = sbr.rel (%p1155) target = $region52
      $region51: #{_lambda_.13} parent=47 // pred_region
        %s1158 = smul.u32 32, %s22
        %p1159 = scmp.lt.s32.totalorder %s1158, 63
        %s1160 = scalar_select %p1159, %s1158, 63
        %p1161 = scmp.lt.s32.totalorder %s23, 0
        %s1162 = scalar_select %p1161, %s23, 0
        %s1163 = sadd.s32 %s1162, %s1160
        %s1164 = smul.addr %s1163, 4
        %s1165 = scalar_lea.vmem %s3, %s1164
      $region52: #{_lambda_.13} parent=47 // pred_fallthru
        _
    $region48: #{_lambda_.13} parent=5 // pred_fallthru
      _
  $region6: #{_lambda_.13} parent=0 // loop_footer
    %s13 = sadd.s32 1, %s9
  $region7: #{_lambda_.13} parent=0 // loop_footer_branch
    %8 = sbr.rel target = $region3
  $region8: #{_lambda_.13} parent=0 // loop_exit
    _

// kernel: _lambda_.14
$region0: #{_lambda_.14}
  #allocation0 [shape = 'u32[]', space=smem, size = 0x4, offset = 0x4, fixed_abs, tag = 'smem constant byte address 0x4 - core index']
  #allocation1 [shape = 'u32[144,128]{1,0:T(1,128)}', space=vmem, size = 0x12000, scoped, tag = 'internal scratch']
  %s0 = inlined_call_operand.vmem [shape: bf16[16,512], index: 0, kind: input, shape index: {}]
  %s1 = inlined_call_operand.vmem [shape: bf16[16,512], index: 1, kind: input, shape index: {}]
  %s2 = inlined_call_operand.vmem [shape: bf16[16,512], index: 2, kind: input, shape index: {}]
  %s3 = inlined_call_operand.vmem [shape: bf16[16,512], index: 3, kind: input, shape index: {}]
  %s4 = inlined_call_operand.vmem [shape: bf16[16,512], index: 4, kind: input, shape index: {}]
  %s5 = inlined_call_operand.vmem [shape: bf16[16,512], index: 5, kind: input, shape index: {}]
  %s6 = inlined_call_operand.vmem [shape: bf16[16,512], index: 6, kind: input, shape index: {}]
  %s7 = inlined_call_operand.vmem [shape: bf16[16,512], index: 7, kind: input, shape index: {}]
  %s8 = inlined_call_operand.vmem [shape: bf16[16,512], index: 8, kind: input, shape index: {}]
  %s9 = inlined_call_operand.vmem [shape: bf16[16,512], index: 9, kind: output, shape index: {}]
  %s10 = sld [smem:[#allocation0]]
  $region46: #{_lambda_.14} parent=0
    _
  %s12 = ssub.s32 1, %s10
  %s13 = scalar_select 0, %s12, %s10
  // Predicated region
  $region2: #{_lambda_.14} parent=0 // pred_check
    _
  $region3: #{_lambda_.14} parent=0 // pred_check_branch
    %15 = sbr.rel (0) target = $region5
  $region4: #{_lambda_.14} parent=0 // pred_region
    _
  $region5: #{_lambda_.14} parent=0 // pred_fallthru
    _
  // Predicated region
  $region6: #{_lambda_.14} parent=0 // pred_check
    _
  $region7: #{_lambda_.14} parent=0 // pred_check_branch
    %17 = sbr.rel (0) target = $region9
  $region8: #{_lambda_.14} parent=0 // pred_region
    _
  $region9: #{_lambda_.14} parent=0 // pred_fallthru
    _
  // Predicated region
  $region10: #{_lambda_.14} parent=0 // pred_check
    _
  $region11: #{_lambda_.14} parent=0 // pred_check_branch
    %19 = sbr.rel (0) target = $region13
  $region12: #{_lambda_.14} parent=0 // pred_region
    _
  $region13: #{_lambda_.14} parent=0 // pred_fallthru
    _
  // Predicated region
  $region14: #{_lambda_.14} parent=0 // pred_check
    _
  $region15: #{_lambda_.14} parent=0 // pred_check_branch
    %21 = sbr.rel (0) target = $region17
  $region16: #{_lambda_.14} parent=0 // pred_region
    _
  $region17: #{_lambda_.14} parent=0 // pred_fallthru
    _
  // Predicated region
  $region18: #{_lambda_.14} parent=0 // pred_check
    _
  $region19: #{_lambda_.14} parent=0 // pred_check_branch
    %23 = sbr.rel (0) target = $region21
  $region20: #{_lambda_.14} parent=0 // pred_region
    _
  $region21: #{_lambda_.14} parent=0 // pred_fallthru
    _
  // Predicated region
  $region22: #{_lambda_.14} parent=0 // pred_check
    _
  $region23: #{_lambda_.14} parent=0 // pred_check_branch
    %25 = sbr.rel (0) target = $region25
  $region24: #{_lambda_.14} parent=0 // pred_region
    _
  $region25: #{_lambda_.14} parent=0 // pred_fallthru
    _
  // Predicated region
  $region26: #{_lambda_.14} parent=0 // pred_check
    _
  $region27: #{_lambda_.14} parent=0 // pred_check_branch
    %27 = sbr.rel (0) target = $region29
  $region28: #{_lambda_.14} parent=0 // pred_region
    _
  $region29: #{_lambda_.14} parent=0 // pred_fallthru
    _
  // Predicated region
  $region30: #{_lambda_.14} parent=0 // pred_check
    _
  $region31: #{_lambda_.14} parent=0 // pred_check_branch
    %29 = sbr.rel (0) target = $region33
  $region32: #{_lambda_.14} parent=0 // pred_region
    _
  $region33: #{_lambda_.14} parent=0 // pred_fallthru
    _
  // Predicated region
  $region34: #{_lambda_.14} parent=0 // pred_check
    _
  $region35: #{_lambda_.14} parent=0 // pred_check_branch
    %31 = sbr.rel (0) target = $region37
  $region36: #{_lambda_.14} parent=0 // pred_region
    _
  $region37: #{_lambda_.14} parent=0 // pred_fallthru
    _
  %v32 = vld [vmem:[%s0] sm:$0xff]
  %v33 = vld [vmem:[%s0 + $0x8] sm:$0xff]
  %v34 = vld [vmem:[%s0 + $0x10] sm:$0xff]
  %v35 = vld [vmem:[%s0 + $0x18] sm:$0xff]
  %v36 = vld [vmem:[%s1] sm:$0xff]
  %v37 = vld [vmem:[%s1 + $0x8] sm:$0xff]
  %v38 = vld [vmem:[%s1 + $0x10] sm:$0xff]
  %v39 = vld [vmem:[%s1 + $0x18] sm:$0xff]
  %v40 = vmax.bf16 %v32, %v36
  %v41 = vmax.bf16 %v33, %v37
  %v42 = vmax.bf16 %v34, %v38
  %v43 = vmax.bf16 %v35, %v39
  %v44 = vld [vmem:[%s2] sm:$0xff]
  %v45 = vld [vmem:[%s2 + $0x8] sm:$0xff]
  %v46 = vld [vmem:[%s2 + $0x10] sm:$0xff]
  %v47 = vld [vmem:[%s2 + $0x18] sm:$0xff]
  %v48 = vmax.bf16 %v40, %v44
  %v49 = vmax.bf16 %v41, %v45
  %v50 = vmax.bf16 %v42, %v46
  %v51 = vmax.bf16 %v43, %v47
  %v52 = vld [vmem:[%s3] sm:$0xff]
  %v53 = vld [vmem:[%s3 + $0x8] sm:$0xff]
  %v54 = vld [vmem:[%s3 + $0x10] sm:$0xff]
  %v55 = vld [vmem:[%s3 + $0x18] sm:$0xff]
  %v56 = vmax.bf16 %v48, %v52
  %v57 = vmax.bf16 %v49, %v53
  %v58 = vmax.bf16 %v50, %v54
  %v59 = vmax.bf16 %v51, %v55
  %v60 = vld [vmem:[%s4] sm:$0xff]
  %v61 = vld [vmem:[%s4 + $0x8] sm:$0xff]
  %v62 = vld [vmem:[%s4 + $0x10] sm:$0xff]
  %v63 = vld [vmem:[%s4 + $0x18] sm:$0xff]
  %v64 = vmax.bf16 %v56, %v60
  %v65 = vmax.bf16 %v57, %v61
  %v66 = vmax.bf16 %v58, %v62
  %v67 = vmax.bf16 %v59, %v63
  %v68 = vld [vmem:[%s5] sm:$0xff]
  %v69 = vld [vmem:[%s5 + $0x8] sm:$0xff]
  %v70 = vld [vmem:[%s5 + $0x10] sm:$0xff]
  %v71 = vld [vmem:[%s5 + $0x18] sm:$0xff]
  %v72 = vmax.bf16 %v64, %v68
  %v73 = vmax.bf16 %v65, %v69
  %v74 = vmax.bf16 %v66, %v70
  %v75 = vmax.bf16 %v67, %v71
  %v76 = vld [vmem:[%s6] sm:$0xff]
  %v77 = vld [vmem:[%s6 + $0x8] sm:$0xff]
  %v78 = vld [vmem:[%s6 + $0x10] sm:$0xff]
  %v79 = vld [vmem:[%s6 + $0x18] sm:$0xff]
  %v80 = vmax.bf16 %v72, %v76
  %v81 = vmax.bf16 %v73, %v77
  %v82 = vmax.bf16 %v74, %v78
  %v83 = vmax.bf16 %v75, %v79
  %v84 = vld [vmem:[%s7] sm:$0xff]
  %v85 = vld [vmem:[%s7 + $0x8] sm:$0xff]
  %v86 = vld [vmem:[%s7 + $0x10] sm:$0xff]
  %v87 = vld [vmem:[%s7 + $0x18] sm:$0xff]
  %v88 = vmax.bf16 %v80, %v84
  %v89 = vmax.bf16 %v81, %v85
  %v90 = vmax.bf16 %v82, %v86
  %v91 = vmax.bf16 %v83, %v87
  %v92 = vld [vmem:[%s8] sm:$0xff]
  %v93 = vld [vmem:[%s8 + $0x8] sm:$0xff]
  %v94 = vld [vmem:[%s8 + $0x10] sm:$0xff]
  %v95 = vld [vmem:[%s8 + $0x18] sm:$0xff]
  %v96 = vmax.bf16 %v88, %v92
  %v97 = vmax.bf16 %v89, %v93
  %v98 = vmax.bf16 %v90, %v94
  %v99 = vmax.bf16 %v91, %v95
  %100 = vst [vmem:[%s9] sm:$0xff] %v96
  %101 = vst [vmem:[%s9 + $0x8] sm:$0xff] %v97
  %102 = vst [vmem:[%s9 + $0x10] sm:$0xff] %v98
  %103 = vst [vmem:[%s9 + $0x18] sm:$0xff] %v99
  // Predicated region
  $region38: #{_lambda_.14} parent=0 // pred_check
    _
  $region39: #{_lambda_.14} parent=0 // pred_check_branch
    %105 = sbr.rel (0) target = $region41
  $region40: #{_lambda_.14} parent=0 // pred_region
    _
  $region41: #{_lambda_.14} parent=0 // pred_fallthru
    _
  // Predicated region
  $region42: #{_lambda_.14} parent=0 // pred_check
    _
  $region43: #{_lambda_.14} parent=0 // pred_check_branch
    %107 = sbr.rel (0) target = $region45
  $region44: #{_lambda_.14} parent=0 // pred_region
    _
  $region45: #{_lambda_.14} parent=0 // pred_fallthru
    _

// kernel: _lambda_.15
$region0: #{_lambda_.15}
  #allocation0 [shape = 'u32[]', space=smem, size = 0x4, offset = 0x4, fixed_abs, tag = 'smem constant byte address 0x4 - core index']
  #allocation1 [shape = 'u32[144,128]{1,0:T(1,128)}', space=vmem, size = 0x12000, scoped, tag = 'internal scratch']
  #allocation2 [shape = 'f32[128,64]{1,0:T(8,128)}', space=vmem, size = 0x10000, scoped, tag = 'scratch operand']
  %s0 = inlined_call_operand.vmem [shape: bf16[128,576], index: 0, kind: input, shape index: {}]
  %s1 = inlined_call_operand.vmem [shape: bf16[576,64], index: 1, kind: input, shape index: {}]
  %s2 = inlined_call_operand.vmem [shape: f32[1,64], index: 2, kind: input, shape index: {}]
  %s3 = inlined_call_operand.vmem [shape: bf16[128,64], index: 3, kind: output, shape index: {}]
  %s4 = sld [smem:[#allocation0]]
  $region30: #{_lambda_.15} parent=0
    _
  %s6 = ssub.s32 1, %s4
  %s7 = scalar_select 0, %s6, %s4
  // Predicated region
  $region2: #{_lambda_.15} parent=0 // pred_check
    _
  $region3: #{_lambda_.15} parent=0 // pred_check_branch
    %9 = sbr.rel (0) target = $region5
  $region4: #{_lambda_.15} parent=0 // pred_region
    _
  $region5: #{_lambda_.15} parent=0 // pred_fallthru
    _
  // Predicated region
  $region6: #{_lambda_.15} parent=0 // pred_check
    _
  $region7: #{_lambda_.15} parent=0 // pred_check_branch
    %11 = sbr.rel (0) target = $region9
  $region8: #{_lambda_.15} parent=0 // pred_region
    _
  $region9: #{_lambda_.15} parent=0 // pred_fallthru
    _
  // Predicated region
  $region10: #{_lambda_.15} parent=0 // pred_check
    _
  $region11: #{_lambda_.15} parent=0 // pred_check_branch
    %13 = sbr.rel (0) target = $region13
  $region12: #{_lambda_.15} parent=0 // pred_region
    _
  $region13: #{_lambda_.15} parent=0 // pred_fallthru
    _
  %p15 = scmp.eq.s32.totalorder 0, 0
  // Predicated region
  $region14: #{_lambda_.15} parent=0 // pred_check
    %p16 = pneg %p15
  $region15: #{_lambda_.15} parent=0 // pred_check_branch
    %18 = sbr.rel (%p16) target = $region17
  $region16: #{_lambda_.15} parent=0 // pred_region
    %vm19 = vcmask 523264
    %20 = vst.msk [vmem:[#allocation2] sm:$0xff] %vm19, 0.0
    %21 = vst.msk [vmem:[#allocation2 + $0x8] sm:$0xff] %vm19, 0.0
    %22 = vst.msk [vmem:[#allocation2 + $0x10] sm:$0xff] %vm19, 0.0
    %23 = vst.msk [vmem:[#allocation2 + $0x18] sm:$0xff] %vm19, 0.0
    %24 = vst.msk [vmem:[#allocation2 + $0x20] sm:$0xff] %vm19, 0.0
    %25 = vst.msk [vmem:[#allocation2 + $0x28] sm:$0xff] %vm19, 0.0
    %26 = vst.msk [vmem:[#allocation2 + $0x30] sm:$0xff] %vm19, 0.0
    %27 = vst.msk [vmem:[#allocation2 + $0x38] sm:$0xff] %vm19, 0.0
    %28 = vst.msk [vmem:[#allocation2 + $0x40] sm:$0xff] %vm19, 0.0
    %29 = vst.msk [vmem:[#allocation2 + $0x48] sm:$0xff] %vm19, 0.0
    %30 = vst.msk [vmem:[#allocation2 + $0x50] sm:$0xff] %vm19, 0.0
    %31 = vst.msk [vmem:[#allocation2 + $0x58] sm:$0xff] %vm19, 0.0
    %32 = vst.msk [vmem:[#allocation2 + $0x60] sm:$0xff] %vm19, 0.0
    %33 = vst.msk [vmem:[#allocation2 + $0x68] sm:$0xff] %vm19, 0.0
    %34 = vst.msk [vmem:[#allocation2 + $0x70] sm:$0xff] %vm19, 0.0
    %35 = vst.msk [vmem:[#allocation2 + $0x78] sm:$0xff] %vm19, 0.0
  $region17: #{_lambda_.15} parent=0 // pred_fallthru
    _
  %v36 = vld [vmem:[#allocation2] sm:$0xff]
  %v37 = vld [vmem:[#allocation2 + $0x8] sm:$0xff]
  %v38 = vld [vmem:[#allocation2 + $0x10] sm:$0xff]
  %v39 = vld [vmem:[#allocation2 + $0x18] sm:$0xff]
  %v40 = vld [vmem:[#allocation2 + $0x20] sm:$0xff]
  %v41 = vld [vmem:[#allocation2 + $0x28] sm:$0xff]
  %v42 = vld [vmem:[#allocation2 + $0x30] sm:$0xff]
  %v43 = vld [vmem:[#allocation2 + $0x38] sm:$0xff]
  %v44 = vld [vmem:[#allocation2 + $0x40] sm:$0xff]
  %v45 = vld [vmem:[#allocation2 + $0x48] sm:$0xff]
  %v46 = vld [vmem:[#allocation2 + $0x50] sm:$0xff]
  %v47 = vld [vmem:[#allocation2 + $0x58] sm:$0xff]
  %v48 = vld [vmem:[#allocation2 + $0x60] sm:$0xff]
  %v49 = vld [vmem:[#allocation2 + $0x68] sm:$0xff]
  %v50 = vld [vmem:[#allocation2 + $0x70] sm:$0xff]
  %v51 = vld [vmem:[#allocation2 + $0x78] sm:$0xff]
  %v52 = vld [vmem:[%s0] sm:$0xff]
  %v53 = vld [vmem:[%s0 + $0x8] sm:$0xff]
  %v54 = vld [vmem:[%s0 + $0x10] sm:$0xf]
  %v55 = vld [vmem:[%s0 + $0x14] sm:$0xff]
  %v56 = vld [vmem:[%s0 + $0x1c] sm:$0xff]
  %v57 = vld [vmem:[%s0 + $0x24] sm:$0xf]
  %v58 = vld [vmem:[%s0 + $0x28] sm:$0xff]
  %v59 = vld [vmem:[%s0 + $0x30] sm:$0xff]
  %v60 = vld [vmem:[%s0 + $0x38] sm:$0xf]
  %v61 = vld [vmem:[%s0 + $0x3c] sm:$0xff]
  %v62 = vld [vmem:[%s0 + $0x44] sm:$0xff]
  %v63 = vld [vmem:[%s0 + $0x4c] sm:$0xf]
  %v64 = vld [vmem:[%s0 + $0x50] sm:$0xff]
  %v65 = vld [vmem:[%s0 + $0x58] sm:$0xff]
  %v66 = vld [vmem:[%s0 + $0x60] sm:$0xf]
  %v67 = vld [vmem:[%s0 + $0x64] sm:$0xff]
  %v68 = vld [vmem:[%s0 + $0x6c] sm:$0xff]
  %v69 = vld [vmem:[%s0 + $0x74] sm:$0xf]
  %v70 = vld [vmem:[%s0 + $0x78] sm:$0xff]
  %v71 = vld [vmem:[%s0 + $0x80] sm:$0xff]
  %v72 = vld [vmem:[%s0 + $0x88] sm:$0xf]
  %v73 = vld [vmem:[%s0 + $0x8c] sm:$0xff]
  %v74 = vld [vmem:[%s0 + $0x94] sm:$0xff]
  %v75 = vld [vmem:[%s0 + $0x9c] sm:$0xf]
  %v76 = vld [vmem:[%s0 + $0xa0] sm:$0xff]
  %v77 = vld [vmem:[%s0 + $0xa8] sm:$0xff]
  %v78 = vld [vmem:[%s0 + $0xb0] sm:$0xf]
  %v79 = vld [vmem:[%s0 + $0xb4] sm:$0xff]
  %v80 = vld [vmem:[%s0 + $0xbc] sm:$0xff]
  %v81 = vld [vmem:[%s0 + $0xc4] sm:$0xf]
  %v82 = vld [vmem:[%s0 + $0xc8] sm:$0xff]
  %v83 = vld [vmem:[%s0 + $0xd0] sm:$0xff]
  %v84 = vld [vmem:[%s0 + $0xd8] sm:$0xf]
  %v85 = vld [vmem:[%s0 + $0xdc] sm:$0xff]
  %v86 = vld [vmem:[%s0 + $0xe4] sm:$0xff]
  %v87 = vld [vmem:[%s0 + $0xec] sm:$0xf]
  %v88 = vld [vmem:[%s0 + $0xf0] sm:$0xff]
  %v89 = vld [vmem:[%s0 + $0xf8] sm:$0xff]
  %v90 = vld [vmem:[%s0 + $0x100] sm:$0xf]
  %v91 = vld [vmem:[%s0 + $0x104] sm:$0xff]
  %v92 = vld [vmem:[%s0 + $0x10c] sm:$0xff]
  %v93 = vld [vmem:[%s0 + $0x114] sm:$0xf]
  %v94 = vld [vmem:[%s0 + $0x118] sm:$0xff]
  %v95 = vld [vmem:[%s0 + $0x120] sm:$0xff]
  %v96 = vld [vmem:[%s0 + $0x128] sm:$0xf]
  %v97 = vld [vmem:[%s0 + $0x12c] sm:$0xff]
  %v98 = vld [vmem:[%s0 + $0x134] sm:$0xff]
  %v99 = vld [vmem:[%s0 + $0x13c] sm:$0xf]
  %v100 = vld [vmem:[%s1] sm:$0xf]
  %v101 = vld [vmem:[%s1 + $0x4] sm:$0xf]
  %v102 = vld [vmem:[%s1 + $0x8] sm:$0xf]
  %v103 = vld [vmem:[%s1 + $0xc] sm:$0xf]
  %v104 = vld [vmem:[%s1 + $0x10] sm:$0xf]
  %v105 = vld [vmem:[%s1 + $0x14] sm:$0xf]
  %v106 = vld [vmem:[%s1 + $0x18] sm:$0xf]
  %v107 = vld [vmem:[%s1 + $0x1c] sm:$0xf]
  %v108 = vld [vmem:[%s1 + $0x20] sm:$0xf]
  %v109 = vld [vmem:[%s1 + $0x24] sm:$0xf]
  %v110 = vld [vmem:[%s1 + $0x28] sm:$0xf]
  %v111 = vld [vmem:[%s1 + $0x2c] sm:$0xf]
  %v112 = vld [vmem:[%s1 + $0x30] sm:$0xf]
  %v113 = vld [vmem:[%s1 + $0x34] sm:$0xf]
  %v114 = vld [vmem:[%s1 + $0x38] sm:$0xf]
  %v115 = vld [vmem:[%s1 + $0x3c] sm:$0xf]
  %v116 = vld [vmem:[%s1 + $0x40] sm:$0xf]
  %v117 = vld [vmem:[%s1 + $0x44] sm:$0xf]
  %v118 = vld [vmem:[%s1 + $0x48] sm:$0xf]
  %v119 = vld [vmem:[%s1 + $0x4c] sm:$0xf]
  %v120 = vld [vmem:[%s1 + $0x50] sm:$0xf]
  %v121 = vld [vmem:[%s1 + $0x54] sm:$0xf]
  %v122 = vld [vmem:[%s1 + $0x58] sm:$0xf]
  %v123 = vld [vmem:[%s1 + $0x5c] sm:$0xf]
  %v124 = vld [vmem:[%s1 + $0x60] sm:$0xf]
  %v125 = vld [vmem:[%s1 + $0x64] sm:$0xf]
  %v126 = vld [vmem:[%s1 + $0x68] sm:$0xf]
  %v127 = vld [vmem:[%s1 + $0x6c] sm:$0xf]
  %v128 = vld [vmem:[%s1 + $0x70] sm:$0xf]
  %v129 = vld [vmem:[%s1 + $0x74] sm:$0xf]
  %v130 = vld [vmem:[%s1 + $0x78] sm:$0xf]
  %v131 = vld [vmem:[%s1 + $0x7c] sm:$0xf]
  %v132 = vld [vmem:[%s1 + $0x80] sm:$0xf]
  %v133 = vld [vmem:[%s1 + $0x84] sm:$0xf]
  %v134 = vld [vmem:[%s1 + $0x88] sm:$0xf]
  %v135 = vld [vmem:[%s1 + $0x8c] sm:$0xf]
  %v136 = vld [vmem:[%s1 + $0x90] sm:$0xf]
  %v137 = vld [vmem:[%s1 + $0x94] sm:$0xf]
  %v138 = vld [vmem:[%s1 + $0x98] sm:$0xf]
  %v139 = vld [vmem:[%s1 + $0x9c] sm:$0xf]
  %v140 = vld [vmem:[%s1 + $0xa0] sm:$0xf]
  %v141 = vld [vmem:[%s1 + $0xa4] sm:$0xf]
  %v142 = vld [vmem:[%s1 + $0xa8] sm:$0xf]
  %v143 = vld [vmem:[%s1 + $0xac] sm:$0xf]
  %v144 = vld [vmem:[%s1 + $0xb0] sm:$0xf]
  %v145 = vld [vmem:[%s1 + $0xb4] sm:$0xf]
  %v146 = vld [vmem:[%s1 + $0xb8] sm:$0xf]
  %v147 = vld [vmem:[%s1 + $0xbc] sm:$0xf]
  %v148 = vld [vmem:[%s1 + $0xc0] sm:$0xf]
  %v149 = vld [vmem:[%s1 + $0xc4] sm:$0xf]
  %v150 = vld [vmem:[%s1 + $0xc8] sm:$0xf]
  %v151 = vld [vmem:[%s1 + $0xcc] sm:$0xf]
  %v152 = vld [vmem:[%s1 + $0xd0] sm:$0xf]
  %v153 = vld [vmem:[%s1 + $0xd4] sm:$0xf]
  %v154 = vld [vmem:[%s1 + $0xd8] sm:$0xf]
  %v155 = vld [vmem:[%s1 + $0xdc] sm:$0xf]
  %v156 = vld [vmem:[%s1 + $0xe0] sm:$0xf]
  %v157 = vld [vmem:[%s1 + $0xe4] sm:$0xf]
  %v158 = vld [vmem:[%s1 + $0xe8] sm:$0xf]
  %v159 = vld [vmem:[%s1 + $0xec] sm:$0xf]
  %v160 = vld [vmem:[%s1 + $0xf0] sm:$0xf]
  %v161 = vld [vmem:[%s1 + $0xf4] sm:$0xf]
  %v162 = vld [vmem:[%s1 + $0xf8] sm:$0xf]
  %v163 = vld [vmem:[%s1 + $0xfc] sm:$0xf]
  %v164 = vld [vmem:[%s1 + $0x100] sm:$0xf]
  %v165 = vld [vmem:[%s1 + $0x104] sm:$0xf]
  %v166 = vld [vmem:[%s1 + $0x108] sm:$0xf]
  %v167 = vld [vmem:[%s1 + $0x10c] sm:$0xf]
  %v168 = vld [vmem:[%s1 + $0x110] sm:$0xf]
  %v169 = vld [vmem:[%s1 + $0x114] sm:$0xf]
  %v170 = vld [vmem:[%s1 + $0x118] sm:$0xf]
  %v171 = vld [vmem:[%s1 + $0x11c] sm:$0xf]
  %v220 = vunpack.c.l.b16 %v52
  %v221 = vunpack.c.h.b16 %v52
  %v222 = vunpack.c.l.b16 %v53
  %v223 = vunpack.c.h.b16 %v53
  %v224 = vunpack.c.l.b16 %v54
  %v225 = vunpack.c.l.b16 %v55
  %v226 = vunpack.c.h.b16 %v55
  %v227 = vunpack.c.l.b16 %v56
  %v228 = vunpack.c.h.b16 %v56
  %v229 = vunpack.c.l.b16 %v57
  %v230 = vunpack.c.l.b16 %v58
  %v231 = vunpack.c.h.b16 %v58
  %v232 = vunpack.c.l.b16 %v59
  %v233 = vunpack.c.h.b16 %v59
  %v234 = vunpack.c.l.b16 %v60
  %v235 = vunpack.c.l.b16 %v61
  %v236 = vunpack.c.h.b16 %v61
  %v237 = vunpack.c.l.b16 %v62
  %v238 = vunpack.c.h.b16 %v62
  %v239 = vunpack.c.l.b16 %v63
  %v240 = vunpack.c.l.b16 %v64
  %v241 = vunpack.c.h.b16 %v64
  %v242 = vunpack.c.l.b16 %v65
  %v243 = vunpack.c.h.b16 %v65
  %v244 = vunpack.c.l.b16 %v66
  %v245 = vunpack.c.l.b16 %v67
  %v246 = vunpack.c.h.b16 %v67
  %v247 = vunpack.c.l.b16 %v68
  %v248 = vunpack.c.h.b16 %v68
  %v249 = vunpack.c.l.b16 %v69
  %v250 = vunpack.c.l.b16 %v70
  %v251 = vunpack.c.h.b16 %v70
  %v252 = vunpack.c.l.b16 %v71
  %v253 = vunpack.c.h.b16 %v71
  %v254 = vunpack.c.l.b16 %v72
  %v255 = vunpack.c.l.b16 %v73
  %v256 = vunpack.c.h.b16 %v73
  %v257 = vunpack.c.l.b16 %v74
  %v258 = vunpack.c.h.b16 %v74
  %v259 = vunpack.c.l.b16 %v75
  %v260 = vunpack.c.l.b16 %v76
  %v261 = vunpack.c.h.b16 %v76
  %v262 = vunpack.c.l.b16 %v77
  %v263 = vunpack.c.h.b16 %v77
  %v264 = vunpack.c.l.b16 %v78
  %v265 = vunpack.c.l.b16 %v79
  %v266 = vunpack.c.h.b16 %v79
  %v267 = vunpack.c.l.b16 %v80
  %v268 = vunpack.c.h.b16 %v80
  %v269 = vunpack.c.l.b16 %v81
  %v270 = vunpack.c.l.b16 %v82
  %v271 = vunpack.c.h.b16 %v82
  %v272 = vunpack.c.l.b16 %v83
  %v273 = vunpack.c.h.b16 %v83
  %v274 = vunpack.c.l.b16 %v84
  %v275 = vunpack.c.l.b16 %v85
  %v276 = vunpack.c.h.b16 %v85
  %v277 = vunpack.c.l.b16 %v86
  %v278 = vunpack.c.h.b16 %v86
  %v279 = vunpack.c.l.b16 %v87
  %v280 = vunpack.c.l.b16 %v88
  %v281 = vunpack.c.h.b16 %v88
  %v282 = vunpack.c.l.b16 %v89
  %v283 = vunpack.c.h.b16 %v89
  %v284 = vunpack.c.l.b16 %v90
  %v285 = vunpack.c.l.b16 %v91
  %v286 = vunpack.c.h.b16 %v91
  %v287 = vunpack.c.l.b16 %v92
  %v288 = vunpack.c.h.b16 %v92
  %v289 = vunpack.c.l.b16 %v93
  %v290 = vunpack.c.l.b16 %v94
  %v291 = vunpack.c.h.b16 %v94
  %v292 = vunpack.c.l.b16 %v95
  %v293 = vunpack.c.h.b16 %v95
  %v294 = vunpack.c.l.b16 %v96
  %v295 = vunpack.c.l.b16 %v97
  %v296 = vunpack.c.h.b16 %v97
  %v297 = vunpack.c.l.b16 %v98
  %v298 = vunpack.c.h.b16 %v98
  %v299 = vunpack.c.l.b16 %v99
  %v300 = vpack.c.b16 %v225, %v220
  %v301 = vpack.c.b16 %v226, %v221
  %v302 = vpack.c.b16 %v227, %v222
  %v303 = vpack.c.b16 %v228, %v223
  %v304 = vpack.c.b16 %v229, %v224
  %v305 = vpack.c.b16 %v235, %v230
  %v306 = vpack.c.b16 %v236, %v231
  %v307 = vpack.c.b16 %v237, %v232
  %v308 = vpack.c.b16 %v238, %v233
  %v309 = vpack.c.b16 %v239, %v234
  %v310 = vpack.c.b16 %v245, %v240
  %v311 = vpack.c.b16 %v246, %v241
  %v312 = vpack.c.b16 %v247, %v242
  %v313 = vpack.c.b16 %v248, %v243
  %v314 = vpack.c.b16 %v249, %v244
  %v315 = vpack.c.b16 %v255, %v250
  %v316 = vpack.c.b16 %v256, %v251
  %v317 = vpack.c.b16 %v257, %v252
  %v318 = vpack.c.b16 %v258, %v253
  %v319 = vpack.c.b16 %v259, %v254
  %v320 = vpack.c.b16 %v265, %v260
  %v321 = vpack.c.b16 %v266, %v261
  %v322 = vpack.c.b16 %v267, %v262
  %v323 = vpack.c.b16 %v268, %v263
  %v324 = vpack.c.b16 %v269, %v264
  %v325 = vpack.c.b16 %v275, %v270
  %v326 = vpack.c.b16 %v276, %v271
  %v327 = vpack.c.b16 %v277, %v272
  %v328 = vpack.c.b16 %v278, %v273
  %v329 = vpack.c.b16 %v279, %v274
  %v330 = vpack.c.b16 %v285, %v280
  %v331 = vpack.c.b16 %v286, %v281
  %v332 = vpack.c.b16 %v287, %v282
  %v333 = vpack.c.b16 %v288, %v283
  %v334 = vpack.c.b16 %v289, %v284
  %v335 = vpack.c.b16 %v295, %v290
  %v336 = vpack.c.b16 %v296, %v291
  %v337 = vpack.c.b16 %v297, %v292
  %v338 = vpack.c.b16 %v298, %v293
  %v339 = vpack.c.b16 %v299, %v294
  %v444 = vunpack.c.l.b16 %v100
  %v445 = vunpack.c.l.b16 %v101
  %v446 = vunpack.c.l.b16 %v102
  %v447 = vunpack.c.l.b16 %v103
  %v448 = vunpack.c.l.b16 %v104
  %v449 = vunpack.c.l.b16 %v105
  %v450 = vunpack.c.l.b16 %v106
  %v451 = vunpack.c.l.b16 %v107
  %v452 = vunpack.c.l.b16 %v108
  %v453 = vunpack.c.l.b16 %v109
  %v454 = vunpack.c.l.b16 %v110
  %v455 = vunpack.c.l.b16 %v111
  %v456 = vunpack.c.l.b16 %v112
  %v457 = vunpack.c.l.b16 %v113
  %v458 = vunpack.c.l.b16 %v114
  %v459 = vunpack.c.l.b16 %v115
  %v460 = vunpack.c.l.b16 %v116
  %v461 = vunpack.c.l.b16 %v117
  %v462 = vunpack.c.l.b16 %v118
  %v463 = vunpack.c.l.b16 %v119
  %v464 = vunpack.c.l.b16 %v120
  %v465 = vunpack.c.l.b16 %v121
  %v466 = vunpack.c.l.b16 %v122
  %v467 = vunpack.c.l.b16 %v123
  %v468 = vunpack.c.l.b16 %v124
  %v469 = vunpack.c.l.b16 %v125
  %v470 = vunpack.c.l.b16 %v126
  %v471 = vunpack.c.l.b16 %v127
  %v472 = vunpack.c.l.b16 %v128
  %v473 = vunpack.c.l.b16 %v129
  %v474 = vunpack.c.l.b16 %v130
  %v475 = vunpack.c.l.b16 %v131
  %v476 = vunpack.c.l.b16 %v132
  %v477 = vunpack.c.l.b16 %v133
  %v478 = vunpack.c.l.b16 %v134
  %v479 = vunpack.c.l.b16 %v135
  %v480 = vunpack.c.l.b16 %v136
  %v481 = vunpack.c.l.b16 %v137
  %v482 = vunpack.c.l.b16 %v138
  %v483 = vunpack.c.l.b16 %v139
  %v484 = vunpack.c.l.b16 %v140
  %v485 = vunpack.c.l.b16 %v141
  %v486 = vunpack.c.l.b16 %v142
  %v487 = vunpack.c.l.b16 %v143
  %v488 = vunpack.c.l.b16 %v144
  %v489 = vunpack.c.l.b16 %v145
  %v490 = vunpack.c.l.b16 %v146
  %v491 = vunpack.c.l.b16 %v147
  %v492 = vunpack.c.l.b16 %v148
  %v493 = vunpack.c.l.b16 %v149
  %v494 = vunpack.c.l.b16 %v150
  %v495 = vunpack.c.l.b16 %v151
  %v496 = vunpack.c.l.b16 %v152
  %v497 = vunpack.c.l.b16 %v153
  %v498 = vunpack.c.l.b16 %v154
  %v499 = vunpack.c.l.b16 %v155
  %v500 = vunpack.c.l.b16 %v156
  %v501 = vunpack.c.l.b16 %v157
  %v502 = vunpack.c.l.b16 %v158
  %v503 = vunpack.c.l.b16 %v159
  %v504 = vunpack.c.l.b16 %v160
  %v505 = vunpack.c.l.b16 %v161
  %v506 = vunpack.c.l.b16 %v162
  %v507 = vunpack.c.l.b16 %v163
  %v508 = vunpack.c.l.b16 %v164
  %v509 = vunpack.c.l.b16 %v165
  %v510 = vunpack.c.l.b16 %v166
  %v511 = vunpack.c.l.b16 %v167
  %v512 = vunpack.c.l.b16 %v168
  %v513 = vunpack.c.l.b16 %v169
  %v514 = vunpack.c.l.b16 %v170
  %v515 = vunpack.c.l.b16 %v171
  %v516 = vpack.c.b16 %v445, %v444
  %v517 = vpack.c.b16 %v447, %v446
  %v518 = vpack.c.b16 %v449, %v448
  %v519 = vpack.c.b16 %v451, %v450
  %v520 = vpack.c.b16 %v453, %v452
  %v521 = vpack.c.b16 %v455, %v454
  %v522 = vpack.c.b16 %v457, %v456
  %v523 = vpack.c.b16 %v459, %v458
  %v524 = vpack.c.b16 %v461, %v460
  %v525 = vpack.c.b16 %v463, %v462
  %v526 = vpack.c.b16 %v465, %v464
  %v527 = vpack.c.b16 %v467, %v466
  %v528 = vpack.c.b16 %v469, %v468
  %v529 = vpack.c.b16 %v471, %v470
  %v530 = vpack.c.b16 %v473, %v472
  %v531 = vpack.c.b16 %v475, %v474
  %v532 = vpack.c.b16 %v477, %v476
  %v533 = vpack.c.b16 %v479, %v478
  %v534 = vpack.c.b16 %v481, %v480
  %v535 = vpack.c.b16 %v483, %v482
  %v536 = vpack.c.b16 %v485, %v484
  %v537 = vpack.c.b16 %v487, %v486
  %v538 = vpack.c.b16 %v489, %v488
  %v539 = vpack.c.b16 %v491, %v490
  %v540 = vpack.c.b16 %v493, %v492
  %v541 = vpack.c.b16 %v495, %v494
  %v542 = vpack.c.b16 %v497, %v496
  %v543 = vpack.c.b16 %v499, %v498
  %v544 = vpack.c.b16 %v501, %v500
  %v545 = vpack.c.b16 %v503, %v502
  %v546 = vpack.c.b16 %v505, %v504
  %v547 = vpack.c.b16 %v507, %v506
  %v548 = vpack.c.b16 %v509, %v508
  %v549 = vpack.c.b16 %v511, %v510
  %v550 = vpack.c.b16 %v513, %v512
  %v551 = vpack.c.b16 %v515, %v514
  %vm588 = vcmask 523264
  %v590 = vsel %vm588, %v304, 0
  %v593 = vsel %vm588, %v309, 0
  %v596 = vsel %vm588, %v314, 0
  %v599 = vsel %vm588, %v319, 0
  %v602 = vsel %vm588, %v324, 0
  %v605 = vsel %vm588, %v329, 0
  %v608 = vsel %vm588, %v334, 0
  %v611 = vsel %vm588, %v339, 0
  %613 = vmatprep.subr.bf16.mxu0 0
  %614 = vmatpush1.bf16.msra.mxu0 %v516
  %615 = vmatprep.subr.bf16.mxu0 0
  %616 = vmatpush1.bf16.msra.mxu0 %v517
  %617 = vmatprep.subr.bf16.mxu0 0
  %618 = vmatpush1.bf16.msra.mxu0 %v518
  %619 = vmatprep.subr.bf16.mxu0 0
  %620 = vmatpush1.bf16.msra.mxu0 %v519
  %621 = vmatprep.subr.bf16.mxu0 0
  %622 = vmatpush1.bf16.msra.mxu0 %v520
  %623 = vmatprep.subr.bf16.mxu0 0
  %624 = vmatpush1.bf16.msra.mxu0 %v521
  %625 = vmatprep.subr.bf16.mxu0 0
  %626 = vmatpush1.bf16.msra.mxu0 %v522
  %627 = vmatprep.subr.bf16.mxu0 0
  %628 = vmatpush1.bf16.msra.mxu0 %v523
  %629 = vmatprep.subr.bf16.mxu0 0
  %630 = vmatpush1.bf16.msra.mxu0 %v524
  %631 = vmatprep.subr.bf16.mxu0 0
  %632 = vmatpush1.bf16.msra.mxu0 %v525
  %633 = vmatprep.subr.bf16.mxu0 0
  %634 = vmatpush1.bf16.msra.mxu0 %v526
  %635 = vmatprep.subr.bf16.mxu0 0
  %636 = vmatpush1.bf16.msra.mxu0 %v527
  %637 = vmatprep.subr.bf16.mxu0 0
  %638 = vmatpush1.bf16.msra.mxu0 %v528
  %639 = vmatprep.subr.bf16.mxu0 0
  %640 = vmatpush1.bf16.msra.mxu0 %v529
  %641 = vmatprep.subr.bf16.mxu0 0
  %642 = vmatpush1.bf16.msra.mxu0 %v530
  %643 = vmatprep.subr.bf16.mxu0 0
  %644 = vmatpush1.bf16.msra.mxu0 %v531
  %645 = vmatprep.mubr.bf16.mxu0 %v301
  %646 = vmatmul.mubr.bf16.gmra.mrb[0].mxu0 %v300
  %v647 = vpop.f32.mrb[0].mxu0
  %v648 = vadd.f32 0.0, %v647
  %v649 = vpop.f32.mrb[0].mxu0
  %v650 = vpop.f32.mrb[0].mxu0
  %v651 = vadd.f32 0.0, %v650
  %v652 = vpop.f32.mrb[0].mxu0
  %653 = vmatprep.mubr.bf16.mxu0 %v306
  %654 = vmatmul.mubr.bf16.gmra.mrb[0].mxu0 %v305
  %v655 = vpop.f32.mrb[0].mxu0
  %v656 = vadd.f32 0.0, %v655
  %v657 = vpop.f32.mrb[0].mxu0
  %v658 = vpop.f32.mrb[0].mxu0
  %v659 = vadd.f32 0.0, %v658
  %v660 = vpop.f32.mrb[0].mxu0
  %661 = vmatprep.mubr.bf16.mxu0 %v311
  %662 = vmatmul.mubr.bf16.gmra.mrb[0].mxu0 %v310
  %v663 = vpop.f32.mrb[0].mxu0
  %v664 = vadd.f32 0.0, %v663
  %v665 = vpop.f32.mrb[0].mxu0
  %v666 = vpop.f32.mrb[0].mxu0
  %v667 = vadd.f32 0.0, %v666
  %v668 = vpop.f32.mrb[0].mxu0
  %669 = vmatprep.mubr.bf16.mxu0 %v316
  %670 = vmatmul.mubr.bf16.gmra.mrb[0].mxu0 %v315
  %v671 = vpop.f32.mrb[0].mxu0
  %v672 = vadd.f32 0.0, %v671
  %v673 = vpop.f32.mrb[0].mxu0
  %v674 = vpop.f32.mrb[0].mxu0
  %v675 = vadd.f32 0.0, %v674
  %v676 = vpop.f32.mrb[0].mxu0
  %677 = vmatprep.mubr.bf16.mxu0 %v321
  %678 = vmatmul.mubr.bf16.gmra.mrb[0].mxu0 %v320
  %v679 = vpop.f32.mrb[0].mxu0
  %v680 = vadd.f32 0.0, %v679
  %v681 = vpop.f32.mrb[0].mxu0
  %v682 = vpop.f32.mrb[0].mxu0
  %v683 = vadd.f32 0.0, %v682
  %v684 = vpop.f32.mrb[0].mxu0
  %685 = vmatprep.mubr.bf16.mxu0 %v326
  %686 = vmatmul.mubr.bf16.gmra.mrb[0].mxu0 %v325
  %v687 = vpop.f32.mrb[0].mxu0
  %v688 = vadd.f32 0.0, %v687
  %v689 = vpop.f32.mrb[0].mxu0
  %v690 = vpop.f32.mrb[0].mxu0
  %v691 = vadd.f32 0.0, %v690
  %v692 = vpop.f32.mrb[0].mxu0
  %693 = vmatprep.mubr.bf16.mxu0 %v331
  %694 = vmatmul.mubr.bf16.gmra.mrb[0].mxu0 %v330
  %v695 = vpop.f32.mrb[0].mxu0
  %v696 = vadd.f32 0.0, %v695
  %v697 = vpop.f32.mrb[0].mxu0
  %v698 = vpop.f32.mrb[0].mxu0
  %v699 = vadd.f32 0.0, %v698
  %v700 = vpop.f32.mrb[0].mxu0
  %701 = vmatprep.mubr.bf16.mxu0 %v336
  %702 = vmatmul.mubr.bf16.gmra.mrb[0].mxu0 %v335
  %v703 = vpop.f32.mrb[0].mxu0
  %v704 = vadd.f32 0.0, %v703
  %v705 = vpop.f32.mrb[0].mxu0
  %v706 = vpop.f32.mrb[0].mxu0
  %v707 = vadd.f32 0.0, %v706
  %v708 = vpop.f32.mrb[0].mxu0
  %709 = vdwg.mxu0
  %710 = vmatprep.subr.bf16.mxu0 0
  %711 = vmatpush1.bf16.msra.mxu0 %v532
  %712 = vmatprep.subr.bf16.mxu0 0
  %713 = vmatpush1.bf16.msra.mxu0 %v533
  %714 = vmatprep.subr.bf16.mxu0 0
  %715 = vmatpush1.bf16.msra.mxu0 %v534
  %716 = vmatprep.subr.bf16.mxu0 0
  %717 = vmatpush1.bf16.msra.mxu0 %v535
  %718 = vmatprep.subr.bf16.mxu0 0
  %719 = vmatpush1.bf16.msra.mxu0 %v536
  %720 = vmatprep.subr.bf16.mxu0 0
  %721 = vmatpush1.bf16.msra.mxu0 %v537
  %722 = vmatprep.subr.bf16.mxu0 0
  %723 = vmatpush1.bf16.msra.mxu0 %v538
  %724 = vmatprep.subr.bf16.mxu0 0
  %725 = vmatpush1.bf16.msra.mxu0 %v539
  %726 = vmatprep.subr.bf16.mxu0 0
  %727 = vmatpush1.bf16.msra.mxu0 %v540
  %728 = vmatprep.subr.bf16.mxu0 0
  %729 = vmatpush1.bf16.msra.mxu0 %v541
  %730 = vmatprep.subr.bf16.mxu0 0
  %731 = vmatpush1.bf16.msra.mxu0 %v542
  %732 = vmatprep.subr.bf16.mxu0 0
  %733 = vmatpush1.bf16.msra.mxu0 %v543
  %734 = vmatprep.subr.bf16.mxu0 0
  %735 = vmatpush1.bf16.msra.mxu0 %v544
  %736 = vmatprep.subr.bf16.mxu0 0
  %737 = vmatpush1.bf16.msra.mxu0 %v545
  %738 = vmatprep.subr.bf16.mxu0 0
  %739 = vmatpush1.bf16.msra.mxu0 %v546
  %740 = vmatprep.subr.bf16.mxu0 0
  %741 = vmatpush1.bf16.msra.mxu0 %v547
  %742 = vmatprep.mubr.bf16.mxu0 %v303
  %743 = vmatmul.mubr.bf16.gmra.mrb[0].mxu0 %v302
  %v744 = vpop.f32.mrb[0].mxu0
  %v745 = vadd.f32 %v648, %v744
  %v746 = vpop.f32.mrb[0].mxu0
  %v747 = vpop.f32.mrb[0].mxu0
  %v748 = vadd.f32 %v651, %v747
  %v749 = vpop.f32.mrb[0].mxu0
  %750 = vmatprep.mubr.bf16.mxu0 %v308
  %751 = vmatmul.mubr.bf16.gmra.mrb[0].mxu0 %v307
  %v752 = vpop.f32.mrb[0].mxu0
  %v753 = vadd.f32 %v656, %v752
  %v754 = vpop.f32.mrb[0].mxu0
  %v755 = vpop.f32.mrb[0].mxu0
  %v756 = vadd.f32 %v659, %v755
  %v757 = vpop.f32.mrb[0].mxu0
  %758 = vmatprep.mubr.bf16.mxu0 %v313
  %759 = vmatmul.mubr.bf16.gmra.mrb[0].mxu0 %v312
  %v760 = vpop.f32.mrb[0].mxu0
  %v761 = vadd.f32 %v664, %v760
  %v762 = vpop.f32.mrb[0].mxu0
  %v763 = vpop.f32.mrb[0].mxu0
  %v764 = vadd.f32 %v667, %v763
  %v765 = vpop.f32.mrb[0].mxu0
  %766 = vmatprep.mubr.bf16.mxu0 %v318
  %767 = vmatmul.mubr.bf16.gmra.mrb[0].mxu0 %v317
  %v768 = vpop.f32.mrb[0].mxu0
  %v769 = vadd.f32 %v672, %v768
  %v770 = vpop.f32.mrb[0].mxu0
  %v771 = vpop.f32.mrb[0].mxu0
  %v772 = vadd.f32 %v675, %v771
  %v773 = vpop.f32.mrb[0].mxu0
  %774 = vmatprep.mubr.bf16.mxu0 %v323
  %775 = vmatmul.mubr.bf16.gmra.mrb[0].mxu0 %v322
  %v776 = vpop.f32.mrb[0].mxu0
  %v777 = vadd.f32 %v680, %v776
  %v778 = vpop.f32.mrb[0].mxu0
  %v779 = vpop.f32.mrb[0].mxu0
  %v780 = vadd.f32 %v683, %v779
  %v781 = vpop.f32.mrb[0].mxu0
  %782 = vmatprep.mubr.bf16.mxu0 %v328
  %783 = vmatmul.mubr.bf16.gmra.mrb[0].mxu0 %v327
  %v784 = vpop.f32.mrb[0].mxu0
  %v785 = vadd.f32 %v688, %v784
  %v786 = vpop.f32.mrb[0].mxu0
  %v787 = vpop.f32.mrb[0].mxu0
  %v788 = vadd.f32 %v691, %v787
  %v789 = vpop.f32.mrb[0].mxu0
  %790 = vmatprep.mubr.bf16.mxu0 %v333
  %791 = vmatmul.mubr.bf16.gmra.mrb[0].mxu0 %v332
  %v792 = vpop.f32.mrb[0].mxu0
  %v793 = vadd.f32 %v696, %v792
  %v794 = vpop.f32.mrb[0].mxu0
  %v795 = vpop.f32.mrb[0].mxu0
  %v796 = vadd.f32 %v699, %v795
  %v797 = vpop.f32.mrb[0].mxu0
  %798 = vmatprep.mubr.bf16.mxu0 %v338
  %799 = vmatmul.mubr.bf16.gmra.mrb[0].mxu0 %v337
  %v800 = vpop.f32.mrb[0].mxu0
  %v801 = vadd.f32 %v704, %v800
  %v802 = vpop.f32.mrb[0].mxu0
  %v803 = vpop.f32.mrb[0].mxu0
  %v804 = vadd.f32 %v707, %v803
  %v805 = vpop.f32.mrb[0].mxu0
  %806 = vdwg.mxu0
  %807 = vmatprep.subr.bf16.mxu0 0
  %808 = vmatpush1.bf16.msra.mxu0 %v548
  %809 = vmatprep.subr.bf16.mxu0 0
  %810 = vmatpush1.bf16.msra.mxu0 %v549
  %811 = vmatprep.subr.bf16.mxu0 0
  %812 = vmatpush1.bf16.msra.mxu0 %v550
  %813 = vmatprep.subr.bf16.mxu0 0
  %814 = vmatpush1.bf16.msra.mxu0 %v551
  %815 = vmatprep.subr.bf16.mxu0 0
  %816 = vmatpush1.bf16.msra.mxu0 0
  %817 = vmatprep.subr.bf16.mxu0 0
  %818 = vmatpush1.bf16.msra.mxu0 0
  %819 = vmatprep.subr.bf16.mxu0 0
  %820 = vmatpush1.bf16.msra.mxu0 0
  %821 = vmatprep.subr.bf16.mxu0 0
  %822 = vmatpush1.bf16.msra.mxu0 0
  %823 = vmatprep.subr.bf16.mxu0 0
  %824 = vmatpush1.bf16.msra.mxu0 0
  %825 = vmatprep.subr.bf16.mxu0 0
  %826 = vmatpush1.bf16.msra.mxu0 0
  %827 = vmatprep.subr.bf16.mxu0 0
  %828 = vmatpush1.bf16.msra.mxu0 0
  %829 = vmatprep.subr.bf16.mxu0 0
  %830 = vmatpush1.bf16.msra.mxu0 0
  %831 = vmatprep.subr.bf16.mxu0 0
  %832 = vmatpush1.bf16.msra.mxu0 0
  %833 = vmatprep.subr.bf16.mxu0 0
  %834 = vmatpush1.bf16.msra.mxu0 0
  %835 = vmatprep.subr.bf16.mxu0 0
  %836 = vmatpush1.bf16.msra.mxu0 0
  %837 = vmatprep.subr.bf16.mxu0 0
  %838 = vmatpush1.bf16.msra.mxu0 0
  %839 = vmatprep.mubr.bf16.mxu0 0
  %840 = vmatmul.mubr.bf16.gmra.mrb[0].mxu0 %v590
  %v841 = vpop.f32.mrb[0].mxu0
  %v842 = vadd.f32 %v745, %v841
  %v843 = vpop.f32.mrb[0].mxu0
  %v844 = vpop.f32.mrb[0].mxu0
  %v845 = vadd.f32 %v748, %v844
  %v846 = vpop.f32.mrb[0].mxu0
  %847 = vmatprep.mubr.bf16.mxu0 0
  %848 = vmatmul.mubr.bf16.gmra.mrb[0].mxu0 %v593
  %v849 = vpop.f32.mrb[0].mxu0
  %v850 = vadd.f32 %v753, %v849
  %v851 = vpop.f32.mrb[0].mxu0
  %v852 = vpop.f32.mrb[0].mxu0
  %v853 = vadd.f32 %v756, %v852
  %v854 = vpop.f32.mrb[0].mxu0
  %855 = vmatprep.mubr.bf16.mxu0 0
  %856 = vmatmul.mubr.bf16.gmra.mrb[0].mxu0 %v596
  %v857 = vpop.f32.mrb[0].mxu0
  %v858 = vadd.f32 %v761, %v857
  %v859 = vpop.f32.mrb[0].mxu0
  %v860 = vpop.f32.mrb[0].mxu0
  %v861 = vadd.f32 %v764, %v860
  %v862 = vpop.f32.mrb[0].mxu0
  %863 = vmatprep.mubr.bf16.mxu0 0
  %864 = vmatmul.mubr.bf16.gmra.mrb[0].mxu0 %v599
  %v865 = vpop.f32.mrb[0].mxu0
  %v866 = vadd.f32 %v769, %v865
  %v867 = vpop.f32.mrb[0].mxu0
  %v868 = vpop.f32.mrb[0].mxu0
  %v869 = vadd.f32 %v772, %v868
  %v870 = vpop.f32.mrb[0].mxu0
  %871 = vmatprep.mubr.bf16.mxu0 0
  %872 = vmatmul.mubr.bf16.gmra.mrb[0].mxu0 %v602
  %v873 = vpop.f32.mrb[0].mxu0
  %v874 = vadd.f32 %v777, %v873
  %v875 = vpop.f32.mrb[0].mxu0
  %v876 = vpop.f32.mrb[0].mxu0
  %v877 = vadd.f32 %v780, %v876
  %v878 = vpop.f32.mrb[0].mxu0
  %879 = vmatprep.mubr.bf16.mxu0 0
  %880 = vmatmul.mubr.bf16.gmra.mrb[0].mxu0 %v605
  %v881 = vpop.f32.mrb[0].mxu0
  %v882 = vadd.f32 %v785, %v881
  %v883 = vpop.f32.mrb[0].mxu0
  %v884 = vpop.f32.mrb[0].mxu0
  %v885 = vadd.f32 %v788, %v884
  %v886 = vpop.f32.mrb[0].mxu0
  %887 = vmatprep.mubr.bf16.mxu0 0
  %888 = vmatmul.mubr.bf16.gmra.mrb[0].mxu0 %v608
  %v889 = vpop.f32.mrb[0].mxu0
  %v890 = vadd.f32 %v793, %v889
  %v891 = vpop.f32.mrb[0].mxu0
  %v892 = vpop.f32.mrb[0].mxu0
  %v893 = vadd.f32 %v796, %v892
  %v894 = vpop.f32.mrb[0].mxu0
  %895 = vmatprep.mubr.bf16.mxu0 0
  %896 = vmatmul.mubr.bf16.gmra.mrb[0].mxu0 %v611
  %v897 = vpop.f32.mrb[0].mxu0
  %v898 = vadd.f32 %v801, %v897
  %v899 = vpop.f32.mrb[0].mxu0
  %v900 = vpop.f32.mrb[0].mxu0
  %v901 = vadd.f32 %v804, %v900
  %v902 = vpop.f32.mrb[0].mxu0
  %903 = vdwg.mxu0
  %v904 = vadd.f32 %v36, %v842
  %v905 = vadd.f32 %v37, %v845
  %v906 = vadd.f32 %v38, %v850
  %v907 = vadd.f32 %v39, %v853
  %v908 = vadd.f32 %v40, %v858
  %v909 = vadd.f32 %v41, %v861
  %v910 = vadd.f32 %v42, %v866
  %v911 = vadd.f32 %v43, %v869
  %v912 = vadd.f32 %v44, %v874
  %v913 = vadd.f32 %v45, %v877
  %v914 = vadd.f32 %v46, %v882
  %v915 = vadd.f32 %v47, %v885
  %v916 = vadd.f32 %v48, %v890
  %v917 = vadd.f32 %v49, %v893
  %v918 = vadd.f32 %v50, %v898
  %v919 = vadd.f32 %v51, %v901
  %920 = vst.msk [vmem:[#allocation2] sm:$0xff] %vm588, %v904
  %921 = vst.msk [vmem:[#allocation2 + $0x8] sm:$0xff] %vm588, %v905
  %922 = vst.msk [vmem:[#allocation2 + $0x10] sm:$0xff] %vm588, %v906
  %923 = vst.msk [vmem:[#allocation2 + $0x18] sm:$0xff] %vm588, %v907
  %924 = vst.msk [vmem:[#allocation2 + $0x20] sm:$0xff] %vm588, %v908
  %925 = vst.msk [vmem:[#allocation2 + $0x28] sm:$0xff] %vm588, %v909
  %926 = vst.msk [vmem:[#allocation2 + $0x30] sm:$0xff] %vm588, %v910
  %927 = vst.msk [vmem:[#allocation2 + $0x38] sm:$0xff] %vm588, %v911
  %928 = vst.msk [vmem:[#allocation2 + $0x40] sm:$0xff] %vm588, %v912
  %929 = vst.msk [vmem:[#allocation2 + $0x48] sm:$0xff] %vm588, %v913
  %930 = vst.msk [vmem:[#allocation2 + $0x50] sm:$0xff] %vm588, %v914
  %931 = vst.msk [vmem:[#allocation2 + $0x58] sm:$0xff] %vm588, %v915
  %932 = vst.msk [vmem:[#allocation2 + $0x60] sm:$0xff] %vm588, %v916
  %933 = vst.msk [vmem:[#allocation2 + $0x68] sm:$0xff] %vm588, %v917
  %934 = vst.msk [vmem:[#allocation2 + $0x70] sm:$0xff] %vm588, %v918
  %935 = vst.msk [vmem:[#allocation2 + $0x78] sm:$0xff] %vm588, %v919
  // Predicated region
  $region18: #{_lambda_.15} parent=0 // pred_check
    %p936 = pneg %p15
  $region19: #{_lambda_.15} parent=0 // pred_check_branch
    %938 = sbr.rel (%p936) target = $region21
  $region20: #{_lambda_.15} parent=0 // pred_region
    %v939 = vld [vmem:[#allocation2] sm:$0xff]
    %v940 = vld [vmem:[#allocation2 + $0x8] sm:$0xff]
    %v941 = vld [vmem:[#allocation2 + $0x10] sm:$0xff]
    %v942 = vld [vmem:[#allocation2 + $0x18] sm:$0xff]
    %v943 = vld [vmem:[#allocation2 + $0x20] sm:$0xff]
    %v944 = vld [vmem:[#allocation2 + $0x28] sm:$0xff]
    %v945 = vld [vmem:[#allocation2 + $0x30] sm:$0xff]
    %v946 = vld [vmem:[#allocation2 + $0x38] sm:$0xff]
    %v947 = vld [vmem:[#allocation2 + $0x40] sm:$0xff]
    %v948 = vld [vmem:[#allocation2 + $0x48] sm:$0xff]
    %v949 = vld [vmem:[#allocation2 + $0x50] sm:$0xff]
    %v950 = vld [vmem:[#allocation2 + $0x58] sm:$0xff]
    %v951 = vld [vmem:[#allocation2 + $0x60] sm:$0xff]
    %v952 = vld [vmem:[#allocation2 + $0x68] sm:$0xff]
    %v953 = vld [vmem:[#allocation2 + $0x70] sm:$0xff]
    %v954 = vld [vmem:[#allocation2 + $0x78] sm:$0xff]
    %v955 = vld [vmem:[%s2] sm:$0x1]
    %v957 = vlaneseq
    %v958 = vshrl.u32 %v957, 7
    %v959 = vsub.s32 0, %v958
    %v960 = vrot.slane %v955, %v959
    %v962 = vadd.f32 %v939, %v960
    %v963 = vadd.f32 %v940, %v960
    %v964 = vadd.f32 %v941, %v960
    %v965 = vadd.f32 %v942, %v960
    %v966 = vadd.f32 %v943, %v960
    %v967 = vadd.f32 %v944, %v960
    %v968 = vadd.f32 %v945, %v960
    %v969 = vadd.f32 %v946, %v960
    %v970 = vadd.f32 %v947, %v960
    %v971 = vadd.f32 %v948, %v960
    %v972 = vadd.f32 %v949, %v960
    %v973 = vadd.f32 %v950, %v960
    %v974 = vadd.f32 %v951, %v960
    %v975 = vadd.f32 %v952, %v960
    %v976 = vadd.f32 %v953, %v960
    %v977 = vadd.f32 %v954, %v960
    %v978 = vmax.f32 %v962, 0.0
    %v979 = vmax.f32 %v963, 0.0
    %v980 = vmax.f32 %v964, 0.0
    %v981 = vmax.f32 %v965, 0.0
    %v982 = vmax.f32 %v966, 0.0
    %v983 = vmax.f32 %v967, 0.0
    %v984 = vmax.f32 %v968, 0.0
    %v985 = vmax.f32 %v969, 0.0
    %v986 = vmax.f32 %v970, 0.0
    %v987 = vmax.f32 %v971, 0.0
    %v988 = vmax.f32 %v972, 0.0
    %v989 = vmax.f32 %v973, 0.0
    %v990 = vmax.f32 %v974, 0.0
    %v991 = vmax.f32 %v975, 0.0
    %v992 = vmax.f32 %v976, 0.0
    %v993 = vmax.f32 %v977, 0.0
    %v994 = vpack.c.bf16 %v979, %v978
    %v995 = vpack.c.bf16 %v981, %v980
    %v996 = vpack.c.bf16 %v983, %v982
    %v997 = vpack.c.bf16 %v985, %v984
    %v998 = vpack.c.bf16 %v987, %v986
    %v999 = vpack.c.bf16 %v989, %v988
    %v1000 = vpack.c.bf16 %v991, %v990
    %v1001 = vpack.c.bf16 %v993, %v992
    %v1010 = vunpack.c.l.b16 %v994
    %v1011 = vunpack.c.h.b16 %v994
    %v1012 = vunpack.c.l.b16 %v995
    %v1013 = vunpack.c.h.b16 %v995
    %v1014 = vunpack.c.l.b16 %v996
    %v1015 = vunpack.c.h.b16 %v996
    %v1016 = vunpack.c.l.b16 %v997
    %v1017 = vunpack.c.h.b16 %v997
    %v1018 = vunpack.c.l.b16 %v998
    %v1019 = vunpack.c.h.b16 %v998
    %v1020 = vunpack.c.l.b16 %v999
    %v1021 = vunpack.c.h.b16 %v999
    %v1022 = vunpack.c.l.b16 %v1000
    %v1023 = vunpack.c.h.b16 %v1000
    %v1024 = vunpack.c.l.b16 %v1001
    %v1025 = vunpack.c.h.b16 %v1001
    %v1026 = vpack.c.b16 %v1010, %v1010
    %v1027 = vpack.c.b16 %v1011, %v1011
    %v1028 = vpack.c.b16 %v1012, %v1012
    %v1029 = vpack.c.b16 %v1013, %v1013
    %v1030 = vpack.c.b16 %v1014, %v1014
    %v1031 = vpack.c.b16 %v1015, %v1015
    %v1032 = vpack.c.b16 %v1016, %v1016
    %v1033 = vpack.c.b16 %v1017, %v1017
    %v1034 = vpack.c.b16 %v1018, %v1018
    %v1035 = vpack.c.b16 %v1019, %v1019
    %v1036 = vpack.c.b16 %v1020, %v1020
    %v1037 = vpack.c.b16 %v1021, %v1021
    %v1038 = vpack.c.b16 %v1022, %v1022
    %v1039 = vpack.c.b16 %v1023, %v1023
    %v1040 = vpack.c.b16 %v1024, %v1024
    %v1041 = vpack.c.b16 %v1025, %v1025
    %vm1058 = vcmask 519168
    %1059 = vst.msk [vmem:[%s3] sm:$0xf] %vm1058, %v1026
    %1060 = vst.msk [vmem:[%s3 + $0x4] sm:$0xf] %vm1058, %v1027
    %1061 = vst.msk [vmem:[%s3 + $0x8] sm:$0xf] %vm1058, %v1028
    %1062 = vst.msk [vmem:[%s3 + $0xc] sm:$0xf] %vm1058, %v1029
    %1063 = vst.msk [vmem:[%s3 + $0x10] sm:$0xf] %vm1058, %v1030
    %1064 = vst.msk [vmem:[%s3 + $0x14] sm:$0xf] %vm1058, %v1031
    %1065 = vst.msk [vmem:[%s3 + $0x18] sm:$0xf] %vm1058, %v1032
    %1066 = vst.msk [vmem:[%s3 + $0x1c] sm:$0xf] %vm1058, %v1033
    %1067 = vst.msk [vmem:[%s3 + $0x20] sm:$0xf] %vm1058, %v1034
    %1068 = vst.msk [vmem:[%s3 + $0x24] sm:$0xf] %vm1058, %v1035
    %1069 = vst.msk [vmem:[%s3 + $0x28] sm:$0xf] %vm1058, %v1036
    %1070 = vst.msk [vmem:[%s3 + $0x2c] sm:$0xf] %vm1058, %v1037
    %1071 = vst.msk [vmem:[%s3 + $0x30] sm:$0xf] %vm1058, %v1038
    %1072 = vst.msk [vmem:[%s3 + $0x34] sm:$0xf] %vm1058, %v1039
    %1073 = vst.msk [vmem:[%s3 + $0x38] sm:$0xf] %vm1058, %v1040
    %1074 = vst.msk [vmem:[%s3 + $0x3c] sm:$0xf] %vm1058, %v1041
  $region21: #{_lambda_.15} parent=0 // pred_fallthru
    _
  // Predicated region
  $region22: #{_lambda_.15} parent=0 // pred_check
    _
  $region23: #{_lambda_.15} parent=0 // pred_check_branch
    %1076 = sbr.rel (0) target = $region25
  $region24: #{_lambda_.15} parent=0 // pred_region
    _
  $region25: #{_lambda_.15} parent=0 // pred_fallthru
    _
  // Predicated region
  $region26: #{_lambda_.15} parent=0 // pred_check
    _
  $region27: #{_lambda_.15} parent=0 // pred_check_branch
    %1078 = sbr.rel (0) target = $region29
  $region28: #{_lambda_.15} parent=0 // pred_region
    _
  $region29: #{_lambda_.15} parent=0 // pred_fallthru
    _

// kernel: _lambda_.16
$region0: #{_lambda_.16}
  #allocation0 [shape = 'u32[]', space=smem, size = 0x4, offset = 0x4, fixed_abs, tag = 'smem constant byte address 0x4 - core index']
  #allocation1 [shape = 'u32[144,128]{1,0:T(1,128)}', space=vmem, size = 0x12000, scoped, tag = 'internal scratch']
  #allocation2 [shape = 'f32[128,64]{1,0:T(8,128)}', space=vmem, size = 0x10000, scoped, tag = 'scratch operand']
  %s0 = inlined_call_operand.vmem [shape: bf16[128,576], index: 0, kind: input, shape index: {}]
  %s1 = inlined_call_operand.vmem [shape: bf16[576,64], index: 1, kind: input, shape index: {}]
  %s2 = inlined_call_operand.vmem [shape: f32[1,64], index: 2, kind: input, shape index: {}]
  %s3 = inlined_call_operand.vmem [shape: bf16[128,64], index: 3, kind: input, shape index: {}]
  %s4 = inlined_call_operand.vmem [shape: bf16[128,64], index: 4, kind: output, shape index: {}]
  %s5 = sld [smem:[#allocation0]]
  $region34: #{_lambda_.16} parent=0
    _
  %s7 = ssub.s32 1, %s5
  %s8 = scalar_select 0, %s7, %s5
  // Predicated region
  $region2: #{_lambda_.16} parent=0 // pred_check
    _
  $region3: #{_lambda_.16} parent=0 // pred_check_branch
    %10 = sbr.rel (0) target = $region5
  $region4: #{_lambda_.16} parent=0 // pred_region
    _
  $region5: #{_lambda_.16} parent=0 // pred_fallthru
    _
  // Predicated region
  $region6: #{_lambda_.16} parent=0 // pred_check
    _
  $region7: #{_lambda_.16} parent=0 // pred_check_branch
    %12 = sbr.rel (0) target = $region9
  $region8: #{_lambda_.16} parent=0 // pred_region
    _
  $region9: #{_lambda_.16} parent=0 // pred_fallthru
    _
  // Predicated region
  $region10: #{_lambda_.16} parent=0 // pred_check
    _
  $region11: #{_lambda_.16} parent=0 // pred_check_branch
    %14 = sbr.rel (0) target = $region13
  $region12: #{_lambda_.16} parent=0 // pred_region
    _
  $region13: #{_lambda_.16} parent=0 // pred_fallthru
    _
  // Predicated region
  $region14: #{_lambda_.16} parent=0 // pred_check
    _
  $region15: #{_lambda_.16} parent=0 // pred_check_branch
    %16 = sbr.rel (0) target = $region17
  $region16: #{_lambda_.16} parent=0 // pred_region
    _
  $region17: #{_lambda_.16} parent=0 // pred_fallthru
    _
  %p18 = scmp.eq.s32.totalorder 0, 0
  // Predicated region
  $region18: #{_lambda_.16} parent=0 // pred_check
    %p19 = pneg %p18
  $region19: #{_lambda_.16} parent=0 // pred_check_branch
    %21 = sbr.rel (%p19) target = $region21
  $region20: #{_lambda_.16} parent=0 // pred_region
    %vm22 = vcmask 523264
    %23 = vst.msk [vmem:[#allocation2] sm:$0xff] %vm22, 0.0
    %24 = vst.msk [vmem:[#allocation2 + $0x8] sm:$0xff] %vm22, 0.0
    %25 = vst.msk [vmem:[#allocation2 + $0x10] sm:$0xff] %vm22, 0.0
    %26 = vst.msk [vmem:[#allocation2 + $0x18] sm:$0xff] %vm22, 0.0
    %27 = vst.msk [vmem:[#allocation2 + $0x20] sm:$0xff] %vm22, 0.0
    %28 = vst.msk [vmem:[#allocation2 + $0x28] sm:$0xff] %vm22, 0.0
    %29 = vst.msk [vmem:[#allocation2 + $0x30] sm:$0xff] %vm22, 0.0
    %30 = vst.msk [vmem:[#allocation2 + $0x38] sm:$0xff] %vm22, 0.0
    %31 = vst.msk [vmem:[#allocation2 + $0x40] sm:$0xff] %vm22, 0.0
    %32 = vst.msk [vmem:[#allocation2 + $0x48] sm:$0xff] %vm22, 0.0
    %33 = vst.msk [vmem:[#allocation2 + $0x50] sm:$0xff] %vm22, 0.0
    %34 = vst.msk [vmem:[#allocation2 + $0x58] sm:$0xff] %vm22, 0.0
    %35 = vst.msk [vmem:[#allocation2 + $0x60] sm:$0xff] %vm22, 0.0
    %36 = vst.msk [vmem:[#allocation2 + $0x68] sm:$0xff] %vm22, 0.0
    %37 = vst.msk [vmem:[#allocation2 + $0x70] sm:$0xff] %vm22, 0.0
    %38 = vst.msk [vmem:[#allocation2 + $0x78] sm:$0xff] %vm22, 0.0
  $region21: #{_lambda_.16} parent=0 // pred_fallthru
    _
  %v39 = vld [vmem:[#allocation2] sm:$0xff]
  %v40 = vld [vmem:[#allocation2 + $0x8] sm:$0xff]
  %v41 = vld [vmem:[#allocation2 + $0x10] sm:$0xff]
  %v42 = vld [vmem:[#allocation2 + $0x18] sm:$0xff]
  %v43 = vld [vmem:[#allocation2 + $0x20] sm:$0xff]
  %v44 = vld [vmem:[#allocation2 + $0x28] sm:$0xff]
  %v45 = vld [vmem:[#allocation2 + $0x30] sm:$0xff]
  %v46 = vld [vmem:[#allocation2 + $0x38] sm:$0xff]
  %v47 = vld [vmem:[#allocation2 + $0x40] sm:$0xff]
  %v48 = vld [vmem:[#allocation2 + $0x48] sm:$0xff]
  %v49 = vld [vmem:[#allocation2 + $0x50] sm:$0xff]
  %v50 = vld [vmem:[#allocation2 + $0x58] sm:$0xff]
  %v51 = vld [vmem:[#allocation2 + $0x60] sm:$0xff]
  %v52 = vld [vmem:[#allocation2 + $0x68] sm:$0xff]
  %v53 = vld [vmem:[#allocation2 + $0x70] sm:$0xff]
  %v54 = vld [vmem:[#allocation2 + $0x78] sm:$0xff]
  %v55 = vld [vmem:[%s0] sm:$0xff]
  %v56 = vld [vmem:[%s0 + $0x8] sm:$0xff]
  %v57 = vld [vmem:[%s0 + $0x10] sm:$0xf]
  %v58 = vld [vmem:[%s0 + $0x14] sm:$0xff]
  %v59 = vld [vmem:[%s0 + $0x1c] sm:$0xff]
  %v60 = vld [vmem:[%s0 + $0x24] sm:$0xf]
  %v61 = vld [vmem:[%s0 + $0x28] sm:$0xff]
  %v62 = vld [vmem:[%s0 + $0x30] sm:$0xff]
  %v63 = vld [vmem:[%s0 + $0x38] sm:$0xf]
  %v64 = vld [vmem:[%s0 + $0x3c] sm:$0xff]
  %v65 = vld [vmem:[%s0 + $0x44] sm:$0xff]
  %v66 = vld [vmem:[%s0 + $0x4c] sm:$0xf]
  %v67 = vld [vmem:[%s0 + $0x50] sm:$0xff]
  %v68 = vld [vmem:[%s0 + $0x58] sm:$0xff]
  %v69 = vld [vmem:[%s0 + $0x60] sm:$0xf]
  %v70 = vld [vmem:[%s0 + $0x64] sm:$0xff]
  %v71 = vld [vmem:[%s0 + $0x6c] sm:$0xff]
  %v72 = vld [vmem:[%s0 + $0x74] sm:$0xf]
  %v73 = vld [vmem:[%s0 + $0x78] sm:$0xff]
  %v74 = vld [vmem:[%s0 + $0x80] sm:$0xff]
  %v75 = vld [vmem:[%s0 + $0x88] sm:$0xf]
  %v76 = vld [vmem:[%s0 + $0x8c] sm:$0xff]
  %v77 = vld [vmem:[%s0 + $0x94] sm:$0xff]
  %v78 = vld [vmem:[%s0 + $0x9c] sm:$0xf]
  %v79 = vld [vmem:[%s0 + $0xa0] sm:$0xff]
  %v80 = vld [vmem:[%s0 + $0xa8] sm:$0xff]
  %v81 = vld [vmem:[%s0 + $0xb0] sm:$0xf]
  %v82 = vld [vmem:[%s0 + $0xb4] sm:$0xff]
  %v83 = vld [vmem:[%s0 + $0xbc] sm:$0xff]
  %v84 = vld [vmem:[%s0 + $0xc4] sm:$0xf]
  %v85 = vld [vmem:[%s0 + $0xc8] sm:$0xff]
  %v86 = vld [vmem:[%s0 + $0xd0] sm:$0xff]
  %v87 = vld [vmem:[%s0 + $0xd8] sm:$0xf]
  %v88 = vld [vmem:[%s0 + $0xdc] sm:$0xff]
  %v89 = vld [vmem:[%s0 + $0xe4] sm:$0xff]
  %v90 = vld [vmem:[%s0 + $0xec] sm:$0xf]
  %v91 = vld [vmem:[%s0 + $0xf0] sm:$0xff]
  %v92 = vld [vmem:[%s0 + $0xf8] sm:$0xff]
  %v93 = vld [vmem:[%s0 + $0x100] sm:$0xf]
  %v94 = vld [vmem:[%s0 + $0x104] sm:$0xff]
  %v95 = vld [vmem:[%s0 + $0x10c] sm:$0xff]
  %v96 = vld [vmem:[%s0 + $0x114] sm:$0xf]
  %v97 = vld [vmem:[%s0 + $0x118] sm:$0xff]
  %v98 = vld [vmem:[%s0 + $0x120] sm:$0xff]
  %v99 = vld [vmem:[%s0 + $0x128] sm:$0xf]
  %v100 = vld [vmem:[%s0 + $0x12c] sm:$0xff]
  %v101 = vld [vmem:[%s0 + $0x134] sm:$0xff]
  %v102 = vld [vmem:[%s0 + $0x13c] sm:$0xf]
  %v103 = vld [vmem:[%s1] sm:$0xf]
  %v104 = vld [vmem:[%s1 + $0x4] sm:$0xf]
  %v105 = vld [vmem:[%s1 + $0x8] sm:$0xf]
  %v106 = vld [vmem:[%s1 + $0xc] sm:$0xf]
  %v107 = vld [vmem:[%s1 + $0x10] sm:$0xf]
  %v108 = vld [vmem:[%s1 + $0x14] sm:$0xf]
  %v109 = vld [vmem:[%s1 + $0x18] sm:$0xf]
  %v110 = vld [vmem:[%s1 + $0x1c] sm:$0xf]
  %v111 = vld [vmem:[%s1 + $0x20] sm:$0xf]
  %v112 = vld [vmem:[%s1 + $0x24] sm:$0xf]
  %v113 = vld [vmem:[%s1 + $0x28] sm:$0xf]
  %v114 = vld [vmem:[%s1 + $0x2c] sm:$0xf]
  %v115 = vld [vmem:[%s1 + $0x30] sm:$0xf]
  %v116 = vld [vmem:[%s1 + $0x34] sm:$0xf]
  %v117 = vld [vmem:[%s1 + $0x38] sm:$0xf]
  %v118 = vld [vmem:[%s1 + $0x3c] sm:$0xf]
  %v119 = vld [vmem:[%s1 + $0x40] sm:$0xf]
  %v120 = vld [vmem:[%s1 + $0x44] sm:$0xf]
  %v121 = vld [vmem:[%s1 + $0x48] sm:$0xf]
  %v122 = vld [vmem:[%s1 + $0x4c] sm:$0xf]
  %v123 = vld [vmem:[%s1 + $0x50] sm:$0xf]
  %v124 = vld [vmem:[%s1 + $0x54] sm:$0xf]
  %v125 = vld [vmem:[%s1 + $0x58] sm:$0xf]
  %v126 = vld [vmem:[%s1 + $0x5c] sm:$0xf]
  %v127 = vld [vmem:[%s1 + $0x60] sm:$0xf]
  %v128 = vld [vmem:[%s1 + $0x64] sm:$0xf]
  %v129 = vld [vmem:[%s1 + $0x68] sm:$0xf]
  %v130 = vld [vmem:[%s1 + $0x6c] sm:$0xf]
  %v131 = vld [vmem:[%s1 + $0x70] sm:$0xf]
  %v132 = vld [vmem:[%s1 + $0x74] sm:$0xf]
  %v133 = vld [vmem:[%s1 + $0x78] sm:$0xf]
  %v134 = vld [vmem:[%s1 + $0x7c] sm:$0xf]
  %v135 = vld [vmem:[%s1 + $0x80] sm:$0xf]
  %v136 = vld [vmem:[%s1 + $0x84] sm:$0xf]
  %v137 = vld [vmem:[%s1 + $0x88] sm:$0xf]
  %v138 = vld [vmem:[%s1 + $0x8c] sm:$0xf]
  %v139 = vld [vmem:[%s1 + $0x90] sm:$0xf]
  %v140 = vld [vmem:[%s1 + $0x94] sm:$0xf]
  %v141 = vld [vmem:[%s1 + $0x98] sm:$0xf]
  %v142 = vld [vmem:[%s1 + $0x9c] sm:$0xf]
  %v143 = vld [vmem:[%s1 + $0xa0] sm:$0xf]
  %v144 = vld [vmem:[%s1 + $0xa4] sm:$0xf]
  %v145 = vld [vmem:[%s1 + $0xa8] sm:$0xf]
  %v146 = vld [vmem:[%s1 + $0xac] sm:$0xf]
  %v147 = vld [vmem:[%s1 + $0xb0] sm:$0xf]
  %v148 = vld [vmem:[%s1 + $0xb4] sm:$0xf]
  %v149 = vld [vmem:[%s1 + $0xb8] sm:$0xf]
  %v150 = vld [vmem:[%s1 + $0xbc] sm:$0xf]
  %v151 = vld [vmem:[%s1 + $0xc0] sm:$0xf]
  %v152 = vld [vmem:[%s1 + $0xc4] sm:$0xf]
  %v153 = vld [vmem:[%s1 + $0xc8] sm:$0xf]
  %v154 = vld [vmem:[%s1 + $0xcc] sm:$0xf]
  %v155 = vld [vmem:[%s1 + $0xd0] sm:$0xf]
  %v156 = vld [vmem:[%s1 + $0xd4] sm:$0xf]
  %v157 = vld [vmem:[%s1 + $0xd8] sm:$0xf]
  %v158 = vld [vmem:[%s1 + $0xdc] sm:$0xf]
  %v159 = vld [vmem:[%s1 + $0xe0] sm:$0xf]
  %v160 = vld [vmem:[%s1 + $0xe4] sm:$0xf]
  %v161 = vld [vmem:[%s1 + $0xe8] sm:$0xf]
  %v162 = vld [vmem:[%s1 + $0xec] sm:$0xf]
  %v163 = vld [vmem:[%s1 + $0xf0] sm:$0xf]
  %v164 = vld [vmem:[%s1 + $0xf4] sm:$0xf]
  %v165 = vld [vmem:[%s1 + $0xf8] sm:$0xf]
  %v166 = vld [vmem:[%s1 + $0xfc] sm:$0xf]
  %v167 = vld [vmem:[%s1 + $0x100] sm:$0xf]
  %v168 = vld [vmem:[%s1 + $0x104] sm:$0xf]
  %v169 = vld [vmem:[%s1 + $0x108] sm:$0xf]
  %v170 = vld [vmem:[%s1 + $0x10c] sm:$0xf]
  %v171 = vld [vmem:[%s1 + $0x110] sm:$0xf]
  %v172 = vld [vmem:[%s1 + $0x114] sm:$0xf]
  %v173 = vld [vmem:[%s1 + $0x118] sm:$0xf]
  %v174 = vld [vmem:[%s1 + $0x11c] sm:$0xf]
  %v223 = vunpack.c.l.b16 %v55
  %v224 = vunpack.c.h.b16 %v55
  %v225 = vunpack.c.l.b16 %v56
  %v226 = vunpack.c.h.b16 %v56
  %v227 = vunpack.c.l.b16 %v57
  %v228 = vunpack.c.l.b16 %v58
  %v229 = vunpack.c.h.b16 %v58
  %v230 = vunpack.c.l.b16 %v59
  %v231 = vunpack.c.h.b16 %v59
  %v232 = vunpack.c.l.b16 %v60
  %v233 = vunpack.c.l.b16 %v61
  %v234 = vunpack.c.h.b16 %v61
  %v235 = vunpack.c.l.b16 %v62
  %v236 = vunpack.c.h.b16 %v62
  %v237 = vunpack.c.l.b16 %v63
  %v238 = vunpack.c.l.b16 %v64
  %v239 = vunpack.c.h.b16 %v64
  %v240 = vunpack.c.l.b16 %v65
  %v241 = vunpack.c.h.b16 %v65
  %v242 = vunpack.c.l.b16 %v66
  %v243 = vunpack.c.l.b16 %v67
  %v244 = vunpack.c.h.b16 %v67
  %v245 = vunpack.c.l.b16 %v68
  %v246 = vunpack.c.h.b16 %v68
  %v247 = vunpack.c.l.b16 %v69
  %v248 = vunpack.c.l.b16 %v70
  %v249 = vunpack.c.h.b16 %v70
  %v250 = vunpack.c.l.b16 %v71
  %v251 = vunpack.c.h.b16 %v71
  %v252 = vunpack.c.l.b16 %v72
  %v253 = vunpack.c.l.b16 %v73
  %v254 = vunpack.c.h.b16 %v73
  %v255 = vunpack.c.l.b16 %v74
  %v256 = vunpack.c.h.b16 %v74
  %v257 = vunpack.c.l.b16 %v75
  %v258 = vunpack.c.l.b16 %v76
  %v259 = vunpack.c.h.b16 %v76
  %v260 = vunpack.c.l.b16 %v77
  %v261 = vunpack.c.h.b16 %v77
  %v262 = vunpack.c.l.b16 %v78
  %v263 = vunpack.c.l.b16 %v79
  %v264 = vunpack.c.h.b16 %v79
  %v265 = vunpack.c.l.b16 %v80
  %v266 = vunpack.c.h.b16 %v80
  %v267 = vunpack.c.l.b16 %v81
  %v268 = vunpack.c.l.b16 %v82
  %v269 = vunpack.c.h.b16 %v82
  %v270 = vunpack.c.l.b16 %v83
  %v271 = vunpack.c.h.b16 %v83
  %v272 = vunpack.c.l.b16 %v84
  %v273 = vunpack.c.l.b16 %v85
  %v274 = vunpack.c.h.b16 %v85
  %v275 = vunpack.c.l.b16 %v86
  %v276 = vunpack.c.h.b16 %v86
  %v277 = vunpack.c.l.b16 %v87
  %v278 = vunpack.c.l.b16 %v88
  %v279 = vunpack.c.h.b16 %v88
  %v280 = vunpack.c.l.b16 %v89
  %v281 = vunpack.c.h.b16 %v89
  %v282 = vunpack.c.l.b16 %v90
  %v283 = vunpack.c.l.b16 %v91
  %v284 = vunpack.c.h.b16 %v91
  %v285 = vunpack.c.l.b16 %v92
  %v286 = vunpack.c.h.b16 %v92
  %v287 = vunpack.c.l.b16 %v93
  %v288 = vunpack.c.l.b16 %v94
  %v289 = vunpack.c.h.b16 %v94
  %v290 = vunpack.c.l.b16 %v95
  %v291 = vunpack.c.h.b16 %v95
  %v292 = vunpack.c.l.b16 %v96
  %v293 = vunpack.c.l.b16 %v97
  %v294 = vunpack.c.h.b16 %v97
  %v295 = vunpack.c.l.b16 %v98
  %v296 = vunpack.c.h.b16 %v98
  %v297 = vunpack.c.l.b16 %v99
  %v298 = vunpack.c.l.b16 %v100
  %v299 = vunpack.c.h.b16 %v100
  %v300 = vunpack.c.l.b16 %v101
  %v301 = vunpack.c.h.b16 %v101
  %v302 = vunpack.c.l.b16 %v102
  %v303 = vpack.c.b16 %v228, %v223
  %v304 = vpack.c.b16 %v229, %v224
  %v305 = vpack.c.b16 %v230, %v225
  %v306 = vpack.c.b16 %v231, %v226
  %v307 = vpack.c.b16 %v232, %v227
  %v308 = vpack.c.b16 %v238, %v233
  %v309 = vpack.c.b16 %v239, %v234
  %v310 = vpack.c.b16 %v240, %v235
  %v311 = vpack.c.b16 %v241, %v236
  %v312 = vpack.c.b16 %v242, %v237
  %v313 = vpack.c.b16 %v248, %v243
  %v314 = vpack.c.b16 %v249, %v244
  %v315 = vpack.c.b16 %v250, %v245
  %v316 = vpack.c.b16 %v251, %v246
  %v317 = vpack.c.b16 %v252, %v247
  %v318 = vpack.c.b16 %v258, %v253
  %v319 = vpack.c.b16 %v259, %v254
  %v320 = vpack.c.b16 %v260, %v255
  %v321 = vpack.c.b16 %v261, %v256
  %v322 = vpack.c.b16 %v262, %v257
  %v323 = vpack.c.b16 %v268, %v263
  %v324 = vpack.c.b16 %v269, %v264
  %v325 = vpack.c.b16 %v270, %v265
  %v326 = vpack.c.b16 %v271, %v266
  %v327 = vpack.c.b16 %v272, %v267
  %v328 = vpack.c.b16 %v278, %v273
  %v329 = vpack.c.b16 %v279, %v274
  %v330 = vpack.c.b16 %v280, %v275
  %v331 = vpack.c.b16 %v281, %v276
  %v332 = vpack.c.b16 %v282, %v277
  %v333 = vpack.c.b16 %v288, %v283
  %v334 = vpack.c.b16 %v289, %v284
  %v335 = vpack.c.b16 %v290, %v285
  %v336 = vpack.c.b16 %v291, %v286
  %v337 = vpack.c.b16 %v292, %v287
  %v338 = vpack.c.b16 %v298, %v293
  %v339 = vpack.c.b16 %v299, %v294
  %v340 = vpack.c.b16 %v300, %v295
  %v341 = vpack.c.b16 %v301, %v296
  %v342 = vpack.c.b16 %v302, %v297
  %v447 = vunpack.c.l.b16 %v103
  %v448 = vunpack.c.l.b16 %v104
  %v449 = vunpack.c.l.b16 %v105
  %v450 = vunpack.c.l.b16 %v106
  %v451 = vunpack.c.l.b16 %v107
  %v452 = vunpack.c.l.b16 %v108
  %v453 = vunpack.c.l.b16 %v109
  %v454 = vunpack.c.l.b16 %v110
  %v455 = vunpack.c.l.b16 %v111
  %v456 = vunpack.c.l.b16 %v112
  %v457 = vunpack.c.l.b16 %v113
  %v458 = vunpack.c.l.b16 %v114
  %v459 = vunpack.c.l.b16 %v115
  %v460 = vunpack.c.l.b16 %v116
  %v461 = vunpack.c.l.b16 %v117
  %v462 = vunpack.c.l.b16 %v118
  %v463 = vunpack.c.l.b16 %v119
  %v464 = vunpack.c.l.b16 %v120
  %v465 = vunpack.c.l.b16 %v121
  %v466 = vunpack.c.l.b16 %v122
  %v467 = vunpack.c.l.b16 %v123
  %v468 = vunpack.c.l.b16 %v124
  %v469 = vunpack.c.l.b16 %v125
  %v470 = vunpack.c.l.b16 %v126
  %v471 = vunpack.c.l.b16 %v127
  %v472 = vunpack.c.l.b16 %v128
  %v473 = vunpack.c.l.b16 %v129
  %v474 = vunpack.c.l.b16 %v130
  %v475 = vunpack.c.l.b16 %v131
  %v476 = vunpack.c.l.b16 %v132
  %v477 = vunpack.c.l.b16 %v133
  %v478 = vunpack.c.l.b16 %v134
  %v479 = vunpack.c.l.b16 %v135
  %v480 = vunpack.c.l.b16 %v136
  %v481 = vunpack.c.l.b16 %v137
  %v482 = vunpack.c.l.b16 %v138
  %v483 = vunpack.c.l.b16 %v139
  %v484 = vunpack.c.l.b16 %v140
  %v485 = vunpack.c.l.b16 %v141
  %v486 = vunpack.c.l.b16 %v142
  %v487 = vunpack.c.l.b16 %v143
  %v488 = vunpack.c.l.b16 %v144
  %v489 = vunpack.c.l.b16 %v145
  %v490 = vunpack.c.l.b16 %v146
  %v491 = vunpack.c.l.b16 %v147
  %v492 = vunpack.c.l.b16 %v148
  %v493 = vunpack.c.l.b16 %v149
  %v494 = vunpack.c.l.b16 %v150
  %v495 = vunpack.c.l.b16 %v151
  %v496 = vunpack.c.l.b16 %v152
  %v497 = vunpack.c.l.b16 %v153
  %v498 = vunpack.c.l.b16 %v154
  %v499 = vunpack.c.l.b16 %v155
  %v500 = vunpack.c.l.b16 %v156
  %v501 = vunpack.c.l.b16 %v157
  %v502 = vunpack.c.l.b16 %v158
  %v503 = vunpack.c.l.b16 %v159
  %v504 = vunpack.c.l.b16 %v160
  %v505 = vunpack.c.l.b16 %v161
  %v506 = vunpack.c.l.b16 %v162
  %v507 = vunpack.c.l.b16 %v163
  %v508 = vunpack.c.l.b16 %v164
  %v509 = vunpack.c.l.b16 %v165
  %v510 = vunpack.c.l.b16 %v166
  %v511 = vunpack.c.l.b16 %v167
  %v512 = vunpack.c.l.b16 %v168
  %v513 = vunpack.c.l.b16 %v169
  %v514 = vunpack.c.l.b16 %v170
  %v515 = vunpack.c.l.b16 %v171
  %v516 = vunpack.c.l.b16 %v172
  %v517 = vunpack.c.l.b16 %v173
  %v518 = vunpack.c.l.b16 %v174
  %v519 = vpack.c.b16 %v448, %v447
  %v520 = vpack.c.b16 %v450, %v449
  %v521 = vpack.c.b16 %v452, %v451
  %v522 = vpack.c.b16 %v454, %v453
  %v523 = vpack.c.b16 %v456, %v455
  %v524 = vpack.c.b16 %v458, %v457
  %v525 = vpack.c.b16 %v460, %v459
  %v526 = vpack.c.b16 %v462, %v461
  %v527 = vpack.c.b16 %v464, %v463
  %v528 = vpack.c.b16 %v466, %v465
  %v529 = vpack.c.b16 %v468, %v467
  %v530 = vpack.c.b16 %v470, %v469
  %v531 = vpack.c.b16 %v472, %v471
  %v532 = vpack.c.b16 %v474, %v473
  %v533 = vpack.c.b16 %v476, %v475
  %v534 = vpack.c.b16 %v478, %v477
  %v535 = vpack.c.b16 %v480, %v479
  %v536 = vpack.c.b16 %v482, %v481
  %v537 = vpack.c.b16 %v484, %v483
  %v538 = vpack.c.b16 %v486, %v485
  %v539 = vpack.c.b16 %v488, %v487
  %v540 = vpack.c.b16 %v490, %v489
  %v541 = vpack.c.b16 %v492, %v491
  %v542 = vpack.c.b16 %v494, %v493
  %v543 = vpack.c.b16 %v496, %v495
  %v544 = vpack.c.b16 %v498, %v497
  %v545 = vpack.c.b16 %v500, %v499
  %v546 = vpack.c.b16 %v502, %v501
  %v547 = vpack.c.b16 %v504, %v503
  %v548 = vpack.c.b16 %v506, %v505
  %v549 = vpack.c.b16 %v508, %v507
  %v550 = vpack.c.b16 %v510, %v509
  %v551 = vpack.c.b16 %v512, %v511
  %v552 = vpack.c.b16 %v514, %v513
  %v553 = vpack.c.b16 %v516, %v515
  %v554 = vpack.c.b16 %v518, %v517
  %vm591 = vcmask 523264
  %v593 = vsel %vm591, %v307, 0
  %v596 = vsel %vm591, %v312, 0
  %v599 = vsel %vm591, %v317, 0
  %v602 = vsel %vm591, %v322, 0
  %v605 = vsel %vm591, %v327, 0
  %v608 = vsel %vm591, %v332, 0
  %v611 = vsel %vm591, %v337, 0
  %v614 = vsel %vm591, %v342, 0
  %616 = vmatprep.subr.bf16.mxu0 0
  %617 = vmatpush1.bf16.msra.mxu0 %v519
  %618 = vmatprep.subr.bf16.mxu0 0
  %619 = vmatpush1.bf16.msra.mxu0 %v520
  %620 = vmatprep.subr.bf16.mxu0 0
  %621 = vmatpush1.bf16.msra.mxu0 %v521
  %622 = vmatprep.subr.bf16.mxu0 0
  %623 = vmatpush1.bf16.msra.mxu0 %v522
  %624 = vmatprep.subr.bf16.mxu0 0
  %625 = vmatpush1.bf16.msra.mxu0 %v523
  %626 = vmatprep.subr.bf16.mxu0 0
  %627 = vmatpush1.bf16.msra.mxu0 %v524
  %628 = vmatprep.subr.bf16.mxu0 0
  %629 = vmatpush1.bf16.msra.mxu0 %v525
  %630 = vmatprep.subr.bf16.mxu0 0
  %631 = vmatpush1.bf16.msra.mxu0 %v526
  %632 = vmatprep.subr.bf16.mxu0 0
  %633 = vmatpush1.bf16.msra.mxu0 %v527
  %634 = vmatprep.subr.bf16.mxu0 0
  %635 = vmatpush1.bf16.msra.mxu0 %v528
  %636 = vmatprep.subr.bf16.mxu0 0
  %637 = vmatpush1.bf16.msra.mxu0 %v529
  %638 = vmatprep.subr.bf16.mxu0 0
  %639 = vmatpush1.bf16.msra.mxu0 %v530
  %640 = vmatprep.subr.bf16.mxu0 0
  %641 = vmatpush1.bf16.msra.mxu0 %v531
  %642 = vmatprep.subr.bf16.mxu0 0
  %643 = vmatpush1.bf16.msra.mxu0 %v532
  %644 = vmatprep.subr.bf16.mxu0 0
  %645 = vmatpush1.bf16.msra.mxu0 %v533
  %646 = vmatprep.subr.bf16.mxu0 0
  %647 = vmatpush1.bf16.msra.mxu0 %v534
  %648 = vmatprep.mubr.bf16.mxu0 %v304
  %649 = vmatmul.mubr.bf16.gmra.mrb[0].mxu0 %v303
  %v650 = vpop.f32.mrb[0].mxu0
  %v651 = vadd.f32 0.0, %v650
  %v652 = vpop.f32.mrb[0].mxu0
  %v653 = vpop.f32.mrb[0].mxu0
  %v654 = vadd.f32 0.0, %v653
  %v655 = vpop.f32.mrb[0].mxu0
  %656 = vmatprep.mubr.bf16.mxu0 %v309
  %657 = vmatmul.mubr.bf16.gmra.mrb[0].mxu0 %v308
  %v658 = vpop.f32.mrb[0].mxu0
  %v659 = vadd.f32 0.0, %v658
  %v660 = vpop.f32.mrb[0].mxu0
  %v661 = vpop.f32.mrb[0].mxu0
  %v662 = vadd.f32 0.0, %v661
  %v663 = vpop.f32.mrb[0].mxu0
  %664 = vmatprep.mubr.bf16.mxu0 %v314
  %665 = vmatmul.mubr.bf16.gmra.mrb[0].mxu0 %v313
  %v666 = vpop.f32.mrb[0].mxu0
  %v667 = vadd.f32 0.0, %v666
  %v668 = vpop.f32.mrb[0].mxu0
  %v669 = vpop.f32.mrb[0].mxu0
  %v670 = vadd.f32 0.0, %v669
  %v671 = vpop.f32.mrb[0].mxu0
  %672 = vmatprep.mubr.bf16.mxu0 %v319
  %673 = vmatmul.mubr.bf16.gmra.mrb[0].mxu0 %v318
  %v674 = vpop.f32.mrb[0].mxu0
  %v675 = vadd.f32 0.0, %v674
  %v676 = vpop.f32.mrb[0].mxu0
  %v677 = vpop.f32.mrb[0].mxu0
  %v678 = vadd.f32 0.0, %v677
  %v679 = vpop.f32.mrb[0].mxu0
  %680 = vmatprep.mubr.bf16.mxu0 %v324
  %681 = vmatmul.mubr.bf16.gmra.mrb[0].mxu0 %v323
  %v682 = vpop.f32.mrb[0].mxu0
  %v683 = vadd.f32 0.0, %v682
  %v684 = vpop.f32.mrb[0].mxu0
  %v685 = vpop.f32.mrb[0].mxu0
  %v686 = vadd.f32 0.0, %v685
  %v687 = vpop.f32.mrb[0].mxu0
  %688 = vmatprep.mubr.bf16.mxu0 %v329
  %689 = vmatmul.mubr.bf16.gmra.mrb[0].mxu0 %v328
  %v690 = vpop.f32.mrb[0].mxu0
  %v691 = vadd.f32 0.0, %v690
  %v692 = vpop.f32.mrb[0].mxu0
  %v693 = vpop.f32.mrb[0].mxu0
  %v694 = vadd.f32 0.0, %v693
  %v695 = vpop.f32.mrb[0].mxu0
  %696 = vmatprep.mubr.bf16.mxu0 %v334
  %697 = vmatmul.mubr.bf16.gmra.mrb[0].mxu0 %v333
  %v698 = vpop.f32.mrb[0].mxu0
  %v699 = vadd.f32 0.0, %v698
  %v700 = vpop.f32.mrb[0].mxu0
  %v701 = vpop.f32.mrb[0].mxu0
  %v702 = vadd.f32 0.0, %v701
  %v703 = vpop.f32.mrb[0].mxu0
  %704 = vmatprep.mubr.bf16.mxu0 %v339
  %705 = vmatmul.mubr.bf16.gmra.mrb[0].mxu0 %v338
  %v706 = vpop.f32.mrb[0].mxu0
  %v707 = vadd.f32 0.0, %v706
  %v708 = vpop.f32.mrb[0].mxu0
  %v709 = vpop.f32.mrb[0].mxu0
  %v710 = vadd.f32 0.0, %v709
  %v711 = vpop.f32.mrb[0].mxu0
  %712 = vdwg.mxu0
  %713 = vmatprep.subr.bf16.mxu0 0
  %714 = vmatpush1.bf16.msra.mxu0 %v535
  %715 = vmatprep.subr.bf16.mxu0 0
  %716 = vmatpush1.bf16.msra.mxu0 %v536
  %717 = vmatprep.subr.bf16.mxu0 0
  %718 = vmatpush1.bf16.msra.mxu0 %v537
  %719 = vmatprep.subr.bf16.mxu0 0
  %720 = vmatpush1.bf16.msra.mxu0 %v538
  %721 = vmatprep.subr.bf16.mxu0 0
  %722 = vmatpush1.bf16.msra.mxu0 %v539
  %723 = vmatprep.subr.bf16.mxu0 0
  %724 = vmatpush1.bf16.msra.mxu0 %v540
  %725 = vmatprep.subr.bf16.mxu0 0
  %726 = vmatpush1.bf16.msra.mxu0 %v541
  %727 = vmatprep.subr.bf16.mxu0 0
  %728 = vmatpush1.bf16.msra.mxu0 %v542
  %729 = vmatprep.subr.bf16.mxu0 0
  %730 = vmatpush1.bf16.msra.mxu0 %v543
  %731 = vmatprep.subr.bf16.mxu0 0
  %732 = vmatpush1.bf16.msra.mxu0 %v544
  %733 = vmatprep.subr.bf16.mxu0 0
  %734 = vmatpush1.bf16.msra.mxu0 %v545
  %735 = vmatprep.subr.bf16.mxu0 0
  %736 = vmatpush1.bf16.msra.mxu0 %v546
  %737 = vmatprep.subr.bf16.mxu0 0
  %738 = vmatpush1.bf16.msra.mxu0 %v547
  %739 = vmatprep.subr.bf16.mxu0 0
  %740 = vmatpush1.bf16.msra.mxu0 %v548
  %741 = vmatprep.subr.bf16.mxu0 0
  %742 = vmatpush1.bf16.msra.mxu0 %v549
  %743 = vmatprep.subr.bf16.mxu0 0
  %744 = vmatpush1.bf16.msra.mxu0 %v550
  %745 = vmatprep.mubr.bf16.mxu0 %v306
  %746 = vmatmul.mubr.bf16.gmra.mrb[0].mxu0 %v305
  %v747 = vpop.f32.mrb[0].mxu0
  %v748 = vadd.f32 %v651, %v747
  %v749 = vpop.f32.mrb[0].mxu0
  %v750 = vpop.f32.mrb[0].mxu0
  %v751 = vadd.f32 %v654, %v750
  %v752 = vpop.f32.mrb[0].mxu0
  %753 = vmatprep.mubr.bf16.mxu0 %v311
  %754 = vmatmul.mubr.bf16.gmra.mrb[0].mxu0 %v310
  %v755 = vpop.f32.mrb[0].mxu0
  %v756 = vadd.f32 %v659, %v755
  %v757 = vpop.f32.mrb[0].mxu0
  %v758 = vpop.f32.mrb[0].mxu0
  %v759 = vadd.f32 %v662, %v758
  %v760 = vpop.f32.mrb[0].mxu0
  %761 = vmatprep.mubr.bf16.mxu0 %v316
  %762 = vmatmul.mubr.bf16.gmra.mrb[0].mxu0 %v315
  %v763 = vpop.f32.mrb[0].mxu0
  %v764 = vadd.f32 %v667, %v763
  %v765 = vpop.f32.mrb[0].mxu0
  %v766 = vpop.f32.mrb[0].mxu0
  %v767 = vadd.f32 %v670, %v766
  %v768 = vpop.f32.mrb[0].mxu0
  %769 = vmatprep.mubr.bf16.mxu0 %v321
  %770 = vmatmul.mubr.bf16.gmra.mrb[0].mxu0 %v320
  %v771 = vpop.f32.mrb[0].mxu0
  %v772 = vadd.f32 %v675, %v771
  %v773 = vpop.f32.mrb[0].mxu0
  %v774 = vpop.f32.mrb[0].mxu0
  %v775 = vadd.f32 %v678, %v774
  %v776 = vpop.f32.mrb[0].mxu0
  %777 = vmatprep.mubr.bf16.mxu0 %v326
  %778 = vmatmul.mubr.bf16.gmra.mrb[0].mxu0 %v325
  %v779 = vpop.f32.mrb[0].mxu0
  %v780 = vadd.f32 %v683, %v779
  %v781 = vpop.f32.mrb[0].mxu0
  %v782 = vpop.f32.mrb[0].mxu0
  %v783 = vadd.f32 %v686, %v782
  %v784 = vpop.f32.mrb[0].mxu0
  %785 = vmatprep.mubr.bf16.mxu0 %v331
  %786 = vmatmul.mubr.bf16.gmra.mrb[0].mxu0 %v330
  %v787 = vpop.f32.mrb[0].mxu0
  %v788 = vadd.f32 %v691, %v787
  %v789 = vpop.f32.mrb[0].mxu0
  %v790 = vpop.f32.mrb[0].mxu0
  %v791 = vadd.f32 %v694, %v790
  %v792 = vpop.f32.mrb[0].mxu0
  %793 = vmatprep.mubr.bf16.mxu0 %v336
  %794 = vmatmul.mubr.bf16.gmra.mrb[0].mxu0 %v335
  %v795 = vpop.f32.mrb[0].mxu0
  %v796 = vadd.f32 %v699, %v795
  %v797 = vpop.f32.mrb[0].mxu0
  %v798 = vpop.f32.mrb[0].mxu0
  %v799 = vadd.f32 %v702, %v798
  %v800 = vpop.f32.mrb[0].mxu0
  %801 = vmatprep.mubr.bf16.mxu0 %v341
  %802 = vmatmul.mubr.bf16.gmra.mrb[0].mxu0 %v340
  %v803 = vpop.f32.mrb[0].mxu0
  %v804 = vadd.f32 %v707, %v803
  %v805 = vpop.f32.mrb[0].mxu0
  %v806 = vpop.f32.mrb[0].mxu0
  %v807 = vadd.f32 %v710, %v806
  %v808 = vpop.f32.mrb[0].mxu0
  %809 = vdwg.mxu0
  %810 = vmatprep.subr.bf16.mxu0 0
  %811 = vmatpush1.bf16.msra.mxu0 %v551
  %812 = vmatprep.subr.bf16.mxu0 0
  %813 = vmatpush1.bf16.msra.mxu0 %v552
  %814 = vmatprep.subr.bf16.mxu0 0
  %815 = vmatpush1.bf16.msra.mxu0 %v553
  %816 = vmatprep.subr.bf16.mxu0 0
  %817 = vmatpush1.bf16.msra.mxu0 %v554
  %818 = vmatprep.subr.bf16.mxu0 0
  %819 = vmatpush1.bf16.msra.mxu0 0
  %820 = vmatprep.subr.bf16.mxu0 0
  %821 = vmatpush1.bf16.msra.mxu0 0
  %822 = vmatprep.subr.bf16.mxu0 0
  %823 = vmatpush1.bf16.msra.mxu0 0
  %824 = vmatprep.subr.bf16.mxu0 0
  %825 = vmatpush1.bf16.msra.mxu0 0
  %826 = vmatprep.subr.bf16.mxu0 0
  %827 = vmatpush1.bf16.msra.mxu0 0
  %828 = vmatprep.subr.bf16.mxu0 0
  %829 = vmatpush1.bf16.msra.mxu0 0
  %830 = vmatprep.subr.bf16.mxu0 0
  %831 = vmatpush1.bf16.msra.mxu0 0
  %832 = vmatprep.subr.bf16.mxu0 0
  %833 = vmatpush1.bf16.msra.mxu0 0
  %834 = vmatprep.subr.bf16.mxu0 0
  %835 = vmatpush1.bf16.msra.mxu0 0
  %836 = vmatprep.subr.bf16.mxu0 0
  %837 = vmatpush1.bf16.msra.mxu0 0
  %838 = vmatprep.subr.bf16.mxu0 0
  %839 = vmatpush1.bf16.msra.mxu0 0
  %840 = vmatprep.subr.bf16.mxu0 0
  %841 = vmatpush1.bf16.msra.mxu0 0
  %842 = vmatprep.mubr.bf16.mxu0 0
  %843 = vmatmul.mubr.bf16.gmra.mrb[0].mxu0 %v593
  %v844 = vpop.f32.mrb[0].mxu0
  %v845 = vadd.f32 %v748, %v844
  %v846 = vpop.f32.mrb[0].mxu0
  %v847 = vpop.f32.mrb[0].mxu0
  %v848 = vadd.f32 %v751, %v847
  %v849 = vpop.f32.mrb[0].mxu0
  %850 = vmatprep.mubr.bf16.mxu0 0
  %851 = vmatmul.mubr.bf16.gmra.mrb[0].mxu0 %v596
  %v852 = vpop.f32.mrb[0].mxu0
  %v853 = vadd.f32 %v756, %v852
  %v854 = vpop.f32.mrb[0].mxu0
  %v855 = vpop.f32.mrb[0].mxu0
  %v856 = vadd.f32 %v759, %v855
  %v857 = vpop.f32.mrb[0].mxu0
  %858 = vmatprep.mubr.bf16.mxu0 0
  %859 = vmatmul.mubr.bf16.gmra.mrb[0].mxu0 %v599
  %v860 = vpop.f32.mrb[0].mxu0
  %v861 = vadd.f32 %v764, %v860
  %v862 = vpop.f32.mrb[0].mxu0
  %v863 = vpop.f32.mrb[0].mxu0
  %v864 = vadd.f32 %v767, %v863
  %v865 = vpop.f32.mrb[0].mxu0
  %866 = vmatprep.mubr.bf16.mxu0 0
  %867 = vmatmul.mubr.bf16.gmra.mrb[0].mxu0 %v602
  %v868 = vpop.f32.mrb[0].mxu0
  %v869 = vadd.f32 %v772, %v868
  %v870 = vpop.f32.mrb[0].mxu0
  %v871 = vpop.f32.mrb[0].mxu0
  %v872 = vadd.f32 %v775, %v871
  %v873 = vpop.f32.mrb[0].mxu0
  %874 = vmatprep.mubr.bf16.mxu0 0
  %875 = vmatmul.mubr.bf16.gmra.mrb[0].mxu0 %v605
  %v876 = vpop.f32.mrb[0].mxu0
  %v877 = vadd.f32 %v780, %v876
  %v878 = vpop.f32.mrb[0].mxu0
  %v879 = vpop.f32.mrb[0].mxu0
  %v880 = vadd.f32 %v783, %v879
  %v881 = vpop.f32.mrb[0].mxu0
  %882 = vmatprep.mubr.bf16.mxu0 0
  %883 = vmatmul.mubr.bf16.gmra.mrb[0].mxu0 %v608
  %v884 = vpop.f32.mrb[0].mxu0
  %v885 = vadd.f32 %v788, %v884
  %v886 = vpop.f32.mrb[0].mxu0
  %v887 = vpop.f32.mrb[0].mxu0
  %v888 = vadd.f32 %v791, %v887
  %v889 = vpop.f32.mrb[0].mxu0
  %890 = vmatprep.mubr.bf16.mxu0 0
  %891 = vmatmul.mubr.bf16.gmra.mrb[0].mxu0 %v611
  %v892 = vpop.f32.mrb[0].mxu0
  %v893 = vadd.f32 %v796, %v892
  %v894 = vpop.f32.mrb[0].mxu0
  %v895 = vpop.f32.mrb[0].mxu0
  %v896 = vadd.f32 %v799, %v895
  %v897 = vpop.f32.mrb[0].mxu0
  %898 = vmatprep.mubr.bf16.mxu0 0
  %899 = vmatmul.mubr.bf16.gmra.mrb[0].mxu0 %v614
  %v900 = vpop.f32.mrb[0].mxu0
  %v901 = vadd.f32 %v804, %v900
  %v902 = vpop.f32.mrb[0].mxu0
  %v903 = vpop.f32.mrb[0].mxu0
  %v904 = vadd.f32 %v807, %v903
  %v905 = vpop.f32.mrb[0].mxu0
  %906 = vdwg.mxu0
  %v907 = vadd.f32 %v39, %v845
  %v908 = vadd.f32 %v40, %v848
  %v909 = vadd.f32 %v41, %v853
  %v910 = vadd.f32 %v42, %v856
  %v911 = vadd.f32 %v43, %v861
  %v912 = vadd.f32 %v44, %v864
  %v913 = vadd.f32 %v45, %v869
  %v914 = vadd.f32 %v46, %v872
  %v915 = vadd.f32 %v47, %v877
  %v916 = vadd.f32 %v48, %v880
  %v917 = vadd.f32 %v49, %v885
  %v918 = vadd.f32 %v50, %v888
  %v919 = vadd.f32 %v51, %v893
  %v920 = vadd.f32 %v52, %v896
  %v921 = vadd.f32 %v53, %v901
  %v922 = vadd.f32 %v54, %v904
  %923 = vst.msk [vmem:[#allocation2] sm:$0xff] %vm591, %v907
  %924 = vst.msk [vmem:[#allocation2 + $0x8] sm:$0xff] %vm591, %v908
  %925 = vst.msk [vmem:[#allocation2 + $0x10] sm:$0xff] %vm591, %v909
  %926 = vst.msk [vmem:[#allocation2 + $0x18] sm:$0xff] %vm591, %v910
  %927 = vst.msk [vmem:[#allocation2 + $0x20] sm:$0xff] %vm591, %v911
  %928 = vst.msk [vmem:[#allocation2 + $0x28] sm:$0xff] %vm591, %v912
  %929 = vst.msk [vmem:[#allocation2 + $0x30] sm:$0xff] %vm591, %v913
  %930 = vst.msk [vmem:[#allocation2 + $0x38] sm:$0xff] %vm591, %v914
  %931 = vst.msk [vmem:[#allocation2 + $0x40] sm:$0xff] %vm591, %v915
  %932 = vst.msk [vmem:[#allocation2 + $0x48] sm:$0xff] %vm591, %v916
  %933 = vst.msk [vmem:[#allocation2 + $0x50] sm:$0xff] %vm591, %v917
  %934 = vst.msk [vmem:[#allocation2 + $0x58] sm:$0xff] %vm591, %v918
  %935 = vst.msk [vmem:[#allocation2 + $0x60] sm:$0xff] %vm591, %v919
  %936 = vst.msk [vmem:[#allocation2 + $0x68] sm:$0xff] %vm591, %v920
  %937 = vst.msk [vmem:[#allocation2 + $0x70] sm:$0xff] %vm591, %v921
  %938 = vst.msk [vmem:[#allocation2 + $0x78] sm:$0xff] %vm591, %v922
  // Predicated region
  $region22: #{_lambda_.16} parent=0 // pred_check
    %p939 = pneg %p18
  $region23: #{_lambda_.16} parent=0 // pred_check_branch
    %941 = sbr.rel (%p939) target = $region25
  $region24: #{_lambda_.16} parent=0 // pred_region
    %v942 = vld [vmem:[#allocation2] sm:$0xff]
    %v943 = vld [vmem:[#allocation2 + $0x8] sm:$0xff]
    %v944 = vld [vmem:[#allocation2 + $0x10] sm:$0xff]
    %v945 = vld [vmem:[#allocation2 + $0x18] sm:$0xff]
    %v946 = vld [vmem:[#allocation2 + $0x20] sm:$0xff]
    %v947 = vld [vmem:[#allocation2 + $0x28] sm:$0xff]
    %v948 = vld [vmem:[#allocation2 + $0x30] sm:$0xff]
    %v949 = vld [vmem:[#allocation2 + $0x38] sm:$0xff]
    %v950 = vld [vmem:[#allocation2 + $0x40] sm:$0xff]
    %v951 = vld [vmem:[#allocation2 + $0x48] sm:$0xff]
    %v952 = vld [vmem:[#allocation2 + $0x50] sm:$0xff]
    %v953 = vld [vmem:[#allocation2 + $0x58] sm:$0xff]
    %v954 = vld [vmem:[#allocation2 + $0x60] sm:$0xff]
    %v955 = vld [vmem:[#allocation2 + $0x68] sm:$0xff]
    %v956 = vld [vmem:[#allocation2 + $0x70] sm:$0xff]
    %v957 = vld [vmem:[#allocation2 + $0x78] sm:$0xff]
    %v958 = vld [vmem:[%s2] sm:$0x1]
    %v960 = vlaneseq
    %v961 = vshrl.u32 %v960, 7
    %v962 = vsub.s32 0, %v961
    %v963 = vrot.slane %v958, %v962
    %v965 = vadd.f32 %v942, %v963
    %v966 = vadd.f32 %v943, %v963
    %v967 = vadd.f32 %v944, %v963
    %v968 = vadd.f32 %v945, %v963
    %v969 = vadd.f32 %v946, %v963
    %v970 = vadd.f32 %v947, %v963
    %v971 = vadd.f32 %v948, %v963
    %v972 = vadd.f32 %v949, %v963
    %v973 = vadd.f32 %v950, %v963
    %v974 = vadd.f32 %v951, %v963
    %v975 = vadd.f32 %v952, %v963
    %v976 = vadd.f32 %v953, %v963
    %v977 = vadd.f32 %v954, %v963
    %v978 = vadd.f32 %v955, %v963
    %v979 = vadd.f32 %v956, %v963
    %v980 = vadd.f32 %v957, %v963
    %v981 = vld [vmem:[%s3] sm:$0xf]
    %v982 = vld [vmem:[%s3 + $0x4] sm:$0xf]
    %v983 = vld [vmem:[%s3 + $0x8] sm:$0xf]
    %v984 = vld [vmem:[%s3 + $0xc] sm:$0xf]
    %v985 = vld [vmem:[%s3 + $0x10] sm:$0xf]
    %v986 = vld [vmem:[%s3 + $0x14] sm:$0xf]
    %v987 = vld [vmem:[%s3 + $0x18] sm:$0xf]
    %v988 = vld [vmem:[%s3 + $0x1c] sm:$0xf]
    %v989 = vld [vmem:[%s3 + $0x20] sm:$0xf]
    %v990 = vld [vmem:[%s3 + $0x24] sm:$0xf]
    %v991 = vld [vmem:[%s3 + $0x28] sm:$0xf]
    %v992 = vld [vmem:[%s3 + $0x2c] sm:$0xf]
    %v993 = vld [vmem:[%s3 + $0x30] sm:$0xf]
    %v994 = vld [vmem:[%s3 + $0x34] sm:$0xf]
    %v995 = vld [vmem:[%s3 + $0x38] sm:$0xf]
    %v996 = vld [vmem:[%s3 + $0x3c] sm:$0xf]
    %v997 = vunpack.c.l.bf16 %v981
    %v998 = vunpack.c.l.bf16 %v982
    %v999 = vunpack.c.l.bf16 %v983
    %v1000 = vunpack.c.l.bf16 %v984
    %v1001 = vunpack.c.l.bf16 %v985
    %v1002 = vunpack.c.l.bf16 %v986
    %v1003 = vunpack.c.l.bf16 %v987
    %v1004 = vunpack.c.l.bf16 %v988
    %v1005 = vunpack.c.l.bf16 %v989
    %v1006 = vunpack.c.l.bf16 %v990
    %v1007 = vunpack.c.l.bf16 %v991
    %v1008 = vunpack.c.l.bf16 %v992
    %v1009 = vunpack.c.l.bf16 %v993
    %v1010 = vunpack.c.l.bf16 %v994
    %v1011 = vunpack.c.l.bf16 %v995
    %v1012 = vunpack.c.l.bf16 %v996
    %v1013 = vadd.f32 %v965, %v997
    %v1014 = vadd.f32 %v966, %v998
    %v1015 = vadd.f32 %v967, %v999
    %v1016 = vadd.f32 %v968, %v1000
    %v1017 = vadd.f32 %v969, %v1001
    %v1018 = vadd.f32 %v970, %v1002
    %v1019 = vadd.f32 %v971, %v1003
    %v1020 = vadd.f32 %v972, %v1004
    %v1021 = vadd.f32 %v973, %v1005
    %v1022 = vadd.f32 %v974, %v1006
    %v1023 = vadd.f32 %v975, %v1007
    %v1024 = vadd.f32 %v976, %v1008
    %v1025 = vadd.f32 %v977, %v1009
    %v1026 = vadd.f32 %v978, %v1010
    %v1027 = vadd.f32 %v979, %v1011
    %v1028 = vadd.f32 %v980, %v1012
    %v1029 = vmax.f32 %v1013, 0.0
    %v1030 = vmax.f32 %v1014, 0.0
    %v1031 = vmax.f32 %v1015, 0.0
    %v1032 = vmax.f32 %v1016, 0.0
    %v1033 = vmax.f32 %v1017, 0.0
    %v1034 = vmax.f32 %v1018, 0.0
    %v1035 = vmax.f32 %v1019, 0.0
    %v1036 = vmax.f32 %v1020, 0.0
    %v1037 = vmax.f32 %v1021, 0.0
    %v1038 = vmax.f32 %v1022, 0.0
    %v1039 = vmax.f32 %v1023, 0.0
    %v1040 = vmax.f32 %v1024, 0.0
    %v1041 = vmax.f32 %v1025, 0.0
    %v1042 = vmax.f32 %v1026, 0.0
    %v1043 = vmax.f32 %v1027, 0.0
    %v1044 = vmax.f32 %v1028, 0.0
    %v1045 = vpack.c.bf16 %v1030, %v1029
    %v1046 = vpack.c.bf16 %v1032, %v1031
    %v1047 = vpack.c.bf16 %v1034, %v1033
    %v1048 = vpack.c.bf16 %v1036, %v1035
    %v1049 = vpack.c.bf16 %v1038, %v1037
    %v1050 = vpack.c.bf16 %v1040, %v1039
    %v1051 = vpack.c.bf16 %v1042, %v1041
    %v1052 = vpack.c.bf16 %v1044, %v1043
    %v1061 = vunpack.c.l.b16 %v1045
    %v1062 = vunpack.c.h.b16 %v1045
    %v1063 = vunpack.c.l.b16 %v1046
    %v1064 = vunpack.c.h.b16 %v1046
    %v1065 = vunpack.c.l.b16 %v1047
    %v1066 = vunpack.c.h.b16 %v1047
    %v1067 = vunpack.c.l.b16 %v1048
    %v1068 = vunpack.c.h.b16 %v1048
    %v1069 = vunpack.c.l.b16 %v1049
    %v1070 = vunpack.c.h.b16 %v1049
    %v1071 = vunpack.c.l.b16 %v1050
    %v1072 = vunpack.c.h.b16 %v1050
    %v1073 = vunpack.c.l.b16 %v1051
    %v1074 = vunpack.c.h.b16 %v1051
    %v1075 = vunpack.c.l.b16 %v1052
    %v1076 = vunpack.c.h.b16 %v1052
    %v1077 = vpack.c.b16 %v1061, %v1061
    %v1078 = vpack.c.b16 %v1062, %v1062
    %v1079 = vpack.c.b16 %v1063, %v1063
    %v1080 = vpack.c.b16 %v1064, %v1064
    %v1081 = vpack.c.b16 %v1065, %v1065
    %v1082 = vpack.c.b16 %v1066, %v1066
    %v1083 = vpack.c.b16 %v1067, %v1067
    %v1084 = vpack.c.b16 %v1068, %v1068
    %v1085 = vpack.c.b16 %v1069, %v1069
    %v1086 = vpack.c.b16 %v1070, %v1070
    %v1087 = vpack.c.b16 %v1071, %v1071
    %v1088 = vpack.c.b16 %v1072, %v1072
    %v1089 = vpack.c.b16 %v1073, %v1073
    %v1090 = vpack.c.b16 %v1074, %v1074
    %v1091 = vpack.c.b16 %v1075, %v1075
    %v1092 = vpack.c.b16 %v1076, %v1076
    %vm1109 = vcmask 519168
    %1110 = vst.msk [vmem:[%s4] sm:$0xf] %vm1109, %v1077
    %1111 = vst.msk [vmem:[%s4 + $0x4] sm:$0xf] %vm1109, %v1078
    %1112 = vst.msk [vmem:[%s4 + $0x8] sm:$0xf] %vm1109, %v1079
    %1113 = vst.msk [vmem:[%s4 + $0xc] sm:$0xf] %vm1109, %v1080
    %1114 = vst.msk [vmem:[%s4 + $0x10] sm:$0xf] %vm1109, %v1081
    %1115 = vst.msk [vmem:[%s4 + $0x14] sm:$0xf] %vm1109, %v1082
    %1116 = vst.msk [vmem:[%s4 + $0x18] sm:$0xf] %vm1109, %v1083
    %1117 = vst.msk [vmem:[%s4 + $0x1c] sm:$0xf] %vm1109, %v1084
    %1118 = vst.msk [vmem:[%s4 + $0x20] sm:$0xf] %vm1109, %v1085
    %1119 = vst.msk [vmem:[%s4 + $0x24] sm:$0xf] %vm1109, %v1086
    %1120 = vst.msk [vmem:[%s4 + $0x28] sm:$0xf] %vm1109, %v1087
    %1121 = vst.msk [vmem:[%s4 + $0x2c] sm:$0xf] %vm1109, %v1088
    %1122 = vst.msk [vmem:[%s4 + $0x30] sm:$0xf] %vm1109, %v1089
    %1123 = vst.msk [vmem:[%s4 + $0x34] sm:$0xf] %vm1109, %v1090
    %1124 = vst.msk [vmem:[%s4 + $0x38] sm:$0xf] %vm1109, %v1091
    %1125 = vst.msk [vmem:[%s4 + $0x3c] sm:$0xf] %vm1109, %v1092
  $region25: #{_lambda_.16} parent=0 // pred_fallthru
    _
  // Predicated region
  $region26: #{_lambda_.16} parent=0 // pred_check
    _
  $region27: #{_lambda_.16} parent=0 // pred_check_branch
    %1127 = sbr.rel (0) target = $region29
  $region28: #{_lambda_.16} parent=0 // pred_region
    _
  $region29: #{_lambda_.16} parent=0 // pred_fallthru
    _
  // Predicated region
  $region30: #{_lambda_.16} parent=0 // pred_check
    _
  $region31: #{_lambda_.16} parent=0 // pred_check_branch
    %1129 = sbr.rel (0) target = $region33
  $region32: #{_lambda_.16} parent=0 // pred_region
    _
  $region33: #{_lambda_.16} parent=0 // pred_fallthru
    _

// kernel: _lambda_.18
$region0: #{_lambda_.18}
  #allocation0 [shape = 'u32[]', space=smem, size = 0x4, offset = 0x4, fixed_abs, tag = 'smem constant byte address 0x4 - core index']
  #allocation1 [shape = 'u32[144,128]{1,0:T(1,128)}', space=vmem, size = 0x12000, scoped, tag = 'internal scratch']
  #allocation2 [shape = 'f32[32,128]{1,0:T(8,128)}', space=vmem, size = 0x4000, scoped, tag = 'scratch operand']
  %s0 = inlined_call_operand.vmem [shape: bf16[32,576], index: 0, kind: input, shape index: {}]
  %s1 = inlined_call_operand.vmem [shape: bf16[576,128], index: 1, kind: input, shape index: {}]
  %s2 = inlined_call_operand.vmem [shape: f32[1,128], index: 2, kind: input, shape index: {}]
  %s3 = inlined_call_operand.vmem [shape: bf16[32,128], index: 3, kind: output, shape index: {}]
  %s4 = sld [smem:[#allocation0]]
  $region30: #{_lambda_.18} parent=0
    _
  %s6 = ssub.s32 1, %s4
  %s7 = scalar_select 0, %s6, %s4
  // Predicated region
  $region2: #{_lambda_.18} parent=0 // pred_check
    _
  $region3: #{_lambda_.18} parent=0 // pred_check_branch
    %9 = sbr.rel (0) target = $region5
  $region4: #{_lambda_.18} parent=0 // pred_region
    _
  $region5: #{_lambda_.18} parent=0 // pred_fallthru
    _
  // Predicated region
  $region6: #{_lambda_.18} parent=0 // pred_check
    _
  $region7: #{_lambda_.18} parent=0 // pred_check_branch
    %11 = sbr.rel (0) target = $region9
  $region8: #{_lambda_.18} parent=0 // pred_region
    _
  $region9: #{_lambda_.18} parent=0 // pred_fallthru
    _
  // Predicated region
  $region10: #{_lambda_.18} parent=0 // pred_check
    _
  $region11: #{_lambda_.18} parent=0 // pred_check_branch
    %13 = sbr.rel (0) target = $region13
  $region12: #{_lambda_.18} parent=0 // pred_region
    _
  $region13: #{_lambda_.18} parent=0 // pred_fallthru
    _
  %p15 = scmp.eq.s32.totalorder 0, 0
  // Predicated region
  $region14: #{_lambda_.18} parent=0 // pred_check
    %p16 = pneg %p15
  $region15: #{_lambda_.18} parent=0 // pred_check_branch
    %18 = sbr.rel (%p16) target = $region17
  $region16: #{_lambda_.18} parent=0 // pred_region
    %19 = vst [vmem:[#allocation2] sm:$0xff] 0.0
    %20 = vst [vmem:[#allocation2 + $0x8] sm:$0xff] 0.0
    %21 = vst [vmem:[#allocation2 + $0x10] sm:$0xff] 0.0
    %22 = vst [vmem:[#allocation2 + $0x18] sm:$0xff] 0.0
  $region17: #{_lambda_.18} parent=0 // pred_fallthru
    _
  %v23 = vld [vmem:[#allocation2] sm:$0xff]
  %v24 = vld [vmem:[#allocation2 + $0x8] sm:$0xff]
  %v25 = vld [vmem:[#allocation2 + $0x10] sm:$0xff]
  %v26 = vld [vmem:[#allocation2 + $0x18] sm:$0xff]
  %v27 = vld [vmem:[%s0] sm:$0xff]
  %v28 = vld [vmem:[%s0 + $0x8] sm:$0xff]
  %v29 = vld [vmem:[%s0 + $0x10] sm:$0xf]
  %v30 = vld [vmem:[%s0 + $0x14] sm:$0xff]
  %v31 = vld [vmem:[%s0 + $0x1c] sm:$0xff]
  %v32 = vld [vmem:[%s0 + $0x24] sm:$0xf]
  %v33 = vld [vmem:[%s0 + $0x28] sm:$0xff]
  %v34 = vld [vmem:[%s0 + $0x30] sm:$0xff]
  %v35 = vld [vmem:[%s0 + $0x38] sm:$0xf]
  %v36 = vld [vmem:[%s0 + $0x3c] sm:$0xff]
  %v37 = vld [vmem:[%s0 + $0x44] sm:$0xff]
  %v38 = vld [vmem:[%s0 + $0x4c] sm:$0xf]
  %v39 = vld [vmem:[%s1] sm:$0xf]
  %v40 = vld [vmem:[%s1 + $0x4] sm:$0xf]
  %v41 = vld [vmem:[%s1 + $0x8] sm:$0xf]
  %v42 = vld [vmem:[%s1 + $0xc] sm:$0xf]
  %v43 = vld [vmem:[%s1 + $0x10] sm:$0xf]
  %v44 = vld [vmem:[%s1 + $0x14] sm:$0xf]
  %v45 = vld [vmem:[%s1 + $0x18] sm:$0xf]
  %v46 = vld [vmem:[%s1 + $0x1c] sm:$0xf]
  %v47 = vld [vmem:[%s1 + $0x20] sm:$0xf]
  %v48 = vld [vmem:[%s1 + $0x24] sm:$0xf]
  %v49 = vld [vmem:[%s1 + $0x28] sm:$0xf]
  %v50 = vld [vmem:[%s1 + $0x2c] sm:$0xf]
  %v51 = vld [vmem:[%s1 + $0x30] sm:$0xf]
  %v52 = vld [vmem:[%s1 + $0x34] sm:$0xf]
  %v53 = vld [vmem:[%s1 + $0x38] sm:$0xf]
  %v54 = vld [vmem:[%s1 + $0x3c] sm:$0xf]
  %v55 = vld [vmem:[%s1 + $0x40] sm:$0xf]
  %v56 = vld [vmem:[%s1 + $0x44] sm:$0xf]
  %v57 = vld [vmem:[%s1 + $0x48] sm:$0xf]
  %v58 = vld [vmem:[%s1 + $0x4c] sm:$0xf]
  %v59 = vld [vmem:[%s1 + $0x50] sm:$0xf]
  %v60 = vld [vmem:[%s1 + $0x54] sm:$0xf]
  %v61 = vld [vmem:[%s1 + $0x58] sm:$0xf]
  %v62 = vld [vmem:[%s1 + $0x5c] sm:$0xf]
  %v63 = vld [vmem:[%s1 + $0x60] sm:$0xf]
  %v64 = vld [vmem:[%s1 + $0x64] sm:$0xf]
  %v65 = vld [vmem:[%s1 + $0x68] sm:$0xf]
  %v66 = vld [vmem:[%s1 + $0x6c] sm:$0xf]
  %v67 = vld [vmem:[%s1 + $0x70] sm:$0xf]
  %v68 = vld [vmem:[%s1 + $0x74] sm:$0xf]
  %v69 = vld [vmem:[%s1 + $0x78] sm:$0xf]
  %v70 = vld [vmem:[%s1 + $0x7c] sm:$0xf]
  %v71 = vld [vmem:[%s1 + $0x80] sm:$0xf]
  %v72 = vld [vmem:[%s1 + $0x84] sm:$0xf]
  %v73 = vld [vmem:[%s1 + $0x88] sm:$0xf]
  %v74 = vld [vmem:[%s1 + $0x8c] sm:$0xf]
  %v75 = vld [vmem:[%s1 + $0x90] sm:$0xf]
  %v76 = vld [vmem:[%s1 + $0x94] sm:$0xf]
  %v77 = vld [vmem:[%s1 + $0x98] sm:$0xf]
  %v78 = vld [vmem:[%s1 + $0x9c] sm:$0xf]
  %v79 = vld [vmem:[%s1 + $0xa0] sm:$0xf]
  %v80 = vld [vmem:[%s1 + $0xa4] sm:$0xf]
  %v81 = vld [vmem:[%s1 + $0xa8] sm:$0xf]
  %v82 = vld [vmem:[%s1 + $0xac] sm:$0xf]
  %v83 = vld [vmem:[%s1 + $0xb0] sm:$0xf]
  %v84 = vld [vmem:[%s1 + $0xb4] sm:$0xf]
  %v85 = vld [vmem:[%s1 + $0xb8] sm:$0xf]
  %v86 = vld [vmem:[%s1 + $0xbc] sm:$0xf]
  %v87 = vld [vmem:[%s1 + $0xc0] sm:$0xf]
  %v88 = vld [vmem:[%s1 + $0xc4] sm:$0xf]
  %v89 = vld [vmem:[%s1 + $0xc8] sm:$0xf]
  %v90 = vld [vmem:[%s1 + $0xcc] sm:$0xf]
  %v91 = vld [vmem:[%s1 + $0xd0] sm:$0xf]
  %v92 = vld [vmem:[%s1 + $0xd4] sm:$0xf]
  %v93 = vld [vmem:[%s1 + $0xd8] sm:$0xf]
  %v94 = vld [vmem:[%s1 + $0xdc] sm:$0xf]
  %v95 = vld [vmem:[%s1 + $0xe0] sm:$0xf]
  %v96 = vld [vmem:[%s1 + $0xe4] sm:$0xf]
  %v97 = vld [vmem:[%s1 + $0xe8] sm:$0xf]
  %v98 = vld [vmem:[%s1 + $0xec] sm:$0xf]
  %v99 = vld [vmem:[%s1 + $0xf0] sm:$0xf]
  %v100 = vld [vmem:[%s1 + $0xf4] sm:$0xf]
  %v101 = vld [vmem:[%s1 + $0xf8] sm:$0xf]
  %v102 = vld [vmem:[%s1 + $0xfc] sm:$0xf]
  %v103 = vld [vmem:[%s1 + $0x100] sm:$0xf]
  %v104 = vld [vmem:[%s1 + $0x104] sm:$0xf]
  %v105 = vld [vmem:[%s1 + $0x108] sm:$0xf]
  %v106 = vld [vmem:[%s1 + $0x10c] sm:$0xf]
  %v107 = vld [vmem:[%s1 + $0x110] sm:$0xf]
  %v108 = vld [vmem:[%s1 + $0x114] sm:$0xf]
  %v109 = vld [vmem:[%s1 + $0x118] sm:$0xf]
  %v110 = vld [vmem:[%s1 + $0x11c] sm:$0xf]
  %v123 = vunpack.c.l.b16 %v27
  %v124 = vunpack.c.h.b16 %v27
  %v125 = vunpack.c.l.b16 %v28
  %v126 = vunpack.c.h.b16 %v28
  %v127 = vunpack.c.l.b16 %v29
  %v128 = vunpack.c.l.b16 %v30
  %v129 = vunpack.c.h.b16 %v30
  %v130 = vunpack.c.l.b16 %v31
  %v131 = vunpack.c.h.b16 %v31
  %v132 = vunpack.c.l.b16 %v32
  %v133 = vunpack.c.l.b16 %v33
  %v134 = vunpack.c.h.b16 %v33
  %v135 = vunpack.c.l.b16 %v34
  %v136 = vunpack.c.h.b16 %v34
  %v137 = vunpack.c.l.b16 %v35
  %v138 = vunpack.c.l.b16 %v36
  %v139 = vunpack.c.h.b16 %v36
  %v140 = vunpack.c.l.b16 %v37
  %v141 = vunpack.c.h.b16 %v37
  %v142 = vunpack.c.l.b16 %v38
  %v143 = vpack.c.b16 %v128, %v123
  %v144 = vpack.c.b16 %v129, %v124
  %v145 = vpack.c.b16 %v130, %v125
  %v146 = vpack.c.b16 %v131, %v126
  %v147 = vpack.c.b16 %v132, %v127
  %v148 = vpack.c.b16 %v138, %v133
  %v149 = vpack.c.b16 %v139, %v134
  %v150 = vpack.c.b16 %v140, %v135
  %v151 = vpack.c.b16 %v141, %v136
  %v152 = vpack.c.b16 %v142, %v137
  %v233 = vunpack.c.l.b16 %v39
  %v234 = vunpack.c.l.b16 %v40
  %v235 = vunpack.c.l.b16 %v41
  %v236 = vunpack.c.l.b16 %v42
  %v237 = vunpack.c.l.b16 %v43
  %v238 = vunpack.c.l.b16 %v44
  %v239 = vunpack.c.l.b16 %v45
  %v240 = vunpack.c.l.b16 %v46
  %v241 = vunpack.c.l.b16 %v47
  %v242 = vunpack.c.l.b16 %v48
  %v243 = vunpack.c.l.b16 %v49
  %v244 = vunpack.c.l.b16 %v50
  %v245 = vunpack.c.l.b16 %v51
  %v246 = vunpack.c.l.b16 %v52
  %v247 = vunpack.c.l.b16 %v53
  %v248 = vunpack.c.l.b16 %v54
  %v249 = vunpack.c.l.b16 %v55
  %v250 = vunpack.c.l.b16 %v56
  %v251 = vunpack.c.l.b16 %v57
  %v252 = vunpack.c.l.b16 %v58
  %v253 = vunpack.c.l.b16 %v59
  %v254 = vunpack.c.l.b16 %v60
  %v255 = vunpack.c.l.b16 %v61
  %v256 = vunpack.c.l.b16 %v62
  %v257 = vunpack.c.l.b16 %v63
  %v258 = vunpack.c.l.b16 %v64
  %v259 = vunpack.c.l.b16 %v65
  %v260 = vunpack.c.l.b16 %v66
  %v261 = vunpack.c.l.b16 %v67
  %v262 = vunpack.c.l.b16 %v68
  %v263 = vunpack.c.l.b16 %v69
  %v264 = vunpack.c.l.b16 %v70
  %v265 = vunpack.c.l.b16 %v71
  %v266 = vunpack.c.l.b16 %v72
  %v267 = vunpack.c.l.b16 %v73
  %v268 = vunpack.c.l.b16 %v74
  %v269 = vunpack.c.l.b16 %v75
  %v270 = vunpack.c.l.b16 %v76
  %v271 = vunpack.c.l.b16 %v77
  %v272 = vunpack.c.l.b16 %v78
  %v273 = vunpack.c.l.b16 %v79
  %v274 = vunpack.c.l.b16 %v80
  %v275 = vunpack.c.l.b16 %v81
  %v276 = vunpack.c.l.b16 %v82
  %v277 = vunpack.c.l.b16 %v83
  %v278 = vunpack.c.l.b16 %v84
  %v279 = vunpack.c.l.b16 %v85
  %v280 = vunpack.c.l.b16 %v86
  %v281 = vunpack.c.l.b16 %v87
  %v282 = vunpack.c.l.b16 %v88
  %v283 = vunpack.c.l.b16 %v89
  %v284 = vunpack.c.l.b16 %v90
  %v285 = vunpack.c.l.b16 %v91
  %v286 = vunpack.c.l.b16 %v92
  %v287 = vunpack.c.l.b16 %v93
  %v288 = vunpack.c.l.b16 %v94
  %v289 = vunpack.c.l.b16 %v95
  %v290 = vunpack.c.l.b16 %v96
  %v291 = vunpack.c.l.b16 %v97
  %v292 = vunpack.c.l.b16 %v98
  %v293 = vunpack.c.l.b16 %v99
  %v294 = vunpack.c.l.b16 %v100
  %v295 = vunpack.c.l.b16 %v101
  %v296 = vunpack.c.l.b16 %v102
  %v297 = vunpack.c.l.b16 %v103
  %v298 = vunpack.c.l.b16 %v104
  %v299 = vunpack.c.l.b16 %v105
  %v300 = vunpack.c.l.b16 %v106
  %v301 = vunpack.c.l.b16 %v107
  %v302 = vunpack.c.l.b16 %v108
  %v303 = vunpack.c.l.b16 %v109
  %v304 = vunpack.c.l.b16 %v110
  %v305 = vpack.c.b16 %v234, %v233
  %v306 = vpack.c.b16 %v236, %v235
  %v307 = vpack.c.b16 %v238, %v237
  %v308 = vpack.c.b16 %v240, %v239
  %v309 = vpack.c.b16 %v242, %v241
  %v310 = vpack.c.b16 %v244, %v243
  %v311 = vpack.c.b16 %v246, %v245
  %v312 = vpack.c.b16 %v248, %v247
  %v313 = vpack.c.b16 %v250, %v249
  %v314 = vpack.c.b16 %v252, %v251
  %v315 = vpack.c.b16 %v254, %v253
  %v316 = vpack.c.b16 %v256, %v255
  %v317 = vpack.c.b16 %v258, %v257
  %v318 = vpack.c.b16 %v260, %v259
  %v319 = vpack.c.b16 %v262, %v261
  %v320 = vpack.c.b16 %v264, %v263
  %v321 = vpack.c.b16 %v266, %v265
  %v322 = vpack.c.b16 %v268, %v267
  %v323 = vpack.c.b16 %v270, %v269
  %v324 = vpack.c.b16 %v272, %v271
  %v325 = vpack.c.b16 %v274, %v273
  %v326 = vpack.c.b16 %v276, %v275
  %v327 = vpack.c.b16 %v278, %v277
  %v328 = vpack.c.b16 %v280, %v279
  %v329 = vpack.c.b16 %v282, %v281
  %v330 = vpack.c.b16 %v284, %v283
  %v331 = vpack.c.b16 %v286, %v285
  %v332 = vpack.c.b16 %v288, %v287
  %v333 = vpack.c.b16 %v290, %v289
  %v334 = vpack.c.b16 %v292, %v291
  %v335 = vpack.c.b16 %v294, %v293
  %v336 = vpack.c.b16 %v296, %v295
  %v337 = vpack.c.b16 %v298, %v297
  %v338 = vpack.c.b16 %v300, %v299
  %v339 = vpack.c.b16 %v302, %v301
  %v340 = vpack.c.b16 %v304, %v303
  %vm377 = vcmask 523264
  %v379 = vsel %vm377, %v147, 0
  %v382 = vsel %vm377, %v152, 0
  %384 = vmatprep.subr.bf16.mxu0 0
  %385 = vmatpush1.bf16.msra.mxu0 %v305
  %386 = vmatprep.subr.bf16.mxu0 0
  %387 = vmatpush1.bf16.msra.mxu0 %v306
  %388 = vmatprep.subr.bf16.mxu0 0
  %389 = vmatpush1.bf16.msra.mxu0 %v307
  %390 = vmatprep.subr.bf16.mxu0 0
  %391 = vmatpush1.bf16.msra.mxu0 %v308
  %392 = vmatprep.subr.bf16.mxu0 0
  %393 = vmatpush1.bf16.msra.mxu0 %v309
  %394 = vmatprep.subr.bf16.mxu0 0
  %395 = vmatpush1.bf16.msra.mxu0 %v310
  %396 = vmatprep.subr.bf16.mxu0 0
  %397 = vmatpush1.bf16.msra.mxu0 %v311
  %398 = vmatprep.subr.bf16.mxu0 0
  %399 = vmatpush1.bf16.msra.mxu0 %v312
  %400 = vmatprep.subr.bf16.mxu0 0
  %401 = vmatpush1.bf16.msra.mxu0 %v313
  %402 = vmatprep.subr.bf16.mxu0 0
  %403 = vmatpush1.bf16.msra.mxu0 %v314
  %404 = vmatprep.subr.bf16.mxu0 0
  %405 = vmatpush1.bf16.msra.mxu0 %v315
  %406 = vmatprep.subr.bf16.mxu0 0
  %407 = vmatpush1.bf16.msra.mxu0 %v316
  %408 = vmatprep.subr.bf16.mxu0 0
  %409 = vmatpush1.bf16.msra.mxu0 %v317
  %410 = vmatprep.subr.bf16.mxu0 0
  %411 = vmatpush1.bf16.msra.mxu0 %v318
  %412 = vmatprep.subr.bf16.mxu0 0
  %413 = vmatpush1.bf16.msra.mxu0 %v319
  %414 = vmatprep.subr.bf16.mxu0 0
  %415 = vmatpush1.bf16.msra.mxu0 %v320
  %416 = vmatprep.mubr.bf16.mxu0 %v144
  %417 = vmatmul.mubr.bf16.gmra.mrb[0].mxu0 %v143
  %v418 = vpop.f32.mrb[0].mxu0
  %v419 = vadd.f32 0.0, %v418
  %v420 = vpop.f32.mrb[0].mxu0
  %v421 = vpop.f32.mrb[0].mxu0
  %v422 = vadd.f32 0.0, %v421
  %v423 = vpop.f32.mrb[0].mxu0
  %424 = vmatprep.mubr.bf16.mxu0 %v149
  %425 = vmatmul.mubr.bf16.gmra.mrb[0].mxu0 %v148
  %v426 = vpop.f32.mrb[0].mxu0
  %v427 = vadd.f32 0.0, %v426
  %v428 = vpop.f32.mrb[0].mxu0
  %v429 = vpop.f32.mrb[0].mxu0
  %v430 = vadd.f32 0.0, %v429
  %v431 = vpop.f32.mrb[0].mxu0
  %432 = vdwg.mxu0
  %433 = vmatprep.subr.bf16.mxu0 0
  %434 = vmatpush1.bf16.msra.mxu0 %v321
  %435 = vmatprep.subr.bf16.mxu0 0
  %436 = vmatpush1.bf16.msra.mxu0 %v322
  %437 = vmatprep.subr.bf16.mxu0 0
  %438 = vmatpush1.bf16.msra.mxu0 %v323
  %439 = vmatprep.subr.bf16.mxu0 0
  %440 = vmatpush1.bf16.msra.mxu0 %v324
  %441 = vmatprep.subr.bf16.mxu0 0
  %442 = vmatpush1.bf16.msra.mxu0 %v325
  %443 = vmatprep.subr.bf16.mxu0 0
  %444 = vmatpush1.bf16.msra.mxu0 %v326
  %445 = vmatprep.subr.bf16.mxu0 0
  %446 = vmatpush1.bf16.msra.mxu0 %v327
  %447 = vmatprep.subr.bf16.mxu0 0
  %448 = vmatpush1.bf16.msra.mxu0 %v328
  %449 = vmatprep.subr.bf16.mxu0 0
  %450 = vmatpush1.bf16.msra.mxu0 %v329
  %451 = vmatprep.subr.bf16.mxu0 0
  %452 = vmatpush1.bf16.msra.mxu0 %v330
  %453 = vmatprep.subr.bf16.mxu0 0
  %454 = vmatpush1.bf16.msra.mxu0 %v331
  %455 = vmatprep.subr.bf16.mxu0 0
  %456 = vmatpush1.bf16.msra.mxu0 %v332
  %457 = vmatprep.subr.bf16.mxu0 0
  %458 = vmatpush1.bf16.msra.mxu0 %v333
  %459 = vmatprep.subr.bf16.mxu0 0
  %460 = vmatpush1.bf16.msra.mxu0 %v334
  %461 = vmatprep.subr.bf16.mxu0 0
  %462 = vmatpush1.bf16.msra.mxu0 %v335
  %463 = vmatprep.subr.bf16.mxu0 0
  %464 = vmatpush1.bf16.msra.mxu0 %v336
  %465 = vmatprep.mubr.bf16.mxu0 %v146
  %466 = vmatmul.mubr.bf16.gmra.mrb[0].mxu0 %v145
  %v467 = vpop.f32.mrb[0].mxu0
  %v468 = vadd.f32 %v419, %v467
  %v469 = vpop.f32.mrb[0].mxu0
  %v470 = vpop.f32.mrb[0].mxu0
  %v471 = vadd.f32 %v422, %v470
  %v472 = vpop.f32.mrb[0].mxu0
  %473 = vmatprep.mubr.bf16.mxu0 %v151
  %474 = vmatmul.mubr.bf16.gmra.mrb[0].mxu0 %v150
  %v475 = vpop.f32.mrb[0].mxu0
  %v476 = vadd.f32 %v427, %v475
  %v477 = vpop.f32.mrb[0].mxu0
  %v478 = vpop.f32.mrb[0].mxu0
  %v479 = vadd.f32 %v430, %v478
  %v480 = vpop.f32.mrb[0].mxu0
  %481 = vdwg.mxu0
  %482 = vmatprep.subr.bf16.mxu0 0
  %483 = vmatpush1.bf16.msra.mxu0 %v337
  %484 = vmatprep.subr.bf16.mxu0 0
  %485 = vmatpush1.bf16.msra.mxu0 %v338
  %486 = vmatprep.subr.bf16.mxu0 0
  %487 = vmatpush1.bf16.msra.mxu0 %v339
  %488 = vmatprep.subr.bf16.mxu0 0
  %489 = vmatpush1.bf16.msra.mxu0 %v340
  %490 = vmatprep.subr.bf16.mxu0 0
  %491 = vmatpush1.bf16.msra.mxu0 0
  %492 = vmatprep.subr.bf16.mxu0 0
  %493 = vmatpush1.bf16.msra.mxu0 0
  %494 = vmatprep.subr.bf16.mxu0 0
  %495 = vmatpush1.bf16.msra.mxu0 0
  %496 = vmatprep.subr.bf16.mxu0 0
  %497 = vmatpush1.bf16.msra.mxu0 0
  %498 = vmatprep.subr.bf16.mxu0 0
  %499 = vmatpush1.bf16.msra.mxu0 0
  %500 = vmatprep.subr.bf16.mxu0 0
  %501 = vmatpush1.bf16.msra.mxu0 0
  %502 = vmatprep.subr.bf16.mxu0 0
  %503 = vmatpush1.bf16.msra.mxu0 0
  %504 = vmatprep.subr.bf16.mxu0 0
  %505 = vmatpush1.bf16.msra.mxu0 0
  %506 = vmatprep.subr.bf16.mxu0 0
  %507 = vmatpush1.bf16.msra.mxu0 0
  %508 = vmatprep.subr.bf16.mxu0 0
  %509 = vmatpush1.bf16.msra.mxu0 0
  %510 = vmatprep.subr.bf16.mxu0 0
  %511 = vmatpush1.bf16.msra.mxu0 0
  %512 = vmatprep.subr.bf16.mxu0 0
  %513 = vmatpush1.bf16.msra.mxu0 0
  %514 = vmatprep.mubr.bf16.mxu0 0
  %515 = vmatmul.mubr.bf16.gmra.mrb[0].mxu0 %v379
  %v516 = vpop.f32.mrb[0].mxu0
  %v517 = vadd.f32 %v468, %v516
  %v518 = vpop.f32.mrb[0].mxu0
  %v519 = vpop.f32.mrb[0].mxu0
  %v520 = vadd.f32 %v471, %v519
  %v521 = vpop.f32.mrb[0].mxu0
  %522 = vmatprep.mubr.bf16.mxu0 0
  %523 = vmatmul.mubr.bf16.gmra.mrb[0].mxu0 %v382
  %v524 = vpop.f32.mrb[0].mxu0
  %v525 = vadd.f32 %v476, %v524
  %v526 = vpop.f32.mrb[0].mxu0
  %v527 = vpop.f32.mrb[0].mxu0
  %v528 = vadd.f32 %v479, %v527
  %v529 = vpop.f32.mrb[0].mxu0
  %530 = vdwg.mxu0
  %v531 = vadd.f32 %v23, %v517
  %v532 = vadd.f32 %v24, %v520
  %v533 = vadd.f32 %v25, %v525
  %v534 = vadd.f32 %v26, %v528
  %535 = vst [vmem:[#allocation2] sm:$0xff] %v531
  %536 = vst [vmem:[#allocation2 + $0x8] sm:$0xff] %v532
  %537 = vst [vmem:[#allocation2 + $0x10] sm:$0xff] %v533
  %538 = vst [vmem:[#allocation2 + $0x18] sm:$0xff] %v534
  // Predicated region
  $region18: #{_lambda_.18} parent=0 // pred_check
    %p539 = pneg %p15
  $region19: #{_lambda_.18} parent=0 // pred_check_branch
    %541 = sbr.rel (%p539) target = $region21
  $region20: #{_lambda_.18} parent=0 // pred_region
    %v542 = vld [vmem:[#allocation2] sm:$0xff]
    %v543 = vld [vmem:[#allocation2 + $0x8] sm:$0xff]
    %v544 = vld [vmem:[#allocation2 + $0x10] sm:$0xff]
    %v545 = vld [vmem:[#allocation2 + $0x18] sm:$0xff]
    %v546 = vld [vmem:[%s2] sm:$0x1]
    %v548 = vlaneseq
    %v549 = vshrl.u32 %v548, 7
    %v550 = vsub.s32 0, %v549
    %v551 = vrot.slane %v546, %v550
    %v553 = vadd.f32 %v542, %v551
    %v554 = vadd.f32 %v543, %v551
    %v555 = vadd.f32 %v544, %v551
    %v556 = vadd.f32 %v545, %v551
    %v557 = vmax.f32 %v553, 0.0
    %v558 = vmax.f32 %v554, 0.0
    %v559 = vmax.f32 %v555, 0.0
    %v560 = vmax.f32 %v556, 0.0
    %v561 = vpack.c.bf16 %v558, %v557
    %v562 = vpack.c.bf16 %v560, %v559
    %v565 = vunpack.c.l.b16 %v561
    %v566 = vunpack.c.h.b16 %v561
    %v567 = vunpack.c.l.b16 %v562
    %v568 = vunpack.c.h.b16 %v562
    %v569 = vpack.c.b16 %v565, %v565
    %v570 = vpack.c.b16 %v566, %v566
    %v571 = vpack.c.b16 %v567, %v567
    %v572 = vpack.c.b16 %v568, %v568
    %577 = vst [vmem:[%s3] sm:$0xf] %v569
    %578 = vst [vmem:[%s3 + $0x4] sm:$0xf] %v570
    %579 = vst [vmem:[%s3 + $0x8] sm:$0xf] %v571
    %580 = vst [vmem:[%s3 + $0xc] sm:$0xf] %v572
  $region21: #{_lambda_.18} parent=0 // pred_fallthru
    _
  // Predicated region
  $region22: #{_lambda_.18} parent=0 // pred_check
    _
  $region23: #{_lambda_.18} parent=0 // pred_check_branch
    %582 = sbr.rel (0) target = $region25
  $region24: #{_lambda_.18} parent=0 // pred_region
    _
  $region25: #{_lambda_.18} parent=0 // pred_fallthru
    _
  // Predicated region
  $region26: #{_lambda_.18} parent=0 // pred_check
    _
  $region27: #{_lambda_.18} parent=0 // pred_check_branch
    %584 = sbr.rel (0) target = $region29
  $region28: #{_lambda_.18} parent=0 // pred_region
    _
  $region29: #{_lambda_.18} parent=0 // pred_fallthru
    _

// kernel: _lambda_.17
$region0: #{_lambda_.17}
  #allocation0 [shape = 'u32[]', space=smem, size = 0x4, offset = 0x4, fixed_abs, tag = 'smem constant byte address 0x4 - core index']
  #allocation1 [shape = 'u32[144,128]{1,0:T(1,128)}', space=vmem, size = 0x12000, scoped, tag = 'internal scratch']
  #allocation2 [shape = 'f32[32,128]{1,0:T(8,128)}', space=vmem, size = 0x4000, scoped, tag = 'scratch operand']
  %s0 = inlined_call_operand.vmem [shape: bf16[32,64], index: 0, kind: input, shape index: {}]
  %s1 = inlined_call_operand.vmem [shape: bf16[64,128], index: 1, kind: input, shape index: {}]
  %s2 = inlined_call_operand.vmem [shape: f32[1,128], index: 2, kind: input, shape index: {}]
  %s3 = inlined_call_operand.vmem [shape: bf16[32,128], index: 3, kind: output, shape index: {}]
  %s4 = sld [smem:[#allocation0]]
  $region30: #{_lambda_.17} parent=0
    _
  %s6 = ssub.s32 1, %s4
  %s7 = scalar_select 0, %s6, %s4
  // Predicated region
  $region2: #{_lambda_.17} parent=0 // pred_check
    _
  $region3: #{_lambda_.17} parent=0 // pred_check_branch
    %9 = sbr.rel (0) target = $region5
  $region4: #{_lambda_.17} parent=0 // pred_region
    _
  $region5: #{_lambda_.17} parent=0 // pred_fallthru
    _
  // Predicated region
  $region6: #{_lambda_.17} parent=0 // pred_check
    _
  $region7: #{_lambda_.17} parent=0 // pred_check_branch
    %11 = sbr.rel (0) target = $region9
  $region8: #{_lambda_.17} parent=0 // pred_region
    _
  $region9: #{_lambda_.17} parent=0 // pred_fallthru
    _
  // Predicated region
  $region10: #{_lambda_.17} parent=0 // pred_check
    _
  $region11: #{_lambda_.17} parent=0 // pred_check_branch
    %13 = sbr.rel (0) target = $region13
  $region12: #{_lambda_.17} parent=0 // pred_region
    _
  $region13: #{_lambda_.17} parent=0 // pred_fallthru
    _
  %p15 = scmp.eq.s32.totalorder 0, 0
  // Predicated region
  $region14: #{_lambda_.17} parent=0 // pred_check
    %p16 = pneg %p15
  $region15: #{_lambda_.17} parent=0 // pred_check_branch
    %18 = sbr.rel (%p16) target = $region17
  $region16: #{_lambda_.17} parent=0 // pred_region
    %19 = vst [vmem:[#allocation2] sm:$0xff] 0.0
    %20 = vst [vmem:[#allocation2 + $0x8] sm:$0xff] 0.0
    %21 = vst [vmem:[#allocation2 + $0x10] sm:$0xff] 0.0
    %22 = vst [vmem:[#allocation2 + $0x18] sm:$0xff] 0.0
  $region17: #{_lambda_.17} parent=0 // pred_fallthru
    _
  %v23 = vld [vmem:[#allocation2] sm:$0xff]
  %v24 = vld [vmem:[#allocation2 + $0x8] sm:$0xff]
  %v25 = vld [vmem:[#allocation2 + $0x10] sm:$0xff]
  %v26 = vld [vmem:[#allocation2 + $0x18] sm:$0xff]
  %v27 = vld [vmem:[%s0] sm:$0xf]
  %v28 = vld [vmem:[%s0 + $0x4] sm:$0xf]
  %v29 = vld [vmem:[%s0 + $0x8] sm:$0xf]
  %v30 = vld [vmem:[%s0 + $0xc] sm:$0xf]
  %v31 = vld [vmem:[%s1] sm:$0xf]
  %v32 = vld [vmem:[%s1 + $0x4] sm:$0xf]
  %v33 = vld [vmem:[%s1 + $0x8] sm:$0xf]
  %v34 = vld [vmem:[%s1 + $0xc] sm:$0xf]
  %v35 = vld [vmem:[%s1 + $0x10] sm:$0xf]
  %v36 = vld [vmem:[%s1 + $0x14] sm:$0xf]
  %v37 = vld [vmem:[%s1 + $0x18] sm:$0xf]
  %v38 = vld [vmem:[%s1 + $0x1c] sm:$0xf]
  %v43 = vunpack.c.l.b16 %v27
  %v44 = vunpack.c.l.b16 %v28
  %v45 = vunpack.c.l.b16 %v29
  %v46 = vunpack.c.l.b16 %v30
  %v47 = vpack.c.b16 %v44, %v43
  %v48 = vpack.c.b16 %v46, %v45
  %v57 = vunpack.c.l.b16 %v31
  %v58 = vunpack.c.l.b16 %v32
  %v59 = vunpack.c.l.b16 %v33
  %v60 = vunpack.c.l.b16 %v34
  %v61 = vunpack.c.l.b16 %v35
  %v62 = vunpack.c.l.b16 %v36
  %v63 = vunpack.c.l.b16 %v37
  %v64 = vunpack.c.l.b16 %v38
  %v65 = vpack.c.b16 %v58, %v57
  %v66 = vpack.c.b16 %v60, %v59
  %v67 = vpack.c.b16 %v62, %v61
  %v68 = vpack.c.b16 %v64, %v63
  %vm73 = vcmask 523264
  %v75 = vsel %vm73, %v47, 0
  %v78 = vsel %vm73, %v48, 0
  %80 = vmatprep.subr.bf16.mxu0 0
  %81 = vmatpush1.bf16.msra.mxu0 %v65
  %82 = vmatprep.subr.bf16.mxu0 0
  %83 = vmatpush1.bf16.msra.mxu0 %v66
  %84 = vmatprep.subr.bf16.mxu0 0
  %85 = vmatpush1.bf16.msra.mxu0 %v67
  %86 = vmatprep.subr.bf16.mxu0 0
  %87 = vmatpush1.bf16.msra.mxu0 %v68
  %88 = vmatprep.subr.bf16.mxu0 0
  %89 = vmatpush1.bf16.msra.mxu0 0
  %90 = vmatprep.subr.bf16.mxu0 0
  %91 = vmatpush1.bf16.msra.mxu0 0
  %92 = vmatprep.subr.bf16.mxu0 0
  %93 = vmatpush1.bf16.msra.mxu0 0
  %94 = vmatprep.subr.bf16.mxu0 0
  %95 = vmatpush1.bf16.msra.mxu0 0
  %96 = vmatprep.subr.bf16.mxu0 0
  %97 = vmatpush1.bf16.msra.mxu0 0
  %98 = vmatprep.subr.bf16.mxu0 0
  %99 = vmatpush1.bf16.msra.mxu0 0
  %100 = vmatprep.subr.bf16.mxu0 0
  %101 = vmatpush1.bf16.msra.mxu0 0
  %102 = vmatprep.subr.bf16.mxu0 0
  %103 = vmatpush1.bf16.msra.mxu0 0
  %104 = vmatprep.subr.bf16.mxu0 0
  %105 = vmatpush1.bf16.msra.mxu0 0
  %106 = vmatprep.subr.bf16.mxu0 0
  %107 = vmatpush1.bf16.msra.mxu0 0
  %108 = vmatprep.subr.bf16.mxu0 0
  %109 = vmatpush1.bf16.msra.mxu0 0
  %110 = vmatprep.subr.bf16.mxu0 0
  %111 = vmatpush1.bf16.msra.mxu0 0
  %112 = vmatprep.mubr.bf16.mxu0 0
  %113 = vmatmul.mubr.bf16.gmra.mrb[0].mxu0 %v75
  %v114 = vpop.f32.mrb[0].mxu0
  %v115 = vadd.f32 0.0, %v114
  %v116 = vpop.f32.mrb[0].mxu0
  %v117 = vpop.f32.mrb[0].mxu0
  %v118 = vadd.f32 0.0, %v117
  %v119 = vpop.f32.mrb[0].mxu0
  %120 = vmatprep.mubr.bf16.mxu0 0
  %121 = vmatmul.mubr.bf16.gmra.mrb[0].mxu0 %v78
  %v122 = vpop.f32.mrb[0].mxu0
  %v123 = vadd.f32 0.0, %v122
  %v124 = vpop.f32.mrb[0].mxu0
  %v125 = vpop.f32.mrb[0].mxu0
  %v126 = vadd.f32 0.0, %v125
  %v127 = vpop.f32.mrb[0].mxu0
  %128 = vdwg.mxu0
  %v129 = vadd.f32 %v23, %v115
  %v130 = vadd.f32 %v24, %v118
  %v131 = vadd.f32 %v25, %v123
  %v132 = vadd.f32 %v26, %v126
  %133 = vst [vmem:[#allocation2] sm:$0xff] %v129
  %134 = vst [vmem:[#allocation2 + $0x8] sm:$0xff] %v130
  %135 = vst [vmem:[#allocation2 + $0x10] sm:$0xff] %v131
  %136 = vst [vmem:[#allocation2 + $0x18] sm:$0xff] %v132
  // Predicated region
  $region18: #{_lambda_.17} parent=0 // pred_check
    %p137 = pneg %p15
  $region19: #{_lambda_.17} parent=0 // pred_check_branch
    %139 = sbr.rel (%p137) target = $region21
  $region20: #{_lambda_.17} parent=0 // pred_region
    %v140 = vld [vmem:[#allocation2] sm:$0xff]
    %v141 = vld [vmem:[#allocation2 + $0x8] sm:$0xff]
    %v142 = vld [vmem:[#allocation2 + $0x10] sm:$0xff]
    %v143 = vld [vmem:[#allocation2 + $0x18] sm:$0xff]
    %v144 = vld [vmem:[%s2] sm:$0x1]
    %v146 = vlaneseq
    %v147 = vshrl.u32 %v146, 7
    %v148 = vsub.s32 0, %v147
    %v149 = vrot.slane %v144, %v148
    %v151 = vadd.f32 %v140, %v149
    %v152 = vadd.f32 %v141, %v149
    %v153 = vadd.f32 %v142, %v149
    %v154 = vadd.f32 %v143, %v149
    %v155 = vpack.c.bf16 %v152, %v151
    %v156 = vpack.c.bf16 %v154, %v153
    %v159 = vunpack.c.l.b16 %v155
    %v160 = vunpack.c.h.b16 %v155
    %v161 = vunpack.c.l.b16 %v156
    %v162 = vunpack.c.h.b16 %v156
    %v163 = vpack.c.b16 %v159, %v159
    %v164 = vpack.c.b16 %v160, %v160
    %v165 = vpack.c.b16 %v161, %v161
    %v166 = vpack.c.b16 %v162, %v162
    %171 = vst [vmem:[%s3] sm:$0xf] %v163
    %172 = vst [vmem:[%s3 + $0x4] sm:$0xf] %v164
    %173 = vst [vmem:[%s3 + $0x8] sm:$0xf] %v165
    %174 = vst [vmem:[%s3 + $0xc] sm:$0xf] %v166
  $region21: #{_lambda_.17} parent=0 // pred_fallthru
    _
  // Predicated region
  $region22: #{_lambda_.17} parent=0 // pred_check
    _
  $region23: #{_lambda_.17} parent=0 // pred_check_branch
    %176 = sbr.rel (0) target = $region25
  $region24: #{_lambda_.17} parent=0 // pred_region
    _
  $region25: #{_lambda_.17} parent=0 // pred_fallthru
    _
  // Predicated region
  $region26: #{_lambda_.17} parent=0 // pred_check
    _
  $region27: #{_lambda_.17} parent=0 // pred_check_branch
    %178 = sbr.rel (0) target = $region29
  $region28: #{_lambda_.17} parent=0 // pred_region
    _
  $region29: #{_lambda_.17} parent=0 // pred_fallthru
    _

// kernel: _lambda_.19
$region0: #{_lambda_.19}
  #allocation0 [shape = 'u32[]', space=smem, size = 0x4, offset = 0x4, fixed_abs, tag = 'smem constant byte address 0x4 - core index']
  #allocation1 [shape = 'u32[144,128]{1,0:T(1,128)}', space=vmem, size = 0x12000, scoped, tag = 'internal scratch']
  #allocation2 [shape = 'f32[32,128]{1,0:T(8,128)}', space=vmem, size = 0x4000, scoped, tag = 'scratch operand']
  %s0 = inlined_call_operand.vmem [shape: bf16[32,1152], index: 0, kind: input, shape index: {}]
  %s1 = inlined_call_operand.vmem [shape: bf16[1152,128], index: 1, kind: input, shape index: {}]
  %s2 = inlined_call_operand.vmem [shape: f32[1,128], index: 2, kind: input, shape index: {}]
  %s3 = inlined_call_operand.vmem [shape: bf16[32,128], index: 3, kind: input, shape index: {}]
  %s4 = inlined_call_operand.vmem [shape: bf16[32,128], index: 4, kind: output, shape index: {}]
  %s5 = sld [smem:[#allocation0]]
  $region83: #{_lambda_.19} parent=0
    _
  %s7 = ssub.s32 1, %s5
  %s8 = scalar_select 0, %s7, %s5
  $region1: #{_lambda_.19} parent=0
    #allocation3 [shape = 'u8[49152]{0}', space=vmem, size = 0xc000, scoped, tag = 'input window, operand 0']
    loop: start=0, step=1, limit=5
    $region2: #{_lambda_.19} parent=1 // loop_pre_header
      _
    $region3: #{_lambda_.19} parent=1 // loop_header
      %s10 = sphi 0, %s14
      %p11 = scmp.ge.s32.totalorder %s10, 5
      %s17 = sphi 0, %s36
      %s18 = sphi 0, %s32
      %s19 = sphi 0, %s28
      %s20 = sphi 0, %s17
      %s21 = sphi 0, %s18
      %s22 = sphi 0, %s19
      %s23 = sphi 0, %s20
      %s24 = sphi 0, %s21
      %s25 = sphi 0, %s22
      %s41 = sphi 0, %s43
      %s44 = sphi 0, %s41
      %s45 = sphi 0, %s44
      %s61 = sphi 0, %s45
      %s69 = sphi 0, %s71
      %s72 = sphi 0, %s69
      %s73 = sphi 0, %s72
      %s89 = sphi 0, %s73
      %s95 = sphi 0, %s97
      %s98 = sphi 0, %s95
      %s99 = sphi 0, %s98
      %s115 = sphi 0, %s99
      %s123 = sphi 0, %s125
      %s126 = sphi 0, %s123
      %s127 = sphi 0, %s126
      %s143 = sphi 0, %s127
      %s151 = sphi 0, %s153
      %s154 = sphi 0, %s151
      %s155 = sphi 0, %s154
      %s171 = sphi 0, %s155
    $region4: #{_lambda_.19} parent=1 // loop_header_branch
      %13 = sbr.rel (%p11) target = $region8
    $region5: #{_lambda_.19} parent=1 // loop_body
      %s15 = ssub.s32 %s10, 1
      %s16 = ssub.s32 %s10, 2
      %s26 = sadd.s32 1, %s19
      %p27 = scmp.ge.s32.totalorder %s26, 3
      %s28 = scalar_select %p27, 0, %s26
      %s29 = sadd.s32 1, %s18
      %s30 = scalar_select %p27, %s29, %s18
      %p31 = scmp.ge.s32.totalorder %s30, 1
      %s32 = scalar_select %p31, 0, %s30
      %s33 = sadd.s32 1, %s17
      %s34 = scalar_select %p31, %s33, %s17
      %p35 = scmp.ge.s32.totalorder %s34, 1
      %s36 = scalar_select %p35, 0, %s34
      %s37 = ssub.s32 %s17, %s36
      %s38 = ssub.s32 %s19, %s28
      %s39 = sor.u32 %s37, %s38
      %p40 = scmp.eq.s32.totalorder %s39, 0
      %s42 = sadd.s32 %s41, 1
      %s43 = scalar_select %p40, %s41, %s42
      %p46 = pneg %p40
      %p47 = scmp.eq.s32.totalorder %s10, 2
      %p48 = por %p46, %p47
      %p49 = scmp.ne.s32.totalorder %s41, %s44
      %p50 = scmp.eq.s32.totalorder %s10, 0
      %p51 = por %p49, %p50
      %p52 = scmp.ne.s32.totalorder %s41, %s44
      %p53 = scmp.eq.s32.totalorder %s15, 2
      %p54 = por %p52, %p53
      %p55 = scmp.ne.s32.totalorder %s44, %s45
      %p56 = scmp.eq.s32.totalorder %s15, 0
      %p57 = por %p55, %p56
      %p58 = scmp.ne.s32.totalorder %s44, %s45
      %p59 = scmp.eq.s32.totalorder %s16, 2
      %p60 = por %p58, %p59
      %p62 = scmp.ne.s32.totalorder %s45, %s61
      %p63 = scmp.eq.s32.totalorder %s16, 0
      %p64 = por %p62, %p63
      %s65 = ssub.s32 %s19, %s28
      %s66 = ssub.s32 %s18, %s32
      %s67 = sor.u32 %s65, %s66
      %p68 = scmp.eq.s32.totalorder %s67, 0
      %s70 = sadd.s32 %s69, 1
      %s71 = scalar_select %p68, %s69, %s70
      %p74 = pneg %p68
      %p75 = scmp.eq.s32.totalorder %s10, 2
      %p76 = por %p74, %p75
      %p77 = scmp.ne.s32.totalorder %s69, %s72
      %p78 = scmp.eq.s32.totalorder %s10, 0
      %p79 = por %p77, %p78
      %p80 = scmp.ne.s32.totalorder %s69, %s72
      %p81 = scmp.eq.s32.totalorder %s15, 2
      %p82 = por %p80, %p81
      %p83 = scmp.ne.s32.totalorder %s72, %s73
      %p84 = scmp.eq.s32.totalorder %s15, 0
      %p85 = por %p83, %p84
      %p86 = scmp.ne.s32.totalorder %s72, %s73
      %p87 = scmp.eq.s32.totalorder %s16, 2
      %p88 = por %p86, %p87
      %p90 = scmp.ne.s32.totalorder %s73, %s89
      %p91 = scmp.eq.s32.totalorder %s16, 0
      %p92 = por %p90, %p91
      %s93 = ssub.s32 %s18, %s32
      %p94 = scmp.eq.s32.totalorder %s93, 0
      %s96 = sadd.s32 %s95, 1
      %s97 = scalar_select %p94, %s95, %s96
      %p100 = pneg %p94
      %p101 = scmp.eq.s32.totalorder %s10, 2
      %p102 = por %p100, %p101
      %p103 = scmp.ne.s32.totalorder %s95, %s98
      %p104 = scmp.eq.s32.totalorder %s10, 0
      %p105 = por %p103, %p104
      %p106 = scmp.ne.s32.totalorder %s95, %s98
      %p107 = scmp.eq.s32.totalorder %s15, 2
      %p108 = por %p106, %p107
      %p109 = scmp.ne.s32.totalorder %s98, %s99
      %p110 = scmp.eq.s32.totalorder %s15, 0
      %p111 = por %p109, %p110
      %p112 = scmp.ne.s32.totalorder %s98, %s99
      %p113 = scmp.eq.s32.totalorder %s16, 2
      %p114 = por %p112, %p113
      %p116 = scmp.ne.s32.totalorder %s99, %s115
      %p117 = scmp.eq.s32.totalorder %s16, 0
      %p118 = por %p116, %p117
      %s119 = ssub.s32 %s17, %s36
      %s120 = ssub.s32 %s18, %s32
      %s121 = sor.u32 %s119, %s120
      %p122 = scmp.eq.s32.totalorder %s121, 0
      %s124 = sadd.s32 %s123, 1
      %s125 = scalar_select %p122, %s123, %s124
      %p128 = pneg %p122
      %p129 = scmp.eq.s32.totalorder %s10, 2
      %p130 = por %p128, %p129
      %p131 = scmp.ne.s32.totalorder %s123, %s126
      %p132 = scmp.eq.s32.totalorder %s10, 0
      %p133 = por %p131, %p132
      %p134 = scmp.ne.s32.totalorder %s123, %s126
      %p135 = scmp.eq.s32.totalorder %s15, 2
      %p136 = por %p134, %p135
      %p137 = scmp.ne.s32.totalorder %s126, %s127
      %p138 = scmp.eq.s32.totalorder %s15, 0
      %p139 = por %p137, %p138
      %p140 = scmp.ne.s32.totalorder %s126, %s127
      %p141 = scmp.eq.s32.totalorder %s16, 2
      %p142 = por %p140, %p141
      %p144 = scmp.ne.s32.totalorder %s127, %s143
      %p145 = scmp.eq.s32.totalorder %s16, 0
      %p146 = por %p144, %p145
      %s147 = ssub.s32 %s17, %s36
      %s148 = ssub.s32 %s18, %s32
      %s149 = sor.u32 %s147, %s148
      %p150 = scmp.eq.s32.totalorder %s149, 0
      %s152 = sadd.s32 %s151, 1
      %s153 = scalar_select %p150, %s151, %s152
      %p156 = pneg %p150
      %p157 = scmp.eq.s32.totalorder %s10, 2
      %p158 = por %p156, %p157
      %p159 = scmp.ne.s32.totalorder %s151, %s154
      %p160 = scmp.eq.s32.totalorder %s10, 0
      %p161 = por %p159, %p160
      %p162 = scmp.ne.s32.totalorder %s151, %s154
      %p163 = scmp.eq.s32.totalorder %s15, 2
      %p164 = por %p162, %p163
      %p165 = scmp.ne.s32.totalorder %s154, %s155
      %p166 = scmp.eq.s32.totalorder %s15, 0
      %p167 = por %p165, %p166
      %p168 = scmp.ne.s32.totalorder %s154, %s155
      %p169 = scmp.eq.s32.totalorder %s16, 2
      %p170 = por %p168, %p169
      %p172 = scmp.ne.s32.totalorder %s155, %s171
      %p173 = scmp.eq.s32.totalorder %s16, 0
      %p174 = por %p172, %p173
      %p175 = scmp.le.s32.totalorder 1, %s10
      %p176 = scmp.lt.s32.totalorder %s10, 4
      %p177 = pnand %p175, %p176
      %p178 = pneg %p177
      // Predicated region
      $region9: #{_lambda_.19} parent=5 // pred_check
        _
      $region10: #{_lambda_.19} parent=5 // pred_check_branch
        %180 = sbr.rel (%p177) target = $region12
      $region11: #{_lambda_.19} parent=5 // pred_region
        %s181 = ssub.s32 %s10, 1
        // Predicated region
        $region13: #{_lambda_.19} parent=11 // pred_check
          %p182 = pneg %p111
        $region14: #{_lambda_.19} parent=11 // pred_check_branch
          %184 = sbr.rel (%p182) target = $region16
        $region15: #{_lambda_.19} parent=11 // pred_region
          %p185 = scmp.lt.s32.totalorder %s21, 0
          %s186 = scalar_select %p185, %s21, 0
          %s187 = scalar_lea.vmem %s2, %s186
        $region16: #{_lambda_.19} parent=11 // pred_fallthru
          _
        // Predicated region
        $region17: #{_lambda_.19} parent=11 // pred_check
          %p188 = pneg %p139
        $region18: #{_lambda_.19} parent=11 // pred_check_branch
          %190 = sbr.rel (%p188) target = $region20
        $region19: #{_lambda_.19} parent=11 // pred_region
          %s191 = smul.u32 4, %s20
          %p192 = scmp.lt.s32.totalorder %s191, 3
          %s193 = scalar_select %p192, %s191, 3
          %p194 = scmp.lt.s32.totalorder %s21, 0
          %s195 = scalar_select %p194, %s21, 0
          %s196 = sadd.s32 %s195, %s193
          %s197 = smul.addr %s196, 4
          %s198 = scalar_lea.vmem %s3, %s197
          %s199 = smul.u32 4, %s20
        $region20: #{_lambda_.19} parent=11 // pred_fallthru
          _
      $region12: #{_lambda_.19} parent=5 // pred_fallthru
        _
      %p200 = scmp.lt.s32.totalorder %s10, 3
      // Predicated region
      $region21: #{_lambda_.19} parent=5 // pred_check
        %p201 = pneg %p200
      $region22: #{_lambda_.19} parent=5 // pred_check_branch
        %203 = sbr.rel (%p201) target = $region24
      $region23: #{_lambda_.19} parent=5 // pred_region
        // Predicated region
        $region25: #{_lambda_.19} parent=23 // pred_check
          %p204 = pneg %p51
        $region26: #{_lambda_.19} parent=23 // pred_check_branch
          %206 = sbr.rel (%p204) target = $region28
        $region27: #{_lambda_.19} parent=23 // pred_region
          %s207 = sand.u32 %s41, 1
          %s208 = sand.u32 %s41, 1
          %s209 = smul.addr %s208, 48
          %s210 = scalar_lea.vmem [#allocation3], %s209
          %s211 = smul.u32 4, %s17
          %s212 = smul.u32 3, %s19
          %s213 = smul.addr %s211, 9
          %s214 = sadd.s32 %s212, %s213
          %s215 = smul.addr %s214, 4
          %s216 = scalar_lea.vmem %s0, %s215
          // Predicated region
          $region29: #{_lambda_.19} parent=27 // pred_check
            _
          $region30: #{_lambda_.19} parent=27 // pred_check_branch
            %218 = sbr.rel (0) target = $region32
          $region31: #{_lambda_.19} parent=27 // pred_region
            // Predicated region
            $region33: #{_lambda_.19} parent=31 // pred_check
              _
            $region34: #{_lambda_.19} parent=31 // pred_check_branch
              %220 = sbr.rel (0) target = $region36
            $region35: #{_lambda_.19} parent=31 // pred_region
              %s221 = scalar_lea.vmem %s216, 8
              %s222 = scalar_lea.vmem %s210, 8 [#allocation3]
              loop: start=0, step=1, limit=1
              $region37: #{_lambda_.19} parent=35 // loop_pre_header
                _
              $region38: #{_lambda_.19} parent=35 // loop_header
                %s224 = sphi 0, %s228
                %p225 = scmp.ge.s32.totalorder %s224, 1
                %s229 = sphi %s216, %s216
                %s230 = sphi %s210, %s210
              $region39: #{_lambda_.19} parent=35 // loop_header_branch
                %227 = sbr.rel (%p225) target = $region43
              $region40: #{_lambda_.19} parent=35 // loop_body
                %v231 = vld [vmem:[%s229] sm:$0xff]
                %232 = vst [vmem:[%s230] sm:$0xff] %v231
                %v233 = vld [vmem:[%s229 + $0x24] sm:$0xff]
                %234 = vst [vmem:[%s230 + $0xc] sm:$0xff] %v233
                %v235 = vld [vmem:[%s229 + $0x48] sm:$0xff]
                %236 = vst [vmem:[%s230 + $0x18] sm:$0xff] %v235
                %v237 = vld [vmem:[%s229 + $0x6c] sm:$0xff]
                %238 = vst [vmem:[%s230 + $0x24] sm:$0xff] %v237
              $region41: #{_lambda_.19} parent=35 // loop_footer
                %s228 = sadd.s32 1, %s224
              $region42: #{_lambda_.19} parent=35 // loop_footer_branch
                %223 = sbr.rel target = $region38
              $region43: #{_lambda_.19} parent=35 // loop_exit
                _
              loop: start=0, step=1, limit=1
              $region44: #{_lambda_.19} parent=35 // loop_pre_header
                _
              $region45: #{_lambda_.19} parent=35 // loop_header
                %s241 = sphi 0, %s245
                %p242 = scmp.ge.s32.totalorder %s241, 1
                %s246 = sphi %s221, %s221
                %s247 = sphi %s222, %s222
              $region46: #{_lambda_.19} parent=35 // loop_header_branch
                %244 = sbr.rel (%p242) target = $region50
              $region47: #{_lambda_.19} parent=35 // loop_body
                %v248 = vld [vmem:[%s246] sm:$0xf]
                %249 = vst [vmem:[%s247] sm:$0xf] %v248
                %v250 = vld [vmem:[%s246 + $0x24] sm:$0xf]
                %251 = vst [vmem:[%s247 + $0xc] sm:$0xf] %v250
                %v252 = vld [vmem:[%s246 + $0x48] sm:$0xf]
                %253 = vst [vmem:[%s247 + $0x18] sm:$0xf] %v252
                %v254 = vld [vmem:[%s246 + $0x6c] sm:$0xf]
                %255 = vst [vmem:[%s247 + $0x24] sm:$0xf] %v254
              $region48: #{_lambda_.19} parent=35 // loop_footer
                %s245 = sadd.s32 1, %s241
              $region49: #{_lambda_.19} parent=35 // loop_footer_branch
                %240 = sbr.rel target = $region45
              $region50: #{_lambda_.19} parent=35 // loop_exit
                _
            $region36: #{_lambda_.19} parent=31 // pred_fallthru
              _
          $region32: #{_lambda_.19} parent=27 // pred_fallthru
            _
          %256 = vnop
        $region28: #{_lambda_.19} parent=23 // pred_fallthru
          _
        // Predicated region
        $region51: #{_lambda_.19} parent=23 // pred_check
          %p257 = pneg %p79
        $region52: #{_lambda_.19} parent=23 // pred_check_branch
          %259 = sbr.rel (%p257) target = $region54
        $region53: #{_lambda_.19} parent=23 // pred_region
          %s260 = smul.u32 48, %s19
          %p261 = scmp.lt.s32.totalorder %s260, 143
          %s262 = scalar_select %p261, %s260, 143
          %p263 = scmp.lt.s32.totalorder %s18, 0
          %s264 = scalar_select %p263, %s18, 0
          %s265 = sadd.s32 %s264, %s262
          %s266 = smul.addr %s265, 4
          %s267 = scalar_lea.vmem %s1, %s266
          %s268 = smul.u32 48, %s19
        $region54: #{_lambda_.19} parent=23 // pred_fallthru
          _
      $region24: #{_lambda_.19} parent=5 // pred_fallthru
        _
      %p269 = scmp.le.s32.totalorder 1, %s10
      %p270 = scmp.lt.s32.totalorder %s10, 4
      %p271 = pnand %p269, %p270
      %p272 = pneg %p271
      // Predicated region
      $region55: #{_lambda_.19} parent=5 // pred_check
        _
      $region56: #{_lambda_.19} parent=5 // pred_check_branch
        %274 = sbr.rel (%p271) target = $region58
      $region57: #{_lambda_.19} parent=5 // pred_region
        %s275 = ssub.s32 %s10, 1
        %s276 = sand.u32 %s44, 1
        %s277 = sand.u32 %s44, 1
        %s278 = smul.addr %s277, 48
        %s279 = scalar_lea.vmem [#allocation3], %s278
        // Predicated region
        $region59: #{_lambda_.19} parent=57 // pred_check
          %p280 = pneg %p57
        $region60: #{_lambda_.19} parent=57 // pred_check_branch
          %282 = sbr.rel (%p280) target = $region62
        $region61: #{_lambda_.19} parent=57 // pred_region
          _
        $region62: #{_lambda_.19} parent=57 // pred_fallthru
          _
        %s283 = sand.u32 %s44, 1
        %s284 = sand.u32 %s44, 1
        %s285 = smul.addr %s284, 48
        %s286 = scalar_lea.vmem [#allocation3], %s285
        %p287 = pneg %p57
        %p288 = pneg %p54
        %s289 = smul.u32 48, %s22
        %p290 = scmp.lt.s32.totalorder %s289, 143
        %s291 = scalar_select %p290, %s289, 143
        %p292 = scmp.lt.s32.totalorder %s21, 0
        %s293 = scalar_select %p292, %s21, 0
        %s294 = sadd.s32 %s293, %s291
        %s295 = smul.addr %s294, 4
        %s296 = scalar_lea.vmem %s1, %s295
        %p297 = pneg %p85
        %p298 = pneg %p82
        %p299 = scmp.lt.s32.totalorder %s21, 0
        %s300 = scalar_select %p299, %s21, 0
        %s301 = scalar_lea.vmem %s2, %s300
        %p302 = pneg %p111
        %p303 = pneg %p108
        %s304 = smul.u32 4, %s20
        %p305 = scmp.lt.s32.totalorder %s304, 3
        %s306 = scalar_select %p305, %s304, 3
        %p307 = scmp.lt.s32.totalorder %s21, 0
        %s308 = scalar_select %p307, %s21, 0
        %s309 = sadd.s32 %s308, %s306
        %s310 = smul.addr %s309, 4
        %s311 = scalar_lea.vmem %s3, %s310
        %p312 = pneg %p139
        %p313 = pneg %p136
        %p314 = pneg %p167
        %p315 = pneg %p164
        %s316 = smul.u32 4, %s20
        %p317 = scmp.lt.s32.totalorder %s316, 3
        %s318 = scalar_select %p317, %s316, 3
        %p319 = scmp.lt.s32.totalorder %s21, 0
        %s320 = scalar_select %p319, %s21, 0
        %s321 = sadd.s32 %s320, %s318
        %s322 = smul.addr %s321, 4
        %s323 = scalar_lea.vmem %s4, %s322
        %s324 = smul.u32 4, %s20
        %s325 = smul.u32 3, %s22
        %s326 = smul.u32 48, %s22
        %p327 = scmp.lt.s32.totalorder %s326, 143
        %s328 = scalar_select %p327, %s326, 143
        %p329 = scmp.lt.s32.totalorder %s21, 0
        %s330 = scalar_select %p329, %s21, 0
        %s331 = sadd.s32 %s330, %s328
        %s332 = smul.addr %s331, 4
        %s333 = scalar_lea.vmem %s1, %s332
        %s334 = smul.u32 48, %s22
        %p335 = scmp.lt.s32.totalorder %s21, 0
        %s336 = scalar_select %p335, %s21, 0
        %s337 = scalar_lea.vmem %s2, %s336
        %s338 = smul.u32 4, %s20
        %p339 = scmp.lt.s32.totalorder %s338, 3
        %s340 = scalar_select %p339, %s338, 3
        %p341 = scmp.lt.s32.totalorder %s21, 0
        %s342 = scalar_select %p341, %s21, 0
        %s343 = sadd.s32 %s342, %s340
        %s344 = smul.addr %s343, 4
        %s345 = scalar_lea.vmem %s3, %s344
        %s346 = smul.u32 4, %s20
        %s347 = smul.u32 4, %s20
        %p348 = scmp.lt.s32.totalorder %s347, 3
        %s349 = scalar_select %p348, %s347, 3
        %p350 = scmp.lt.s32.totalorder %s21, 0
        %s351 = scalar_select %p350, %s21, 0
        %s352 = sadd.s32 %s351, %s349
        %s353 = smul.addr %s352, 4
        %s354 = scalar_lea.vmem %s4, %s353
        %s355 = smul.u32 4, %s20
        %p357 = scmp.eq.s32.totalorder %s22, 0
        // Predicated region
        $region63: #{_lambda_.19} parent=57 // pred_check
          %p358 = pneg %p357
        $region64: #{_lambda_.19} parent=57 // pred_check_branch
          %360 = sbr.rel (%p358) target = $region66
        $region65: #{_lambda_.19} parent=57 // pred_region
          %361 = vst [vmem:[#allocation2] sm:$0xff] 0.0
          %362 = vst [vmem:[#allocation2 + $0x8] sm:$0xff] 0.0
          %363 = vst [vmem:[#allocation2 + $0x10] sm:$0xff] 0.0
          %364 = vst [vmem:[#allocation2 + $0x18] sm:$0xff] 0.0
        $region66: #{_lambda_.19} parent=57 // pred_fallthru
          _
        %v365 = vld [vmem:[#allocation2] sm:$0xff]
        %v366 = vld [vmem:[#allocation2 + $0x8] sm:$0xff]
        %v367 = vld [vmem:[#allocation2 + $0x10] sm:$0xff]
        %v368 = vld [vmem:[#allocation2 + $0x18] sm:$0xff]
        %v369 = vld [vmem:[%s279] sm:$0xff]
        %v370 = vld [vmem:[%s279 + $0x8] sm:$0xf]
        %v371 = vld [vmem:[%s279 + $0xc] sm:$0xff]
        %v372 = vld [vmem:[%s279 + $0x14] sm:$0xf]
        %v373 = vld [vmem:[%s279 + $0x18] sm:$0xff]
        %v374 = vld [vmem:[%s279 + $0x20] sm:$0xf]
        %v375 = vld [vmem:[%s279 + $0x24] sm:$0xff]
        %v376 = vld [vmem:[%s279 + $0x2c] sm:$0xf]
        %v377 = vld [vmem:[%s333] sm:$0xf]
        %v378 = vld [vmem:[%s333 + $0x4] sm:$0xf]
        %v379 = vld [vmem:[%s333 + $0x8] sm:$0xf]
        %v380 = vld [vmem:[%s333 + $0xc] sm:$0xf]
        %v381 = vld [vmem:[%s333 + $0x10] sm:$0xf]
        %v382 = vld [vmem:[%s333 + $0x14] sm:$0xf]
        %v383 = vld [vmem:[%s333 + $0x18] sm:$0xf]
        %v384 = vld [vmem:[%s333 + $0x1c] sm:$0xf]
        %v385 = vld [vmem:[%s333 + $0x20] sm:$0xf]
        %v386 = vld [vmem:[%s333 + $0x24] sm:$0xf]
        %v387 = vld [vmem:[%s333 + $0x28] sm:$0xf]
        %v388 = vld [vmem:[%s333 + $0x2c] sm:$0xf]
        %v389 = vld [vmem:[%s333 + $0x30] sm:$0xf]
        %v390 = vld [vmem:[%s333 + $0x34] sm:$0xf]
        %v391 = vld [vmem:[%s333 + $0x38] sm:$0xf]
        %v392 = vld [vmem:[%s333 + $0x3c] sm:$0xf]
        %v393 = vld [vmem:[%s333 + $0x40] sm:$0xf]
        %v394 = vld [vmem:[%s333 + $0x44] sm:$0xf]
        %v395 = vld [vmem:[%s333 + $0x48] sm:$0xf]
        %v396 = vld [vmem:[%s333 + $0x4c] sm:$0xf]
        %v397 = vld [vmem:[%s333 + $0x50] sm:$0xf]
        %v398 = vld [vmem:[%s333 + $0x54] sm:$0xf]
        %v399 = vld [vmem:[%s333 + $0x58] sm:$0xf]
        %v400 = vld [vmem:[%s333 + $0x5c] sm:$0xf]
        %v401 = vld [vmem:[%s333 + $0x60] sm:$0xf]
        %v402 = vld [vmem:[%s333 + $0x64] sm:$0xf]
        %v403 = vld [vmem:[%s333 + $0x68] sm:$0xf]
        %v404 = vld [vmem:[%s333 + $0x6c] sm:$0xf]
        %v405 = vld [vmem:[%s333 + $0x70] sm:$0xf]
        %v406 = vld [vmem:[%s333 + $0x74] sm:$0xf]
        %v407 = vld [vmem:[%s333 + $0x78] sm:$0xf]
        %v408 = vld [vmem:[%s333 + $0x7c] sm:$0xf]
        %v409 = vld [vmem:[%s333 + $0x80] sm:$0xf]
        %v410 = vld [vmem:[%s333 + $0x84] sm:$0xf]
        %v411 = vld [vmem:[%s333 + $0x88] sm:$0xf]
        %v412 = vld [vmem:[%s333 + $0x8c] sm:$0xf]
        %v413 = vld [vmem:[%s333 + $0x90] sm:$0xf]
        %v414 = vld [vmem:[%s333 + $0x94] sm:$0xf]
        %v415 = vld [vmem:[%s333 + $0x98] sm:$0xf]
        %v416 = vld [vmem:[%s333 + $0x9c] sm:$0xf]
        %v417 = vld [vmem:[%s333 + $0xa0] sm:$0xf]
        %v418 = vld [vmem:[%s333 + $0xa4] sm:$0xf]
        %v419 = vld [vmem:[%s333 + $0xa8] sm:$0xf]
        %v420 = vld [vmem:[%s333 + $0xac] sm:$0xf]
        %v421 = vld [vmem:[%s333 + $0xb0] sm:$0xf]
        %v422 = vld [vmem:[%s333 + $0xb4] sm:$0xf]
        %v423 = vld [vmem:[%s333 + $0xb8] sm:$0xf]
        %v424 = vld [vmem:[%s333 + $0xbc] sm:$0xf]
        %v433 = vunpack.c.l.b16 %v369
        %v434 = vunpack.c.h.b16 %v369
        %v435 = vunpack.c.l.b16 %v370
        %v436 = vunpack.c.l.b16 %v371
        %v437 = vunpack.c.h.b16 %v371
        %v438 = vunpack.c.l.b16 %v372
        %v439 = vunpack.c.l.b16 %v373
        %v440 = vunpack.c.h.b16 %v373
        %v441 = vunpack.c.l.b16 %v374
        %v442 = vunpack.c.l.b16 %v375
        %v443 = vunpack.c.h.b16 %v375
        %v444 = vunpack.c.l.b16 %v376
        %v445 = vpack.c.b16 %v436, %v433
        %v446 = vpack.c.b16 %v437, %v434
        %v447 = vpack.c.b16 %v438, %v435
        %v448 = vpack.c.b16 %v442, %v439
        %v449 = vpack.c.b16 %v443, %v440
        %v450 = vpack.c.b16 %v444, %v441
        %v505 = vunpack.c.l.b16 %v377
        %v506 = vunpack.c.l.b16 %v378
        %v507 = vunpack.c.l.b16 %v379
        %v508 = vunpack.c.l.b16 %v380
        %v509 = vunpack.c.l.b16 %v381
        %v510 = vunpack.c.l.b16 %v382
        %v511 = vunpack.c.l.b16 %v383
        %v512 = vunpack.c.l.b16 %v384
        %v513 = vunpack.c.l.b16 %v385
        %v514 = vunpack.c.l.b16 %v386
        %v515 = vunpack.c.l.b16 %v387
        %v516 = vunpack.c.l.b16 %v388
        %v517 = vunpack.c.l.b16 %v389
        %v518 = vunpack.c.l.b16 %v390
        %v519 = vunpack.c.l.b16 %v391
        %v520 = vunpack.c.l.b16 %v392
        %v521 = vunpack.c.l.b16 %v393
        %v522 = vunpack.c.l.b16 %v394
        %v523 = vunpack.c.l.b16 %v395
        %v524 = vunpack.c.l.b16 %v396
        %v525 = vunpack.c.l.b16 %v397
        %v526 = vunpack.c.l.b16 %v398
        %v527 = vunpack.c.l.b16 %v399
        %v528 = vunpack.c.l.b16 %v400
        %v529 = vunpack.c.l.b16 %v401
        %v530 = vunpack.c.l.b16 %v402
        %v531 = vunpack.c.l.b16 %v403
        %v532 = vunpack.c.l.b16 %v404
        %v533 = vunpack.c.l.b16 %v405
        %v534 = vunpack.c.l.b16 %v406
        %v535 = vunpack.c.l.b16 %v407
        %v536 = vunpack.c.l.b16 %v408
        %v537 = vunpack.c.l.b16 %v409
        %v538 = vunpack.c.l.b16 %v410
        %v539 = vunpack.c.l.b16 %v411
        %v540 = vunpack.c.l.b16 %v412
        %v541 = vunpack.c.l.b16 %v413
        %v542 = vunpack.c.l.b16 %v414
        %v543 = vunpack.c.l.b16 %v415
        %v544 = vunpack.c.l.b16 %v416
        %v545 = vunpack.c.l.b16 %v417
        %v546 = vunpack.c.l.b16 %v418
        %v547 = vunpack.c.l.b16 %v419
        %v548 = vunpack.c.l.b16 %v420
        %v549 = vunpack.c.l.b16 %v421
        %v550 = vunpack.c.l.b16 %v422
        %v551 = vunpack.c.l.b16 %v423
        %v552 = vunpack.c.l.b16 %v424
        %v553 = vpack.c.b16 %v506, %v505
        %v554 = vpack.c.b16 %v508, %v507
        %v555 = vpack.c.b16 %v510, %v509
        %v556 = vpack.c.b16 %v512, %v511
        %v557 = vpack.c.b16 %v514, %v513
        %v558 = vpack.c.b16 %v516, %v515
        %v559 = vpack.c.b16 %v518, %v517
        %v560 = vpack.c.b16 %v520, %v519
        %v561 = vpack.c.b16 %v522, %v521
        %v562 = vpack.c.b16 %v524, %v523
        %v563 = vpack.c.b16 %v526, %v525
        %v564 = vpack.c.b16 %v528, %v527
        %v565 = vpack.c.b16 %v530, %v529
        %v566 = vpack.c.b16 %v532, %v531
        %v567 = vpack.c.b16 %v534, %v533
        %v568 = vpack.c.b16 %v536, %v535
        %v569 = vpack.c.b16 %v538, %v537
        %v570 = vpack.c.b16 %v540, %v539
        %v571 = vpack.c.b16 %v542, %v541
        %v572 = vpack.c.b16 %v544, %v543
        %v573 = vpack.c.b16 %v546, %v545
        %v574 = vpack.c.b16 %v548, %v547
        %v575 = vpack.c.b16 %v550, %v549
        %v576 = vpack.c.b16 %v552, %v551
        %601 = vmatprep.subr.bf16.mxu0 0
        %602 = vmatpush1.bf16.msra.mxu0 %v553
        %603 = vmatprep.subr.bf16.mxu0 0
        %604 = vmatpush1.bf16.msra.mxu0 %v554
        %605 = vmatprep.subr.bf16.mxu0 0
        %606 = vmatpush1.bf16.msra.mxu0 %v555
        %607 = vmatprep.subr.bf16.mxu0 0
        %608 = vmatpush1.bf16.msra.mxu0 %v556
        %609 = vmatprep.subr.bf16.mxu0 0
        %610 = vmatpush1.bf16.msra.mxu0 %v557
        %611 = vmatprep.subr.bf16.mxu0 0
        %612 = vmatpush1.bf16.msra.mxu0 %v558
        %613 = vmatprep.subr.bf16.mxu0 0
        %614 = vmatpush1.bf16.msra.mxu0 %v559
        %615 = vmatprep.subr.bf16.mxu0 0
        %616 = vmatpush1.bf16.msra.mxu0 %v560
        %617 = vmatprep.subr.bf16.mxu0 0
        %618 = vmatpush1.bf16.msra.mxu0 %v561
        %619 = vmatprep.subr.bf16.mxu0 0
        %620 = vmatpush1.bf16.msra.mxu0 %v562
        %621 = vmatprep.subr.bf16.mxu0 0
        %622 = vmatpush1.bf16.msra.mxu0 %v563
        %623 = vmatprep.subr.bf16.mxu0 0
        %624 = vmatpush1.bf16.msra.mxu0 %v564
        %625 = vmatprep.subr.bf16.mxu0 0
        %626 = vmatpush1.bf16.msra.mxu0 %v565
        %627 = vmatprep.subr.bf16.mxu0 0
        %628 = vmatpush1.bf16.msra.mxu0 %v566
        %629 = vmatprep.subr.bf16.mxu0 0
        %630 = vmatpush1.bf16.msra.mxu0 %v567
        %631 = vmatprep.subr.bf16.mxu0 0
        %632 = vmatpush1.bf16.msra.mxu0 %v568
        %633 = vmatprep.mubr.bf16.mxu0 %v446
        %634 = vmatmul.mubr.bf16.gmra.mrb[0].mxu0 %v445
        %v635 = vpop.f32.mrb[0].mxu0
        %v636 = vadd.f32 0.0, %v635
        %v637 = vpop.f32.mrb[0].mxu0
        %v638 = vpop.f32.mrb[0].mxu0
        %v639 = vadd.f32 0.0, %v638
        %v640 = vpop.f32.mrb[0].mxu0
        %641 = vmatprep.mubr.bf16.mxu0 %v449
        %642 = vmatmul.mubr.bf16.gmra.mrb[0].mxu0 %v448
        %v643 = vpop.f32.mrb[0].mxu0
        %v644 = vadd.f32 0.0, %v643
        %v645 = vpop.f32.mrb[0].mxu0
        %v646 = vpop.f32.mrb[0].mxu0
        %v647 = vadd.f32 0.0, %v646
        %v648 = vpop.f32.mrb[0].mxu0
        %649 = vdwg.mxu0
        %650 = vmatprep.subr.bf16.mxu0 0
        %651 = vmatpush1.bf16.msra.mxu0 %v569
        %652 = vmatprep.subr.bf16.mxu0 0
        %653 = vmatpush1.bf16.msra.mxu0 %v570
        %654 = vmatprep.subr.bf16.mxu0 0
        %655 = vmatpush1.bf16.msra.mxu0 %v571
        %656 = vmatprep.subr.bf16.mxu0 0
        %657 = vmatpush1.bf16.msra.mxu0 %v572
        %658 = vmatprep.subr.bf16.mxu0 0
        %659 = vmatpush1.bf16.msra.mxu0 %v573
        %660 = vmatprep.subr.bf16.mxu0 0
        %661 = vmatpush1.bf16.msra.mxu0 %v574
        %662 = vmatprep.subr.bf16.mxu0 0
        %663 = vmatpush1.bf16.msra.mxu0 %v575
        %664 = vmatprep.subr.bf16.mxu0 0
        %665 = vmatpush1.bf16.msra.mxu0 %v576
        %666 = vmatprep.subr.bf16.mxu0 0
        %667 = vmatpush1.bf16.msra.mxu0 0
        %668 = vmatprep.subr.bf16.mxu0 0
        %669 = vmatpush1.bf16.msra.mxu0 0
        %670 = vmatprep.subr.bf16.mxu0 0
        %671 = vmatpush1.bf16.msra.mxu0 0
        %672 = vmatprep.subr.bf16.mxu0 0
        %673 = vmatpush1.bf16.msra.mxu0 0
        %674 = vmatprep.subr.bf16.mxu0 0
        %675 = vmatpush1.bf16.msra.mxu0 0
        %676 = vmatprep.subr.bf16.mxu0 0
        %677 = vmatpush1.bf16.msra.mxu0 0
        %678 = vmatprep.subr.bf16.mxu0 0
        %679 = vmatpush1.bf16.msra.mxu0 0
        %680 = vmatprep.subr.bf16.mxu0 0
        %681 = vmatpush1.bf16.msra.mxu0 0
        %682 = vmatprep.mubr.bf16.mxu0 0
        %683 = vmatmul.mubr.bf16.gmra.mrb[0].mxu0 %v447
        %v684 = vpop.f32.mrb[0].mxu0
        %v685 = vadd.f32 %v636, %v684
        %v686 = vpop.f32.mrb[0].mxu0
        %v687 = vpop.f32.mrb[0].mxu0
        %v688 = vadd.f32 %v639, %v687
        %v689 = vpop.f32.mrb[0].mxu0
        %690 = vmatprep.mubr.bf16.mxu0 0
        %691 = vmatmul.mubr.bf16.gmra.mrb[0].mxu0 %v450
        %v692 = vpop.f32.mrb[0].mxu0
        %v693 = vadd.f32 %v644, %v692
        %v694 = vpop.f32.mrb[0].mxu0
        %v695 = vpop.f32.mrb[0].mxu0
        %v696 = vadd.f32 %v647, %v695
        %v697 = vpop.f32.mrb[0].mxu0
        %698 = vdwg.mxu0
        %v699 = vadd.f32 %v365, %v685
        %v700 = vadd.f32 %v366, %v688
        %v701 = vadd.f32 %v367, %v693
        %v702 = vadd.f32 %v368, %v696
        %703 = vst [vmem:[#allocation2] sm:$0xff] %v699
        %704 = vst [vmem:[#allocation2 + $0x8] sm:$0xff] %v700
        %705 = vst [vmem:[#allocation2 + $0x10] sm:$0xff] %v701
        %706 = vst [vmem:[#allocation2 + $0x18] sm:$0xff] %v702
        %p707 = scmp.eq.s32.totalorder %s22, 2
        // Predicated region
        $region67: #{_lambda_.19} parent=57 // pred_check
          %p708 = pneg %p707
        $region68: #{_lambda_.19} parent=57 // pred_check_branch
          %710 = sbr.rel (%p708) target = $region70
        $region69: #{_lambda_.19} parent=57 // pred_region
          %v711 = vld [vmem:[#allocation2] sm:$0xff]
          %v712 = vld [vmem:[#allocation2 + $0x8] sm:$0xff]
          %v713 = vld [vmem:[#allocation2 + $0x10] sm:$0xff]
          %v714 = vld [vmem:[#allocation2 + $0x18] sm:$0xff]
          %v715 = vld [vmem:[%s337] sm:$0x1]
          %v717 = vlaneseq
          %v718 = vshrl.u32 %v717, 7
          %v719 = vsub.s32 0, %v718
          %v720 = vrot.slane %v715, %v719
          %v722 = vadd.f32 %v711, %v720
          %v723 = vadd.f32 %v712, %v720
          %v724 = vadd.f32 %v713, %v720
          %v725 = vadd.f32 %v714, %v720
          %v726 = vld [vmem:[%s345] sm:$0xf]
          %v727 = vld [vmem:[%s345 + $0x4] sm:$0xf]
          %v728 = vld [vmem:[%s345 + $0x8] sm:$0xf]
          %v729 = vld [vmem:[%s345 + $0xc] sm:$0xf]
          %v730 = vunpack.c.l.bf16 %v726
          %v731 = vunpack.c.l.bf16 %v727
          %v732 = vunpack.c.l.bf16 %v728
          %v733 = vunpack.c.l.bf16 %v729
          %v734 = vadd.f32 %v722, %v730
          %v735 = vadd.f32 %v723, %v731
          %v736 = vadd.f32 %v724, %v732
          %v737 = vadd.f32 %v725, %v733
          %v738 = vmax.f32 %v734, 0.0
          %v739 = vmax.f32 %v735, 0.0
          %v740 = vmax.f32 %v736, 0.0
          %v741 = vmax.f32 %v737, 0.0
          %v742 = vpack.c.bf16 %v739, %v738
          %v743 = vpack.c.bf16 %v741, %v740
          %v746 = vunpack.c.l.b16 %v742
          %v747 = vunpack.c.h.b16 %v742
          %v748 = vunpack.c.l.b16 %v743
          %v749 = vunpack.c.h.b16 %v743
          %v750 = vpack.c.b16 %v746, %v746
          %v751 = vpack.c.b16 %v747, %v747
          %v752 = vpack.c.b16 %v748, %v748
          %v753 = vpack.c.b16 %v749, %v749
          %758 = vst [vmem:[%s354] sm:$0xf] %v750
          %759 = vst [vmem:[%s354 + $0x4] sm:$0xf] %v751
          %760 = vst [vmem:[%s354 + $0x8] sm:$0xf] %v752
          %761 = vst [vmem:[%s354 + $0xc] sm:$0xf] %v753
        $region70: #{_lambda_.19} parent=57 // pred_fallthru
          _
        %s762 = smul.u32 4, %s20
        %p763 = scmp.lt.s32.totalorder %s762, 3
        %s764 = scalar_select %p763, %s762, 3
        %p765 = scmp.lt.s32.totalorder %s21, 0
        %s766 = scalar_select %p765, %s21, 0
        %s767 = sadd.s32 %s766, %s764
        %s768 = smul.addr %s767, 4
        %s769 = scalar_lea.vmem %s4, %s768
        // Predicated region
        $region71: #{_lambda_.19} parent=57 // pred_check
          %p770 = pneg %p164
        $region72: #{_lambda_.19} parent=57 // pred_check_branch
          %772 = sbr.rel (%p770) target = $region74
        $region73: #{_lambda_.19} parent=57 // pred_region
          %s773 = smul.u32 4, %s20
        $region74: #{_lambda_.19} parent=57 // pred_fallthru
          _
        // Predicated region
        $region75: #{_lambda_.19} parent=57 // pred_check
          %p774 = pneg %p164
        $region76: #{_lambda_.19} parent=57 // pred_check_branch
          %776 = sbr.rel (%p774) target = $region78
        $region77: #{_lambda_.19} parent=57 // pred_region
          %s777 = smul.u32 4, %s20
          %p778 = scmp.lt.s32.totalorder %s777, 3
          %s779 = scalar_select %p778, %s777, 3
          %p780 = scmp.lt.s32.totalorder %s21, 0
          %s781 = scalar_select %p780, %s21, 0
          %s782 = sadd.s32 %s781, %s779
          %s783 = smul.addr %s782, 4
          %s784 = scalar_lea.vmem %s4, %s783
        $region78: #{_lambda_.19} parent=57 // pred_fallthru
          _
      $region58: #{_lambda_.19} parent=5 // pred_fallthru
        _
      %p785 = scmp.le.s32.totalorder 2, %s10
      // Predicated region
      $region79: #{_lambda_.19} parent=5 // pred_check
        %p786 = pneg %p785
      $region80: #{_lambda_.19} parent=5 // pred_check_branch
        %788 = sbr.rel (%p786) target = $region82
      $region81: #{_lambda_.19} parent=5 // pred_region
        %s789 = ssub.s32 %s10, 2
      $region82: #{_lambda_.19} parent=5 // pred_fallthru
        _
    $region6: #{_lambda_.19} parent=1 // loop_footer
      %s14 = sadd.s32 1, %s10
    $region7: #{_lambda_.19} parent=1 // loop_footer_branch
      %9 = sbr.rel target = $region3
    $region8: #{_lambda_.19} parent=1 // loop_exit
      _

// kernel: _lambda_.21
$region0: #{_lambda_.21}
  #allocation0 [shape = 'u32[]', space=smem, size = 0x4, offset = 0x4, fixed_abs, tag = 'smem constant byte address 0x4 - core index']
  #allocation1 [shape = 'u32[144,128]{1,0:T(1,128)}', space=vmem, size = 0x12000, scoped, tag = 'internal scratch']
  #allocation2 [shape = 'f32[8,256]{1,0:T(8,128)}', space=vmem, size = 0x2000, scoped, tag = 'scratch operand']
  %s0 = inlined_call_operand.vmem [shape: bf16[8,1152], index: 0, kind: input, shape index: {}]
  %s1 = inlined_call_operand.vmem [shape: bf16[1152,256], index: 1, kind: input, shape index: {}]
  %s2 = inlined_call_operand.vmem [shape: f32[1,256], index: 2, kind: input, shape index: {}]
  %s3 = inlined_call_operand.vmem [shape: bf16[8,256], index: 3, kind: output, shape index: {}]
  %s4 = sld [smem:[#allocation0]]
  $region53: #{_lambda_.21} parent=0
    _
  %s6 = ssub.s32 1, %s4
  %s7 = scalar_select 0, %s6, %s4
  loop: start=0, step=1, limit=5
  $region2: #{_lambda_.21} parent=0 // loop_pre_header
    _
  $region3: #{_lambda_.21} parent=0 // loop_header
    %s9 = sphi 0, %s13
    %p10 = scmp.ge.s32.totalorder %s9, 5
    %s16 = sphi 0, %s35
    %s17 = sphi 0, %s31
    %s18 = sphi 0, %s27
    %s19 = sphi 0, %s16
    %s20 = sphi 0, %s17
    %s21 = sphi 0, %s18
    %s22 = sphi 0, %s19
    %s23 = sphi 0, %s20
    %s24 = sphi 0, %s21
    %s40 = sphi 0, %s42
    %s43 = sphi 0, %s40
    %s44 = sphi 0, %s43
    %s60 = sphi 0, %s44
    %s68 = sphi 0, %s70
    %s71 = sphi 0, %s68
    %s72 = sphi 0, %s71
    %s88 = sphi 0, %s72
    %s94 = sphi 0, %s96
    %s97 = sphi 0, %s94
    %s98 = sphi 0, %s97
    %s114 = sphi 0, %s98
    %s122 = sphi 0, %s124
    %s125 = sphi 0, %s122
    %s126 = sphi 0, %s125
    %s142 = sphi 0, %s126
  $region4: #{_lambda_.21} parent=0 // loop_header_branch
    %12 = sbr.rel (%p10) target = $region8
  $region5: #{_lambda_.21} parent=0 // loop_body
    %s14 = ssub.s32 %s9, 1
    %s15 = ssub.s32 %s9, 2
    %s25 = sadd.s32 1, %s18
    %p26 = scmp.ge.s32.totalorder %s25, 3
    %s27 = scalar_select %p26, 0, %s25
    %s28 = sadd.s32 1, %s17
    %s29 = scalar_select %p26, %s28, %s17
    %p30 = scmp.ge.s32.totalorder %s29, 1
    %s31 = scalar_select %p30, 0, %s29
    %s32 = sadd.s32 1, %s16
    %s33 = scalar_select %p30, %s32, %s16
    %p34 = scmp.ge.s32.totalorder %s33, 1
    %s35 = scalar_select %p34, 0, %s33
    %s36 = ssub.s32 %s16, %s35
    %s37 = ssub.s32 %s18, %s27
    %s38 = sor.u32 %s36, %s37
    %p39 = scmp.eq.s32.totalorder %s38, 0
    %s41 = sadd.s32 %s40, 1
    %s42 = scalar_select %p39, %s40, %s41
    %p45 = pneg %p39
    %p46 = scmp.eq.s32.totalorder %s9, 2
    %p47 = por %p45, %p46
    %p48 = scmp.ne.s32.totalorder %s40, %s43
    %p49 = scmp.eq.s32.totalorder %s9, 0
    %p50 = por %p48, %p49
    %p51 = scmp.ne.s32.totalorder %s40, %s43
    %p52 = scmp.eq.s32.totalorder %s14, 2
    %p53 = por %p51, %p52
    %p54 = scmp.ne.s32.totalorder %s43, %s44
    %p55 = scmp.eq.s32.totalorder %s14, 0
    %p56 = por %p54, %p55
    %p57 = scmp.ne.s32.totalorder %s43, %s44
    %p58 = scmp.eq.s32.totalorder %s15, 2
    %p59 = por %p57, %p58
    %p61 = scmp.ne.s32.totalorder %s44, %s60
    %p62 = scmp.eq.s32.totalorder %s15, 0
    %p63 = por %p61, %p62
    %s64 = ssub.s32 %s18, %s27
    %s65 = ssub.s32 %s17, %s31
    %s66 = sor.u32 %s64, %s65
    %p67 = scmp.eq.s32.totalorder %s66, 0
    %s69 = sadd.s32 %s68, 1
    %s70 = scalar_select %p67, %s68, %s69
    %p73 = pneg %p67
    %p74 = scmp.eq.s32.totalorder %s9, 2
    %p75 = por %p73, %p74
    %p76 = scmp.ne.s32.totalorder %s68, %s71
    %p77 = scmp.eq.s32.totalorder %s9, 0
    %p78 = por %p76, %p77
    %p79 = scmp.ne.s32.totalorder %s68, %s71
    %p80 = scmp.eq.s32.totalorder %s14, 2
    %p81 = por %p79, %p80
    %p82 = scmp.ne.s32.totalorder %s71, %s72
    %p83 = scmp.eq.s32.totalorder %s14, 0
    %p84 = por %p82, %p83
    %p85 = scmp.ne.s32.totalorder %s71, %s72
    %p86 = scmp.eq.s32.totalorder %s15, 2
    %p87 = por %p85, %p86
    %p89 = scmp.ne.s32.totalorder %s72, %s88
    %p90 = scmp.eq.s32.totalorder %s15, 0
    %p91 = por %p89, %p90
    %s92 = ssub.s32 %s17, %s31
    %p93 = scmp.eq.s32.totalorder %s92, 0
    %s95 = sadd.s32 %s94, 1
    %s96 = scalar_select %p93, %s94, %s95
    %p99 = pneg %p93
    %p100 = scmp.eq.s32.totalorder %s9, 2
    %p101 = por %p99, %p100
    %p102 = scmp.ne.s32.totalorder %s94, %s97
    %p103 = scmp.eq.s32.totalorder %s9, 0
    %p104 = por %p102, %p103
    %p105 = scmp.ne.s32.totalorder %s94, %s97
    %p106 = scmp.eq.s32.totalorder %s14, 2
    %p107 = por %p105, %p106
    %p108 = scmp.ne.s32.totalorder %s97, %s98
    %p109 = scmp.eq.s32.totalorder %s14, 0
    %p110 = por %p108, %p109
    %p111 = scmp.ne.s32.totalorder %s97, %s98
    %p112 = scmp.eq.s32.totalorder %s15, 2
    %p113 = por %p111, %p112
    %p115 = scmp.ne.s32.totalorder %s98, %s114
    %p116 = scmp.eq.s32.totalorder %s15, 0
    %p117 = por %p115, %p116
    %s118 = ssub.s32 %s16, %s35
    %s119 = ssub.s32 %s17, %s31
    %s120 = sor.u32 %s118, %s119
    %p121 = scmp.eq.s32.totalorder %s120, 0
    %s123 = sadd.s32 %s122, 1
    %s124 = scalar_select %p121, %s122, %s123
    %p127 = pneg %p121
    %p128 = scmp.eq.s32.totalorder %s9, 2
    %p129 = por %p127, %p128
    %p130 = scmp.ne.s32.totalorder %s122, %s125
    %p131 = scmp.eq.s32.totalorder %s9, 0
    %p132 = por %p130, %p131
    %p133 = scmp.ne.s32.totalorder %s122, %s125
    %p134 = scmp.eq.s32.totalorder %s14, 2
    %p135 = por %p133, %p134
    %p136 = scmp.ne.s32.totalorder %s125, %s126
    %p137 = scmp.eq.s32.totalorder %s14, 0
    %p138 = por %p136, %p137
    %p139 = scmp.ne.s32.totalorder %s125, %s126
    %p140 = scmp.eq.s32.totalorder %s15, 2
    %p141 = por %p139, %p140
    %p143 = scmp.ne.s32.totalorder %s126, %s142
    %p144 = scmp.eq.s32.totalorder %s15, 0
    %p145 = por %p143, %p144
    %p146 = scmp.le.s32.totalorder 1, %s9
    %p147 = scmp.lt.s32.totalorder %s9, 4
    %p148 = pnand %p146, %p147
    %p149 = pneg %p148
    // Predicated region
    $region9: #{_lambda_.21} parent=5 // pred_check
      _
    $region10: #{_lambda_.21} parent=5 // pred_check_branch
      %151 = sbr.rel (%p148) target = $region12
    $region11: #{_lambda_.21} parent=5 // pred_region
      %s152 = ssub.s32 %s9, 1
      // Predicated region
      $region13: #{_lambda_.21} parent=11 // pred_check
        %p153 = pneg %p110
      $region14: #{_lambda_.21} parent=11 // pred_check_branch
        %155 = sbr.rel (%p153) target = $region16
      $region15: #{_lambda_.21} parent=11 // pred_region
        %s156 = smul.u32 2, %s20
        %p157 = scmp.lt.s32.totalorder %s156, 1
        %s158 = scalar_select %p157, %s156, 1
        %s159 = scalar_lea.vmem %s2, %s158
        %s160 = smul.u32 2, %s20
      $region16: #{_lambda_.21} parent=11 // pred_fallthru
        _
    $region12: #{_lambda_.21} parent=5 // pred_fallthru
      _
    %p161 = scmp.lt.s32.totalorder %s9, 3
    // Predicated region
    $region17: #{_lambda_.21} parent=5 // pred_check
      %p162 = pneg %p161
    $region18: #{_lambda_.21} parent=5 // pred_check_branch
      %164 = sbr.rel (%p162) target = $region20
    $region19: #{_lambda_.21} parent=5 // pred_region
      // Predicated region
      $region21: #{_lambda_.21} parent=19 // pred_check
        %p165 = pneg %p50
      $region22: #{_lambda_.21} parent=19 // pred_check_branch
        %167 = sbr.rel (%p165) target = $region24
      $region23: #{_lambda_.21} parent=19 // pred_region
        %s168 = smul.u32 3, %s18
        %p169 = scmp.lt.s32.totalorder %s16, 0
        %s170 = scalar_select %p169, %s16, 0
        %p171 = scmp.lt.s32.totalorder %s168, 8
        %s172 = scalar_select %p171, %s168, 8
        %s173 = smul.addr %s170, 9
        %s174 = sadd.s32 %s172, %s173
        %s175 = smul.addr %s174, 4
        %s176 = scalar_lea.vmem %s0, %s175
        %s177 = smul.u32 3, %s18
      $region24: #{_lambda_.21} parent=19 // pred_fallthru
        _
      // Predicated region
      $region25: #{_lambda_.21} parent=19 // pred_check
        %p178 = pneg %p78
      $region26: #{_lambda_.21} parent=19 // pred_check_branch
        %180 = sbr.rel (%p178) target = $region28
      $region27: #{_lambda_.21} parent=19 // pred_region
        %s181 = smul.u32 48, %s18
        %s182 = smul.u32 2, %s17
        %p183 = scmp.lt.s32.totalorder %s181, 143
        %s184 = scalar_select %p183, %s181, 143
        %p185 = scmp.lt.s32.totalorder %s182, 1
        %s186 = scalar_select %p185, %s182, 1
        %s187 = smul.addr %s184, 2
        %s188 = sadd.s32 %s186, %s187
        %s189 = smul.addr %s188, 4
        %s190 = scalar_lea.vmem %s1, %s189
        %s191 = smul.u32 48, %s18
        %s192 = smul.u32 2, %s17
      $region28: #{_lambda_.21} parent=19 // pred_fallthru
        _
    $region20: #{_lambda_.21} parent=5 // pred_fallthru
      _
    %p193 = scmp.le.s32.totalorder 1, %s9
    %p194 = scmp.lt.s32.totalorder %s9, 4
    %p195 = pnand %p193, %p194
    %p196 = pneg %p195
    // Predicated region
    $region29: #{_lambda_.21} parent=5 // pred_check
      _
    $region30: #{_lambda_.21} parent=5 // pred_check_branch
      %198 = sbr.rel (%p195) target = $region32
    $region31: #{_lambda_.21} parent=5 // pred_region
      %s199 = ssub.s32 %s9, 1
      %s200 = smul.u32 3, %s21
      %p201 = scmp.lt.s32.totalorder %s19, 0
      %s202 = scalar_select %p201, %s19, 0
      %p203 = scmp.lt.s32.totalorder %s200, 8
      %s204 = scalar_select %p203, %s200, 8
      %s205 = smul.addr %s202, 9
      %s206 = sadd.s32 %s204, %s205
      %s207 = smul.addr %s206, 4
      %s208 = scalar_lea.vmem %s0, %s207
      %p209 = pneg %p56
      %p210 = pneg %p53
      %s211 = smul.u32 48, %s21
      %s212 = smul.u32 2, %s20
      %p213 = scmp.lt.s32.totalorder %s211, 143
      %s214 = scalar_select %p213, %s211, 143
      %p215 = scmp.lt.s32.totalorder %s212, 1
      %s216 = scalar_select %p215, %s212, 1
      %s217 = smul.addr %s214, 2
      %s218 = sadd.s32 %s216, %s217
      %s219 = smul.addr %s218, 4
      %s220 = scalar_lea.vmem %s1, %s219
      %p221 = pneg %p84
      %p222 = pneg %p81
      %s223 = smul.u32 2, %s20
      %p224 = scmp.lt.s32.totalorder %s223, 1
      %s225 = scalar_select %p224, %s223, 1
      %s226 = scalar_lea.vmem %s2, %s225
      %p227 = pneg %p110
      %p228 = pneg %p107
      %p229 = pneg %p138
      %p230 = pneg %p135
      %s231 = smul.u32 2, %s20
      %p232 = scmp.lt.s32.totalorder %s19, 0
      %s233 = scalar_select %p232, %s19, 0
      %p234 = scmp.lt.s32.totalorder %s231, 1
      %s235 = scalar_select %p234, %s231, 1
      %s236 = smul.addr %s233, 2
      %s237 = sadd.s32 %s235, %s236
      %s238 = smul.addr %s237, 4
      %s239 = scalar_lea.vmem %s3, %s238
      %s240 = smul.u32 3, %s21
      %p241 = scmp.lt.s32.totalorder %s19, 0
      %s242 = scalar_select %p241, %s19, 0
      %p243 = scmp.lt.s32.totalorder %s240, 8
      %s244 = scalar_select %p243, %s240, 8
      %s245 = smul.addr %s242, 9
      %s246 = sadd.s32 %s244, %s245
      %s247 = smul.addr %s246, 4
      %s248 = scalar_lea.vmem %s0, %s247
      %s249 = smul.u32 3, %s21
      %s250 = smul.u32 48, %s21
      %s251 = smul.u32 2, %s20
      %p252 = scmp.lt.s32.totalorder %s250, 143
      %s253 = scalar_select %p252, %s250, 143
      %p254 = scmp.lt.s32.totalorder %s251, 1
      %s255 = scalar_select %p254, %s251, 1
      %s256 = smul.addr %s253, 2
      %s257 = sadd.s32 %s255, %s256
      %s258 = smul.addr %s257, 4
      %s259 = scalar_lea.vmem %s1, %s258
      %s260 = smul.u32 48, %s21
      %s261 = smul.u32 2, %s20
      %s262 = smul.u32 2, %s20
      %p263 = scmp.lt.s32.totalorder %s262, 1
      %s264 = scalar_select %p263, %s262, 1
      %s265 = scalar_lea.vmem %s2, %s264
      %s266 = smul.u32 2, %s20
      %s267 = smul.u32 2, %s20
      %p268 = scmp.lt.s32.totalorder %s19, 0
      %s269 = scalar_select %p268, %s19, 0
      %p270 = scmp.lt.s32.totalorder %s267, 1
      %s271 = scalar_select %p270, %s267, 1
      %s272 = smul.addr %s269, 2
      %s273 = sadd.s32 %s271, %s272
      %s274 = smul.addr %s273, 4
      %s275 = scalar_lea.vmem %s3, %s274
      %s276 = smul.u32 2, %s20
      %p278 = scmp.eq.s32.totalorder %s21, 0
      // Predicated region
      $region33: #{_lambda_.21} parent=31 // pred_check
        %p279 = pneg %p278
      $region34: #{_lambda_.21} parent=31 // pred_check_branch
        %281 = sbr.rel (%p279) target = $region36
      $region35: #{_lambda_.21} parent=31 // pred_region
        %282 = vst [vmem:[#allocation2] sm:$0xff] 0.0
        %283 = vst [vmem:[#allocation2 + $0x8] sm:$0xff] 0.0
      $region36: #{_lambda_.21} parent=31 // pred_fallthru
        _
      %v284 = vld [vmem:[#allocation2] sm:$0xff]
      %v285 = vld [vmem:[#allocation2 + $0x8] sm:$0xff]
      %v286 = vld [vmem:[%s248] sm:$0xff]
      %v287 = vld [vmem:[%s248 + $0x8] sm:$0xf]
      %v288 = vld [vmem:[%s259] sm:$0xff]
      %v289 = vld [vmem:[%s259 + $0x8] sm:$0xff]
      %v290 = vld [vmem:[%s259 + $0x10] sm:$0xff]
      %v291 = vld [vmem:[%s259 + $0x18] sm:$0xff]
      %v292 = vld [vmem:[%s259 + $0x20] sm:$0xff]
      %v293 = vld [vmem:[%s259 + $0x28] sm:$0xff]
      %v294 = vld [vmem:[%s259 + $0x30] sm:$0xff]
      %v295 = vld [vmem:[%s259 + $0x38] sm:$0xff]
      %v296 = vld [vmem:[%s259 + $0x40] sm:$0xff]
      %v297 = vld [vmem:[%s259 + $0x48] sm:$0xff]
      %v298 = vld [vmem:[%s259 + $0x50] sm:$0xff]
      %v299 = vld [vmem:[%s259 + $0x58] sm:$0xff]
      %v300 = vld [vmem:[%s259 + $0x60] sm:$0xff]
      %v301 = vld [vmem:[%s259 + $0x68] sm:$0xff]
      %v302 = vld [vmem:[%s259 + $0x70] sm:$0xff]
      %v303 = vld [vmem:[%s259 + $0x78] sm:$0xff]
      %v304 = vld [vmem:[%s259 + $0x80] sm:$0xff]
      %v305 = vld [vmem:[%s259 + $0x88] sm:$0xff]
      %v306 = vld [vmem:[%s259 + $0x90] sm:$0xff]
      %v307 = vld [vmem:[%s259 + $0x98] sm:$0xff]
      %v308 = vld [vmem:[%s259 + $0xa0] sm:$0xff]
      %v309 = vld [vmem:[%s259 + $0xa8] sm:$0xff]
      %v310 = vld [vmem:[%s259 + $0xb0] sm:$0xff]
      %v311 = vld [vmem:[%s259 + $0xb8] sm:$0xff]
      %v312 = vld [vmem:[%s259 + $0xc0] sm:$0xff]
      %v313 = vld [vmem:[%s259 + $0xc8] sm:$0xff]
      %v314 = vld [vmem:[%s259 + $0xd0] sm:$0xff]
      %v315 = vld [vmem:[%s259 + $0xd8] sm:$0xff]
      %v316 = vld [vmem:[%s259 + $0xe0] sm:$0xff]
      %v317 = vld [vmem:[%s259 + $0xe8] sm:$0xff]
      %v318 = vld [vmem:[%s259 + $0xf0] sm:$0xff]
      %v319 = vld [vmem:[%s259 + $0xf8] sm:$0xff]
      %v320 = vld [vmem:[%s259 + $0x100] sm:$0xff]
      %v321 = vld [vmem:[%s259 + $0x108] sm:$0xff]
      %v322 = vld [vmem:[%s259 + $0x110] sm:$0xff]
      %v323 = vld [vmem:[%s259 + $0x118] sm:$0xff]
      %v324 = vld [vmem:[%s259 + $0x120] sm:$0xff]
      %v325 = vld [vmem:[%s259 + $0x128] sm:$0xff]
      %v326 = vld [vmem:[%s259 + $0x130] sm:$0xff]
      %v327 = vld [vmem:[%s259 + $0x138] sm:$0xff]
      %v328 = vld [vmem:[%s259 + $0x140] sm:$0xff]
      %v329 = vld [vmem:[%s259 + $0x148] sm:$0xff]
      %v330 = vld [vmem:[%s259 + $0x150] sm:$0xff]
      %v331 = vld [vmem:[%s259 + $0x158] sm:$0xff]
      %v332 = vld [vmem:[%s259 + $0x160] sm:$0xff]
      %v333 = vld [vmem:[%s259 + $0x168] sm:$0xff]
      %v334 = vld [vmem:[%s259 + $0x170] sm:$0xff]
      %v335 = vld [vmem:[%s259 + $0x178] sm:$0xff]
      %v338 = vunpack.c.l.b16 %v286
      %v339 = vunpack.c.h.b16 %v286
      %v340 = vunpack.c.l.b16 %v287
      %v341 = vpack.c.b16 %v338, %v338
      %v342 = vpack.c.b16 %v339, %v339
      %v343 = vpack.c.b16 %v340, %v340
      %v395 = vunpack.c.l.b16 %v288
      %v396 = vunpack.c.h.b16 %v288
      %v397 = vunpack.c.l.b16 %v289
      %v398 = vunpack.c.h.b16 %v289
      %v399 = vunpack.c.l.b16 %v290
      %v400 = vunpack.c.h.b16 %v290
      %v401 = vunpack.c.l.b16 %v291
      %v402 = vunpack.c.h.b16 %v291
      %v403 = vunpack.c.l.b16 %v292
      %v404 = vunpack.c.h.b16 %v292
      %v405 = vunpack.c.l.b16 %v293
      %v406 = vunpack.c.h.b16 %v293
      %v407 = vunpack.c.l.b16 %v294
      %v408 = vunpack.c.h.b16 %v294
      %v409 = vunpack.c.l.b16 %v295
      %v410 = vunpack.c.h.b16 %v295
      %v411 = vunpack.c.l.b16 %v296
      %v412 = vunpack.c.h.b16 %v296
      %v413 = vunpack.c.l.b16 %v297
      %v414 = vunpack.c.h.b16 %v297
      %v415 = vunpack.c.l.b16 %v298
      %v416 = vunpack.c.h.b16 %v298
      %v417 = vunpack.c.l.b16 %v299
      %v418 = vunpack.c.h.b16 %v299
      %v419 = vunpack.c.l.b16 %v300
      %v420 = vunpack.c.h.b16 %v300
      %v421 = vunpack.c.l.b16 %v301
      %v422 = vunpack.c.h.b16 %v301
      %v423 = vunpack.c.l.b16 %v302
      %v424 = vunpack.c.h.b16 %v302
      %v425 = vunpack.c.l.b16 %v303
      %v426 = vunpack.c.h.b16 %v303
      %v427 = vunpack.c.l.b16 %v304
      %v428 = vunpack.c.h.b16 %v304
      %v429 = vunpack.c.l.b16 %v305
      %v430 = vunpack.c.h.b16 %v305
      %v431 = vunpack.c.l.b16 %v306
      %v432 = vunpack.c.h.b16 %v306
      %v433 = vunpack.c.l.b16 %v307
      %v434 = vunpack.c.h.b16 %v307
      %v435 = vunpack.c.l.b16 %v308
      %v436 = vunpack.c.h.b16 %v308
      %v437 = vunpack.c.l.b16 %v309
      %v438 = vunpack.c.h.b16 %v309
      %v439 = vunpack.c.l.b16 %v310
      %v440 = vunpack.c.h.b16 %v310
      %v441 = vunpack.c.l.b16 %v311
      %v442 = vunpack.c.h.b16 %v311
      %v443 = vunpack.c.l.b16 %v312
      %v444 = vunpack.c.h.b16 %v312
      %v445 = vunpack.c.l.b16 %v313
      %v446 = vunpack.c.h.b16 %v313
      %v447 = vunpack.c.l.b16 %v314
      %v448 = vunpack.c.h.b16 %v314
      %v449 = vunpack.c.l.b16 %v315
      %v450 = vunpack.c.h.b16 %v315
      %v451 = vunpack.c.l.b16 %v316
      %v452 = vunpack.c.h.b16 %v316
      %v453 = vunpack.c.l.b16 %v317
      %v454 = vunpack.c.h.b16 %v317
      %v455 = vunpack.c.l.b16 %v318
      %v456 = vunpack.c.h.b16 %v318
      %v457 = vunpack.c.l.b16 %v319
      %v458 = vunpack.c.h.b16 %v319
      %v459 = vunpack.c.l.b16 %v320
      %v460 = vunpack.c.h.b16 %v320
      %v461 = vunpack.c.l.b16 %v321
      %v462 = vunpack.c.h.b16 %v321
      %v463 = vunpack.c.l.b16 %v322
      %v464 = vunpack.c.h.b16 %v322
      %v465 = vunpack.c.l.b16 %v323
      %v466 = vunpack.c.h.b16 %v323
      %v467 = vunpack.c.l.b16 %v324
      %v468 = vunpack.c.h.b16 %v324
      %v469 = vunpack.c.l.b16 %v325
      %v470 = vunpack.c.h.b16 %v325
      %v471 = vunpack.c.l.b16 %v326
      %v472 = vunpack.c.h.b16 %v326
      %v473 = vunpack.c.l.b16 %v327
      %v474 = vunpack.c.h.b16 %v327
      %v475 = vunpack.c.l.b16 %v328
      %v476 = vunpack.c.h.b16 %v328
      %v477 = vunpack.c.l.b16 %v329
      %v478 = vunpack.c.h.b16 %v329
      %v479 = vunpack.c.l.b16 %v330
      %v480 = vunpack.c.h.b16 %v330
      %v481 = vunpack.c.l.b16 %v331
      %v482 = vunpack.c.h.b16 %v331
      %v483 = vunpack.c.l.b16 %v332
      %v484 = vunpack.c.h.b16 %v332
      %v485 = vunpack.c.l.b16 %v333
      %v486 = vunpack.c.h.b16 %v333
      %v487 = vunpack.c.l.b16 %v334
      %v488 = vunpack.c.h.b16 %v334
      %v489 = vunpack.c.l.b16 %v335
      %v490 = vunpack.c.h.b16 %v335
      %v491 = vpack.c.b16 %v397, %v395
      %v492 = vpack.c.b16 %v398, %v396
      %v493 = vpack.c.b16 %v401, %v399
      %v494 = vpack.c.b16 %v402, %v400
      %v495 = vpack.c.b16 %v405, %v403
      %v496 = vpack.c.b16 %v406, %v404
      %v497 = vpack.c.b16 %v409, %v407
      %v498 = vpack.c.b16 %v410, %v408
      %v499 = vpack.c.b16 %v413, %v411
      %v500 = vpack.c.b16 %v414, %v412
      %v501 = vpack.c.b16 %v417, %v415
      %v502 = vpack.c.b16 %v418, %v416
      %v503 = vpack.c.b16 %v421, %v419
      %v504 = vpack.c.b16 %v422, %v420
      %v505 = vpack.c.b16 %v425, %v423
      %v506 = vpack.c.b16 %v426, %v424
      %v507 = vpack.c.b16 %v429, %v427
      %v508 = vpack.c.b16 %v430, %v428
      %v509 = vpack.c.b16 %v433, %v431
      %v510 = vpack.c.b16 %v434, %v432
      %v511 = vpack.c.b16 %v437, %v435
      %v512 = vpack.c.b16 %v438, %v436
      %v513 = vpack.c.b16 %v441, %v439
      %v514 = vpack.c.b16 %v442, %v440
      %v515 = vpack.c.b16 %v445, %v443
      %v516 = vpack.c.b16 %v446, %v444
      %v517 = vpack.c.b16 %v449, %v447
      %v518 = vpack.c.b16 %v450, %v448
      %v519 = vpack.c.b16 %v453, %v451
      %v520 = vpack.c.b16 %v454, %v452
      %v521 = vpack.c.b16 %v457, %v455
      %v522 = vpack.c.b16 %v458, %v456
      %v523 = vpack.c.b16 %v461, %v459
      %v524 = vpack.c.b16 %v462, %v460
      %v525 = vpack.c.b16 %v465, %v463
      %v526 = vpack.c.b16 %v466, %v464
      %v527 = vpack.c.b16 %v469, %v467
      %v528 = vpack.c.b16 %v470, %v468
      %v529 = vpack.c.b16 %v473, %v471
      %v530 = vpack.c.b16 %v474, %v472
      %v531 = vpack.c.b16 %v477, %v475
      %v532 = vpack.c.b16 %v478, %v476
      %v533 = vpack.c.b16 %v481, %v479
      %v534 = vpack.c.b16 %v482, %v480
      %v535 = vpack.c.b16 %v485, %v483
      %v536 = vpack.c.b16 %v486, %v484
      %v537 = vpack.c.b16 %v489, %v487
      %v538 = vpack.c.b16 %v490, %v488
      %587 = vmatprep.subr.bf16.mxu0 %v492
      %588 = vmatpush1.bf16.msra.mxu0 %v491
      %589 = vmatprep.subr.bf16.mxu0 %v494
      %590 = vmatpush1.bf16.msra.mxu0 %v493
      %591 = vmatprep.subr.bf16.mxu0 %v496
      %592 = vmatpush1.bf16.msra.mxu0 %v495
      %593 = vmatprep.subr.bf16.mxu0 %v498
      %594 = vmatpush1.bf16.msra.mxu0 %v497
      %595 = vmatprep.subr.bf16.mxu0 %v500
      %596 = vmatpush1.bf16.msra.mxu0 %v499
      %597 = vmatprep.subr.bf16.mxu0 %v502
      %598 = vmatpush1.bf16.msra.mxu0 %v501
      %599 = vmatprep.subr.bf16.mxu0 %v504
      %600 = vmatpush1.bf16.msra.mxu0 %v503
      %601 = vmatprep.subr.bf16.mxu0 %v506
      %602 = vmatpush1.bf16.msra.mxu0 %v505
      %603 = vmatprep.subr.bf16.mxu0 %v508
      %604 = vmatpush1.bf16.msra.mxu0 %v507
      %605 = vmatprep.subr.bf16.mxu0 %v510
      %606 = vmatpush1.bf16.msra.mxu0 %v509
      %607 = vmatprep.subr.bf16.mxu0 %v512
      %608 = vmatpush1.bf16.msra.mxu0 %v511
      %609 = vmatprep.subr.bf16.mxu0 %v514
      %610 = vmatpush1.bf16.msra.mxu0 %v513
      %611 = vmatprep.subr.bf16.mxu0 %v516
      %612 = vmatpush1.bf16.msra.mxu0 %v515
      %613 = vmatprep.subr.bf16.mxu0 %v518
      %614 = vmatpush1.bf16.msra.mxu0 %v517
      %615 = vmatprep.subr.bf16.mxu0 %v520
      %616 = vmatpush1.bf16.msra.mxu0 %v519
      %617 = vmatprep.subr.bf16.mxu0 %v522
      %618 = vmatpush1.bf16.msra.mxu0 %v521
      %619 = vmatprep.mubr.bf16.mxu0 %v342
      %620 = vmatmul.mubr.bf16.gmra.mrb[0].mxu0 %v341
      %v621 = vpop.f32.mrb[0].mxu0
      %v622 = vadd.f32 0.0, %v621
      %v623 = vpop.f32.mrb[0].mxu0
      %v624 = vadd.f32 0.0, %v623
      %v625 = vpop.f32.mrb[0].mxu0
      %v626 = vpop.f32.mrb[0].mxu0
      %627 = vdwg.mxu0
      %628 = vmatprep.subr.bf16.mxu0 %v524
      %629 = vmatpush1.bf16.msra.mxu0 %v523
      %630 = vmatprep.subr.bf16.mxu0 %v526
      %631 = vmatpush1.bf16.msra.mxu0 %v525
      %632 = vmatprep.subr.bf16.mxu0 %v528
      %633 = vmatpush1.bf16.msra.mxu0 %v527
      %634 = vmatprep.subr.bf16.mxu0 %v530
      %635 = vmatpush1.bf16.msra.mxu0 %v529
      %636 = vmatprep.subr.bf16.mxu0 %v532
      %637 = vmatpush1.bf16.msra.mxu0 %v531
      %638 = vmatprep.subr.bf16.mxu0 %v534
      %639 = vmatpush1.bf16.msra.mxu0 %v533
      %640 = vmatprep.subr.bf16.mxu0 %v536
      %641 = vmatpush1.bf16.msra.mxu0 %v535
      %642 = vmatprep.subr.bf16.mxu0 %v538
      %643 = vmatpush1.bf16.msra.mxu0 %v537
      %644 = vmatprep.subr.bf16.mxu0 0
      %645 = vmatpush1.bf16.msra.mxu0 0
      %646 = vmatprep.subr.bf16.mxu0 0
      %647 = vmatpush1.bf16.msra.mxu0 0
      %648 = vmatprep.subr.bf16.mxu0 0
      %649 = vmatpush1.bf16.msra.mxu0 0
      %650 = vmatprep.subr.bf16.mxu0 0
      %651 = vmatpush1.bf16.msra.mxu0 0
      %652 = vmatprep.subr.bf16.mxu0 0
      %653 = vmatpush1.bf16.msra.mxu0 0
      %654 = vmatprep.subr.bf16.mxu0 0
      %655 = vmatpush1.bf16.msra.mxu0 0
      %656 = vmatprep.subr.bf16.mxu0 0
      %657 = vmatpush1.bf16.msra.mxu0 0
      %658 = vmatprep.subr.bf16.mxu0 0
      %659 = vmatpush1.bf16.msra.mxu0 0
      %660 = vmatprep.mubr.bf16.mxu0 0
      %661 = vmatmul.mubr.bf16.gmra.mrb[0].mxu0 %v343
      %v662 = vpop.f32.mrb[0].mxu0
      %v663 = vadd.f32 %v622, %v662
      %v664 = vpop.f32.mrb[0].mxu0
      %v665 = vadd.f32 %v624, %v664
      %v666 = vpop.f32.mrb[0].mxu0
      %v667 = vpop.f32.mrb[0].mxu0
      %668 = vdwg.mxu0
      %v669 = vadd.f32 %v284, %v663
      %v670 = vadd.f32 %v285, %v665
      %671 = vst [vmem:[#allocation2] sm:$0xff] %v669
      %672 = vst [vmem:[#allocation2 + $0x8] sm:$0xff] %v670
      %p673 = scmp.eq.s32.totalorder %s21, 2
      // Predicated region
      $region37: #{_lambda_.21} parent=31 // pred_check
        %p674 = pneg %p673
      $region38: #{_lambda_.21} parent=31 // pred_check_branch
        %676 = sbr.rel (%p674) target = $region40
      $region39: #{_lambda_.21} parent=31 // pred_region
        %v677 = vld [vmem:[#allocation2] sm:$0xff]
        %v678 = vld [vmem:[#allocation2 + $0x8] sm:$0xff]
        %v679 = vld [vmem:[%s265] sm:$0x3]
        %v681 = vlaneseq
        %v682 = vshrl.u32 %v681, 7
        %v683 = vsub.s32 0, %v682
        %v684 = vrot.slane %v679, %v683
        %v685 = vlaneseq
        %v686 = vshrl.u32 %v685, 7
        %v687 = vsub.s32 1, %v686
        %v688 = vrot.slane %v679, %v687
        %v691 = vadd.f32 %v677, %v684
        %v692 = vadd.f32 %v678, %v688
        %v693 = vmax.f32 %v691, 0.0
        %v694 = vmax.f32 %v692, 0.0
        %v695 = vpack.c.bf16 %v693, %v693
        %v696 = vpack.c.bf16 %v694, %v694
        %v699 = vunpack.c.l.b16 %v695
        %v700 = vunpack.c.l.b16 %v696
        %v701 = vpack.c.b16 %v700, %v699
        %703 = vst [vmem:[%s275] sm:$0xff] %v701
      $region40: #{_lambda_.21} parent=31 // pred_fallthru
        _
      %s704 = smul.u32 2, %s20
      %p705 = scmp.lt.s32.totalorder %s19, 0
      %s706 = scalar_select %p705, %s19, 0
      %p707 = scmp.lt.s32.totalorder %s704, 1
      %s708 = scalar_select %p707, %s704, 1
      %s709 = smul.addr %s706, 2
      %s710 = sadd.s32 %s708, %s709
      %s711 = smul.addr %s710, 4
      %s712 = scalar_lea.vmem %s3, %s711
      // Predicated region
      $region41: #{_lambda_.21} parent=31 // pred_check
        %p713 = pneg %p135
      $region42: #{_lambda_.21} parent=31 // pred_check_branch
        %715 = sbr.rel (%p713) target = $region44
      $region43: #{_lambda_.21} parent=31 // pred_region
        %s716 = smul.u32 2, %s20
      $region44: #{_lambda_.21} parent=31 // pred_fallthru
        _
      // Predicated region
      $region45: #{_lambda_.21} parent=31 // pred_check
        %p717 = pneg %p135
      $region46: #{_lambda_.21} parent=31 // pred_check_branch
        %719 = sbr.rel (%p717) target = $region48
      $region47: #{_lambda_.21} parent=31 // pred_region
        %s720 = smul.u32 2, %s20
        %p721 = scmp.lt.s32.totalorder %s19, 0
        %s722 = scalar_select %p721, %s19, 0
        %p723 = scmp.lt.s32.totalorder %s720, 1
        %s724 = scalar_select %p723, %s720, 1
        %s725 = smul.addr %s722, 2
        %s726 = sadd.s32 %s724, %s725
        %s727 = smul.addr %s726, 4
        %s728 = scalar_lea.vmem %s3, %s727
      $region48: #{_lambda_.21} parent=31 // pred_fallthru
        _
    $region32: #{_lambda_.21} parent=5 // pred_fallthru
      _
    %p729 = scmp.le.s32.totalorder 2, %s9
    // Predicated region
    $region49: #{_lambda_.21} parent=5 // pred_check
      %p730 = pneg %p729
    $region50: #{_lambda_.21} parent=5 // pred_check_branch
      %732 = sbr.rel (%p730) target = $region52
    $region51: #{_lambda_.21} parent=5 // pred_region
      %s733 = ssub.s32 %s9, 2
    $region52: #{_lambda_.21} parent=5 // pred_fallthru
      _
  $region6: #{_lambda_.21} parent=0 // loop_footer
    %s13 = sadd.s32 1, %s9
  $region7: #{_lambda_.21} parent=0 // loop_footer_branch
    %8 = sbr.rel target = $region3
  $region8: #{_lambda_.21} parent=0 // loop_exit
    _

// kernel: _lambda_.22
$region0: #{_lambda_.22}
  #allocation0 [shape = 'u32[]', space=smem, size = 0x4, offset = 0x4, fixed_abs, tag = 'smem constant byte address 0x4 - core index']
  #allocation1 [shape = 'u32[144,128]{1,0:T(1,128)}', space=vmem, size = 0x12000, scoped, tag = 'internal scratch']
  #allocation2 [shape = 'f32[8,256]{1,0:T(8,128)}', space=vmem, size = 0x2000, scoped, tag = 'scratch operand']
  %s0 = inlined_call_operand.vmem [shape: bf16[8,2304], index: 0, kind: input, shape index: {}]
  %s1 = inlined_call_operand.vmem [shape: bf16[2304,256], index: 1, kind: input, shape index: {}]
  %s2 = inlined_call_operand.vmem [shape: f32[1,256], index: 2, kind: input, shape index: {}]
  %s3 = inlined_call_operand.vmem [shape: bf16[8,256], index: 3, kind: input, shape index: {}]
  %s4 = inlined_call_operand.vmem [shape: bf16[8,256], index: 4, kind: output, shape index: {}]
  %s5 = sld [smem:[#allocation0]]
  $region57: #{_lambda_.22} parent=0
    _
  %s7 = ssub.s32 1, %s5
  %s8 = scalar_select 0, %s7, %s5
  loop: start=0, step=1, limit=8
  $region2: #{_lambda_.22} parent=0 // loop_pre_header
    _
  $region3: #{_lambda_.22} parent=0 // loop_header
    %s10 = sphi 0, %s14
    %p11 = scmp.ge.s32.totalorder %s10, 8
    %s17 = sphi 0, %s36
    %s18 = sphi 0, %s32
    %s19 = sphi 0, %s28
    %s20 = sphi 0, %s17
    %s21 = sphi 0, %s18
    %s22 = sphi 0, %s19
    %s23 = sphi 0, %s20
    %s24 = sphi 0, %s21
    %s25 = sphi 0, %s22
    %s41 = sphi 0, %s43
    %s44 = sphi 0, %s41
    %s45 = sphi 0, %s44
    %s61 = sphi 0, %s45
    %s69 = sphi 0, %s71
    %s72 = sphi 0, %s69
    %s73 = sphi 0, %s72
    %s89 = sphi 0, %s73
    %s95 = sphi 0, %s97
    %s98 = sphi 0, %s95
    %s99 = sphi 0, %s98
    %s115 = sphi 0, %s99
    %s123 = sphi 0, %s125
    %s126 = sphi 0, %s123
    %s127 = sphi 0, %s126
    %s143 = sphi 0, %s127
    %s151 = sphi 0, %s153
    %s154 = sphi 0, %s151
    %s155 = sphi 0, %s154
    %s171 = sphi 0, %s155
  $region4: #{_lambda_.22} parent=0 // loop_header_branch
    %13 = sbr.rel (%p11) target = $region8
  $region5: #{_lambda_.22} parent=0 // loop_body
    %s15 = ssub.s32 %s10, 1
    %s16 = ssub.s32 %s10, 2
    %s26 = sadd.s32 1, %s19
    %p27 = scmp.ge.s32.totalorder %s26, 6
    %s28 = scalar_select %p27, 0, %s26
    %s29 = sadd.s32 1, %s18
    %s30 = scalar_select %p27, %s29, %s18
    %p31 = scmp.ge.s32.totalorder %s30, 1
    %s32 = scalar_select %p31, 0, %s30
    %s33 = sadd.s32 1, %s17
    %s34 = scalar_select %p31, %s33, %s17
    %p35 = scmp.ge.s32.totalorder %s34, 1
    %s36 = scalar_select %p35, 0, %s34
    %s37 = ssub.s32 %s17, %s36
    %s38 = ssub.s32 %s19, %s28
    %s39 = sor.u32 %s37, %s38
    %p40 = scmp.eq.s32.totalorder %s39, 0
    %s42 = sadd.s32 %s41, 1
    %s43 = scalar_select %p40, %s41, %s42
    %p46 = pneg %p40
    %p47 = scmp.eq.s32.totalorder %s10, 5
    %p48 = por %p46, %p47
    %p49 = scmp.ne.s32.totalorder %s41, %s44
    %p50 = scmp.eq.s32.totalorder %s10, 0
    %p51 = por %p49, %p50
    %p52 = scmp.ne.s32.totalorder %s41, %s44
    %p53 = scmp.eq.s32.totalorder %s15, 5
    %p54 = por %p52, %p53
    %p55 = scmp.ne.s32.totalorder %s44, %s45
    %p56 = scmp.eq.s32.totalorder %s15, 0
    %p57 = por %p55, %p56
    %p58 = scmp.ne.s32.totalorder %s44, %s45
    %p59 = scmp.eq.s32.totalorder %s16, 5
    %p60 = por %p58, %p59
    %p62 = scmp.ne.s32.totalorder %s45, %s61
    %p63 = scmp.eq.s32.totalorder %s16, 0
    %p64 = por %p62, %p63
    %s65 = ssub.s32 %s19, %s28
    %s66 = ssub.s32 %s18, %s32
    %s67 = sor.u32 %s65, %s66
    %p68 = scmp.eq.s32.totalorder %s67, 0
    %s70 = sadd.s32 %s69, 1
    %s71 = scalar_select %p68, %s69, %s70
    %p74 = pneg %p68
    %p75 = scmp.eq.s32.totalorder %s10, 5
    %p76 = por %p74, %p75
    %p77 = scmp.ne.s32.totalorder %s69, %s72
    %p78 = scmp.eq.s32.totalorder %s10, 0
    %p79 = por %p77, %p78
    %p80 = scmp.ne.s32.totalorder %s69, %s72
    %p81 = scmp.eq.s32.totalorder %s15, 5
    %p82 = por %p80, %p81
    %p83 = scmp.ne.s32.totalorder %s72, %s73
    %p84 = scmp.eq.s32.totalorder %s15, 0
    %p85 = por %p83, %p84
    %p86 = scmp.ne.s32.totalorder %s72, %s73
    %p87 = scmp.eq.s32.totalorder %s16, 5
    %p88 = por %p86, %p87
    %p90 = scmp.ne.s32.totalorder %s73, %s89
    %p91 = scmp.eq.s32.totalorder %s16, 0
    %p92 = por %p90, %p91
    %s93 = ssub.s32 %s18, %s32
    %p94 = scmp.eq.s32.totalorder %s93, 0
    %s96 = sadd.s32 %s95, 1
    %s97 = scalar_select %p94, %s95, %s96
    %p100 = pneg %p94
    %p101 = scmp.eq.s32.totalorder %s10, 5
    %p102 = por %p100, %p101
    %p103 = scmp.ne.s32.totalorder %s95, %s98
    %p104 = scmp.eq.s32.totalorder %s10, 0
    %p105 = por %p103, %p104
    %p106 = scmp.ne.s32.totalorder %s95, %s98
    %p107 = scmp.eq.s32.totalorder %s15, 5
    %p108 = por %p106, %p107
    %p109 = scmp.ne.s32.totalorder %s98, %s99
    %p110 = scmp.eq.s32.totalorder %s15, 0
    %p111 = por %p109, %p110
    %p112 = scmp.ne.s32.totalorder %s98, %s99
    %p113 = scmp.eq.s32.totalorder %s16, 5
    %p114 = por %p112, %p113
    %p116 = scmp.ne.s32.totalorder %s99, %s115
    %p117 = scmp.eq.s32.totalorder %s16, 0
    %p118 = por %p116, %p117
    %s119 = ssub.s32 %s17, %s36
    %s120 = ssub.s32 %s18, %s32
    %s121 = sor.u32 %s119, %s120
    %p122 = scmp.eq.s32.totalorder %s121, 0
    %s124 = sadd.s32 %s123, 1
    %s125 = scalar_select %p122, %s123, %s124
    %p128 = pneg %p122
    %p129 = scmp.eq.s32.totalorder %s10, 5
    %p130 = por %p128, %p129
    %p131 = scmp.ne.s32.totalorder %s123, %s126
    %p132 = scmp.eq.s32.totalorder %s10, 0
    %p133 = por %p131, %p132
    %p134 = scmp.ne.s32.totalorder %s123, %s126
    %p135 = scmp.eq.s32.totalorder %s15, 5
    %p136 = por %p134, %p135
    %p137 = scmp.ne.s32.totalorder %s126, %s127
    %p138 = scmp.eq.s32.totalorder %s15, 0
    %p139 = por %p137, %p138
    %p140 = scmp.ne.s32.totalorder %s126, %s127
    %p141 = scmp.eq.s32.totalorder %s16, 5
    %p142 = por %p140, %p141
    %p144 = scmp.ne.s32.totalorder %s127, %s143
    %p145 = scmp.eq.s32.totalorder %s16, 0
    %p146 = por %p144, %p145
    %s147 = ssub.s32 %s17, %s36
    %s148 = ssub.s32 %s18, %s32
    %s149 = sor.u32 %s147, %s148
    %p150 = scmp.eq.s32.totalorder %s149, 0
    %s152 = sadd.s32 %s151, 1
    %s153 = scalar_select %p150, %s151, %s152
    %p156 = pneg %p150
    %p157 = scmp.eq.s32.totalorder %s10, 5
    %p158 = por %p156, %p157
    %p159 = scmp.ne.s32.totalorder %s151, %s154
    %p160 = scmp.eq.s32.totalorder %s10, 0
    %p161 = por %p159, %p160
    %p162 = scmp.ne.s32.totalorder %s151, %s154
    %p163 = scmp.eq.s32.totalorder %s15, 5
    %p164 = por %p162, %p163
    %p165 = scmp.ne.s32.totalorder %s154, %s155
    %p166 = scmp.eq.s32.totalorder %s15, 0
    %p167 = por %p165, %p166
    %p168 = scmp.ne.s32.totalorder %s154, %s155
    %p169 = scmp.eq.s32.totalorder %s16, 5
    %p170 = por %p168, %p169
    %p172 = scmp.ne.s32.totalorder %s155, %s171
    %p173 = scmp.eq.s32.totalorder %s16, 0
    %p174 = por %p172, %p173
    %p175 = scmp.le.s32.totalorder 1, %s10
    %p176 = scmp.lt.s32.totalorder %s10, 7
    %p177 = pnand %p175, %p176
    %p178 = pneg %p177
    // Predicated region
    $region9: #{_lambda_.22} parent=5 // pred_check
      _
    $region10: #{_lambda_.22} parent=5 // pred_check_branch
      %180 = sbr.rel (%p177) target = $region12
    $region11: #{_lambda_.22} parent=5 // pred_region
      %s181 = ssub.s32 %s10, 1
      // Predicated region
      $region13: #{_lambda_.22} parent=11 // pred_check
        %p182 = pneg %p111
      $region14: #{_lambda_.22} parent=11 // pred_check_branch
        %184 = sbr.rel (%p182) target = $region16
      $region15: #{_lambda_.22} parent=11 // pred_region
        %s185 = smul.u32 2, %s21
        %p186 = scmp.lt.s32.totalorder %s185, 1
        %s187 = scalar_select %p186, %s185, 1
        %s188 = scalar_lea.vmem %s2, %s187
        %s189 = smul.u32 2, %s21
      $region16: #{_lambda_.22} parent=11 // pred_fallthru
        _
      // Predicated region
      $region17: #{_lambda_.22} parent=11 // pred_check
        %p190 = pneg %p139
      $region18: #{_lambda_.22} parent=11 // pred_check_branch
        %192 = sbr.rel (%p190) target = $region20
      $region19: #{_lambda_.22} parent=11 // pred_region
        %s193 = smul.u32 2, %s21
        %p194 = scmp.lt.s32.totalorder %s20, 0
        %s195 = scalar_select %p194, %s20, 0
        %p196 = scmp.lt.s32.totalorder %s193, 1
        %s197 = scalar_select %p196, %s193, 1
        %s198 = smul.addr %s195, 2
        %s199 = sadd.s32 %s197, %s198
        %s200 = smul.addr %s199, 4
        %s201 = scalar_lea.vmem %s3, %s200
        %s202 = smul.u32 2, %s21
      $region20: #{_lambda_.22} parent=11 // pred_fallthru
        _
    $region12: #{_lambda_.22} parent=5 // pred_fallthru
      _
    %p203 = scmp.lt.s32.totalorder %s10, 6
    // Predicated region
    $region21: #{_lambda_.22} parent=5 // pred_check
      %p204 = pneg %p203
    $region22: #{_lambda_.22} parent=5 // pred_check_branch
      %206 = sbr.rel (%p204) target = $region24
    $region23: #{_lambda_.22} parent=5 // pred_region
      // Predicated region
      $region25: #{_lambda_.22} parent=23 // pred_check
        %p207 = pneg %p51
      $region26: #{_lambda_.22} parent=23 // pred_check_branch
        %209 = sbr.rel (%p207) target = $region28
      $region27: #{_lambda_.22} parent=23 // pred_region
        %s210 = smul.u32 3, %s19
        %p211 = scmp.lt.s32.totalorder %s17, 0
        %s212 = scalar_select %p211, %s17, 0
        %p213 = scmp.lt.s32.totalorder %s210, 17
        %s214 = scalar_select %p213, %s210, 17
        %s215 = smul.addr %s212, 18
        %s216 = sadd.s32 %s214, %s215
        %s217 = smul.addr %s216, 4
        %s218 = scalar_lea.vmem %s0, %s217
        %s219 = smul.u32 3, %s19
      $region28: #{_lambda_.22} parent=23 // pred_fallthru
        _
      // Predicated region
      $region29: #{_lambda_.22} parent=23 // pred_check
        %p220 = pneg %p79
      $region30: #{_lambda_.22} parent=23 // pred_check_branch
        %222 = sbr.rel (%p220) target = $region32
      $region31: #{_lambda_.22} parent=23 // pred_region
        %s223 = smul.u32 48, %s19
        %s224 = smul.u32 2, %s18
        %p225 = scmp.lt.s32.totalorder %s223, 287
        %s226 = scalar_select %p225, %s223, 287
        %p227 = scmp.lt.s32.totalorder %s224, 1
        %s228 = scalar_select %p227, %s224, 1
        %s229 = smul.addr %s226, 2
        %s230 = sadd.s32 %s228, %s229
        %s231 = smul.addr %s230, 4
        %s232 = scalar_lea.vmem %s1, %s231
        %s233 = smul.u32 48, %s19
        %s234 = smul.u32 2, %s18
      $region32: #{_lambda_.22} parent=23 // pred_fallthru
        _
    $region24: #{_lambda_.22} parent=5 // pred_fallthru
      _
    %p235 = scmp.le.s32.totalorder 1, %s10
    %p236 = scmp.lt.s32.totalorder %s10, 7
    %p237 = pnand %p235, %p236
    %p238 = pneg %p237
    // Predicated region
    $region33: #{_lambda_.22} parent=5 // pred_check
      _
    $region34: #{_lambda_.22} parent=5 // pred_check_branch
      %240 = sbr.rel (%p237) target = $region36
    $region35: #{_lambda_.22} parent=5 // pred_region
      %s241 = ssub.s32 %s10, 1
      %s242 = smul.u32 3, %s22
      %p243 = scmp.lt.s32.totalorder %s20, 0
      %s244 = scalar_select %p243, %s20, 0
      %p245 = scmp.lt.s32.totalorder %s242, 17
      %s246 = scalar_select %p245, %s242, 17
      %s247 = smul.addr %s244, 18
      %s248 = sadd.s32 %s246, %s247
      %s249 = smul.addr %s248, 4
      %s250 = scalar_lea.vmem %s0, %s249
      %p251 = pneg %p57
      %p252 = pneg %p54
      %s253 = smul.u32 48, %s22
      %s254 = smul.u32 2, %s21
      %p255 = scmp.lt.s32.totalorder %s253, 287
      %s256 = scalar_select %p255, %s253, 287
      %p257 = scmp.lt.s32.totalorder %s254, 1
      %s258 = scalar_select %p257, %s254, 1
      %s259 = smul.addr %s256, 2
      %s260 = sadd.s32 %s258, %s259
      %s261 = smul.addr %s260, 4
      %s262 = scalar_lea.vmem %s1, %s261
      %p263 = pneg %p85
      %p264 = pneg %p82
      %s265 = smul.u32 2, %s21
      %p266 = scmp.lt.s32.totalorder %s265, 1
      %s267 = scalar_select %p266, %s265, 1
      %s268 = scalar_lea.vmem %s2, %s267
      %p269 = pneg %p111
      %p270 = pneg %p108
      %s271 = smul.u32 2, %s21
      %p272 = scmp.lt.s32.totalorder %s20, 0
      %s273 = scalar_select %p272, %s20, 0
      %p274 = scmp.lt.s32.totalorder %s271, 1
      %s275 = scalar_select %p274, %s271, 1
      %s276 = smul.addr %s273, 2
      %s277 = sadd.s32 %s275, %s276
      %s278 = smul.addr %s277, 4
      %s279 = scalar_lea.vmem %s3, %s278
      %p280 = pneg %p139
      %p281 = pneg %p136
      %p282 = pneg %p167
      %p283 = pneg %p164
      %s284 = smul.u32 2, %s21
      %p285 = scmp.lt.s32.totalorder %s20, 0
      %s286 = scalar_select %p285, %s20, 0
      %p287 = scmp.lt.s32.totalorder %s284, 1
      %s288 = scalar_select %p287, %s284, 1
      %s289 = smul.addr %s286, 2
      %s290 = sadd.s32 %s288, %s289
      %s291 = smul.addr %s290, 4
      %s292 = scalar_lea.vmem %s4, %s291
      %s293 = smul.u32 3, %s22
      %p294 = scmp.lt.s32.totalorder %s20, 0
      %s295 = scalar_select %p294, %s20, 0
      %p296 = scmp.lt.s32.totalorder %s293, 17
      %s297 = scalar_select %p296, %s293, 17
      %s298 = smul.addr %s295, 18
      %s299 = sadd.s32 %s297, %s298
      %s300 = smul.addr %s299, 4
      %s301 = scalar_lea.vmem %s0, %s300
      %s302 = smul.u32 3, %s22
      %s303 = smul.u32 48, %s22
      %s304 = smul.u32 2, %s21
      %p305 = scmp.lt.s32.totalorder %s303, 287
      %s306 = scalar_select %p305, %s303, 287
      %p307 = scmp.lt.s32.totalorder %s304, 1
      %s308 = scalar_select %p307, %s304, 1
      %s309 = smul.addr %s306, 2
      %s310 = sadd.s32 %s308, %s309
      %s311 = smul.addr %s310, 4
      %s312 = scalar_lea.vmem %s1, %s311
      %s313 = smul.u32 48, %s22
      %s314 = smul.u32 2, %s21
      %s315 = smul.u32 2, %s21
      %p316 = scmp.lt.s32.totalorder %s315, 1
      %s317 = scalar_select %p316, %s315, 1
      %s318 = scalar_lea.vmem %s2, %s317
      %s319 = smul.u32 2, %s21
      %s320 = smul.u32 2, %s21
      %p321 = scmp.lt.s32.totalorder %s20, 0
      %s322 = scalar_select %p321, %s20, 0
      %p323 = scmp.lt.s32.totalorder %s320, 1
      %s324 = scalar_select %p323, %s320, 1
      %s325 = smul.addr %s322, 2
      %s326 = sadd.s32 %s324, %s325
      %s327 = smul.addr %s326, 4
      %s328 = scalar_lea.vmem %s3, %s327
      %s329 = smul.u32 2, %s21
      %s330 = smul.u32 2, %s21
      %p331 = scmp.lt.s32.totalorder %s20, 0
      %s332 = scalar_select %p331, %s20, 0
      %p333 = scmp.lt.s32.totalorder %s330, 1
      %s334 = scalar_select %p333, %s330, 1
      %s335 = smul.addr %s332, 2
      %s336 = sadd.s32 %s334, %s335
      %s337 = smul.addr %s336, 4
      %s338 = scalar_lea.vmem %s4, %s337
      %s339 = smul.u32 2, %s21
      %p341 = scmp.eq.s32.totalorder %s22, 0
      // Predicated region
      $region37: #{_lambda_.22} parent=35 // pred_check
        %p342 = pneg %p341
      $region38: #{_lambda_.22} parent=35 // pred_check_branch
        %344 = sbr.rel (%p342) target = $region40
      $region39: #{_lambda_.22} parent=35 // pred_region
        %345 = vst [vmem:[#allocation2] sm:$0xff] 0.0
        %346 = vst [vmem:[#allocation2 + $0x8] sm:$0xff] 0.0
      $region40: #{_lambda_.22} parent=35 // pred_fallthru
        _
      %v347 = vld [vmem:[#allocation2] sm:$0xff]
      %v348 = vld [vmem:[#allocation2 + $0x8] sm:$0xff]
      %v349 = vld [vmem:[%s301] sm:$0xff]
      %v350 = vld [vmem:[%s301 + $0x8] sm:$0xf]
      %v351 = vld [vmem:[%s312] sm:$0xff]
      %v352 = vld [vmem:[%s312 + $0x8] sm:$0xff]
      %v353 = vld [vmem:[%s312 + $0x10] sm:$0xff]
      %v354 = vld [vmem:[%s312 + $0x18] sm:$0xff]
      %v355 = vld [vmem:[%s312 + $0x20] sm:$0xff]
      %v356 = vld [vmem:[%s312 + $0x28] sm:$0xff]
      %v357 = vld [vmem:[%s312 + $0x30] sm:$0xff]
      %v358 = vld [vmem:[%s312 + $0x38] sm:$0xff]
      %v359 = vld [vmem:[%s312 + $0x40] sm:$0xff]
      %v360 = vld [vmem:[%s312 + $0x48] sm:$0xff]
      %v361 = vld [vmem:[%s312 + $0x50] sm:$0xff]
      %v362 = vld [vmem:[%s312 + $0x58] sm:$0xff]
      %v363 = vld [vmem:[%s312 + $0x60] sm:$0xff]
      %v364 = vld [vmem:[%s312 + $0x68] sm:$0xff]
      %v365 = vld [vmem:[%s312 + $0x70] sm:$0xff]
      %v366 = vld [vmem:[%s312 + $0x78] sm:$0xff]
      %v367 = vld [vmem:[%s312 + $0x80] sm:$0xff]
      %v368 = vld [vmem:[%s312 + $0x88] sm:$0xff]
      %v369 = vld [vmem:[%s312 + $0x90] sm:$0xff]
      %v370 = vld [vmem:[%s312 + $0x98] sm:$0xff]
      %v371 = vld [vmem:[%s312 + $0xa0] sm:$0xff]
      %v372 = vld [vmem:[%s312 + $0xa8] sm:$0xff]
      %v373 = vld [vmem:[%s312 + $0xb0] sm:$0xff]
      %v374 = vld [vmem:[%s312 + $0xb8] sm:$0xff]
      %v375 = vld [vmem:[%s312 + $0xc0] sm:$0xff]
      %v376 = vld [vmem:[%s312 + $0xc8] sm:$0xff]
      %v377 = vld [vmem:[%s312 + $0xd0] sm:$0xff]
      %v378 = vld [vmem:[%s312 + $0xd8] sm:$0xff]
      %v379 = vld [vmem:[%s312 + $0xe0] sm:$0xff]
      %v380 = vld [vmem:[%s312 + $0xe8] sm:$0xff]
      %v381 = vld [vmem:[%s312 + $0xf0] sm:$0xff]
      %v382 = vld [vmem:[%s312 + $0xf8] sm:$0xff]
      %v383 = vld [vmem:[%s312 + $0x100] sm:$0xff]
      %v384 = vld [vmem:[%s312 + $0x108] sm:$0xff]
      %v385 = vld [vmem:[%s312 + $0x110] sm:$0xff]
      %v386 = vld [vmem:[%s312 + $0x118] sm:$0xff]
      %v387 = vld [vmem:[%s312 + $0x120] sm:$0xff]
      %v388 = vld [vmem:[%s312 + $0x128] sm:$0xff]
      %v389 = vld [vmem:[%s312 + $0x130] sm:$0xff]
      %v390 = vld [vmem:[%s312 + $0x138] sm:$0xff]
      %v391 = vld [vmem:[%s312 + $0x140] sm:$0xff]
      %v392 = vld [vmem:[%s312 + $0x148] sm:$0xff]
      %v393 = vld [vmem:[%s312 + $0x150] sm:$0xff]
      %v394 = vld [vmem:[%s312 + $0x158] sm:$0xff]
      %v395 = vld [vmem:[%s312 + $0x160] sm:$0xff]
      %v396 = vld [vmem:[%s312 + $0x168] sm:$0xff]
      %v397 = vld [vmem:[%s312 + $0x170] sm:$0xff]
      %v398 = vld [vmem:[%s312 + $0x178] sm:$0xff]
      %v401 = vunpack.c.l.b16 %v349
      %v402 = vunpack.c.h.b16 %v349
      %v403 = vunpack.c.l.b16 %v350
      %v404 = vpack.c.b16 %v401, %v401
      %v405 = vpack.c.b16 %v402, %v402
      %v406 = vpack.c.b16 %v403, %v403
      %v458 = vunpack.c.l.b16 %v351
      %v459 = vunpack.c.h.b16 %v351
      %v460 = vunpack.c.l.b16 %v352
      %v461 = vunpack.c.h.b16 %v352
      %v462 = vunpack.c.l.b16 %v353
      %v463 = vunpack.c.h.b16 %v353
      %v464 = vunpack.c.l.b16 %v354
      %v465 = vunpack.c.h.b16 %v354
      %v466 = vunpack.c.l.b16 %v355
      %v467 = vunpack.c.h.b16 %v355
      %v468 = vunpack.c.l.b16 %v356
      %v469 = vunpack.c.h.b16 %v356
      %v470 = vunpack.c.l.b16 %v357
      %v471 = vunpack.c.h.b16 %v357
      %v472 = vunpack.c.l.b16 %v358
      %v473 = vunpack.c.h.b16 %v358
      %v474 = vunpack.c.l.b16 %v359
      %v475 = vunpack.c.h.b16 %v359
      %v476 = vunpack.c.l.b16 %v360
      %v477 = vunpack.c.h.b16 %v360
      %v478 = vunpack.c.l.b16 %v361
      %v479 = vunpack.c.h.b16 %v361
      %v480 = vunpack.c.l.b16 %v362
      %v481 = vunpack.c.h.b16 %v362
      %v482 = vunpack.c.l.b16 %v363
      %v483 = vunpack.c.h.b16 %v363
      %v484 = vunpack.c.l.b16 %v364
      %v485 = vunpack.c.h.b16 %v364
      %v486 = vunpack.c.l.b16 %v365
      %v487 = vunpack.c.h.b16 %v365
      %v488 = vunpack.c.l.b16 %v366
      %v489 = vunpack.c.h.b16 %v366
      %v490 = vunpack.c.l.b16 %v367
      %v491 = vunpack.c.h.b16 %v367
      %v492 = vunpack.c.l.b16 %v368
      %v493 = vunpack.c.h.b16 %v368
      %v494 = vunpack.c.l.b16 %v369
      %v495 = vunpack.c.h.b16 %v369
      %v496 = vunpack.c.l.b16 %v370
      %v497 = vunpack.c.h.b16 %v370
      %v498 = vunpack.c.l.b16 %v371
      %v499 = vunpack.c.h.b16 %v371
      %v500 = vunpack.c.l.b16 %v372
      %v501 = vunpack.c.h.b16 %v372
      %v502 = vunpack.c.l.b16 %v373
      %v503 = vunpack.c.h.b16 %v373
      %v504 = vunpack.c.l.b16 %v374
      %v505 = vunpack.c.h.b16 %v374
      %v506 = vunpack.c.l.b16 %v375
      %v507 = vunpack.c.h.b16 %v375
      %v508 = vunpack.c.l.b16 %v376
      %v509 = vunpack.c.h.b16 %v376
      %v510 = vunpack.c.l.b16 %v377
      %v511 = vunpack.c.h.b16 %v377
      %v512 = vunpack.c.l.b16 %v378
      %v513 = vunpack.c.h.b16 %v378
      %v514 = vunpack.c.l.b16 %v379
      %v515 = vunpack.c.h.b16 %v379
      %v516 = vunpack.c.l.b16 %v380
      %v517 = vunpack.c.h.b16 %v380
      %v518 = vunpack.c.l.b16 %v381
      %v519 = vunpack.c.h.b16 %v381
      %v520 = vunpack.c.l.b16 %v382
      %v521 = vunpack.c.h.b16 %v382
      %v522 = vunpack.c.l.b16 %v383
      %v523 = vunpack.c.h.b16 %v383
      %v524 = vunpack.c.l.b16 %v384
      %v525 = vunpack.c.h.b16 %v384
      %v526 = vunpack.c.l.b16 %v385
      %v527 = vunpack.c.h.b16 %v385
      %v528 = vunpack.c.l.b16 %v386
      %v529 = vunpack.c.h.b16 %v386
      %v530 = vunpack.c.l.b16 %v387
      %v531 = vunpack.c.h.b16 %v387
      %v532 = vunpack.c.l.b16 %v388
      %v533 = vunpack.c.h.b16 %v388
      %v534 = vunpack.c.l.b16 %v389
      %v535 = vunpack.c.h.b16 %v389
      %v536 = vunpack.c.l.b16 %v390
      %v537 = vunpack.c.h.b16 %v390
      %v538 = vunpack.c.l.b16 %v391
      %v539 = vunpack.c.h.b16 %v391
      %v540 = vunpack.c.l.b16 %v392
      %v541 = vunpack.c.h.b16 %v392
      %v542 = vunpack.c.l.b16 %v393
      %v543 = vunpack.c.h.b16 %v393
      %v544 = vunpack.c.l.b16 %v394
      %v545 = vunpack.c.h.b16 %v394
      %v546 = vunpack.c.l.b16 %v395
      %v547 = vunpack.c.h.b16 %v395
      %v548 = vunpack.c.l.b16 %v396
      %v549 = vunpack.c.h.b16 %v396
      %v550 = vunpack.c.l.b16 %v397
      %v551 = vunpack.c.h.b16 %v397
      %v552 = vunpack.c.l.b16 %v398
      %v553 = vunpack.c.h.b16 %v398
      %v554 = vpack.c.b16 %v460, %v458
      %v555 = vpack.c.b16 %v461, %v459
      %v556 = vpack.c.b16 %v464, %v462
      %v557 = vpack.c.b16 %v465, %v463
      %v558 = vpack.c.b16 %v468, %v466
      %v559 = vpack.c.b16 %v469, %v467
      %v560 = vpack.c.b16 %v472, %v470
      %v561 = vpack.c.b16 %v473, %v471
      %v562 = vpack.c.b16 %v476, %v474
      %v563 = vpack.c.b16 %v477, %v475
      %v564 = vpack.c.b16 %v480, %v478
      %v565 = vpack.c.b16 %v481, %v479
      %v566 = vpack.c.b16 %v484, %v482
      %v567 = vpack.c.b16 %v485, %v483
      %v568 = vpack.c.b16 %v488, %v486
      %v569 = vpack.c.b16 %v489, %v487
      %v570 = vpack.c.b16 %v492, %v490
      %v571 = vpack.c.b16 %v493, %v491
      %v572 = vpack.c.b16 %v496, %v494
      %v573 = vpack.c.b16 %v497, %v495
      %v574 = vpack.c.b16 %v500, %v498
      %v575 = vpack.c.b16 %v501, %v499
      %v576 = vpack.c.b16 %v504, %v502
      %v577 = vpack.c.b16 %v505, %v503
      %v578 = vpack.c.b16 %v508, %v506
      %v579 = vpack.c.b16 %v509, %v507
      %v580 = vpack.c.b16 %v512, %v510
      %v581 = vpack.c.b16 %v513, %v511
      %v582 = vpack.c.b16 %v516, %v514
      %v583 = vpack.c.b16 %v517, %v515
      %v584 = vpack.c.b16 %v520, %v518
      %v585 = vpack.c.b16 %v521, %v519
      %v586 = vpack.c.b16 %v524, %v522
      %v587 = vpack.c.b16 %v525, %v523
      %v588 = vpack.c.b16 %v528, %v526
      %v589 = vpack.c.b16 %v529, %v527
      %v590 = vpack.c.b16 %v532, %v530
      %v591 = vpack.c.b16 %v533, %v531
      %v592 = vpack.c.b16 %v536, %v534
      %v593 = vpack.c.b16 %v537, %v535
      %v594 = vpack.c.b16 %v540, %v538
      %v595 = vpack.c.b16 %v541, %v539
      %v596 = vpack.c.b16 %v544, %v542
      %v597 = vpack.c.b16 %v545, %v543
      %v598 = vpack.c.b16 %v548, %v546
      %v599 = vpack.c.b16 %v549, %v547
      %v600 = vpack.c.b16 %v552, %v550
      %v601 = vpack.c.b16 %v553, %v551
      %650 = vmatprep.subr.bf16.mxu0 %v555
      %651 = vmatpush1.bf16.msra.mxu0 %v554
      %652 = vmatprep.subr.bf16.mxu0 %v557
      %653 = vmatpush1.bf16.msra.mxu0 %v556
      %654 = vmatprep.subr.bf16.mxu0 %v559
      %655 = vmatpush1.bf16.msra.mxu0 %v558
      %656 = vmatprep.subr.bf16.mxu0 %v561
      %657 = vmatpush1.bf16.msra.mxu0 %v560
      %658 = vmatprep.subr.bf16.mxu0 %v563
      %659 = vmatpush1.bf16.msra.mxu0 %v562
      %660 = vmatprep.subr.bf16.mxu0 %v565
      %661 = vmatpush1.bf16.msra.mxu0 %v564
      %662 = vmatprep.subr.bf16.mxu0 %v567
      %663 = vmatpush1.bf16.msra.mxu0 %v566
      %664 = vmatprep.subr.bf16.mxu0 %v569
      %665 = vmatpush1.bf16.msra.mxu0 %v568
      %666 = vmatprep.subr.bf16.mxu0 %v571
      %667 = vmatpush1.bf16.msra.mxu0 %v570
      %668 = vmatprep.subr.bf16.mxu0 %v573
      %669 = vmatpush1.bf16.msra.mxu0 %v572
      %670 = vmatprep.subr.bf16.mxu0 %v575
      %671 = vmatpush1.bf16.msra.mxu0 %v574
      %672 = vmatprep.subr.bf16.mxu0 %v577
      %673 = vmatpush1.bf16.msra.mxu0 %v576
      %674 = vmatprep.subr.bf16.mxu0 %v579
      %675 = vmatpush1.bf16.msra.mxu0 %v578
      %676 = vmatprep.subr.bf16.mxu0 %v581
      %677 = vmatpush1.bf16.msra.mxu0 %v580
      %678 = vmatprep.subr.bf16.mxu0 %v583
      %679 = vmatpush1.bf16.msra.mxu0 %v582
      %680 = vmatprep.subr.bf16.mxu0 %v585
      %681 = vmatpush1.bf16.msra.mxu0 %v584
      %682 = vmatprep.mubr.bf16.mxu0 %v405
      %683 = vmatmul.mubr.bf16.gmra.mrb[0].mxu0 %v404
      %v684 = vpop.f32.mrb[0].mxu0
      %v685 = vadd.f32 0.0, %v684
      %v686 = vpop.f32.mrb[0].mxu0
      %v687 = vadd.f32 0.0, %v686
      %v688 = vpop.f32.mrb[0].mxu0
      %v689 = vpop.f32.mrb[0].mxu0
      %690 = vdwg.mxu0
      %691 = vmatprep.subr.bf16.mxu0 %v587
      %692 = vmatpush1.bf16.msra.mxu0 %v586
      %693 = vmatprep.subr.bf16.mxu0 %v589
      %694 = vmatpush1.bf16.msra.mxu0 %v588
      %695 = vmatprep.subr.bf16.mxu0 %v591
      %696 = vmatpush1.bf16.msra.mxu0 %v590
      %697 = vmatprep.subr.bf16.mxu0 %v593
      %698 = vmatpush1.bf16.msra.mxu0 %v592
      %699 = vmatprep.subr.bf16.mxu0 %v595
      %700 = vmatpush1.bf16.msra.mxu0 %v594
      %701 = vmatprep.subr.bf16.mxu0 %v597
      %702 = vmatpush1.bf16.msra.mxu0 %v596
      %703 = vmatprep.subr.bf16.mxu0 %v599
      %704 = vmatpush1.bf16.msra.mxu0 %v598
      %705 = vmatprep.subr.bf16.mxu0 %v601
      %706 = vmatpush1.bf16.msra.mxu0 %v600
      %707 = vmatprep.subr.bf16.mxu0 0
      %708 = vmatpush1.bf16.msra.mxu0 0
      %709 = vmatprep.subr.bf16.mxu0 0
      %710 = vmatpush1.bf16.msra.mxu0 0
      %711 = vmatprep.subr.bf16.mxu0 0
      %712 = vmatpush1.bf16.msra.mxu0 0
      %713 = vmatprep.subr.bf16.mxu0 0
      %714 = vmatpush1.bf16.msra.mxu0 0
      %715 = vmatprep.subr.bf16.mxu0 0
      %716 = vmatpush1.bf16.msra.mxu0 0
      %717 = vmatprep.subr.bf16.mxu0 0
      %718 = vmatpush1.bf16.msra.mxu0 0
      %719 = vmatprep.subr.bf16.mxu0 0
      %720 = vmatpush1.bf16.msra.mxu0 0
      %721 = vmatprep.subr.bf16.mxu0 0
      %722 = vmatpush1.bf16.msra.mxu0 0
      %723 = vmatprep.mubr.bf16.mxu0 0
      %724 = vmatmul.mubr.bf16.gmra.mrb[0].mxu0 %v406
      %v725 = vpop.f32.mrb[0].mxu0
      %v726 = vadd.f32 %v685, %v725
      %v727 = vpop.f32.mrb[0].mxu0
      %v728 = vadd.f32 %v687, %v727
      %v729 = vpop.f32.mrb[0].mxu0
      %v730 = vpop.f32.mrb[0].mxu0
      %731 = vdwg.mxu0
      %v732 = vadd.f32 %v347, %v726
      %v733 = vadd.f32 %v348, %v728
      %734 = vst [vmem:[#allocation2] sm:$0xff] %v732
      %735 = vst [vmem:[#allocation2 + $0x8] sm:$0xff] %v733
      %p736 = scmp.eq.s32.totalorder %s22, 5
      // Predicated region
      $region41: #{_lambda_.22} parent=35 // pred_check
        %p737 = pneg %p736
      $region42: #{_lambda_.22} parent=35 // pred_check_branch
        %739 = sbr.rel (%p737) target = $region44
      $region43: #{_lambda_.22} parent=35 // pred_region
        %v740 = vld [vmem:[#allocation2] sm:$0xff]
        %v741 = vld [vmem:[#allocation2 + $0x8] sm:$0xff]
        %v742 = vld [vmem:[%s318] sm:$0x3]
        %v744 = vlaneseq
        %v745 = vshrl.u32 %v744, 7
        %v746 = vsub.s32 0, %v745
        %v747 = vrot.slane %v742, %v746
        %v748 = vlaneseq
        %v749 = vshrl.u32 %v748, 7
        %v750 = vsub.s32 1, %v749
        %v751 = vrot.slane %v742, %v750
        %v754 = vadd.f32 %v740, %v747
        %v755 = vadd.f32 %v741, %v751
        %v756 = vld [vmem:[%s328] sm:$0xff]
        %v757 = vunpack.c.l.bf16 %v756
        %v758 = vunpack.c.h.bf16 %v756
        %v759 = vadd.f32 %v754, %v757
        %v760 = vadd.f32 %v755, %v758
        %v761 = vmax.f32 %v759, 0.0
        %v762 = vmax.f32 %v760, 0.0
        %v763 = vpack.c.bf16 %v761, %v761
        %v764 = vpack.c.bf16 %v762, %v762
        %v767 = vunpack.c.l.b16 %v763
        %v768 = vunpack.c.l.b16 %v764
        %v769 = vpack.c.b16 %v768, %v767
        %771 = vst [vmem:[%s338] sm:$0xff] %v769
      $region44: #{_lambda_.22} parent=35 // pred_fallthru
        _
      %s772 = smul.u32 2, %s21
      %p773 = scmp.lt.s32.totalorder %s20, 0
      %s774 = scalar_select %p773, %s20, 0
      %p775 = scmp.lt.s32.totalorder %s772, 1
      %s776 = scalar_select %p775, %s772, 1
      %s777 = smul.addr %s774, 2
      %s778 = sadd.s32 %s776, %s777
      %s779 = smul.addr %s778, 4
      %s780 = scalar_lea.vmem %s4, %s779
      // Predicated region
      $region45: #{_lambda_.22} parent=35 // pred_check
        %p781 = pneg %p164
      $region46: #{_lambda_.22} parent=35 // pred_check_branch
        %783 = sbr.rel (%p781) target = $region48
      $region47: #{_lambda_.22} parent=35 // pred_region
        %s784 = smul.u32 2, %s21
      $region48: #{_lambda_.22} parent=35 // pred_fallthru
        _
      // Predicated region
      $region49: #{_lambda_.22} parent=35 // pred_check
        %p785 = pneg %p164
      $region50: #{_lambda_.22} parent=35 // pred_check_branch
        %787 = sbr.rel (%p785) target = $region52
      $region51: #{_lambda_.22} parent=35 // pred_region
        %s788 = smul.u32 2, %s21
        %p789 = scmp.lt.s32.totalorder %s20, 0
        %s790 = scalar_select %p789, %s20, 0
        %p791 = scmp.lt.s32.totalorder %s788, 1
        %s792 = scalar_select %p791, %s788, 1
        %s793 = smul.addr %s790, 2
        %s794 = sadd.s32 %s792, %s793
        %s795 = smul.addr %s794, 4
        %s796 = scalar_lea.vmem %s4, %s795
      $region52: #{_lambda_.22} parent=35 // pred_fallthru
        _
    $region36: #{_lambda_.22} parent=5 // pred_fallthru
      _
    %p797 = scmp.le.s32.totalorder 2, %s10
    // Predicated region
    $region53: #{_lambda_.22} parent=5 // pred_check
      %p798 = pneg %p797
    $region54: #{_lambda_.22} parent=5 // pred_check_branch
      %800 = sbr.rel (%p798) target = $region56
    $region55: #{_lambda_.22} parent=5 // pred_region
      %s801 = ssub.s32 %s10, 2
    $region56: #{_lambda_.22} parent=5 // pred_fallthru
      _
  $region6: #{_lambda_.22} parent=0 // loop_footer
    %s14 = sadd.s32 1, %s10
  $region7: #{_lambda_.22} parent=0 // loop_footer_branch
    %9 = sbr.rel target = $region3
  $region8: #{_lambda_.22} parent=0 // loop_exit
    _

// kernel: _lambda_.20
$region0: #{_lambda_.20}
  #allocation0 [shape = 'u32[]', space=smem, size = 0x4, offset = 0x4, fixed_abs, tag = 'smem constant byte address 0x4 - core index']
  #allocation1 [shape = 'u32[144,128]{1,0:T(1,128)}', space=vmem, size = 0x12000, scoped, tag = 'internal scratch']
  #allocation2 [shape = 'f32[8,256]{1,0:T(8,128)}', space=vmem, size = 0x2000, scoped, tag = 'scratch operand']
  %s0 = inlined_call_operand.vmem [shape: bf16[8,128], index: 0, kind: input, shape index: {}]
  %s1 = inlined_call_operand.vmem [shape: bf16[128,256], index: 1, kind: input, shape index: {}]
  %s2 = inlined_call_operand.vmem [shape: f32[1,256], index: 2, kind: input, shape index: {}]
  %s3 = inlined_call_operand.vmem [shape: bf16[8,256], index: 3, kind: output, shape index: {}]
  %s4 = sld [smem:[#allocation0]]
  $region30: #{_lambda_.20} parent=0
    _
  %s6 = ssub.s32 1, %s4
  %s7 = scalar_select 0, %s6, %s4
  // Predicated region
  $region2: #{_lambda_.20} parent=0 // pred_check
    _
  $region3: #{_lambda_.20} parent=0 // pred_check_branch
    %9 = sbr.rel (0) target = $region5
  $region4: #{_lambda_.20} parent=0 // pred_region
    _
  $region5: #{_lambda_.20} parent=0 // pred_fallthru
    _
  // Predicated region
  $region6: #{_lambda_.20} parent=0 // pred_check
    _
  $region7: #{_lambda_.20} parent=0 // pred_check_branch
    %11 = sbr.rel (0) target = $region9
  $region8: #{_lambda_.20} parent=0 // pred_region
    _
  $region9: #{_lambda_.20} parent=0 // pred_fallthru
    _
  // Predicated region
  $region10: #{_lambda_.20} parent=0 // pred_check
    _
  $region11: #{_lambda_.20} parent=0 // pred_check_branch
    %13 = sbr.rel (0) target = $region13
  $region12: #{_lambda_.20} parent=0 // pred_region
    _
  $region13: #{_lambda_.20} parent=0 // pred_fallthru
    _
  %p15 = scmp.eq.s32.totalorder 0, 0
  // Predicated region
  $region14: #{_lambda_.20} parent=0 // pred_check
    %p16 = pneg %p15
  $region15: #{_lambda_.20} parent=0 // pred_check_branch
    %18 = sbr.rel (%p16) target = $region17
  $region16: #{_lambda_.20} parent=0 // pred_region
    %19 = vst [vmem:[#allocation2] sm:$0xff] 0.0
    %20 = vst [vmem:[#allocation2 + $0x8] sm:$0xff] 0.0
  $region17: #{_lambda_.20} parent=0 // pred_fallthru
    _
  %v21 = vld [vmem:[#allocation2] sm:$0xff]
  %v22 = vld [vmem:[#allocation2 + $0x8] sm:$0xff]
  %v23 = vld [vmem:[%s0] sm:$0xf]
  %v24 = vld [vmem:[%s1] sm:$0xff]
  %v25 = vld [vmem:[%s1 + $0x8] sm:$0xff]
  %v26 = vld [vmem:[%s1 + $0x10] sm:$0xff]
  %v27 = vld [vmem:[%s1 + $0x18] sm:$0xff]
  %v28 = vld [vmem:[%s1 + $0x20] sm:$0xff]
  %v29 = vld [vmem:[%s1 + $0x28] sm:$0xff]
  %v30 = vld [vmem:[%s1 + $0x30] sm:$0xff]
  %v31 = vld [vmem:[%s1 + $0x38] sm:$0xff]
  %v32 = vld [vmem:[%s1 + $0x40] sm:$0xff]
  %v33 = vld [vmem:[%s1 + $0x48] sm:$0xff]
  %v34 = vld [vmem:[%s1 + $0x50] sm:$0xff]
  %v35 = vld [vmem:[%s1 + $0x58] sm:$0xff]
  %v36 = vld [vmem:[%s1 + $0x60] sm:$0xff]
  %v37 = vld [vmem:[%s1 + $0x68] sm:$0xff]
  %v38 = vld [vmem:[%s1 + $0x70] sm:$0xff]
  %v39 = vld [vmem:[%s1 + $0x78] sm:$0xff]
  %v56 = vunpack.c.l.b16 %v24
  %v57 = vunpack.c.h.b16 %v24
  %v58 = vunpack.c.l.b16 %v25
  %v59 = vunpack.c.h.b16 %v25
  %v60 = vunpack.c.l.b16 %v26
  %v61 = vunpack.c.h.b16 %v26
  %v62 = vunpack.c.l.b16 %v27
  %v63 = vunpack.c.h.b16 %v27
  %v64 = vunpack.c.l.b16 %v28
  %v65 = vunpack.c.h.b16 %v28
  %v66 = vunpack.c.l.b16 %v29
  %v67 = vunpack.c.h.b16 %v29
  %v68 = vunpack.c.l.b16 %v30
  %v69 = vunpack.c.h.b16 %v30
  %v70 = vunpack.c.l.b16 %v31
  %v71 = vunpack.c.h.b16 %v31
  %v72 = vunpack.c.l.b16 %v32
  %v73 = vunpack.c.h.b16 %v32
  %v74 = vunpack.c.l.b16 %v33
  %v75 = vunpack.c.h.b16 %v33
  %v76 = vunpack.c.l.b16 %v34
  %v77 = vunpack.c.h.b16 %v34
  %v78 = vunpack.c.l.b16 %v35
  %v79 = vunpack.c.h.b16 %v35
  %v80 = vunpack.c.l.b16 %v36
  %v81 = vunpack.c.h.b16 %v36
  %v82 = vunpack.c.l.b16 %v37
  %v83 = vunpack.c.h.b16 %v37
  %v84 = vunpack.c.l.b16 %v38
  %v85 = vunpack.c.h.b16 %v38
  %v86 = vunpack.c.l.b16 %v39
  %v87 = vunpack.c.h.b16 %v39
  %v88 = vpack.c.b16 %v58, %v56
  %v89 = vpack.c.b16 %v59, %v57
  %v90 = vpack.c.b16 %v62, %v60
  %v91 = vpack.c.b16 %v63, %v61
  %v92 = vpack.c.b16 %v66, %v64
  %v93 = vpack.c.b16 %v67, %v65
  %v94 = vpack.c.b16 %v70, %v68
  %v95 = vpack.c.b16 %v71, %v69
  %v96 = vpack.c.b16 %v74, %v72
  %v97 = vpack.c.b16 %v75, %v73
  %v98 = vpack.c.b16 %v78, %v76
  %v99 = vpack.c.b16 %v79, %v77
  %v100 = vpack.c.b16 %v82, %v80
  %v101 = vpack.c.b16 %v83, %v81
  %v102 = vpack.c.b16 %v86, %v84
  %v103 = vpack.c.b16 %v87, %v85
  %120 = vmatprep.subr.bf16.mxu0 %v89
  %121 = vmatpush1.bf16.msra.mxu0 %v88
  %122 = vmatprep.subr.bf16.mxu0 %v91
  %123 = vmatpush1.bf16.msra.mxu0 %v90
  %124 = vmatprep.subr.bf16.mxu0 %v93
  %125 = vmatpush1.bf16.msra.mxu0 %v92
  %126 = vmatprep.subr.bf16.mxu0 %v95
  %127 = vmatpush1.bf16.msra.mxu0 %v94
  %128 = vmatprep.subr.bf16.mxu0 %v97
  %129 = vmatpush1.bf16.msra.mxu0 %v96
  %130 = vmatprep.subr.bf16.mxu0 %v99
  %131 = vmatpush1.bf16.msra.mxu0 %v98
  %132 = vmatprep.subr.bf16.mxu0 %v101
  %133 = vmatpush1.bf16.msra.mxu0 %v100
  %134 = vmatprep.subr.bf16.mxu0 %v103
  %135 = vmatpush1.bf16.msra.mxu0 %v102
  %136 = vmatprep.subr.bf16.mxu0 0
  %137 = vmatpush1.bf16.msra.mxu0 0
  %138 = vmatprep.subr.bf16.mxu0 0
  %139 = vmatpush1.bf16.msra.mxu0 0
  %140 = vmatprep.subr.bf16.mxu0 0
  %141 = vmatpush1.bf16.msra.mxu0 0
  %142 = vmatprep.subr.bf16.mxu0 0
  %143 = vmatpush1.bf16.msra.mxu0 0
  %144 = vmatprep.subr.bf16.mxu0 0
  %145 = vmatpush1.bf16.msra.mxu0 0
  %146 = vmatprep.subr.bf16.mxu0 0
  %147 = vmatpush1.bf16.msra.mxu0 0
  %148 = vmatprep.subr.bf16.mxu0 0
  %149 = vmatpush1.bf16.msra.mxu0 0
  %150 = vmatprep.subr.bf16.mxu0 0
  %151 = vmatpush1.bf16.msra.mxu0 0
  %152 = vmatprep.mubr.bf16.mxu0 0
  %153 = vmatmul.mubr.bf16.gmra.mrb[0].mxu0 %v23
  %v154 = vpop.f32.mrb[0].mxu0
  %v155 = vadd.f32 0.0, %v154
  %v156 = vpop.f32.mrb[0].mxu0
  %v157 = vadd.f32 0.0, %v156
  %v158 = vpop.f32.mrb[0].mxu0
  %v159 = vpop.f32.mrb[0].mxu0
  %160 = vdwg.mxu0
  %v161 = vadd.f32 %v21, %v155
  %v162 = vadd.f32 %v22, %v157
  %163 = vst [vmem:[#allocation2] sm:$0xff] %v161
  %164 = vst [vmem:[#allocation2 + $0x8] sm:$0xff] %v162
  // Predicated region
  $region18: #{_lambda_.20} parent=0 // pred_check
    %p165 = pneg %p15
  $region19: #{_lambda_.20} parent=0 // pred_check_branch
    %167 = sbr.rel (%p165) target = $region21
  $region20: #{_lambda_.20} parent=0 // pred_region
    %v168 = vld [vmem:[#allocation2] sm:$0xff]
    %v169 = vld [vmem:[#allocation2 + $0x8] sm:$0xff]
    %v170 = vld [vmem:[%s2] sm:$0x3]
    %v172 = vlaneseq
    %v173 = vshrl.u32 %v172, 7
    %v174 = vsub.s32 0, %v173
    %v175 = vrot.slane %v170, %v174
    %v176 = vlaneseq
    %v177 = vshrl.u32 %v176, 7
    %v178 = vsub.s32 1, %v177
    %v179 = vrot.slane %v170, %v178
    %v182 = vadd.f32 %v168, %v175
    %v183 = vadd.f32 %v169, %v179
    %v184 = vpack.c.bf16 %v182, %v182
    %v185 = vpack.c.bf16 %v183, %v183
    %v188 = vunpack.c.l.b16 %v184
    %v189 = vunpack.c.l.b16 %v185
    %v190 = vpack.c.b16 %v189, %v188
    %192 = vst [vmem:[%s3] sm:$0xff] %v190
  $region21: #{_lambda_.20} parent=0 // pred_fallthru
    _
  // Predicated region
  $region22: #{_lambda_.20} parent=0 // pred_check
    _
  $region23: #{_lambda_.20} parent=0 // pred_check_branch
    %194 = sbr.rel (0) target = $region25
  $region24: #{_lambda_.20} parent=0 // pred_region
    _
  $region25: #{_lambda_.20} parent=0 // pred_fallthru
    _
  // Predicated region
  $region26: #{_lambda_.20} parent=0 // pred_check
    _
  $region27: #{_lambda_.20} parent=0 // pred_check_branch
    %196 = sbr.rel (0) target = $region29
  $region28: #{_lambda_.20} parent=0 // pred_region
    _
  $region29: #{_lambda_.20} parent=0 // pred_fallthru
    _

// kernel: _lambda_.24
$region0: #{_lambda_.24}
  #allocation0 [shape = 'u32[]', space=smem, size = 0x4, offset = 0x4, fixed_abs, tag = 'smem constant byte address 0x4 - core index']
  #allocation1 [shape = 'u32[144,128]{1,0:T(1,128)}', space=vmem, size = 0x12000, scoped, tag = 'internal scratch']
  #allocation2 [shape = 'f32[8,256]{1,0:T(8,128)}', space=vmem, size = 0x2000, scoped, tag = 'scratch operand']
  %s0 = inlined_call_operand.vmem [shape: bf16[8,2304], index: 0, kind: input, shape index: {}]
  %s1 = inlined_call_operand.vmem [shape: bf16[2304,512], index: 1, kind: input, shape index: {}]
  %s2 = inlined_call_operand.vmem [shape: f32[1,512], index: 2, kind: input, shape index: {}]
  %s3 = inlined_call_operand.vmem [shape: bf16[8,512], index: 3, kind: output, shape index: {}]
  %s4 = sld [smem:[#allocation0]]
  $region91: #{_lambda_.24} parent=0
    _
  %s6 = ssub.s32 1, %s4
  %s7 = scalar_select 0, %s6, %s4
  $region1: #{_lambda_.24} parent=0
    #allocation3 [shape = 'u8[393216]{0}', space=vmem, size = 0x60000, scoped, tag = 'input window, operand 1']
    loop: start=0, step=1, limit=14
    $region2: #{_lambda_.24} parent=1 // loop_pre_header
      _
    $region3: #{_lambda_.24} parent=1 // loop_header
      %s9 = sphi 0, %s13
      %p10 = scmp.ge.s32.totalorder %s9, 14
      %s16 = sphi 0, %s35
      %s17 = sphi 0, %s31
      %s18 = sphi 0, %s27
      %s19 = sphi 0, %s16
      %s20 = sphi 0, %s17
      %s21 = sphi 0, %s18
      %s22 = sphi 0, %s19
      %s23 = sphi 0, %s20
      %s24 = sphi 0, %s21
      %s40 = sphi 0, %s42
      %s43 = sphi 0, %s40
      %s44 = sphi 0, %s43
      %s60 = sphi 0, %s44
      %s68 = sphi 0, %s70
      %s71 = sphi 0, %s68
      %s72 = sphi 0, %s71
      %s88 = sphi 0, %s72
      %s94 = sphi 0, %s96
      %s97 = sphi 0, %s94
      %s98 = sphi 0, %s97
      %s114 = sphi 0, %s98
      %s122 = sphi 0, %s124
      %s125 = sphi 0, %s122
      %s126 = sphi 0, %s125
      %s142 = sphi 0, %s126
    $region4: #{_lambda_.24} parent=1 // loop_header_branch
      %12 = sbr.rel (%p10) target = $region8
    $region5: #{_lambda_.24} parent=1 // loop_body
      %s14 = ssub.s32 %s9, 1
      %s15 = ssub.s32 %s9, 2
      %s25 = sadd.s32 1, %s18
      %p26 = scmp.ge.s32.totalorder %s25, 6
      %s27 = scalar_select %p26, 0, %s25
      %s28 = sadd.s32 1, %s17
      %s29 = scalar_select %p26, %s28, %s17
      %p30 = scmp.ge.s32.totalorder %s29, 2
      %s31 = scalar_select %p30, 0, %s29
      %s32 = sadd.s32 1, %s16
      %s33 = scalar_select %p30, %s32, %s16
      %p34 = scmp.ge.s32.totalorder %s33, 1
      %s35 = scalar_select %p34, 0, %s33
      %s36 = ssub.s32 %s16, %s35
      %s37 = ssub.s32 %s18, %s27
      %s38 = sor.u32 %s36, %s37
      %p39 = scmp.eq.s32.totalorder %s38, 0
      %s41 = sadd.s32 %s40, 1
      %s42 = scalar_select %p39, %s40, %s41
      %p45 = pneg %p39
      %p46 = scmp.eq.s32.totalorder %s9, 11
      %p47 = por %p45, %p46
      %p48 = scmp.ne.s32.totalorder %s40, %s43
      %p49 = scmp.eq.s32.totalorder %s9, 0
      %p50 = por %p48, %p49
      %p51 = scmp.ne.s32.totalorder %s40, %s43
      %p52 = scmp.eq.s32.totalorder %s14, 11
      %p53 = por %p51, %p52
      %p54 = scmp.ne.s32.totalorder %s43, %s44
      %p55 = scmp.eq.s32.totalorder %s14, 0
      %p56 = por %p54, %p55
      %p57 = scmp.ne.s32.totalorder %s43, %s44
      %p58 = scmp.eq.s32.totalorder %s15, 11
      %p59 = por %p57, %p58
      %p61 = scmp.ne.s32.totalorder %s44, %s60
      %p62 = scmp.eq.s32.totalorder %s15, 0
      %p63 = por %p61, %p62
      %s64 = ssub.s32 %s18, %s27
      %s65 = ssub.s32 %s17, %s31
      %s66 = sor.u32 %s64, %s65
      %p67 = scmp.eq.s32.totalorder %s66, 0
      %s69 = sadd.s32 %s68, 1
      %s70 = scalar_select %p67, %s68, %s69
      %p73 = pneg %p67
      %p74 = scmp.eq.s32.totalorder %s9, 11
      %p75 = por %p73, %p74
      %p76 = scmp.ne.s32.totalorder %s68, %s71
      %p77 = scmp.eq.s32.totalorder %s9, 0
      %p78 = por %p76, %p77
      %p79 = scmp.ne.s32.totalorder %s68, %s71
      %p80 = scmp.eq.s32.totalorder %s14, 11
      %p81 = por %p79, %p80
      %p82 = scmp.ne.s32.totalorder %s71, %s72
      %p83 = scmp.eq.s32.totalorder %s14, 0
      %p84 = por %p82, %p83
      %p85 = scmp.ne.s32.totalorder %s71, %s72
      %p86 = scmp.eq.s32.totalorder %s15, 11
      %p87 = por %p85, %p86
      %p89 = scmp.ne.s32.totalorder %s72, %s88
      %p90 = scmp.eq.s32.totalorder %s15, 0
      %p91 = por %p89, %p90
      %s92 = ssub.s32 %s17, %s31
      %p93 = scmp.eq.s32.totalorder %s92, 0
      %s95 = sadd.s32 %s94, 1
      %s96 = scalar_select %p93, %s94, %s95
      %p99 = pneg %p93
      %p100 = scmp.eq.s32.totalorder %s9, 11
      %p101 = por %p99, %p100
      %p102 = scmp.ne.s32.totalorder %s94, %s97
      %p103 = scmp.eq.s32.totalorder %s9, 0
      %p104 = por %p102, %p103
      %p105 = scmp.ne.s32.totalorder %s94, %s97
      %p106 = scmp.eq.s32.totalorder %s14, 11
      %p107 = por %p105, %p106
      %p108 = scmp.ne.s32.totalorder %s97, %s98
      %p109 = scmp.eq.s32.totalorder %s14, 0
      %p110 = por %p108, %p109
      %p111 = scmp.ne.s32.totalorder %s97, %s98
      %p112 = scmp.eq.s32.totalorder %s15, 11
      %p113 = por %p111, %p112
      %p115 = scmp.ne.s32.totalorder %s98, %s114
      %p116 = scmp.eq.s32.totalorder %s15, 0
      %p117 = por %p115, %p116
      %s118 = ssub.s32 %s16, %s35
      %s119 = ssub.s32 %s17, %s31
      %s120 = sor.u32 %s118, %s119
      %p121 = scmp.eq.s32.totalorder %s120, 0
      %s123 = sadd.s32 %s122, 1
      %s124 = scalar_select %p121, %s122, %s123
      %p127 = pneg %p121
      %p128 = scmp.eq.s32.totalorder %s9, 11
      %p129 = por %p127, %p128
      %p130 = scmp.ne.s32.totalorder %s122, %s125
      %p131 = scmp.eq.s32.totalorder %s9, 0
      %p132 = por %p130, %p131
      %p133 = scmp.ne.s32.totalorder %s122, %s125
      %p134 = scmp.eq.s32.totalorder %s14, 11
      %p135 = por %p133, %p134
      %p136 = scmp.ne.s32.totalorder %s125, %s126
      %p137 = scmp.eq.s32.totalorder %s14, 0
      %p138 = por %p136, %p137
      %p139 = scmp.ne.s32.totalorder %s125, %s126
      %p140 = scmp.eq.s32.totalorder %s15, 11
      %p141 = por %p139, %p140
      %p143 = scmp.ne.s32.totalorder %s126, %s142
      %p144 = scmp.eq.s32.totalorder %s15, 0
      %p145 = por %p143, %p144
      %p146 = scmp.le.s32.totalorder 1, %s9
      %p147 = scmp.lt.s32.totalorder %s9, 13
      %p148 = pnand %p146, %p147
      %p149 = pneg %p148
      // Predicated region
      $region9: #{_lambda_.24} parent=5 // pred_check
        _
      $region10: #{_lambda_.24} parent=5 // pred_check_branch
        %151 = sbr.rel (%p148) target = $region12
      $region11: #{_lambda_.24} parent=5 // pred_region
        %s152 = ssub.s32 %s9, 1
      $region12: #{_lambda_.24} parent=5 // pred_fallthru
        _
      %p153 = scmp.lt.s32.totalorder %s9, 12
      // Predicated region
      $region13: #{_lambda_.24} parent=5 // pred_check
        %p154 = pneg %p153
      $region14: #{_lambda_.24} parent=5 // pred_check_branch
        %156 = sbr.rel (%p154) target = $region16
      $region15: #{_lambda_.24} parent=5 // pred_region
        // Predicated region
        $region17: #{_lambda_.24} parent=15 // pred_check
          %p157 = pneg %p50
        $region18: #{_lambda_.24} parent=15 // pred_check_branch
          %159 = sbr.rel (%p157) target = $region20
        $region19: #{_lambda_.24} parent=15 // pred_region
          %s160 = smul.u32 3, %s18
          %p161 = scmp.lt.s32.totalorder %s16, 0
          %s162 = scalar_select %p161, %s16, 0
          %p163 = scmp.lt.s32.totalorder %s160, 17
          %s164 = scalar_select %p163, %s160, 17
          %s165 = smul.addr %s162, 18
          %s166 = sadd.s32 %s164, %s165
          %s167 = smul.addr %s166, 4
          %s168 = scalar_lea.vmem %s0, %s167
          %s169 = smul.u32 3, %s18
        $region20: #{_lambda_.24} parent=15 // pred_fallthru
          _
        // Predicated region
        $region21: #{_lambda_.24} parent=15 // pred_check
          %p170 = pneg %p78
        $region22: #{_lambda_.24} parent=15 // pred_check_branch
          %172 = sbr.rel (%p170) target = $region24
        $region23: #{_lambda_.24} parent=15 // pred_region
          %s173 = sand.u32 %s68, 1
          %s174 = sand.u32 %s68, 1
          %s175 = smul.addr %s174, 384
          %s176 = scalar_lea.vmem [#allocation3], %s175
          %s177 = smul.u32 48, %s18
          %s178 = smul.u32 2, %s17
          %s179 = smul.addr %s177, 4
          %s180 = sadd.s32 %s178, %s179
          %s181 = smul.addr %s180, 4
          %s182 = scalar_lea.vmem %s1, %s181
          // Predicated region
          $region25: #{_lambda_.24} parent=23 // pred_check
            _
          $region26: #{_lambda_.24} parent=23 // pred_check_branch
            %184 = sbr.rel (0) target = $region28
          $region27: #{_lambda_.24} parent=23 // pred_region
            // Predicated region
            $region29: #{_lambda_.24} parent=27 // pred_check
              _
            $region30: #{_lambda_.24} parent=27 // pred_check_branch
              %186 = sbr.rel (0) target = $region32
            $region31: #{_lambda_.24} parent=27 // pred_region
              // Predicated region
              $region44: #{_lambda_.24} parent=31 // pred_check
                _
              $region45: #{_lambda_.24} parent=31 // pred_check_branch
                %295 = sbr.rel (0) target = $region47
              $region46: #{_lambda_.24} parent=31 // pred_region
                loop: start=0, step=1, limit=1
                $region48: #{_lambda_.24} parent=46 // loop_pre_header
                  _
                $region49: #{_lambda_.24} parent=46 // loop_header
                  %s297 = sphi 0, %s301
                  %p298 = scmp.ge.s32.totalorder %s297, 1
                  %s302 = sphi %s182, %s182
                  %s303 = sphi %s176, %s176
                $region50: #{_lambda_.24} parent=46 // loop_header_branch
                  %300 = sbr.rel (%p298) target = $region54
                $region51: #{_lambda_.24} parent=46 // loop_body
                  %v304 = vld [vmem:[%s302] sm:$0xff]
                  %305 = vst [vmem:[%s303] sm:$0xff] %v304
                  %v306 = vld [vmem:[%s302 + $0x10] sm:$0xff]
                  %307 = vst [vmem:[%s303 + $0x8] sm:$0xff] %v306
                  %v308 = vld [vmem:[%s302 + $0x20] sm:$0xff]
                  %309 = vst [vmem:[%s303 + $0x10] sm:$0xff] %v308
                  %v310 = vld [vmem:[%s302 + $0x30] sm:$0xff]
                  %311 = vst [vmem:[%s303 + $0x18] sm:$0xff] %v310
                  %v312 = vld [vmem:[%s302 + $0x40] sm:$0xff]
                  %313 = vst [vmem:[%s303 + $0x20] sm:$0xff] %v312
                  %v314 = vld [vmem:[%s302 + $0x50] sm:$0xff]
                  %315 = vst [vmem:[%s303 + $0x28] sm:$0xff] %v314
                  %v316 = vld [vmem:[%s302 + $0x60] sm:$0xff]
                  %317 = vst [vmem:[%s303 + $0x30] sm:$0xff] %v316
                  %v318 = vld [vmem:[%s302 + $0x70] sm:$0xff]
                  %319 = vst [vmem:[%s303 + $0x38] sm:$0xff] %v318
                  %v320 = vld [vmem:[%s302 + $0x80] sm:$0xff]
                  %321 = vst [vmem:[%s303 + $0x40] sm:$0xff] %v320
                  %v322 = vld [vmem:[%s302 + $0x90] sm:$0xff]
                  %323 = vst [vmem:[%s303 + $0x48] sm:$0xff] %v322
                  %v324 = vld [vmem:[%s302 + $0xa0] sm:$0xff]
                  %325 = vst [vmem:[%s303 + $0x50] sm:$0xff] %v324
                  %v326 = vld [vmem:[%s302 + $0xb0] sm:$0xff]
                  %327 = vst [vmem:[%s303 + $0x58] sm:$0xff] %v326
                  %v328 = vld [vmem:[%s302 + $0xc0] sm:$0xff]
                  %329 = vst [vmem:[%s303 + $0x60] sm:$0xff] %v328
                  %v330 = vld [vmem:[%s302 + $0xd0] sm:$0xff]
                  %331 = vst [vmem:[%s303 + $0x68] sm:$0xff] %v330
                  %v332 = vld [vmem:[%s302 + $0xe0] sm:$0xff]
                  %333 = vst [vmem:[%s303 + $0x70] sm:$0xff] %v332
                  %v334 = vld [vmem:[%s302 + $0xf0] sm:$0xff]
                  %335 = vst [vmem:[%s303 + $0x78] sm:$0xff] %v334
                  %v336 = vld [vmem:[%s302 + $0x100] sm:$0xff]
                  %337 = vst [vmem:[%s303 + $0x80] sm:$0xff] %v336
                  %v338 = vld [vmem:[%s302 + $0x110] sm:$0xff]
                  %339 = vst [vmem:[%s303 + $0x88] sm:$0xff] %v338
                  %v340 = vld [vmem:[%s302 + $0x120] sm:$0xff]
                  %341 = vst [vmem:[%s303 + $0x90] sm:$0xff] %v340
                  %v342 = vld [vmem:[%s302 + $0x130] sm:$0xff]
                  %343 = vst [vmem:[%s303 + $0x98] sm:$0xff] %v342
                  %v344 = vld [vmem:[%s302 + $0x140] sm:$0xff]
                  %345 = vst [vmem:[%s303 + $0xa0] sm:$0xff] %v344
                  %v346 = vld [vmem:[%s302 + $0x150] sm:$0xff]
                  %347 = vst [vmem:[%s303 + $0xa8] sm:$0xff] %v346
                  %v348 = vld [vmem:[%s302 + $0x160] sm:$0xff]
                  %349 = vst [vmem:[%s303 + $0xb0] sm:$0xff] %v348
                  %v350 = vld [vmem:[%s302 + $0x170] sm:$0xff]
                  %351 = vst [vmem:[%s303 + $0xb8] sm:$0xff] %v350
                  %v352 = vld [vmem:[%s302 + $0x180] sm:$0xff]
                  %353 = vst [vmem:[%s303 + $0xc0] sm:$0xff] %v352
                  %v354 = vld [vmem:[%s302 + $0x190] sm:$0xff]
                  %355 = vst [vmem:[%s303 + $0xc8] sm:$0xff] %v354
                  %v356 = vld [vmem:[%s302 + $0x1a0] sm:$0xff]
                  %357 = vst [vmem:[%s303 + $0xd0] sm:$0xff] %v356
                  %v358 = vld [vmem:[%s302 + $0x1b0] sm:$0xff]
                  %359 = vst [vmem:[%s303 + $0xd8] sm:$0xff] %v358
                  %v360 = vld [vmem:[%s302 + $0x1c0] sm:$0xff]
                  %361 = vst [vmem:[%s303 + $0xe0] sm:$0xff] %v360
                  %v362 = vld [vmem:[%s302 + $0x1d0] sm:$0xff]
                  %363 = vst [vmem:[%s303 + $0xe8] sm:$0xff] %v362
                  %v364 = vld [vmem:[%s302 + $0x1e0] sm:$0xff]
                  %365 = vst [vmem:[%s303 + $0xf0] sm:$0xff] %v364
                  %v366 = vld [vmem:[%s302 + $0x1f0] sm:$0xff]
                  %367 = vst [vmem:[%s303 + $0xf8] sm:$0xff] %v366
                  %v368 = vld [vmem:[%s302 + $0x200] sm:$0xff]
                  %369 = vst [vmem:[%s303 + $0x100] sm:$0xff] %v368
                  %v370 = vld [vmem:[%s302 + $0x210] sm:$0xff]
                  %371 = vst [vmem:[%s303 + $0x108] sm:$0xff] %v370
                  %v372 = vld [vmem:[%s302 + $0x220] sm:$0xff]
                  %373 = vst [vmem:[%s303 + $0x110] sm:$0xff] %v372
                  %v374 = vld [vmem:[%s302 + $0x230] sm:$0xff]
                  %375 = vst [vmem:[%s303 + $0x118] sm:$0xff] %v374
                  %v376 = vld [vmem:[%s302 + $0x240] sm:$0xff]
                  %377 = vst [vmem:[%s303 + $0x120] sm:$0xff] %v376
                  %v378 = vld [vmem:[%s302 + $0x250] sm:$0xff]
                  %379 = vst [vmem:[%s303 + $0x128] sm:$0xff] %v378
                  %v380 = vld [vmem:[%s302 + $0x260] sm:$0xff]
                  %381 = vst [vmem:[%s303 + $0x130] sm:$0xff] %v380
                  %v382 = vld [vmem:[%s302 + $0x270] sm:$0xff]
                  %383 = vst [vmem:[%s303 + $0x138] sm:$0xff] %v382
                  %v384 = vld [vmem:[%s302 + $0x280] sm:$0xff]
                  %385 = vst [vmem:[%s303 + $0x140] sm:$0xff] %v384
                  %v386 = vld [vmem:[%s302 + $0x290] sm:$0xff]
                  %387 = vst [vmem:[%s303 + $0x148] sm:$0xff] %v386
                  %v388 = vld [vmem:[%s302 + $0x2a0] sm:$0xff]
                  %389 = vst [vmem:[%s303 + $0x150] sm:$0xff] %v388
                  %v390 = vld [vmem:[%s302 + $0x2b0] sm:$0xff]
                  %391 = vst [vmem:[%s303 + $0x158] sm:$0xff] %v390
                  %v392 = vld [vmem:[%s302 + $0x2c0] sm:$0xff]
                  %393 = vst [vmem:[%s303 + $0x160] sm:$0xff] %v392
                  %v394 = vld [vmem:[%s302 + $0x2d0] sm:$0xff]
                  %395 = vst [vmem:[%s303 + $0x168] sm:$0xff] %v394
                  %v396 = vld [vmem:[%s302 + $0x2e0] sm:$0xff]
                  %397 = vst [vmem:[%s303 + $0x170] sm:$0xff] %v396
                  %v398 = vld [vmem:[%s302 + $0x2f0] sm:$0xff]
                  %399 = vst [vmem:[%s303 + $0x178] sm:$0xff] %v398
                $region52: #{_lambda_.24} parent=46 // loop_footer
                  %s301 = sadd.s32 1, %s297
                $region53: #{_lambda_.24} parent=46 // loop_footer_branch
                  %296 = sbr.rel target = $region49
                $region54: #{_lambda_.24} parent=46 // loop_exit
                  _
              $region47: #{_lambda_.24} parent=31 // pred_fallthru
                _
              // Predicated region
              $region55: #{_lambda_.24} parent=31 // pred_check
                _
              $region56: #{_lambda_.24} parent=31 // pred_check_branch
                %401 = sbr.rel target = $region58
              $region57: #{_lambda_.24} parent=31 // pred_region
                _
              $region58: #{_lambda_.24} parent=31 // pred_fallthru
                _
            $region32: #{_lambda_.24} parent=27 // pred_fallthru
              _
            // Predicated region
            $region33: #{_lambda_.24} parent=27 // pred_check
              _
            $region34: #{_lambda_.24} parent=27 // pred_check_branch
              %188 = sbr.rel target = $region36
            $region35: #{_lambda_.24} parent=27 // pred_region
              loop: start=0, step=1, limit=1
              $region37: #{_lambda_.24} parent=35 // loop_pre_header
                _
              $region38: #{_lambda_.24} parent=35 // loop_header
                %s191 = sphi 0, %s195
                %p192 = scmp.ge.s32.totalorder %s191, 1
                %s196 = sphi %s182, %s182
                %s197 = sphi %s176, %s176
              $region39: #{_lambda_.24} parent=35 // loop_header_branch
                %194 = sbr.rel (%p192) target = $region43
              $region40: #{_lambda_.24} parent=35 // loop_body
                %v198 = vld [vmem:[%s196] sm:$0xff]
                %199 = vst [vmem:[%s197] sm:$0xff] %v198
                %v200 = vld [vmem:[%s196 + $0x10] sm:$0xff]
                %201 = vst [vmem:[%s197 + $0x8] sm:$0xff] %v200
                %v202 = vld [vmem:[%s196 + $0x20] sm:$0xff]
                %203 = vst [vmem:[%s197 + $0x10] sm:$0xff] %v202
                %v204 = vld [vmem:[%s196 + $0x30] sm:$0xff]
                %205 = vst [vmem:[%s197 + $0x18] sm:$0xff] %v204
                %v206 = vld [vmem:[%s196 + $0x40] sm:$0xff]
                %207 = vst [vmem:[%s197 + $0x20] sm:$0xff] %v206
                %v208 = vld [vmem:[%s196 + $0x50] sm:$0xff]
                %209 = vst [vmem:[%s197 + $0x28] sm:$0xff] %v208
                %v210 = vld [vmem:[%s196 + $0x60] sm:$0xff]
                %211 = vst [vmem:[%s197 + $0x30] sm:$0xff] %v210
                %v212 = vld [vmem:[%s196 + $0x70] sm:$0xff]
                %213 = vst [vmem:[%s197 + $0x38] sm:$0xff] %v212
                %v214 = vld [vmem:[%s196 + $0x80] sm:$0xff]
                %215 = vst [vmem:[%s197 + $0x40] sm:$0xff] %v214
                %v216 = vld [vmem:[%s196 + $0x90] sm:$0xff]
                %217 = vst [vmem:[%s197 + $0x48] sm:$0xff] %v216
                %v218 = vld [vmem:[%s196 + $0xa0] sm:$0xff]
                %219 = vst [vmem:[%s197 + $0x50] sm:$0xff] %v218
                %v220 = vld [vmem:[%s196 + $0xb0] sm:$0xff]
                %221 = vst [vmem:[%s197 + $0x58] sm:$0xff] %v220
                %v222 = vld [vmem:[%s196 + $0xc0] sm:$0xff]
                %223 = vst [vmem:[%s197 + $0x60] sm:$0xff] %v222
                %v224 = vld [vmem:[%s196 + $0xd0] sm:$0xff]
                %225 = vst [vmem:[%s197 + $0x68] sm:$0xff] %v224
                %v226 = vld [vmem:[%s196 + $0xe0] sm:$0xff]
                %227 = vst [vmem:[%s197 + $0x70] sm:$0xff] %v226
                %v228 = vld [vmem:[%s196 + $0xf0] sm:$0xff]
                %229 = vst [vmem:[%s197 + $0x78] sm:$0xff] %v228
                %v230 = vld [vmem:[%s196 + $0x100] sm:$0xff]
                %231 = vst [vmem:[%s197 + $0x80] sm:$0xff] %v230
                %v232 = vld [vmem:[%s196 + $0x110] sm:$0xff]
                %233 = vst [vmem:[%s197 + $0x88] sm:$0xff] %v232
                %v234 = vld [vmem:[%s196 + $0x120] sm:$0xff]
                %235 = vst [vmem:[%s197 + $0x90] sm:$0xff] %v234
                %v236 = vld [vmem:[%s196 + $0x130] sm:$0xff]
                %237 = vst [vmem:[%s197 + $0x98] sm:$0xff] %v236
                %v238 = vld [vmem:[%s196 + $0x140] sm:$0xff]
                %239 = vst [vmem:[%s197 + $0xa0] sm:$0xff] %v238
                %v240 = vld [vmem:[%s196 + $0x150] sm:$0xff]
                %241 = vst [vmem:[%s197 + $0xa8] sm:$0xff] %v240
                %v242 = vld [vmem:[%s196 + $0x160] sm:$0xff]
                %243 = vst [vmem:[%s197 + $0xb0] sm:$0xff] %v242
                %v244 = vld [vmem:[%s196 + $0x170] sm:$0xff]
                %245 = vst [vmem:[%s197 + $0xb8] sm:$0xff] %v244
                %v246 = vld [vmem:[%s196 + $0x180] sm:$0xff]
                %247 = vst [vmem:[%s197 + $0xc0] sm:$0xff] %v246
                %v248 = vld [vmem:[%s196 + $0x190] sm:$0xff]
                %249 = vst [vmem:[%s197 + $0xc8] sm:$0xff] %v248
                %v250 = vld [vmem:[%s196 + $0x1a0] sm:$0xff]
                %251 = vst [vmem:[%s197 + $0xd0] sm:$0xff] %v250
                %v252 = vld [vmem:[%s196 + $0x1b0] sm:$0xff]
                %253 = vst [vmem:[%s197 + $0xd8] sm:$0xff] %v252
                %v254 = vld [vmem:[%s196 + $0x1c0] sm:$0xff]
                %255 = vst [vmem:[%s197 + $0xe0] sm:$0xff] %v254
                %v256 = vld [vmem:[%s196 + $0x1d0] sm:$0xff]
                %257 = vst [vmem:[%s197 + $0xe8] sm:$0xff] %v256
                %v258 = vld [vmem:[%s196 + $0x1e0] sm:$0xff]
                %259 = vst [vmem:[%s197 + $0xf0] sm:$0xff] %v258
                %v260 = vld [vmem:[%s196 + $0x1f0] sm:$0xff]
                %261 = vst [vmem:[%s197 + $0xf8] sm:$0xff] %v260
                %v262 = vld [vmem:[%s196 + $0x200] sm:$0xff]
                %263 = vst [vmem:[%s197 + $0x100] sm:$0xff] %v262
                %v264 = vld [vmem:[%s196 + $0x210] sm:$0xff]
                %265 = vst [vmem:[%s197 + $0x108] sm:$0xff] %v264
                %v266 = vld [vmem:[%s196 + $0x220] sm:$0xff]
                %267 = vst [vmem:[%s197 + $0x110] sm:$0xff] %v266
                %v268 = vld [vmem:[%s196 + $0x230] sm:$0xff]
                %269 = vst [vmem:[%s197 + $0x118] sm:$0xff] %v268
                %v270 = vld [vmem:[%s196 + $0x240] sm:$0xff]
                %271 = vst [vmem:[%s197 + $0x120] sm:$0xff] %v270
                %v272 = vld [vmem:[%s196 + $0x250] sm:$0xff]
                %273 = vst [vmem:[%s197 + $0x128] sm:$0xff] %v272
                %v274 = vld [vmem:[%s196 + $0x260] sm:$0xff]
                %275 = vst [vmem:[%s197 + $0x130] sm:$0xff] %v274
                %v276 = vld [vmem:[%s196 + $0x270] sm:$0xff]
                %277 = vst [vmem:[%s197 + $0x138] sm:$0xff] %v276
                %v278 = vld [vmem:[%s196 + $0x280] sm:$0xff]
                %279 = vst [vmem:[%s197 + $0x140] sm:$0xff] %v278
                %v280 = vld [vmem:[%s196 + $0x290] sm:$0xff]
                %281 = vst [vmem:[%s197 + $0x148] sm:$0xff] %v280
                %v282 = vld [vmem:[%s196 + $0x2a0] sm:$0xff]
                %283 = vst [vmem:[%s197 + $0x150] sm:$0xff] %v282
                %v284 = vld [vmem:[%s196 + $0x2b0] sm:$0xff]
                %285 = vst [vmem:[%s197 + $0x158] sm:$0xff] %v284
                %v286 = vld [vmem:[%s196 + $0x2c0] sm:$0xff]
                %287 = vst [vmem:[%s197 + $0x160] sm:$0xff] %v286
                %v288 = vld [vmem:[%s196 + $0x2d0] sm:$0xff]
                %289 = vst [vmem:[%s197 + $0x168] sm:$0xff] %v288
                %v290 = vld [vmem:[%s196 + $0x2e0] sm:$0xff]
                %291 = vst [vmem:[%s197 + $0x170] sm:$0xff] %v290
                %v292 = vld [vmem:[%s196 + $0x2f0] sm:$0xff]
                %293 = vst [vmem:[%s197 + $0x178] sm:$0xff] %v292
              $region41: #{_lambda_.24} parent=35 // loop_footer
                %s195 = sadd.s32 1, %s191
              $region42: #{_lambda_.24} parent=35 // loop_footer_branch
                %190 = sbr.rel target = $region38
              $region43: #{_lambda_.24} parent=35 // loop_exit
                _
            $region36: #{_lambda_.24} parent=27 // pred_fallthru
              _
          $region28: #{_lambda_.24} parent=23 // pred_fallthru
            _
          %402 = vnop
        $region24: #{_lambda_.24} parent=15 // pred_fallthru
          _
        // Predicated region
        $region59: #{_lambda_.24} parent=15 // pred_check
          %p403 = pneg %p104
        $region60: #{_lambda_.24} parent=15 // pred_check_branch
          %405 = sbr.rel (%p403) target = $region62
        $region61: #{_lambda_.24} parent=15 // pred_region
          %s406 = smul.u32 2, %s17
          %p407 = scmp.lt.s32.totalorder %s406, 3
          %s408 = scalar_select %p407, %s406, 3
          %s409 = scalar_lea.vmem %s2, %s408
          %s410 = smul.u32 2, %s17
        $region62: #{_lambda_.24} parent=15 // pred_fallthru
          _
      $region16: #{_lambda_.24} parent=5 // pred_fallthru
        _
      %p411 = scmp.le.s32.totalorder 1, %s9
      %p412 = scmp.lt.s32.totalorder %s9, 13
      %p413 = pnand %p411, %p412
      %p414 = pneg %p413
      // Predicated region
      $region63: #{_lambda_.24} parent=5 // pred_check
        _
      $region64: #{_lambda_.24} parent=5 // pred_check_branch
        %416 = sbr.rel (%p413) target = $region66
      $region65: #{_lambda_.24} parent=5 // pred_region
        %s417 = ssub.s32 %s9, 1
        %s418 = sand.u32 %s71, 1
        %s419 = sand.u32 %s71, 1
        %s420 = smul.addr %s419, 384
        %s421 = scalar_lea.vmem [#allocation3], %s420
        // Predicated region
        $region67: #{_lambda_.24} parent=65 // pred_check
          %p422 = pneg %p84
        $region68: #{_lambda_.24} parent=65 // pred_check_branch
          %424 = sbr.rel (%p422) target = $region70
        $region69: #{_lambda_.24} parent=65 // pred_region
          _
        $region70: #{_lambda_.24} parent=65 // pred_fallthru
          _
        %s425 = smul.u32 3, %s21
        %p426 = scmp.lt.s32.totalorder %s19, 0
        %s427 = scalar_select %p426, %s19, 0
        %p428 = scmp.lt.s32.totalorder %s425, 17
        %s429 = scalar_select %p428, %s425, 17
        %s430 = smul.addr %s427, 18
        %s431 = sadd.s32 %s429, %s430
        %s432 = smul.addr %s431, 4
        %s433 = scalar_lea.vmem %s0, %s432
        %p434 = pneg %p56
        %p435 = pneg %p53
        %s436 = sand.u32 %s71, 1
        %s437 = sand.u32 %s71, 1
        %s438 = smul.addr %s437, 384
        %s439 = scalar_lea.vmem [#allocation3], %s438
        %p440 = pneg %p84
        %p441 = pneg %p81
        %s442 = smul.u32 2, %s20
        %p443 = scmp.lt.s32.totalorder %s442, 3
        %s444 = scalar_select %p443, %s442, 3
        %s445 = scalar_lea.vmem %s2, %s444
        %p446 = pneg %p110
        %p447 = pneg %p107
        %p448 = pneg %p138
        %p449 = pneg %p135
        %s450 = smul.u32 2, %s20
        %p451 = scmp.lt.s32.totalorder %s19, 0
        %s452 = scalar_select %p451, %s19, 0
        %p453 = scmp.lt.s32.totalorder %s450, 3
        %s454 = scalar_select %p453, %s450, 3
        %s455 = smul.addr %s452, 4
        %s456 = sadd.s32 %s454, %s455
        %s457 = smul.addr %s456, 4
        %s458 = scalar_lea.vmem %s3, %s457
        %s459 = smul.u32 3, %s21
        %p460 = scmp.lt.s32.totalorder %s19, 0
        %s461 = scalar_select %p460, %s19, 0
        %p462 = scmp.lt.s32.totalorder %s459, 17
        %s463 = scalar_select %p462, %s459, 17
        %s464 = smul.addr %s461, 18
        %s465 = sadd.s32 %s463, %s464
        %s466 = smul.addr %s465, 4
        %s467 = scalar_lea.vmem %s0, %s466
        %s468 = smul.u32 3, %s21
        %s469 = smul.u32 48, %s21
        %s470 = smul.u32 2, %s20
        %s471 = smul.u32 2, %s20
        %p472 = scmp.lt.s32.totalorder %s471, 3
        %s473 = scalar_select %p472, %s471, 3
        %s474 = scalar_lea.vmem %s2, %s473
        %s475 = smul.u32 2, %s20
        %s476 = smul.u32 2, %s20
        %p477 = scmp.lt.s32.totalorder %s19, 0
        %s478 = scalar_select %p477, %s19, 0
        %p479 = scmp.lt.s32.totalorder %s476, 3
        %s480 = scalar_select %p479, %s476, 3
        %s481 = smul.addr %s478, 4
        %s482 = sadd.s32 %s480, %s481
        %s483 = smul.addr %s482, 4
        %s484 = scalar_lea.vmem %s3, %s483
        %s485 = smul.u32 2, %s20
        %p487 = scmp.eq.s32.totalorder %s21, 0
        // Predicated region
        $region71: #{_lambda_.24} parent=65 // pred_check
          %p488 = pneg %p487
        $region72: #{_lambda_.24} parent=65 // pred_check_branch
          %490 = sbr.rel (%p488) target = $region74
        $region73: #{_lambda_.24} parent=65 // pred_region
          %491 = vst [vmem:[#allocation2] sm:$0xff] 0.0
          %492 = vst [vmem:[#allocation2 + $0x8] sm:$0xff] 0.0
        $region74: #{_lambda_.24} parent=65 // pred_fallthru
          _
        %v493 = vld [vmem:[#allocation2] sm:$0xff]
        %v494 = vld [vmem:[#allocation2 + $0x8] sm:$0xff]
        %v495 = vld [vmem:[%s467] sm:$0xff]
        %v496 = vld [vmem:[%s467 + $0x8] sm:$0xf]
        %v497 = vld [vmem:[%s421] sm:$0xff]
        %v498 = vld [vmem:[%s421 + $0x8] sm:$0xff]
        %v499 = vld [vmem:[%s421 + $0x10] sm:$0xff]
        %v500 = vld [vmem:[%s421 + $0x18] sm:$0xff]
        %v501 = vld [vmem:[%s421 + $0x20] sm:$0xff]
        %v502 = vld [vmem:[%s421 + $0x28] sm:$0xff]
        %v503 = vld [vmem:[%s421 + $0x30] sm:$0xff]
        %v504 = vld [vmem:[%s421 + $0x38] sm:$0xff]
        %v505 = vld [vmem:[%s421 + $0x40] sm:$0xff]
        %v506 = vld [vmem:[%s421 + $0x48] sm:$0xff]
        %v507 = vld [vmem:[%s421 + $0x50] sm:$0xff]
        %v508 = vld [vmem:[%s421 + $0x58] sm:$0xff]
        %v509 = vld [vmem:[%s421 + $0x60] sm:$0xff]
        %v510 = vld [vmem:[%s421 + $0x68] sm:$0xff]
        %v511 = vld [vmem:[%s421 + $0x70] sm:$0xff]
        %v512 = vld [vmem:[%s421 + $0x78] sm:$0xff]
        %v513 = vld [vmem:[%s421 + $0x80] sm:$0xff]
        %v514 = vld [vmem:[%s421 + $0x88] sm:$0xff]
        %v515 = vld [vmem:[%s421 + $0x90] sm:$0xff]
        %v516 = vld [vmem:[%s421 + $0x98] sm:$0xff]
        %v517 = vld [vmem:[%s421 + $0xa0] sm:$0xff]
        %v518 = vld [vmem:[%s421 + $0xa8] sm:$0xff]
        %v519 = vld [vmem:[%s421 + $0xb0] sm:$0xff]
        %v520 = vld [vmem:[%s421 + $0xb8] sm:$0xff]
        %v521 = vld [vmem:[%s421 + $0xc0] sm:$0xff]
        %v522 = vld [vmem:[%s421 + $0xc8] sm:$0xff]
        %v523 = vld [vmem:[%s421 + $0xd0] sm:$0xff]
        %v524 = vld [vmem:[%s421 + $0xd8] sm:$0xff]
        %v525 = vld [vmem:[%s421 + $0xe0] sm:$0xff]
        %v526 = vld [vmem:[%s421 + $0xe8] sm:$0xff]
        %v527 = vld [vmem:[%s421 + $0xf0] sm:$0xff]
        %v528 = vld [vmem:[%s421 + $0xf8] sm:$0xff]
        %v529 = vld [vmem:[%s421 + $0x100] sm:$0xff]
        %v530 = vld [vmem:[%s421 + $0x108] sm:$0xff]
        %v531 = vld [vmem:[%s421 + $0x110] sm:$0xff]
        %v532 = vld [vmem:[%s421 + $0x118] sm:$0xff]
        %v533 = vld [vmem:[%s421 + $0x120] sm:$0xff]
        %v534 = vld [vmem:[%s421 + $0x128] sm:$0xff]
        %v535 = vld [vmem:[%s421 + $0x130] sm:$0xff]
        %v536 = vld [vmem:[%s421 + $0x138] sm:$0xff]
        %v537 = vld [vmem:[%s421 + $0x140] sm:$0xff]
        %v538 = vld [vmem:[%s421 + $0x148] sm:$0xff]
        %v539 = vld [vmem:[%s421 + $0x150] sm:$0xff]
        %v540 = vld [vmem:[%s421 + $0x158] sm:$0xff]
        %v541 = vld [vmem:[%s421 + $0x160] sm:$0xff]
        %v542 = vld [vmem:[%s421 + $0x168] sm:$0xff]
        %v543 = vld [vmem:[%s421 + $0x170] sm:$0xff]
        %v544 = vld [vmem:[%s421 + $0x178] sm:$0xff]
        %v547 = vunpack.c.l.b16 %v495
        %v548 = vunpack.c.h.b16 %v495
        %v549 = vunpack.c.l.b16 %v496
        %v550 = vpack.c.b16 %v547, %v547
        %v551 = vpack.c.b16 %v548, %v548
        %v552 = vpack.c.b16 %v549, %v549
        %v604 = vunpack.c.l.b16 %v497
        %v605 = vunpack.c.h.b16 %v497
        %v606 = vunpack.c.l.b16 %v498
        %v607 = vunpack.c.h.b16 %v498
        %v608 = vunpack.c.l.b16 %v499
        %v609 = vunpack.c.h.b16 %v499
        %v610 = vunpack.c.l.b16 %v500
        %v611 = vunpack.c.h.b16 %v500
        %v612 = vunpack.c.l.b16 %v501
        %v613 = vunpack.c.h.b16 %v501
        %v614 = vunpack.c.l.b16 %v502
        %v615 = vunpack.c.h.b16 %v502
        %v616 = vunpack.c.l.b16 %v503
        %v617 = vunpack.c.h.b16 %v503
        %v618 = vunpack.c.l.b16 %v504
        %v619 = vunpack.c.h.b16 %v504
        %v620 = vunpack.c.l.b16 %v505
        %v621 = vunpack.c.h.b16 %v505
        %v622 = vunpack.c.l.b16 %v506
        %v623 = vunpack.c.h.b16 %v506
        %v624 = vunpack.c.l.b16 %v507
        %v625 = vunpack.c.h.b16 %v507
        %v626 = vunpack.c.l.b16 %v508
        %v627 = vunpack.c.h.b16 %v508
        %v628 = vunpack.c.l.b16 %v509
        %v629 = vunpack.c.h.b16 %v509
        %v630 = vunpack.c.l.b16 %v510
        %v631 = vunpack.c.h.b16 %v510
        %v632 = vunpack.c.l.b16 %v511
        %v633 = vunpack.c.h.b16 %v511
        %v634 = vunpack.c.l.b16 %v512
        %v635 = vunpack.c.h.b16 %v512
        %v636 = vunpack.c.l.b16 %v513
        %v637 = vunpack.c.h.b16 %v513
        %v638 = vunpack.c.l.b16 %v514
        %v639 = vunpack.c.h.b16 %v514
        %v640 = vunpack.c.l.b16 %v515
        %v641 = vunpack.c.h.b16 %v515
        %v642 = vunpack.c.l.b16 %v516
        %v643 = vunpack.c.h.b16 %v516
        %v644 = vunpack.c.l.b16 %v517
        %v645 = vunpack.c.h.b16 %v517
        %v646 = vunpack.c.l.b16 %v518
        %v647 = vunpack.c.h.b16 %v518
        %v648 = vunpack.c.l.b16 %v519
        %v649 = vunpack.c.h.b16 %v519
        %v650 = vunpack.c.l.b16 %v520
        %v651 = vunpack.c.h.b16 %v520
        %v652 = vunpack.c.l.b16 %v521
        %v653 = vunpack.c.h.b16 %v521
        %v654 = vunpack.c.l.b16 %v522
        %v655 = vunpack.c.h.b16 %v522
        %v656 = vunpack.c.l.b16 %v523
        %v657 = vunpack.c.h.b16 %v523
        %v658 = vunpack.c.l.b16 %v524
        %v659 = vunpack.c.h.b16 %v524
        %v660 = vunpack.c.l.b16 %v525
        %v661 = vunpack.c.h.b16 %v525
        %v662 = vunpack.c.l.b16 %v526
        %v663 = vunpack.c.h.b16 %v526
        %v664 = vunpack.c.l.b16 %v527
        %v665 = vunpack.c.h.b16 %v527
        %v666 = vunpack.c.l.b16 %v528
        %v667 = vunpack.c.h.b16 %v528
        %v668 = vunpack.c.l.b16 %v529
        %v669 = vunpack.c.h.b16 %v529
        %v670 = vunpack.c.l.b16 %v530
        %v671 = vunpack.c.h.b16 %v530
        %v672 = vunpack.c.l.b16 %v531
        %v673 = vunpack.c.h.b16 %v531
        %v674 = vunpack.c.l.b16 %v532
        %v675 = vunpack.c.h.b16 %v532
        %v676 = vunpack.c.l.b16 %v533
        %v677 = vunpack.c.h.b16 %v533
        %v678 = vunpack.c.l.b16 %v534
        %v679 = vunpack.c.h.b16 %v534
        %v680 = vunpack.c.l.b16 %v535
        %v681 = vunpack.c.h.b16 %v535
        %v682 = vunpack.c.l.b16 %v536
        %v683 = vunpack.c.h.b16 %v536
        %v684 = vunpack.c.l.b16 %v537
        %v685 = vunpack.c.h.b16 %v537
        %v686 = vunpack.c.l.b16 %v538
        %v687 = vunpack.c.h.b16 %v538
        %v688 = vunpack.c.l.b16 %v539
        %v689 = vunpack.c.h.b16 %v539
        %v690 = vunpack.c.l.b16 %v540
        %v691 = vunpack.c.h.b16 %v540
        %v692 = vunpack.c.l.b16 %v541
        %v693 = vunpack.c.h.b16 %v541
        %v694 = vunpack.c.l.b16 %v542
        %v695 = vunpack.c.h.b16 %v542
        %v696 = vunpack.c.l.b16 %v543
        %v697 = vunpack.c.h.b16 %v543
        %v698 = vunpack.c.l.b16 %v544
        %v699 = vunpack.c.h.b16 %v544
        %v700 = vpack.c.b16 %v606, %v604
        %v701 = vpack.c.b16 %v607, %v605
        %v702 = vpack.c.b16 %v610, %v608
        %v703 = vpack.c.b16 %v611, %v609
        %v704 = vpack.c.b16 %v614, %v612
        %v705 = vpack.c.b16 %v615, %v613
        %v706 = vpack.c.b16 %v618, %v616
        %v707 = vpack.c.b16 %v619, %v617
        %v708 = vpack.c.b16 %v622, %v620
        %v709 = vpack.c.b16 %v623, %v621
        %v710 = vpack.c.b16 %v626, %v624
        %v711 = vpack.c.b16 %v627, %v625
        %v712 = vpack.c.b16 %v630, %v628
        %v713 = vpack.c.b16 %v631, %v629
        %v714 = vpack.c.b16 %v634, %v632
        %v715 = vpack.c.b16 %v635, %v633
        %v716 = vpack.c.b16 %v638, %v636
        %v717 = vpack.c.b16 %v639, %v637
        %v718 = vpack.c.b16 %v642, %v640
        %v719 = vpack.c.b16 %v643, %v641
        %v720 = vpack.c.b16 %v646, %v644
        %v721 = vpack.c.b16 %v647, %v645
        %v722 = vpack.c.b16 %v650, %v648
        %v723 = vpack.c.b16 %v651, %v649
        %v724 = vpack.c.b16 %v654, %v652
        %v725 = vpack.c.b16 %v655, %v653
        %v726 = vpack.c.b16 %v658, %v656
        %v727 = vpack.c.b16 %v659, %v657
        %v728 = vpack.c.b16 %v662, %v660
        %v729 = vpack.c.b16 %v663, %v661
        %v730 = vpack.c.b16 %v666, %v664
        %v731 = vpack.c.b16 %v667, %v665
        %v732 = vpack.c.b16 %v670, %v668
        %v733 = vpack.c.b16 %v671, %v669
        %v734 = vpack.c.b16 %v674, %v672
        %v735 = vpack.c.b16 %v675, %v673
        %v736 = vpack.c.b16 %v678, %v676
        %v737 = vpack.c.b16 %v679, %v677
        %v738 = vpack.c.b16 %v682, %v680
        %v739 = vpack.c.b16 %v683, %v681
        %v740 = vpack.c.b16 %v686, %v684
        %v741 = vpack.c.b16 %v687, %v685
        %v742 = vpack.c.b16 %v690, %v688
        %v743 = vpack.c.b16 %v691, %v689
        %v744 = vpack.c.b16 %v694, %v692
        %v745 = vpack.c.b16 %v695, %v693
        %v746 = vpack.c.b16 %v698, %v696
        %v747 = vpack.c.b16 %v699, %v697
        %796 = vmatprep.subr.bf16.mxu0 %v701
        %797 = vmatpush1.bf16.msra.mxu0 %v700
        %798 = vmatprep.subr.bf16.mxu0 %v703
        %799 = vmatpush1.bf16.msra.mxu0 %v702
        %800 = vmatprep.subr.bf16.mxu0 %v705
        %801 = vmatpush1.bf16.msra.mxu0 %v704
        %802 = vmatprep.subr.bf16.mxu0 %v707
        %803 = vmatpush1.bf16.msra.mxu0 %v706
        %804 = vmatprep.subr.bf16.mxu0 %v709
        %805 = vmatpush1.bf16.msra.mxu0 %v708
        %806 = vmatprep.subr.bf16.mxu0 %v711
        %807 = vmatpush1.bf16.msra.mxu0 %v710
        %808 = vmatprep.subr.bf16.mxu0 %v713
        %809 = vmatpush1.bf16.msra.mxu0 %v712
        %810 = vmatprep.subr.bf16.mxu0 %v715
        %811 = vmatpush1.bf16.msra.mxu0 %v714
        %812 = vmatprep.subr.bf16.mxu0 %v717
        %813 = vmatpush1.bf16.msra.mxu0 %v716
        %814 = vmatprep.subr.bf16.mxu0 %v719
        %815 = vmatpush1.bf16.msra.mxu0 %v718
        %816 = vmatprep.subr.bf16.mxu0 %v721
        %817 = vmatpush1.bf16.msra.mxu0 %v720
        %818 = vmatprep.subr.bf16.mxu0 %v723
        %819 = vmatpush1.bf16.msra.mxu0 %v722
        %820 = vmatprep.subr.bf16.mxu0 %v725
        %821 = vmatpush1.bf16.msra.mxu0 %v724
        %822 = vmatprep.subr.bf16.mxu0 %v727
        %823 = vmatpush1.bf16.msra.mxu0 %v726
        %824 = vmatprep.subr.bf16.mxu0 %v729
        %825 = vmatpush1.bf16.msra.mxu0 %v728
        %826 = vmatprep.subr.bf16.mxu0 %v731
        %827 = vmatpush1.bf16.msra.mxu0 %v730
        %828 = vmatprep.mubr.bf16.mxu0 %v551
        %829 = vmatmul.mubr.bf16.gmra.mrb[0].mxu0 %v550
        %v830 = vpop.f32.mrb[0].mxu0
        %v831 = vadd.f32 0.0, %v830
        %v832 = vpop.f32.mrb[0].mxu0
        %v833 = vadd.f32 0.0, %v832
        %v834 = vpop.f32.mrb[0].mxu0
        %v835 = vpop.f32.mrb[0].mxu0
        %836 = vdwg.mxu0
        %837 = vmatprep.subr.bf16.mxu0 %v733
        %838 = vmatpush1.bf16.msra.mxu0 %v732
        %839 = vmatprep.subr.bf16.mxu0 %v735
        %840 = vmatpush1.bf16.msra.mxu0 %v734
        %841 = vmatprep.subr.bf16.mxu0 %v737
        %842 = vmatpush1.bf16.msra.mxu0 %v736
        %843 = vmatprep.subr.bf16.mxu0 %v739
        %844 = vmatpush1.bf16.msra.mxu0 %v738
        %845 = vmatprep.subr.bf16.mxu0 %v741
        %846 = vmatpush1.bf16.msra.mxu0 %v740
        %847 = vmatprep.subr.bf16.mxu0 %v743
        %848 = vmatpush1.bf16.msra.mxu0 %v742
        %849 = vmatprep.subr.bf16.mxu0 %v745
        %850 = vmatpush1.bf16.msra.mxu0 %v744
        %851 = vmatprep.subr.bf16.mxu0 %v747
        %852 = vmatpush1.bf16.msra.mxu0 %v746
        %853 = vmatprep.subr.bf16.mxu0 0
        %854 = vmatpush1.bf16.msra.mxu0 0
        %855 = vmatprep.subr.bf16.mxu0 0
        %856 = vmatpush1.bf16.msra.mxu0 0
        %857 = vmatprep.subr.bf16.mxu0 0
        %858 = vmatpush1.bf16.msra.mxu0 0
        %859 = vmatprep.subr.bf16.mxu0 0
        %860 = vmatpush1.bf16.msra.mxu0 0
        %861 = vmatprep.subr.bf16.mxu0 0
        %862 = vmatpush1.bf16.msra.mxu0 0
        %863 = vmatprep.subr.bf16.mxu0 0
        %864 = vmatpush1.bf16.msra.mxu0 0
        %865 = vmatprep.subr.bf16.mxu0 0
        %866 = vmatpush1.bf16.msra.mxu0 0
        %867 = vmatprep.subr.bf16.mxu0 0
        %868 = vmatpush1.bf16.msra.mxu0 0
        %869 = vmatprep.mubr.bf16.mxu0 0
        %870 = vmatmul.mubr.bf16.gmra.mrb[0].mxu0 %v552
        %v871 = vpop.f32.mrb[0].mxu0
        %v872 = vadd.f32 %v831, %v871
        %v873 = vpop.f32.mrb[0].mxu0
        %v874 = vadd.f32 %v833, %v873
        %v875 = vpop.f32.mrb[0].mxu0
        %v876 = vpop.f32.mrb[0].mxu0
        %877 = vdwg.mxu0
        %v878 = vadd.f32 %v493, %v872
        %v879 = vadd.f32 %v494, %v874
        %880 = vst [vmem:[#allocation2] sm:$0xff] %v878
        %881 = vst [vmem:[#allocation2 + $0x8] sm:$0xff] %v879
        %p882 = scmp.eq.s32.totalorder %s21, 5
        // Predicated region
        $region75: #{_lambda_.24} parent=65 // pred_check
          %p883 = pneg %p882
        $region76: #{_lambda_.24} parent=65 // pred_check_branch
          %885 = sbr.rel (%p883) target = $region78
        $region77: #{_lambda_.24} parent=65 // pred_region
          %v886 = vld [vmem:[#allocation2] sm:$0xff]
          %v887 = vld [vmem:[#allocation2 + $0x8] sm:$0xff]
          %v888 = vld [vmem:[%s474] sm:$0x3]
          %v890 = vlaneseq
          %v891 = vshrl.u32 %v890, 7
          %v892 = vsub.s32 0, %v891
          %v893 = vrot.slane %v888, %v892
          %v894 = vlaneseq
          %v895 = vshrl.u32 %v894, 7
          %v896 = vsub.s32 1, %v895
          %v897 = vrot.slane %v888, %v896
          %v900 = vadd.f32 %v886, %v893
          %v901 = vadd.f32 %v887, %v897
          %v902 = vmax.f32 %v900, 0.0
          %v903 = vmax.f32 %v901, 0.0
          %v904 = vpack.c.bf16 %v902, %v902
          %v905 = vpack.c.bf16 %v903, %v903
          %v908 = vunpack.c.l.b16 %v904
          %v909 = vunpack.c.l.b16 %v905
          %v910 = vpack.c.b16 %v909, %v908
          %912 = vst [vmem:[%s484] sm:$0xff] %v910
        $region78: #{_lambda_.24} parent=65 // pred_fallthru
          _
        %s913 = smul.u32 2, %s20
        %p914 = scmp.lt.s32.totalorder %s19, 0
        %s915 = scalar_select %p914, %s19, 0
        %p916 = scmp.lt.s32.totalorder %s913, 3
        %s917 = scalar_select %p916, %s913, 3
        %s918 = smul.addr %s915, 4
        %s919 = sadd.s32 %s917, %s918
        %s920 = smul.addr %s919, 4
        %s921 = scalar_lea.vmem %s3, %s920
        // Predicated region
        $region79: #{_lambda_.24} parent=65 // pred_check
          %p922 = pneg %p135
        $region80: #{_lambda_.24} parent=65 // pred_check_branch
          %924 = sbr.rel (%p922) target = $region82
        $region81: #{_lambda_.24} parent=65 // pred_region
          %s925 = smul.u32 2, %s20
        $region82: #{_lambda_.24} parent=65 // pred_fallthru
          _
      $region66: #{_lambda_.24} parent=5 // pred_fallthru
        _
      %p926 = scmp.le.s32.totalorder 2, %s9
      // Predicated region
      $region83: #{_lambda_.24} parent=5 // pred_check
        %p927 = pneg %p926
      $region84: #{_lambda_.24} parent=5 // pred_check_branch
        %929 = sbr.rel (%p927) target = $region86
      $region85: #{_lambda_.24} parent=5 // pred_region
        %s930 = ssub.s32 %s9, 2
        // Predicated region
        $region87: #{_lambda_.24} parent=85 // pred_check
          %p931 = pneg %p141
        $region88: #{_lambda_.24} parent=85 // pred_check_branch
          %933 = sbr.rel (%p931) target = $region90
        $region89: #{_lambda_.24} parent=85 // pred_region
          %s934 = smul.u32 2, %s23
          %p935 = scmp.lt.s32.totalorder %s22, 0
          %s936 = scalar_select %p935, %s22, 0
          %p937 = scmp.lt.s32.totalorder %s934, 3
          %s938 = scalar_select %p937, %s934, 3
          %s939 = smul.addr %s936, 4
          %s940 = sadd.s32 %s938, %s939
          %s941 = smul.addr %s940, 4
          %s942 = scalar_lea.vmem %s3, %s941
        $region90: #{_lambda_.24} parent=85 // pred_fallthru
          _
      $region86: #{_lambda_.24} parent=5 // pred_fallthru
        _
    $region6: #{_lambda_.24} parent=1 // loop_footer
      %s13 = sadd.s32 1, %s9
    $region7: #{_lambda_.24} parent=1 // loop_footer_branch
      %8 = sbr.rel target = $region3
    $region8: #{_lambda_.24} parent=1 // loop_exit
      _

// kernel: _lambda_.23
$region0: #{_lambda_.23}
  #allocation0 [shape = 'u32[]', space=smem, size = 0x4, offset = 0x4, fixed_abs, tag = 'smem constant byte address 0x4 - core index']
  #allocation1 [shape = 'u32[144,128]{1,0:T(1,128)}', space=vmem, size = 0x12000, scoped, tag = 'internal scratch']
  #allocation2 [shape = 'f32[8,256]{1,0:T(8,128)}', space=vmem, size = 0x2000, scoped, tag = 'scratch operand']
  %s0 = inlined_call_operand.vmem [shape: bf16[8,256], index: 0, kind: input, shape index: {}]
  %s1 = inlined_call_operand.vmem [shape: bf16[256,512], index: 1, kind: input, shape index: {}]
  %s2 = inlined_call_operand.vmem [shape: f32[1,512], index: 2, kind: input, shape index: {}]
  %s3 = inlined_call_operand.vmem [shape: bf16[8,512], index: 3, kind: output, shape index: {}]
  %s4 = sld [smem:[#allocation0]]
  $region91: #{_lambda_.23} parent=0
    _
  %s6 = ssub.s32 1, %s4
  %s7 = scalar_select 0, %s6, %s4
  $region1: #{_lambda_.23} parent=0
    #allocation3 [shape = 'u8[262144]{0}', space=vmem, size = 0x40000, scoped, tag = 'input window, operand 1']
    loop: start=0, step=1, limit=4
    $region2: #{_lambda_.23} parent=1 // loop_pre_header
      _
    $region3: #{_lambda_.23} parent=1 // loop_header
      %s9 = sphi 0, %s13
      %p10 = scmp.ge.s32.totalorder %s9, 4
      %s16 = sphi 0, %s35
      %s17 = sphi 0, %s31
      %s18 = sphi 0, %s27
      %s19 = sphi 0, %s16
      %s20 = sphi 0, %s17
      %s21 = sphi 0, %s18
      %s22 = sphi 0, %s19
      %s23 = sphi 0, %s20
      %s24 = sphi 0, %s21
      %s40 = sphi 0, %s42
      %s43 = sphi 0, %s40
      %s44 = sphi 0, %s43
      %s60 = sphi 0, %s44
      %s68 = sphi 0, %s70
      %s71 = sphi 0, %s68
      %s72 = sphi 0, %s71
      %s88 = sphi 0, %s72
      %s94 = sphi 0, %s96
      %s97 = sphi 0, %s94
      %s98 = sphi 0, %s97
      %s114 = sphi 0, %s98
      %s122 = sphi 0, %s124
      %s125 = sphi 0, %s122
      %s126 = sphi 0, %s125
      %s142 = sphi 0, %s126
    $region4: #{_lambda_.23} parent=1 // loop_header_branch
      %12 = sbr.rel (%p10) target = $region8
    $region5: #{_lambda_.23} parent=1 // loop_body
      %s14 = ssub.s32 %s9, 1
      %s15 = ssub.s32 %s9, 2
      %s25 = sadd.s32 1, %s18
      %p26 = scmp.ge.s32.totalorder %s25, 1
      %s27 = scalar_select %p26, 0, %s25
      %s28 = sadd.s32 1, %s17
      %s29 = scalar_select %p26, %s28, %s17
      %p30 = scmp.ge.s32.totalorder %s29, 2
      %s31 = scalar_select %p30, 0, %s29
      %s32 = sadd.s32 1, %s16
      %s33 = scalar_select %p30, %s32, %s16
      %p34 = scmp.ge.s32.totalorder %s33, 1
      %s35 = scalar_select %p34, 0, %s33
      %s36 = ssub.s32 %s16, %s35
      %s37 = ssub.s32 %s18, %s27
      %s38 = sor.u32 %s36, %s37
      %p39 = scmp.eq.s32.totalorder %s38, 0
      %s41 = sadd.s32 %s40, 1
      %s42 = scalar_select %p39, %s40, %s41
      %p45 = pneg %p39
      %p46 = scmp.eq.s32.totalorder %s9, 1
      %p47 = por %p45, %p46
      %p48 = scmp.ne.s32.totalorder %s40, %s43
      %p49 = scmp.eq.s32.totalorder %s9, 0
      %p50 = por %p48, %p49
      %p51 = scmp.ne.s32.totalorder %s40, %s43
      %p52 = scmp.eq.s32.totalorder %s14, 1
      %p53 = por %p51, %p52
      %p54 = scmp.ne.s32.totalorder %s43, %s44
      %p55 = scmp.eq.s32.totalorder %s14, 0
      %p56 = por %p54, %p55
      %p57 = scmp.ne.s32.totalorder %s43, %s44
      %p58 = scmp.eq.s32.totalorder %s15, 1
      %p59 = por %p57, %p58
      %p61 = scmp.ne.s32.totalorder %s44, %s60
      %p62 = scmp.eq.s32.totalorder %s15, 0
      %p63 = por %p61, %p62
      %s64 = ssub.s32 %s18, %s27
      %s65 = ssub.s32 %s17, %s31
      %s66 = sor.u32 %s64, %s65
      %p67 = scmp.eq.s32.totalorder %s66, 0
      %s69 = sadd.s32 %s68, 1
      %s70 = scalar_select %p67, %s68, %s69
      %p73 = pneg %p67
      %p74 = scmp.eq.s32.totalorder %s9, 1
      %p75 = por %p73, %p74
      %p76 = scmp.ne.s32.totalorder %s68, %s71
      %p77 = scmp.eq.s32.totalorder %s9, 0
      %p78 = por %p76, %p77
      %p79 = scmp.ne.s32.totalorder %s68, %s71
      %p80 = scmp.eq.s32.totalorder %s14, 1
      %p81 = por %p79, %p80
      %p82 = scmp.ne.s32.totalorder %s71, %s72
      %p83 = scmp.eq.s32.totalorder %s14, 0
      %p84 = por %p82, %p83
      %p85 = scmp.ne.s32.totalorder %s71, %s72
      %p86 = scmp.eq.s32.totalorder %s15, 1
      %p87 = por %p85, %p86
      %p89 = scmp.ne.s32.totalorder %s72, %s88
      %p90 = scmp.eq.s32.totalorder %s15, 0
      %p91 = por %p89, %p90
      %s92 = ssub.s32 %s17, %s31
      %p93 = scmp.eq.s32.totalorder %s92, 0
      %s95 = sadd.s32 %s94, 1
      %s96 = scalar_select %p93, %s94, %s95
      %p99 = pneg %p93
      %p100 = scmp.eq.s32.totalorder %s9, 1
      %p101 = por %p99, %p100
      %p102 = scmp.ne.s32.totalorder %s94, %s97
      %p103 = scmp.eq.s32.totalorder %s9, 0
      %p104 = por %p102, %p103
      %p105 = scmp.ne.s32.totalorder %s94, %s97
      %p106 = scmp.eq.s32.totalorder %s14, 1
      %p107 = por %p105, %p106
      %p108 = scmp.ne.s32.totalorder %s97, %s98
      %p109 = scmp.eq.s32.totalorder %s14, 0
      %p110 = por %p108, %p109
      %p111 = scmp.ne.s32.totalorder %s97, %s98
      %p112 = scmp.eq.s32.totalorder %s15, 1
      %p113 = por %p111, %p112
      %p115 = scmp.ne.s32.totalorder %s98, %s114
      %p116 = scmp.eq.s32.totalorder %s15, 0
      %p117 = por %p115, %p116
      %s118 = ssub.s32 %s16, %s35
      %s119 = ssub.s32 %s17, %s31
      %s120 = sor.u32 %s118, %s119
      %p121 = scmp.eq.s32.totalorder %s120, 0
      %s123 = sadd.s32 %s122, 1
      %s124 = scalar_select %p121, %s122, %s123
      %p127 = pneg %p121
      %p128 = scmp.eq.s32.totalorder %s9, 1
      %p129 = por %p127, %p128
      %p130 = scmp.ne.s32.totalorder %s122, %s125
      %p131 = scmp.eq.s32.totalorder %s9, 0
      %p132 = por %p130, %p131
      %p133 = scmp.ne.s32.totalorder %s122, %s125
      %p134 = scmp.eq.s32.totalorder %s14, 1
      %p135 = por %p133, %p134
      %p136 = scmp.ne.s32.totalorder %s125, %s126
      %p137 = scmp.eq.s32.totalorder %s14, 0
      %p138 = por %p136, %p137
      %p139 = scmp.ne.s32.totalorder %s125, %s126
      %p140 = scmp.eq.s32.totalorder %s15, 1
      %p141 = por %p139, %p140
      %p143 = scmp.ne.s32.totalorder %s126, %s142
      %p144 = scmp.eq.s32.totalorder %s15, 0
      %p145 = por %p143, %p144
      %p146 = scmp.le.s32.totalorder 1, %s9
      %p147 = scmp.lt.s32.totalorder %s9, 3
      %p148 = pnand %p146, %p147
      %p149 = pneg %p148
      // Predicated region
      $region9: #{_lambda_.23} parent=5 // pred_check
        _
      $region10: #{_lambda_.23} parent=5 // pred_check_branch
        %151 = sbr.rel (%p148) target = $region12
      $region11: #{_lambda_.23} parent=5 // pred_region
        %s152 = ssub.s32 %s9, 1
        // Predicated region
        $region13: #{_lambda_.23} parent=11 // pred_check
          %p153 = pneg %p56
        $region14: #{_lambda_.23} parent=11 // pred_check_branch
          %155 = sbr.rel (%p153) target = $region16
        $region15: #{_lambda_.23} parent=11 // pred_region
          %s156 = smul.u32 2, %s21
          %p157 = scmp.lt.s32.totalorder %s19, 0
          %s158 = scalar_select %p157, %s19, 0
          %p159 = scmp.lt.s32.totalorder %s156, 1
          %s160 = scalar_select %p159, %s156, 1
          %s161 = smul.addr %s158, 2
          %s162 = sadd.s32 %s160, %s161
          %s163 = smul.addr %s162, 4
          %s164 = scalar_lea.vmem %s0, %s163
          %s165 = smul.u32 2, %s21
        $region16: #{_lambda_.23} parent=11 // pred_fallthru
          _
      $region12: #{_lambda_.23} parent=5 // pred_fallthru
        _
      %p166 = scmp.lt.s32.totalorder %s9, 2
      // Predicated region
      $region17: #{_lambda_.23} parent=5 // pred_check
        %p167 = pneg %p166
      $region18: #{_lambda_.23} parent=5 // pred_check_branch
        %169 = sbr.rel (%p167) target = $region20
      $region19: #{_lambda_.23} parent=5 // pred_region
        // Predicated region
        $region21: #{_lambda_.23} parent=19 // pred_check
          %p170 = pneg %p78
        $region22: #{_lambda_.23} parent=19 // pred_check_branch
          %172 = sbr.rel (%p170) target = $region24
        $region23: #{_lambda_.23} parent=19 // pred_region
          %s173 = sand.u32 %s68, 1
          %s174 = sand.u32 %s68, 1
          %s175 = smul.addr %s174, 256
          %s176 = scalar_lea.vmem [#allocation3], %s175
          %s177 = smul.u32 32, %s18
          %s178 = smul.u32 2, %s17
          %s179 = smul.addr %s177, 4
          %s180 = sadd.s32 %s178, %s179
          %s181 = smul.addr %s180, 4
          %s182 = scalar_lea.vmem %s1, %s181
          // Predicated region
          $region25: #{_lambda_.23} parent=23 // pred_check
            _
          $region26: #{_lambda_.23} parent=23 // pred_check_branch
            %184 = sbr.rel (0) target = $region28
          $region27: #{_lambda_.23} parent=23 // pred_region
            // Predicated region
            $region29: #{_lambda_.23} parent=27 // pred_check
              _
            $region30: #{_lambda_.23} parent=27 // pred_check_branch
              %186 = sbr.rel (0) target = $region32
            $region31: #{_lambda_.23} parent=27 // pred_region
              // Predicated region
              $region44: #{_lambda_.23} parent=31 // pred_check
                _
              $region45: #{_lambda_.23} parent=31 // pred_check_branch
                %263 = sbr.rel (0) target = $region47
              $region46: #{_lambda_.23} parent=31 // pred_region
                loop: start=0, step=1, limit=1
                $region48: #{_lambda_.23} parent=46 // loop_pre_header
                  _
                $region49: #{_lambda_.23} parent=46 // loop_header
                  %s265 = sphi 0, %s269
                  %p266 = scmp.ge.s32.totalorder %s265, 1
                  %s270 = sphi %s182, %s182
                  %s271 = sphi %s176, %s176
                $region50: #{_lambda_.23} parent=46 // loop_header_branch
                  %268 = sbr.rel (%p266) target = $region54
                $region51: #{_lambda_.23} parent=46 // loop_body
                  %v272 = vld [vmem:[%s270] sm:$0xff]
                  %273 = vst [vmem:[%s271] sm:$0xff] %v272
                  %v274 = vld [vmem:[%s270 + $0x10] sm:$0xff]
                  %275 = vst [vmem:[%s271 + $0x8] sm:$0xff] %v274
                  %v276 = vld [vmem:[%s270 + $0x20] sm:$0xff]
                  %277 = vst [vmem:[%s271 + $0x10] sm:$0xff] %v276
                  %v278 = vld [vmem:[%s270 + $0x30] sm:$0xff]
                  %279 = vst [vmem:[%s271 + $0x18] sm:$0xff] %v278
                  %v280 = vld [vmem:[%s270 + $0x40] sm:$0xff]
                  %281 = vst [vmem:[%s271 + $0x20] sm:$0xff] %v280
                  %v282 = vld [vmem:[%s270 + $0x50] sm:$0xff]
                  %283 = vst [vmem:[%s271 + $0x28] sm:$0xff] %v282
                  %v284 = vld [vmem:[%s270 + $0x60] sm:$0xff]
                  %285 = vst [vmem:[%s271 + $0x30] sm:$0xff] %v284
                  %v286 = vld [vmem:[%s270 + $0x70] sm:$0xff]
                  %287 = vst [vmem:[%s271 + $0x38] sm:$0xff] %v286
                  %v288 = vld [vmem:[%s270 + $0x80] sm:$0xff]
                  %289 = vst [vmem:[%s271 + $0x40] sm:$0xff] %v288
                  %v290 = vld [vmem:[%s270 + $0x90] sm:$0xff]
                  %291 = vst [vmem:[%s271 + $0x48] sm:$0xff] %v290
                  %v292 = vld [vmem:[%s270 + $0xa0] sm:$0xff]
                  %293 = vst [vmem:[%s271 + $0x50] sm:$0xff] %v292
                  %v294 = vld [vmem:[%s270 + $0xb0] sm:$0xff]
                  %295 = vst [vmem:[%s271 + $0x58] sm:$0xff] %v294
                  %v296 = vld [vmem:[%s270 + $0xc0] sm:$0xff]
                  %297 = vst [vmem:[%s271 + $0x60] sm:$0xff] %v296
                  %v298 = vld [vmem:[%s270 + $0xd0] sm:$0xff]
                  %299 = vst [vmem:[%s271 + $0x68] sm:$0xff] %v298
                  %v300 = vld [vmem:[%s270 + $0xe0] sm:$0xff]
                  %301 = vst [vmem:[%s271 + $0x70] sm:$0xff] %v300
                  %v302 = vld [vmem:[%s270 + $0xf0] sm:$0xff]
                  %303 = vst [vmem:[%s271 + $0x78] sm:$0xff] %v302
                  %v304 = vld [vmem:[%s270 + $0x100] sm:$0xff]
                  %305 = vst [vmem:[%s271 + $0x80] sm:$0xff] %v304
                  %v306 = vld [vmem:[%s270 + $0x110] sm:$0xff]
                  %307 = vst [vmem:[%s271 + $0x88] sm:$0xff] %v306
                  %v308 = vld [vmem:[%s270 + $0x120] sm:$0xff]
                  %309 = vst [vmem:[%s271 + $0x90] sm:$0xff] %v308
                  %v310 = vld [vmem:[%s270 + $0x130] sm:$0xff]
                  %311 = vst [vmem:[%s271 + $0x98] sm:$0xff] %v310
                  %v312 = vld [vmem:[%s270 + $0x140] sm:$0xff]
                  %313 = vst [vmem:[%s271 + $0xa0] sm:$0xff] %v312
                  %v314 = vld [vmem:[%s270 + $0x150] sm:$0xff]
                  %315 = vst [vmem:[%s271 + $0xa8] sm:$0xff] %v314
                  %v316 = vld [vmem:[%s270 + $0x160] sm:$0xff]
                  %317 = vst [vmem:[%s271 + $0xb0] sm:$0xff] %v316
                  %v318 = vld [vmem:[%s270 + $0x170] sm:$0xff]
                  %319 = vst [vmem:[%s271 + $0xb8] sm:$0xff] %v318
                  %v320 = vld [vmem:[%s270 + $0x180] sm:$0xff]
                  %321 = vst [vmem:[%s271 + $0xc0] sm:$0xff] %v320
                  %v322 = vld [vmem:[%s270 + $0x190] sm:$0xff]
                  %323 = vst [vmem:[%s271 + $0xc8] sm:$0xff] %v322
                  %v324 = vld [vmem:[%s270 + $0x1a0] sm:$0xff]
                  %325 = vst [vmem:[%s271 + $0xd0] sm:$0xff] %v324
                  %v326 = vld [vmem:[%s270 + $0x1b0] sm:$0xff]
                  %327 = vst [vmem:[%s271 + $0xd8] sm:$0xff] %v326
                  %v328 = vld [vmem:[%s270 + $0x1c0] sm:$0xff]
                  %329 = vst [vmem:[%s271 + $0xe0] sm:$0xff] %v328
                  %v330 = vld [vmem:[%s270 + $0x1d0] sm:$0xff]
                  %331 = vst [vmem:[%s271 + $0xe8] sm:$0xff] %v330
                  %v332 = vld [vmem:[%s270 + $0x1e0] sm:$0xff]
                  %333 = vst [vmem:[%s271 + $0xf0] sm:$0xff] %v332
                  %v334 = vld [vmem:[%s270 + $0x1f0] sm:$0xff]
                  %335 = vst [vmem:[%s271 + $0xf8] sm:$0xff] %v334
                $region52: #{_lambda_.23} parent=46 // loop_footer
                  %s269 = sadd.s32 1, %s265
                $region53: #{_lambda_.23} parent=46 // loop_footer_branch
                  %264 = sbr.rel target = $region49
                $region54: #{_lambda_.23} parent=46 // loop_exit
                  _
              $region47: #{_lambda_.23} parent=31 // pred_fallthru
                _
              // Predicated region
              $region55: #{_lambda_.23} parent=31 // pred_check
                _
              $region56: #{_lambda_.23} parent=31 // pred_check_branch
                %337 = sbr.rel target = $region58
              $region57: #{_lambda_.23} parent=31 // pred_region
                _
              $region58: #{_lambda_.23} parent=31 // pred_fallthru
                _
            $region32: #{_lambda_.23} parent=27 // pred_fallthru
              _
            // Predicated region
            $region33: #{_lambda_.23} parent=27 // pred_check
              _
            $region34: #{_lambda_.23} parent=27 // pred_check_branch
              %188 = sbr.rel target = $region36
            $region35: #{_lambda_.23} parent=27 // pred_region
              loop: start=0, step=1, limit=1
              $region37: #{_lambda_.23} parent=35 // loop_pre_header
                _
              $region38: #{_lambda_.23} parent=35 // loop_header
                %s191 = sphi 0, %s195
                %p192 = scmp.ge.s32.totalorder %s191, 1
                %s196 = sphi %s182, %s182
                %s197 = sphi %s176, %s176
              $region39: #{_lambda_.23} parent=35 // loop_header_branch
                %194 = sbr.rel (%p192) target = $region43
              $region40: #{_lambda_.23} parent=35 // loop_body
                %v198 = vld [vmem:[%s196] sm:$0xff]
                %199 = vst [vmem:[%s197] sm:$0xff] %v198
                %v200 = vld [vmem:[%s196 + $0x10] sm:$0xff]
                %201 = vst [vmem:[%s197 + $0x8] sm:$0xff] %v200
                %v202 = vld [vmem:[%s196 + $0x20] sm:$0xff]
                %203 = vst [vmem:[%s197 + $0x10] sm:$0xff] %v202
                %v204 = vld [vmem:[%s196 + $0x30] sm:$0xff]
                %205 = vst [vmem:[%s197 + $0x18] sm:$0xff] %v204
                %v206 = vld [vmem:[%s196 + $0x40] sm:$0xff]
                %207 = vst [vmem:[%s197 + $0x20] sm:$0xff] %v206
                %v208 = vld [vmem:[%s196 + $0x50] sm:$0xff]
                %209 = vst [vmem:[%s197 + $0x28] sm:$0xff] %v208
                %v210 = vld [vmem:[%s196 + $0x60] sm:$0xff]
                %211 = vst [vmem:[%s197 + $0x30] sm:$0xff] %v210
                %v212 = vld [vmem:[%s196 + $0x70] sm:$0xff]
                %213 = vst [vmem:[%s197 + $0x38] sm:$0xff] %v212
                %v214 = vld [vmem:[%s196 + $0x80] sm:$0xff]
                %215 = vst [vmem:[%s197 + $0x40] sm:$0xff] %v214
                %v216 = vld [vmem:[%s196 + $0x90] sm:$0xff]
                %217 = vst [vmem:[%s197 + $0x48] sm:$0xff] %v216
                %v218 = vld [vmem:[%s196 + $0xa0] sm:$0xff]
                %219 = vst [vmem:[%s197 + $0x50] sm:$0xff] %v218
                %v220 = vld [vmem:[%s196 + $0xb0] sm:$0xff]
                %221 = vst [vmem:[%s197 + $0x58] sm:$0xff] %v220
                %v222 = vld [vmem:[%s196 + $0xc0] sm:$0xff]
                %223 = vst [vmem:[%s197 + $0x60] sm:$0xff] %v222
                %v224 = vld [vmem:[%s196 + $0xd0] sm:$0xff]
                %225 = vst [vmem:[%s197 + $0x68] sm:$0xff] %v224
                %v226 = vld [vmem:[%s196 + $0xe0] sm:$0xff]
                %227 = vst [vmem:[%s197 + $0x70] sm:$0xff] %v226
                %v228 = vld [vmem:[%s196 + $0xf0] sm:$0xff]
                %229 = vst [vmem:[%s197 + $0x78] sm:$0xff] %v228
                %v230 = vld [vmem:[%s196 + $0x100] sm:$0xff]
                %231 = vst [vmem:[%s197 + $0x80] sm:$0xff] %v230
                %v232 = vld [vmem:[%s196 + $0x110] sm:$0xff]
                %233 = vst [vmem:[%s197 + $0x88] sm:$0xff] %v232
                %v234 = vld [vmem:[%s196 + $0x120] sm:$0xff]
                %235 = vst [vmem:[%s197 + $0x90] sm:$0xff] %v234
                %v236 = vld [vmem:[%s196 + $0x130] sm:$0xff]
                %237 = vst [vmem:[%s197 + $0x98] sm:$0xff] %v236
                %v238 = vld [vmem:[%s196 + $0x140] sm:$0xff]
                %239 = vst [vmem:[%s197 + $0xa0] sm:$0xff] %v238
                %v240 = vld [vmem:[%s196 + $0x150] sm:$0xff]
                %241 = vst [vmem:[%s197 + $0xa8] sm:$0xff] %v240
                %v242 = vld [vmem:[%s196 + $0x160] sm:$0xff]
                %243 = vst [vmem:[%s197 + $0xb0] sm:$0xff] %v242
                %v244 = vld [vmem:[%s196 + $0x170] sm:$0xff]
                %245 = vst [vmem:[%s197 + $0xb8] sm:$0xff] %v244
                %v246 = vld [vmem:[%s196 + $0x180] sm:$0xff]
                %247 = vst [vmem:[%s197 + $0xc0] sm:$0xff] %v246
                %v248 = vld [vmem:[%s196 + $0x190] sm:$0xff]
                %249 = vst [vmem:[%s197 + $0xc8] sm:$0xff] %v248
                %v250 = vld [vmem:[%s196 + $0x1a0] sm:$0xff]
                %251 = vst [vmem:[%s197 + $0xd0] sm:$0xff] %v250
                %v252 = vld [vmem:[%s196 + $0x1b0] sm:$0xff]
                %253 = vst [vmem:[%s197 + $0xd8] sm:$0xff] %v252
                %v254 = vld [vmem:[%s196 + $0x1c0] sm:$0xff]
                %255 = vst [vmem:[%s197 + $0xe0] sm:$0xff] %v254
                %v256 = vld [vmem:[%s196 + $0x1d0] sm:$0xff]
                %257 = vst [vmem:[%s197 + $0xe8] sm:$0xff] %v256
                %v258 = vld [vmem:[%s196 + $0x1e0] sm:$0xff]
                %259 = vst [vmem:[%s197 + $0xf0] sm:$0xff] %v258
                %v260 = vld [vmem:[%s196 + $0x1f0] sm:$0xff]
                %261 = vst [vmem:[%s197 + $0xf8] sm:$0xff] %v260
              $region41: #{_lambda_.23} parent=35 // loop_footer
                %s195 = sadd.s32 1, %s191
              $region42: #{_lambda_.23} parent=35 // loop_footer_branch
                %190 = sbr.rel target = $region38
              $region43: #{_lambda_.23} parent=35 // loop_exit
                _
            $region36: #{_lambda_.23} parent=27 // pred_fallthru
              _
          $region28: #{_lambda_.23} parent=23 // pred_fallthru
            _
          %338 = vnop
        $region24: #{_lambda_.23} parent=19 // pred_fallthru
          _
        // Predicated region
        $region59: #{_lambda_.23} parent=19 // pred_check
          %p339 = pneg %p104
        $region60: #{_lambda_.23} parent=19 // pred_check_branch
          %341 = sbr.rel (%p339) target = $region62
        $region61: #{_lambda_.23} parent=19 // pred_region
          %s342 = smul.u32 2, %s17
          %p343 = scmp.lt.s32.totalorder %s342, 3
          %s344 = scalar_select %p343, %s342, 3
          %s345 = scalar_lea.vmem %s2, %s344
          %s346 = smul.u32 2, %s17
        $region62: #{_lambda_.23} parent=19 // pred_fallthru
          _
      $region20: #{_lambda_.23} parent=5 // pred_fallthru
        _
      %p347 = scmp.le.s32.totalorder 1, %s9
      %p348 = scmp.lt.s32.totalorder %s9, 3
      %p349 = pnand %p347, %p348
      %p350 = pneg %p349
      // Predicated region
      $region63: #{_lambda_.23} parent=5 // pred_check
        _
      $region64: #{_lambda_.23} parent=5 // pred_check_branch
        %352 = sbr.rel (%p349) target = $region66
      $region65: #{_lambda_.23} parent=5 // pred_region
        %s353 = ssub.s32 %s9, 1
        %s354 = sand.u32 %s71, 1
        %s355 = sand.u32 %s71, 1
        %s356 = smul.addr %s355, 256
        %s357 = scalar_lea.vmem [#allocation3], %s356
        // Predicated region
        $region67: #{_lambda_.23} parent=65 // pred_check
          %p358 = pneg %p84
        $region68: #{_lambda_.23} parent=65 // pred_check_branch
          %360 = sbr.rel (%p358) target = $region70
        $region69: #{_lambda_.23} parent=65 // pred_region
          _
        $region70: #{_lambda_.23} parent=65 // pred_fallthru
          _
        %s361 = smul.u32 2, %s21
        %p362 = scmp.lt.s32.totalorder %s19, 0
        %s363 = scalar_select %p362, %s19, 0
        %p364 = scmp.lt.s32.totalorder %s361, 1
        %s365 = scalar_select %p364, %s361, 1
        %s366 = smul.addr %s363, 2
        %s367 = sadd.s32 %s365, %s366
        %s368 = smul.addr %s367, 4
        %s369 = scalar_lea.vmem %s0, %s368
        %p370 = pneg %p56
        %p371 = pneg %p53
        %s372 = sand.u32 %s71, 1
        %s373 = sand.u32 %s71, 1
        %s374 = smul.addr %s373, 256
        %s375 = scalar_lea.vmem [#allocation3], %s374
        %p376 = pneg %p84
        %p377 = pneg %p81
        %s378 = smul.u32 2, %s20
        %p379 = scmp.lt.s32.totalorder %s378, 3
        %s380 = scalar_select %p379, %s378, 3
        %s381 = scalar_lea.vmem %s2, %s380
        %p382 = pneg %p110
        %p383 = pneg %p107
        %p384 = pneg %p138
        %p385 = pneg %p135
        %s386 = smul.u32 2, %s20
        %p387 = scmp.lt.s32.totalorder %s19, 0
        %s388 = scalar_select %p387, %s19, 0
        %p389 = scmp.lt.s32.totalorder %s386, 3
        %s390 = scalar_select %p389, %s386, 3
        %s391 = smul.addr %s388, 4
        %s392 = sadd.s32 %s390, %s391
        %s393 = smul.addr %s392, 4
        %s394 = scalar_lea.vmem %s3, %s393
        %s395 = smul.u32 2, %s21
        %p396 = scmp.lt.s32.totalorder %s19, 0
        %s397 = scalar_select %p396, %s19, 0
        %p398 = scmp.lt.s32.totalorder %s395, 1
        %s399 = scalar_select %p398, %s395, 1
        %s400 = smul.addr %s397, 2
        %s401 = sadd.s32 %s399, %s400
        %s402 = smul.addr %s401, 4
        %s403 = scalar_lea.vmem %s0, %s402
        %s404 = smul.u32 2, %s21
        %s405 = smul.u32 32, %s21
        %s406 = smul.u32 2, %s20
        %s407 = smul.u32 2, %s20
        %p408 = scmp.lt.s32.totalorder %s407, 3
        %s409 = scalar_select %p408, %s407, 3
        %s410 = scalar_lea.vmem %s2, %s409
        %s411 = smul.u32 2, %s20
        %s412 = smul.u32 2, %s20
        %p413 = scmp.lt.s32.totalorder %s19, 0
        %s414 = scalar_select %p413, %s19, 0
        %p415 = scmp.lt.s32.totalorder %s412, 3
        %s416 = scalar_select %p415, %s412, 3
        %s417 = smul.addr %s414, 4
        %s418 = sadd.s32 %s416, %s417
        %s419 = smul.addr %s418, 4
        %s420 = scalar_lea.vmem %s3, %s419
        %s421 = smul.u32 2, %s20
        %p422 = scmp.eq.s32.totalorder %s21, 0
        // Predicated region
        $region71: #{_lambda_.23} parent=65 // pred_check
          %p423 = pneg %p422
        $region72: #{_lambda_.23} parent=65 // pred_check_branch
          %425 = sbr.rel (%p423) target = $region74
        $region73: #{_lambda_.23} parent=65 // pred_region
          %426 = vst [vmem:[#allocation2] sm:$0xff] 0.0
          %427 = vst [vmem:[#allocation2 + $0x8] sm:$0xff] 0.0
        $region74: #{_lambda_.23} parent=65 // pred_fallthru
          _
        %v428 = vld [vmem:[#allocation2] sm:$0xff]
        %v429 = vld [vmem:[#allocation2 + $0x8] sm:$0xff]
        %v430 = vld [vmem:[%s403] sm:$0xff]
        %v431 = vld [vmem:[%s357] sm:$0xff]
        %v432 = vld [vmem:[%s357 + $0x8] sm:$0xff]
        %v433 = vld [vmem:[%s357 + $0x10] sm:$0xff]
        %v434 = vld [vmem:[%s357 + $0x18] sm:$0xff]
        %v435 = vld [vmem:[%s357 + $0x20] sm:$0xff]
        %v436 = vld [vmem:[%s357 + $0x28] sm:$0xff]
        %v437 = vld [vmem:[%s357 + $0x30] sm:$0xff]
        %v438 = vld [vmem:[%s357 + $0x38] sm:$0xff]
        %v439 = vld [vmem:[%s357 + $0x40] sm:$0xff]
        %v440 = vld [vmem:[%s357 + $0x48] sm:$0xff]
        %v441 = vld [vmem:[%s357 + $0x50] sm:$0xff]
        %v442 = vld [vmem:[%s357 + $0x58] sm:$0xff]
        %v443 = vld [vmem:[%s357 + $0x60] sm:$0xff]
        %v444 = vld [vmem:[%s357 + $0x68] sm:$0xff]
        %v445 = vld [vmem:[%s357 + $0x70] sm:$0xff]
        %v446 = vld [vmem:[%s357 + $0x78] sm:$0xff]
        %v447 = vld [vmem:[%s357 + $0x80] sm:$0xff]
        %v448 = vld [vmem:[%s357 + $0x88] sm:$0xff]
        %v449 = vld [vmem:[%s357 + $0x90] sm:$0xff]
        %v450 = vld [vmem:[%s357 + $0x98] sm:$0xff]
        %v451 = vld [vmem:[%s357 + $0xa0] sm:$0xff]
        %v452 = vld [vmem:[%s357 + $0xa8] sm:$0xff]
        %v453 = vld [vmem:[%s357 + $0xb0] sm:$0xff]
        %v454 = vld [vmem:[%s357 + $0xb8] sm:$0xff]
        %v455 = vld [vmem:[%s357 + $0xc0] sm:$0xff]
        %v456 = vld [vmem:[%s357 + $0xc8] sm:$0xff]
        %v457 = vld [vmem:[%s357 + $0xd0] sm:$0xff]
        %v458 = vld [vmem:[%s357 + $0xd8] sm:$0xff]
        %v459 = vld [vmem:[%s357 + $0xe0] sm:$0xff]
        %v460 = vld [vmem:[%s357 + $0xe8] sm:$0xff]
        %v461 = vld [vmem:[%s357 + $0xf0] sm:$0xff]
        %v462 = vld [vmem:[%s357 + $0xf8] sm:$0xff]
        %v464 = vunpack.c.l.b16 %v430
        %v465 = vunpack.c.h.b16 %v430
        %v466 = vpack.c.b16 %v464, %v464
        %v467 = vpack.c.b16 %v465, %v465
        %v502 = vunpack.c.l.b16 %v431
        %v503 = vunpack.c.h.b16 %v431
        %v504 = vunpack.c.l.b16 %v432
        %v505 = vunpack.c.h.b16 %v432
        %v506 = vunpack.c.l.b16 %v433
        %v507 = vunpack.c.h.b16 %v433
        %v508 = vunpack.c.l.b16 %v434
        %v509 = vunpack.c.h.b16 %v434
        %v510 = vunpack.c.l.b16 %v435
        %v511 = vunpack.c.h.b16 %v435
        %v512 = vunpack.c.l.b16 %v436
        %v513 = vunpack.c.h.b16 %v436
        %v514 = vunpack.c.l.b16 %v437
        %v515 = vunpack.c.h.b16 %v437
        %v516 = vunpack.c.l.b16 %v438
        %v517 = vunpack.c.h.b16 %v438
        %v518 = vunpack.c.l.b16 %v439
        %v519 = vunpack.c.h.b16 %v439
        %v520 = vunpack.c.l.b16 %v440
        %v521 = vunpack.c.h.b16 %v440
        %v522 = vunpack.c.l.b16 %v441
        %v523 = vunpack.c.h.b16 %v441
        %v524 = vunpack.c.l.b16 %v442
        %v525 = vunpack.c.h.b16 %v442
        %v526 = vunpack.c.l.b16 %v443
        %v527 = vunpack.c.h.b16 %v443
        %v528 = vunpack.c.l.b16 %v444
        %v529 = vunpack.c.h.b16 %v444
        %v530 = vunpack.c.l.b16 %v445
        %v531 = vunpack.c.h.b16 %v445
        %v532 = vunpack.c.l.b16 %v446
        %v533 = vunpack.c.h.b16 %v446
        %v534 = vunpack.c.l.b16 %v447
        %v535 = vunpack.c.h.b16 %v447
        %v536 = vunpack.c.l.b16 %v448
        %v537 = vunpack.c.h.b16 %v448
        %v538 = vunpack.c.l.b16 %v449
        %v539 = vunpack.c.h.b16 %v449
        %v540 = vunpack.c.l.b16 %v450
        %v541 = vunpack.c.h.b16 %v450
        %v542 = vunpack.c.l.b16 %v451
        %v543 = vunpack.c.h.b16 %v451
        %v544 = vunpack.c.l.b16 %v452
        %v545 = vunpack.c.h.b16 %v452
        %v546 = vunpack.c.l.b16 %v453
        %v547 = vunpack.c.h.b16 %v453
        %v548 = vunpack.c.l.b16 %v454
        %v549 = vunpack.c.h.b16 %v454
        %v550 = vunpack.c.l.b16 %v455
        %v551 = vunpack.c.h.b16 %v455
        %v552 = vunpack.c.l.b16 %v456
        %v553 = vunpack.c.h.b16 %v456
        %v554 = vunpack.c.l.b16 %v457
        %v555 = vunpack.c.h.b16 %v457
        %v556 = vunpack.c.l.b16 %v458
        %v557 = vunpack.c.h.b16 %v458
        %v558 = vunpack.c.l.b16 %v459
        %v559 = vunpack.c.h.b16 %v459
        %v560 = vunpack.c.l.b16 %v460
        %v561 = vunpack.c.h.b16 %v460
        %v562 = vunpack.c.l.b16 %v461
        %v563 = vunpack.c.h.b16 %v461
        %v564 = vunpack.c.l.b16 %v462
        %v565 = vunpack.c.h.b16 %v462
        %v566 = vpack.c.b16 %v504, %v502
        %v567 = vpack.c.b16 %v505, %v503
        %v568 = vpack.c.b16 %v508, %v506
        %v569 = vpack.c.b16 %v509, %v507
        %v570 = vpack.c.b16 %v512, %v510
        %v571 = vpack.c.b16 %v513, %v511
        %v572 = vpack.c.b16 %v516, %v514
        %v573 = vpack.c.b16 %v517, %v515
        %v574 = vpack.c.b16 %v520, %v518
        %v575 = vpack.c.b16 %v521, %v519
        %v576 = vpack.c.b16 %v524, %v522
        %v577 = vpack.c.b16 %v525, %v523
        %v578 = vpack.c.b16 %v528, %v526
        %v579 = vpack.c.b16 %v529, %v527
        %v580 = vpack.c.b16 %v532, %v530
        %v581 = vpack.c.b16 %v533, %v531
        %v582 = vpack.c.b16 %v536, %v534
        %v583 = vpack.c.b16 %v537, %v535
        %v584 = vpack.c.b16 %v540, %v538
        %v585 = vpack.c.b16 %v541, %v539
        %v586 = vpack.c.b16 %v544, %v542
        %v587 = vpack.c.b16 %v545, %v543
        %v588 = vpack.c.b16 %v548, %v546
        %v589 = vpack.c.b16 %v549, %v547
        %v590 = vpack.c.b16 %v552, %v550
        %v591 = vpack.c.b16 %v553, %v551
        %v592 = vpack.c.b16 %v556, %v554
        %v593 = vpack.c.b16 %v557, %v555
        %v594 = vpack.c.b16 %v560, %v558
        %v595 = vpack.c.b16 %v561, %v559
        %v596 = vpack.c.b16 %v564, %v562
        %v597 = vpack.c.b16 %v565, %v563
        %630 = vmatprep.subr.bf16.mxu0 %v567
        %631 = vmatpush1.bf16.msra.mxu0 %v566
        %632 = vmatprep.subr.bf16.mxu0 %v569
        %633 = vmatpush1.bf16.msra.mxu0 %v568
        %634 = vmatprep.subr.bf16.mxu0 %v571
        %635 = vmatpush1.bf16.msra.mxu0 %v570
        %636 = vmatprep.subr.bf16.mxu0 %v573
        %637 = vmatpush1.bf16.msra.mxu0 %v572
        %638 = vmatprep.subr.bf16.mxu0 %v575
        %639 = vmatpush1.bf16.msra.mxu0 %v574
        %640 = vmatprep.subr.bf16.mxu0 %v577
        %641 = vmatpush1.bf16.msra.mxu0 %v576
        %642 = vmatprep.subr.bf16.mxu0 %v579
        %643 = vmatpush1.bf16.msra.mxu0 %v578
        %644 = vmatprep.subr.bf16.mxu0 %v581
        %645 = vmatpush1.bf16.msra.mxu0 %v580
        %646 = vmatprep.subr.bf16.mxu0 %v583
        %647 = vmatpush1.bf16.msra.mxu0 %v582
        %648 = vmatprep.subr.bf16.mxu0 %v585
        %649 = vmatpush1.bf16.msra.mxu0 %v584
        %650 = vmatprep.subr.bf16.mxu0 %v587
        %651 = vmatpush1.bf16.msra.mxu0 %v586
        %652 = vmatprep.subr.bf16.mxu0 %v589
        %653 = vmatpush1.bf16.msra.mxu0 %v588
        %654 = vmatprep.subr.bf16.mxu0 %v591
        %655 = vmatpush1.bf16.msra.mxu0 %v590
        %656 = vmatprep.subr.bf16.mxu0 %v593
        %657 = vmatpush1.bf16.msra.mxu0 %v592
        %658 = vmatprep.subr.bf16.mxu0 %v595
        %659 = vmatpush1.bf16.msra.mxu0 %v594
        %660 = vmatprep.subr.bf16.mxu0 %v597
        %661 = vmatpush1.bf16.msra.mxu0 %v596
        %662 = vmatprep.mubr.bf16.mxu0 %v467
        %663 = vmatmul.mubr.bf16.gmra.mrb[0].mxu0 %v466
        %v664 = vpop.f32.mrb[0].mxu0
        %v665 = vadd.f32 0.0, %v664
        %v666 = vpop.f32.mrb[0].mxu0
        %v667 = vadd.f32 0.0, %v666
        %v668 = vpop.f32.mrb[0].mxu0
        %v669 = vpop.f32.mrb[0].mxu0
        %670 = vdwg.mxu0
        %v671 = vadd.f32 %v428, %v665
        %v672 = vadd.f32 %v429, %v667
        %673 = vst [vmem:[#allocation2] sm:$0xff] %v671
        %674 = vst [vmem:[#allocation2 + $0x8] sm:$0xff] %v672
        // Predicated region
        $region75: #{_lambda_.23} parent=65 // pred_check
          %p675 = pneg %p422
        $region76: #{_lambda_.23} parent=65 // pred_check_branch
          %677 = sbr.rel (%p675) target = $region78
        $region77: #{_lambda_.23} parent=65 // pred_region
          %v678 = vld [vmem:[#allocation2] sm:$0xff]
          %v679 = vld [vmem:[#allocation2 + $0x8] sm:$0xff]
          %v680 = vld [vmem:[%s410] sm:$0x3]
          %v682 = vlaneseq
          %v683 = vshrl.u32 %v682, 7
          %v684 = vsub.s32 0, %v683
          %v685 = vrot.slane %v680, %v684
          %v686 = vlaneseq
          %v687 = vshrl.u32 %v686, 7
          %v688 = vsub.s32 1, %v687
          %v689 = vrot.slane %v680, %v688
          %v692 = vadd.f32 %v678, %v685
          %v693 = vadd.f32 %v679, %v689
          %v694 = vpack.c.bf16 %v692, %v692
          %v695 = vpack.c.bf16 %v693, %v693
          %v698 = vunpack.c.l.b16 %v694
          %v699 = vunpack.c.l.b16 %v695
          %v700 = vpack.c.b16 %v699, %v698
          %702 = vst [vmem:[%s420] sm:$0xff] %v700
        $region78: #{_lambda_.23} parent=65 // pred_fallthru
          _
        %s703 = smul.u32 2, %s20
        %p704 = scmp.lt.s32.totalorder %s19, 0
        %s705 = scalar_select %p704, %s19, 0
        %p706 = scmp.lt.s32.totalorder %s703, 3
        %s707 = scalar_select %p706, %s703, 3
        %s708 = smul.addr %s705, 4
        %s709 = sadd.s32 %s707, %s708
        %s710 = smul.addr %s709, 4
        %s711 = scalar_lea.vmem %s3, %s710
        // Predicated region
        $region79: #{_lambda_.23} parent=65 // pred_check
          %p712 = pneg %p135
        $region80: #{_lambda_.23} parent=65 // pred_check_branch
          %714 = sbr.rel (%p712) target = $region82
        $region81: #{_lambda_.23} parent=65 // pred_region
          %s715 = smul.u32 2, %s20
        $region82: #{_lambda_.23} parent=65 // pred_fallthru
          _
      $region66: #{_lambda_.23} parent=5 // pred_fallthru
        _
      %p716 = scmp.le.s32.totalorder 2, %s9
      // Predicated region
      $region83: #{_lambda_.23} parent=5 // pred_check
        %p717 = pneg %p716
      $region84: #{_lambda_.23} parent=5 // pred_check_branch
        %719 = sbr.rel (%p717) target = $region86
      $region85: #{_lambda_.23} parent=5 // pred_region
        %s720 = ssub.s32 %s9, 2
        // Predicated region
        $region87: #{_lambda_.23} parent=85 // pred_check
          %p721 = pneg %p141
        $region88: #{_lambda_.23} parent=85 // pred_check_branch
          %723 = sbr.rel (%p721) target = $region90
        $region89: #{_lambda_.23} parent=85 // pred_region
          %s724 = smul.u32 2, %s23
          %p725 = scmp.lt.s32.totalorder %s22, 0
          %s726 = scalar_select %p725, %s22, 0
          %p727 = scmp.lt.s32.totalorder %s724, 3
          %s728 = scalar_select %p727, %s724, 3
          %s729 = smul.addr %s726, 4
          %s730 = sadd.s32 %s728, %s729
          %s731 = smul.addr %s730, 4
          %s732 = scalar_lea.vmem %s3, %s731
        $region90: #{_lambda_.23} parent=85 // pred_fallthru
          _
      $region86: #{_lambda_.23} parent=5 // pred_fallthru
        _
    $region6: #{_lambda_.23} parent=1 // loop_footer
      %s13 = sadd.s32 1, %s9
    $region7: #{_lambda_.23} parent=1 // loop_footer_branch
      %8 = sbr.rel target = $region3
    $region8: #{_lambda_.23} parent=1 // loop_exit
      _

// kernel: _lambda_.25
$region0: #{_lambda_.25}
  #allocation0 [shape = 'u32[]', space=smem, size = 0x4, offset = 0x4, fixed_abs, tag = 'smem constant byte address 0x4 - core index']
  #allocation1 [shape = 'u32[144,128]{1,0:T(1,128)}', space=vmem, size = 0x12000, scoped, tag = 'internal scratch']
  #allocation2 [shape = 'f32[8,256]{1,0:T(8,128)}', space=vmem, size = 0x2000, scoped, tag = 'scratch operand']
  %s0 = inlined_call_operand.vmem [shape: bf16[8,4608], index: 0, kind: input, shape index: {}]
  %s1 = inlined_call_operand.vmem [shape: bf16[4608,512], index: 1, kind: input, shape index: {}]
  %s2 = inlined_call_operand.vmem [shape: f32[1,512], index: 2, kind: input, shape index: {}]
  %s3 = inlined_call_operand.vmem [shape: bf16[8,512], index: 3, kind: input, shape index: {}]
  %s4 = inlined_call_operand.vmem [shape: bf16[8,512], index: 4, kind: output, shape index: {}]
  %s5 = sld [smem:[#allocation0]]
  $region95: #{_lambda_.25} parent=0
    _
  %s7 = ssub.s32 1, %s5
  %s8 = scalar_select 0, %s7, %s5
  $region1: #{_lambda_.25} parent=0
    #allocation3 [shape = 'u8[524288]{0}', space=vmem, size = 0x80000, scoped, tag = 'input window, operand 1']
    loop: start=0, step=1, limit=20
    $region2: #{_lambda_.25} parent=1 // loop_pre_header
      _
    $region3: #{_lambda_.25} parent=1 // loop_header
      %s10 = sphi 0, %s14
      %p11 = scmp.ge.s32.totalorder %s10, 20
      %s17 = sphi 0, %s36
      %s18 = sphi 0, %s32
      %s19 = sphi 0, %s28
      %s20 = sphi 0, %s17
      %s21 = sphi 0, %s18
      %s22 = sphi 0, %s19
      %s23 = sphi 0, %s20
      %s24 = sphi 0, %s21
      %s25 = sphi 0, %s22
      %s41 = sphi 0, %s43
      %s44 = sphi 0, %s41
      %s45 = sphi 0, %s44
      %s61 = sphi 0, %s45
      %s69 = sphi 0, %s71
      %s72 = sphi 0, %s69
      %s73 = sphi 0, %s72
      %s89 = sphi 0, %s73
      %s95 = sphi 0, %s97
      %s98 = sphi 0, %s95
      %s99 = sphi 0, %s98
      %s115 = sphi 0, %s99
      %s123 = sphi 0, %s125
      %s126 = sphi 0, %s123
      %s127 = sphi 0, %s126
      %s143 = sphi 0, %s127
      %s151 = sphi 0, %s153
      %s154 = sphi 0, %s151
      %s155 = sphi 0, %s154
      %s171 = sphi 0, %s155
    $region4: #{_lambda_.25} parent=1 // loop_header_branch
      %13 = sbr.rel (%p11) target = $region8
    $region5: #{_lambda_.25} parent=1 // loop_body
      %s15 = ssub.s32 %s10, 1
      %s16 = ssub.s32 %s10, 2
      %s26 = sadd.s32 1, %s19
      %p27 = scmp.ge.s32.totalorder %s26, 9
      %s28 = scalar_select %p27, 0, %s26
      %s29 = sadd.s32 1, %s18
      %s30 = scalar_select %p27, %s29, %s18
      %p31 = scmp.ge.s32.totalorder %s30, 2
      %s32 = scalar_select %p31, 0, %s30
      %s33 = sadd.s32 1, %s17
      %s34 = scalar_select %p31, %s33, %s17
      %p35 = scmp.ge.s32.totalorder %s34, 1
      %s36 = scalar_select %p35, 0, %s34
      %s37 = ssub.s32 %s17, %s36
      %s38 = ssub.s32 %s19, %s28
      %s39 = sor.u32 %s37, %s38
      %p40 = scmp.eq.s32.totalorder %s39, 0
      %s42 = sadd.s32 %s41, 1
      %s43 = scalar_select %p40, %s41, %s42
      %p46 = pneg %p40
      %p47 = scmp.eq.s32.totalorder %s10, 17
      %p48 = por %p46, %p47
      %p49 = scmp.ne.s32.totalorder %s41, %s44
      %p50 = scmp.eq.s32.totalorder %s10, 0
      %p51 = por %p49, %p50
      %p52 = scmp.ne.s32.totalorder %s41, %s44
      %p53 = scmp.eq.s32.totalorder %s15, 17
      %p54 = por %p52, %p53
      %p55 = scmp.ne.s32.totalorder %s44, %s45
      %p56 = scmp.eq.s32.totalorder %s15, 0
      %p57 = por %p55, %p56
      %p58 = scmp.ne.s32.totalorder %s44, %s45
      %p59 = scmp.eq.s32.totalorder %s16, 17
      %p60 = por %p58, %p59
      %p62 = scmp.ne.s32.totalorder %s45, %s61
      %p63 = scmp.eq.s32.totalorder %s16, 0
      %p64 = por %p62, %p63
      %s65 = ssub.s32 %s19, %s28
      %s66 = ssub.s32 %s18, %s32
      %s67 = sor.u32 %s65, %s66
      %p68 = scmp.eq.s32.totalorder %s67, 0
      %s70 = sadd.s32 %s69, 1
      %s71 = scalar_select %p68, %s69, %s70
      %p74 = pneg %p68
      %p75 = scmp.eq.s32.totalorder %s10, 17
      %p76 = por %p74, %p75
      %p77 = scmp.ne.s32.totalorder %s69, %s72
      %p78 = scmp.eq.s32.totalorder %s10, 0
      %p79 = por %p77, %p78
      %p80 = scmp.ne.s32.totalorder %s69, %s72
      %p81 = scmp.eq.s32.totalorder %s15, 17
      %p82 = por %p80, %p81
      %p83 = scmp.ne.s32.totalorder %s72, %s73
      %p84 = scmp.eq.s32.totalorder %s15, 0
      %p85 = por %p83, %p84
      %p86 = scmp.ne.s32.totalorder %s72, %s73
      %p87 = scmp.eq.s32.totalorder %s16, 17
      %p88 = por %p86, %p87
      %p90 = scmp.ne.s32.totalorder %s73, %s89
      %p91 = scmp.eq.s32.totalorder %s16, 0
      %p92 = por %p90, %p91
      %s93 = ssub.s32 %s18, %s32
      %p94 = scmp.eq.s32.totalorder %s93, 0
      %s96 = sadd.s32 %s95, 1
      %s97 = scalar_select %p94, %s95, %s96
      %p100 = pneg %p94
      %p101 = scmp.eq.s32.totalorder %s10, 17
      %p102 = por %p100, %p101
      %p103 = scmp.ne.s32.totalorder %s95, %s98
      %p104 = scmp.eq.s32.totalorder %s10, 0
      %p105 = por %p103, %p104
      %p106 = scmp.ne.s32.totalorder %s95, %s98
      %p107 = scmp.eq.s32.totalorder %s15, 17
      %p108 = por %p106, %p107
      %p109 = scmp.ne.s32.totalorder %s98, %s99
      %p110 = scmp.eq.s32.totalorder %s15, 0
      %p111 = por %p109, %p110
      %p112 = scmp.ne.s32.totalorder %s98, %s99
      %p113 = scmp.eq.s32.totalorder %s16, 17
      %p114 = por %p112, %p113
      %p116 = scmp.ne.s32.totalorder %s99, %s115
      %p117 = scmp.eq.s32.totalorder %s16, 0
      %p118 = por %p116, %p117
      %s119 = ssub.s32 %s17, %s36
      %s120 = ssub.s32 %s18, %s32
      %s121 = sor.u32 %s119, %s120
      %p122 = scmp.eq.s32.totalorder %s121, 0
      %s124 = sadd.s32 %s123, 1
      %s125 = scalar_select %p122, %s123, %s124
      %p128 = pneg %p122
      %p129 = scmp.eq.s32.totalorder %s10, 17
      %p130 = por %p128, %p129
      %p131 = scmp.ne.s32.totalorder %s123, %s126
      %p132 = scmp.eq.s32.totalorder %s10, 0
      %p133 = por %p131, %p132
      %p134 = scmp.ne.s32.totalorder %s123, %s126
      %p135 = scmp.eq.s32.totalorder %s15, 17
      %p136 = por %p134, %p135
      %p137 = scmp.ne.s32.totalorder %s126, %s127
      %p138 = scmp.eq.s32.totalorder %s15, 0
      %p139 = por %p137, %p138
      %p140 = scmp.ne.s32.totalorder %s126, %s127
      %p141 = scmp.eq.s32.totalorder %s16, 17
      %p142 = por %p140, %p141
      %p144 = scmp.ne.s32.totalorder %s127, %s143
      %p145 = scmp.eq.s32.totalorder %s16, 0
      %p146 = por %p144, %p145
      %s147 = ssub.s32 %s17, %s36
      %s148 = ssub.s32 %s18, %s32
      %s149 = sor.u32 %s147, %s148
      %p150 = scmp.eq.s32.totalorder %s149, 0
      %s152 = sadd.s32 %s151, 1
      %s153 = scalar_select %p150, %s151, %s152
      %p156 = pneg %p150
      %p157 = scmp.eq.s32.totalorder %s10, 17
      %p158 = por %p156, %p157
      %p159 = scmp.ne.s32.totalorder %s151, %s154
      %p160 = scmp.eq.s32.totalorder %s10, 0
      %p161 = por %p159, %p160
      %p162 = scmp.ne.s32.totalorder %s151, %s154
      %p163 = scmp.eq.s32.totalorder %s15, 17
      %p164 = por %p162, %p163
      %p165 = scmp.ne.s32.totalorder %s154, %s155
      %p166 = scmp.eq.s32.totalorder %s15, 0
      %p167 = por %p165, %p166
      %p168 = scmp.ne.s32.totalorder %s154, %s155
      %p169 = scmp.eq.s32.totalorder %s16, 17
      %p170 = por %p168, %p169
      %p172 = scmp.ne.s32.totalorder %s155, %s171
      %p173 = scmp.eq.s32.totalorder %s16, 0
      %p174 = por %p172, %p173
      %p175 = scmp.le.s32.totalorder 1, %s10
      %p176 = scmp.lt.s32.totalorder %s10, 19
      %p177 = pnand %p175, %p176
      %p178 = pneg %p177
      // Predicated region
      $region9: #{_lambda_.25} parent=5 // pred_check
        _
      $region10: #{_lambda_.25} parent=5 // pred_check_branch
        %180 = sbr.rel (%p177) target = $region12
      $region11: #{_lambda_.25} parent=5 // pred_region
        %s181 = ssub.s32 %s10, 1
      $region12: #{_lambda_.25} parent=5 // pred_fallthru
        _
      %p182 = scmp.lt.s32.totalorder %s10, 18
      // Predicated region
      $region13: #{_lambda_.25} parent=5 // pred_check
        %p183 = pneg %p182
      $region14: #{_lambda_.25} parent=5 // pred_check_branch
        %185 = sbr.rel (%p183) target = $region16
      $region15: #{_lambda_.25} parent=5 // pred_region
        // Predicated region
        $region17: #{_lambda_.25} parent=15 // pred_check
          %p186 = pneg %p51
        $region18: #{_lambda_.25} parent=15 // pred_check_branch
          %188 = sbr.rel (%p186) target = $region20
        $region19: #{_lambda_.25} parent=15 // pred_region
          %s189 = smul.u32 4, %s19
          %p190 = scmp.lt.s32.totalorder %s17, 0
          %s191 = scalar_select %p190, %s17, 0
          %p192 = scmp.lt.s32.totalorder %s189, 35
          %s193 = scalar_select %p192, %s189, 35
          %s194 = smul.addr %s191, 36
          %s195 = sadd.s32 %s193, %s194
          %s196 = smul.addr %s195, 4
          %s197 = scalar_lea.vmem %s0, %s196
          %s198 = smul.u32 4, %s19
        $region20: #{_lambda_.25} parent=15 // pred_fallthru
          _
        // Predicated region
        $region21: #{_lambda_.25} parent=15 // pred_check
          %p199 = pneg %p79
        $region22: #{_lambda_.25} parent=15 // pred_check_branch
          %201 = sbr.rel (%p199) target = $region24
        $region23: #{_lambda_.25} parent=15 // pred_region
          %s202 = sand.u32 %s69, 1
          %s203 = sand.u32 %s69, 1
          %s204 = smul.addr %s203, 512
          %s205 = scalar_lea.vmem [#allocation3], %s204
          %s206 = smul.u32 64, %s19
          %s207 = smul.u32 2, %s18
          %s208 = smul.addr %s206, 4
          %s209 = sadd.s32 %s207, %s208
          %s210 = smul.addr %s209, 4
          %s211 = scalar_lea.vmem %s1, %s210
          // Predicated region
          $region25: #{_lambda_.25} parent=23 // pred_check
            _
          $region26: #{_lambda_.25} parent=23 // pred_check_branch
            %213 = sbr.rel (0) target = $region28
          $region27: #{_lambda_.25} parent=23 // pred_region
            // Predicated region
            $region29: #{_lambda_.25} parent=27 // pred_check
              _
            $region30: #{_lambda_.25} parent=27 // pred_check_branch
              %215 = sbr.rel (0) target = $region32
            $region31: #{_lambda_.25} parent=27 // pred_region
              // Predicated region
              $region44: #{_lambda_.25} parent=31 // pred_check
                _
              $region45: #{_lambda_.25} parent=31 // pred_check_branch
                %356 = sbr.rel (0) target = $region47
              $region46: #{_lambda_.25} parent=31 // pred_region
                loop: start=0, step=1, limit=1
                $region48: #{_lambda_.25} parent=46 // loop_pre_header
                  _
                $region49: #{_lambda_.25} parent=46 // loop_header
                  %s358 = sphi 0, %s362
                  %p359 = scmp.ge.s32.totalorder %s358, 1
                  %s363 = sphi %s211, %s211
                  %s364 = sphi %s205, %s205
                $region50: #{_lambda_.25} parent=46 // loop_header_branch
                  %361 = sbr.rel (%p359) target = $region54
                $region51: #{_lambda_.25} parent=46 // loop_body
                  %v365 = vld [vmem:[%s363] sm:$0xff]
                  %366 = vst [vmem:[%s364] sm:$0xff] %v365
                  %v367 = vld [vmem:[%s363 + $0x10] sm:$0xff]
                  %368 = vst [vmem:[%s364 + $0x8] sm:$0xff] %v367
                  %v369 = vld [vmem:[%s363 + $0x20] sm:$0xff]
                  %370 = vst [vmem:[%s364 + $0x10] sm:$0xff] %v369
                  %v371 = vld [vmem:[%s363 + $0x30] sm:$0xff]
                  %372 = vst [vmem:[%s364 + $0x18] sm:$0xff] %v371
                  %v373 = vld [vmem:[%s363 + $0x40] sm:$0xff]
                  %374 = vst [vmem:[%s364 + $0x20] sm:$0xff] %v373
                  %v375 = vld [vmem:[%s363 + $0x50] sm:$0xff]
                  %376 = vst [vmem:[%s364 + $0x28] sm:$0xff] %v375
                  %v377 = vld [vmem:[%s363 + $0x60] sm:$0xff]
                  %378 = vst [vmem:[%s364 + $0x30] sm:$0xff] %v377
                  %v379 = vld [vmem:[%s363 + $0x70] sm:$0xff]
                  %380 = vst [vmem:[%s364 + $0x38] sm:$0xff] %v379
                  %v381 = vld [vmem:[%s363 + $0x80] sm:$0xff]
                  %382 = vst [vmem:[%s364 + $0x40] sm:$0xff] %v381
                  %v383 = vld [vmem:[%s363 + $0x90] sm:$0xff]
                  %384 = vst [vmem:[%s364 + $0x48] sm:$0xff] %v383
                  %v385 = vld [vmem:[%s363 + $0xa0] sm:$0xff]
                  %386 = vst [vmem:[%s364 + $0x50] sm:$0xff] %v385
                  %v387 = vld [vmem:[%s363 + $0xb0] sm:$0xff]
                  %388 = vst [vmem:[%s364 + $0x58] sm:$0xff] %v387
                  %v389 = vld [vmem:[%s363 + $0xc0] sm:$0xff]
                  %390 = vst [vmem:[%s364 + $0x60] sm:$0xff] %v389
                  %v391 = vld [vmem:[%s363 + $0xd0] sm:$0xff]
                  %392 = vst [vmem:[%s364 + $0x68] sm:$0xff] %v391
                  %v393 = vld [vmem:[%s363 + $0xe0] sm:$0xff]
                  %394 = vst [vmem:[%s364 + $0x70] sm:$0xff] %v393
                  %v395 = vld [vmem:[%s363 + $0xf0] sm:$0xff]
                  %396 = vst [vmem:[%s364 + $0x78] sm:$0xff] %v395
                  %v397 = vld [vmem:[%s363 + $0x100] sm:$0xff]
                  %398 = vst [vmem:[%s364 + $0x80] sm:$0xff] %v397
                  %v399 = vld [vmem:[%s363 + $0x110] sm:$0xff]
                  %400 = vst [vmem:[%s364 + $0x88] sm:$0xff] %v399
                  %v401 = vld [vmem:[%s363 + $0x120] sm:$0xff]
                  %402 = vst [vmem:[%s364 + $0x90] sm:$0xff] %v401
                  %v403 = vld [vmem:[%s363 + $0x130] sm:$0xff]
                  %404 = vst [vmem:[%s364 + $0x98] sm:$0xff] %v403
                  %v405 = vld [vmem:[%s363 + $0x140] sm:$0xff]
                  %406 = vst [vmem:[%s364 + $0xa0] sm:$0xff] %v405
                  %v407 = vld [vmem:[%s363 + $0x150] sm:$0xff]
                  %408 = vst [vmem:[%s364 + $0xa8] sm:$0xff] %v407
                  %v409 = vld [vmem:[%s363 + $0x160] sm:$0xff]
                  %410 = vst [vmem:[%s364 + $0xb0] sm:$0xff] %v409
                  %v411 = vld [vmem:[%s363 + $0x170] sm:$0xff]
                  %412 = vst [vmem:[%s364 + $0xb8] sm:$0xff] %v411
                  %v413 = vld [vmem:[%s363 + $0x180] sm:$0xff]
                  %414 = vst [vmem:[%s364 + $0xc0] sm:$0xff] %v413
                  %v415 = vld [vmem:[%s363 + $0x190] sm:$0xff]
                  %416 = vst [vmem:[%s364 + $0xc8] sm:$0xff] %v415
                  %v417 = vld [vmem:[%s363 + $0x1a0] sm:$0xff]
                  %418 = vst [vmem:[%s364 + $0xd0] sm:$0xff] %v417
                  %v419 = vld [vmem:[%s363 + $0x1b0] sm:$0xff]
                  %420 = vst [vmem:[%s364 + $0xd8] sm:$0xff] %v419
                  %v421 = vld [vmem:[%s363 + $0x1c0] sm:$0xff]
                  %422 = vst [vmem:[%s364 + $0xe0] sm:$0xff] %v421
                  %v423 = vld [vmem:[%s363 + $0x1d0] sm:$0xff]
                  %424 = vst [vmem:[%s364 + $0xe8] sm:$0xff] %v423
                  %v425 = vld [vmem:[%s363 + $0x1e0] sm:$0xff]
                  %426 = vst [vmem:[%s364 + $0xf0] sm:$0xff] %v425
                  %v427 = vld [vmem:[%s363 + $0x1f0] sm:$0xff]
                  %428 = vst [vmem:[%s364 + $0xf8] sm:$0xff] %v427
                  %v429 = vld [vmem:[%s363 + $0x200] sm:$0xff]
                  %430 = vst [vmem:[%s364 + $0x100] sm:$0xff] %v429
                  %v431 = vld [vmem:[%s363 + $0x210] sm:$0xff]
                  %432 = vst [vmem:[%s364 + $0x108] sm:$0xff] %v431
                  %v433 = vld [vmem:[%s363 + $0x220] sm:$0xff]
                  %434 = vst [vmem:[%s364 + $0x110] sm:$0xff] %v433
                  %v435 = vld [vmem:[%s363 + $0x230] sm:$0xff]
                  %436 = vst [vmem:[%s364 + $0x118] sm:$0xff] %v435
                  %v437 = vld [vmem:[%s363 + $0x240] sm:$0xff]
                  %438 = vst [vmem:[%s364 + $0x120] sm:$0xff] %v437
                  %v439 = vld [vmem:[%s363 + $0x250] sm:$0xff]
                  %440 = vst [vmem:[%s364 + $0x128] sm:$0xff] %v439
                  %v441 = vld [vmem:[%s363 + $0x260] sm:$0xff]
                  %442 = vst [vmem:[%s364 + $0x130] sm:$0xff] %v441
                  %v443 = vld [vmem:[%s363 + $0x270] sm:$0xff]
                  %444 = vst [vmem:[%s364 + $0x138] sm:$0xff] %v443
                  %v445 = vld [vmem:[%s363 + $0x280] sm:$0xff]
                  %446 = vst [vmem:[%s364 + $0x140] sm:$0xff] %v445
                  %v447 = vld [vmem:[%s363 + $0x290] sm:$0xff]
                  %448 = vst [vmem:[%s364 + $0x148] sm:$0xff] %v447
                  %v449 = vld [vmem:[%s363 + $0x2a0] sm:$0xff]
                  %450 = vst [vmem:[%s364 + $0x150] sm:$0xff] %v449
                  %v451 = vld [vmem:[%s363 + $0x2b0] sm:$0xff]
                  %452 = vst [vmem:[%s364 + $0x158] sm:$0xff] %v451
                  %v453 = vld [vmem:[%s363 + $0x2c0] sm:$0xff]
                  %454 = vst [vmem:[%s364 + $0x160] sm:$0xff] %v453
                  %v455 = vld [vmem:[%s363 + $0x2d0] sm:$0xff]
                  %456 = vst [vmem:[%s364 + $0x168] sm:$0xff] %v455
                  %v457 = vld [vmem:[%s363 + $0x2e0] sm:$0xff]
                  %458 = vst [vmem:[%s364 + $0x170] sm:$0xff] %v457
                  %v459 = vld [vmem:[%s363 + $0x2f0] sm:$0xff]
                  %460 = vst [vmem:[%s364 + $0x178] sm:$0xff] %v459
                  %v461 = vld [vmem:[%s363 + $0x300] sm:$0xff]
                  %462 = vst [vmem:[%s364 + $0x180] sm:$0xff] %v461
                  %v463 = vld [vmem:[%s363 + $0x310] sm:$0xff]
                  %464 = vst [vmem:[%s364 + $0x188] sm:$0xff] %v463
                  %v465 = vld [vmem:[%s363 + $0x320] sm:$0xff]
                  %466 = vst [vmem:[%s364 + $0x190] sm:$0xff] %v465
                  %v467 = vld [vmem:[%s363 + $0x330] sm:$0xff]
                  %468 = vst [vmem:[%s364 + $0x198] sm:$0xff] %v467
                  %v469 = vld [vmem:[%s363 + $0x340] sm:$0xff]
                  %470 = vst [vmem:[%s364 + $0x1a0] sm:$0xff] %v469
                  %v471 = vld [vmem:[%s363 + $0x350] sm:$0xff]
                  %472 = vst [vmem:[%s364 + $0x1a8] sm:$0xff] %v471
                  %v473 = vld [vmem:[%s363 + $0x360] sm:$0xff]
                  %474 = vst [vmem:[%s364 + $0x1b0] sm:$0xff] %v473
                  %v475 = vld [vmem:[%s363 + $0x370] sm:$0xff]
                  %476 = vst [vmem:[%s364 + $0x1b8] sm:$0xff] %v475
                  %v477 = vld [vmem:[%s363 + $0x380] sm:$0xff]
                  %478 = vst [vmem:[%s364 + $0x1c0] sm:$0xff] %v477
                  %v479 = vld [vmem:[%s363 + $0x390] sm:$0xff]
                  %480 = vst [vmem:[%s364 + $0x1c8] sm:$0xff] %v479
                  %v481 = vld [vmem:[%s363 + $0x3a0] sm:$0xff]
                  %482 = vst [vmem:[%s364 + $0x1d0] sm:$0xff] %v481
                  %v483 = vld [vmem:[%s363 + $0x3b0] sm:$0xff]
                  %484 = vst [vmem:[%s364 + $0x1d8] sm:$0xff] %v483
                  %v485 = vld [vmem:[%s363 + $0x3c0] sm:$0xff]
                  %486 = vst [vmem:[%s364 + $0x1e0] sm:$0xff] %v485
                  %v487 = vld [vmem:[%s363 + $0x3d0] sm:$0xff]
                  %488 = vst [vmem:[%s364 + $0x1e8] sm:$0xff] %v487
                  %v489 = vld [vmem:[%s363 + $0x3e0] sm:$0xff]
                  %490 = vst [vmem:[%s364 + $0x1f0] sm:$0xff] %v489
                  %v491 = vld [vmem:[%s363 + $0x3f0] sm:$0xff]
                  %492 = vst [vmem:[%s364 + $0x1f8] sm:$0xff] %v491
                $region52: #{_lambda_.25} parent=46 // loop_footer
                  %s362 = sadd.s32 1, %s358
                $region53: #{_lambda_.25} parent=46 // loop_footer_branch
                  %357 = sbr.rel target = $region49
                $region54: #{_lambda_.25} parent=46 // loop_exit
                  _
              $region47: #{_lambda_.25} parent=31 // pred_fallthru
                _
              // Predicated region
              $region55: #{_lambda_.25} parent=31 // pred_check
                _
              $region56: #{_lambda_.25} parent=31 // pred_check_branch
                %494 = sbr.rel target = $region58
              $region57: #{_lambda_.25} parent=31 // pred_region
                _
              $region58: #{_lambda_.25} parent=31 // pred_fallthru
                _
            $region32: #{_lambda_.25} parent=27 // pred_fallthru
              _
            // Predicated region
            $region33: #{_lambda_.25} parent=27 // pred_check
              _
            $region34: #{_lambda_.25} parent=27 // pred_check_branch
              %217 = sbr.rel target = $region36
            $region35: #{_lambda_.25} parent=27 // pred_region
              loop: start=0, step=1, limit=1
              $region37: #{_lambda_.25} parent=35 // loop_pre_header
                _
              $region38: #{_lambda_.25} parent=35 // loop_header
                %s220 = sphi 0, %s224
                %p221 = scmp.ge.s32.totalorder %s220, 1
                %s225 = sphi %s211, %s211
                %s226 = sphi %s205, %s205
              $region39: #{_lambda_.25} parent=35 // loop_header_branch
                %223 = sbr.rel (%p221) target = $region43
              $region40: #{_lambda_.25} parent=35 // loop_body
                %v227 = vld [vmem:[%s225] sm:$0xff]
                %228 = vst [vmem:[%s226] sm:$0xff] %v227
                %v229 = vld [vmem:[%s225 + $0x10] sm:$0xff]
                %230 = vst [vmem:[%s226 + $0x8] sm:$0xff] %v229
                %v231 = vld [vmem:[%s225 + $0x20] sm:$0xff]
                %232 = vst [vmem:[%s226 + $0x10] sm:$0xff] %v231
                %v233 = vld [vmem:[%s225 + $0x30] sm:$0xff]
                %234 = vst [vmem:[%s226 + $0x18] sm:$0xff] %v233
                %v235 = vld [vmem:[%s225 + $0x40] sm:$0xff]
                %236 = vst [vmem:[%s226 + $0x20] sm:$0xff] %v235
                %v237 = vld [vmem:[%s225 + $0x50] sm:$0xff]
                %238 = vst [vmem:[%s226 + $0x28] sm:$0xff] %v237
                %v239 = vld [vmem:[%s225 + $0x60] sm:$0xff]
                %240 = vst [vmem:[%s226 + $0x30] sm:$0xff] %v239
                %v241 = vld [vmem:[%s225 + $0x70] sm:$0xff]
                %242 = vst [vmem:[%s226 + $0x38] sm:$0xff] %v241
                %v243 = vld [vmem:[%s225 + $0x80] sm:$0xff]
                %244 = vst [vmem:[%s226 + $0x40] sm:$0xff] %v243
                %v245 = vld [vmem:[%s225 + $0x90] sm:$0xff]
                %246 = vst [vmem:[%s226 + $0x48] sm:$0xff] %v245
                %v247 = vld [vmem:[%s225 + $0xa0] sm:$0xff]
                %248 = vst [vmem:[%s226 + $0x50] sm:$0xff] %v247
                %v249 = vld [vmem:[%s225 + $0xb0] sm:$0xff]
                %250 = vst [vmem:[%s226 + $0x58] sm:$0xff] %v249
                %v251 = vld [vmem:[%s225 + $0xc0] sm:$0xff]
                %252 = vst [vmem:[%s226 + $0x60] sm:$0xff] %v251
                %v253 = vld [vmem:[%s225 + $0xd0] sm:$0xff]
                %254 = vst [vmem:[%s226 + $0x68] sm:$0xff] %v253
                %v255 = vld [vmem:[%s225 + $0xe0] sm:$0xff]
                %256 = vst [vmem:[%s226 + $0x70] sm:$0xff] %v255
                %v257 = vld [vmem:[%s225 + $0xf0] sm:$0xff]
                %258 = vst [vmem:[%s226 + $0x78] sm:$0xff] %v257
                %v259 = vld [vmem:[%s225 + $0x100] sm:$0xff]
                %260 = vst [vmem:[%s226 + $0x80] sm:$0xff] %v259
                %v261 = vld [vmem:[%s225 + $0x110] sm:$0xff]
                %262 = vst [vmem:[%s226 + $0x88] sm:$0xff] %v261
                %v263 = vld [vmem:[%s225 + $0x120] sm:$0xff]
                %264 = vst [vmem:[%s226 + $0x90] sm:$0xff] %v263
                %v265 = vld [vmem:[%s225 + $0x130] sm:$0xff]
                %266 = vst [vmem:[%s226 + $0x98] sm:$0xff] %v265
                %v267 = vld [vmem:[%s225 + $0x140] sm:$0xff]
                %268 = vst [vmem:[%s226 + $0xa0] sm:$0xff] %v267
                %v269 = vld [vmem:[%s225 + $0x150] sm:$0xff]
                %270 = vst [vmem:[%s226 + $0xa8] sm:$0xff] %v269
                %v271 = vld [vmem:[%s225 + $0x160] sm:$0xff]
                %272 = vst [vmem:[%s226 + $0xb0] sm:$0xff] %v271
                %v273 = vld [vmem:[%s225 + $0x170] sm:$0xff]
                %274 = vst [vmem:[%s226 + $0xb8] sm:$0xff] %v273
                %v275 = vld [vmem:[%s225 + $0x180] sm:$0xff]
                %276 = vst [vmem:[%s226 + $0xc0] sm:$0xff] %v275
                %v277 = vld [vmem:[%s225 + $0x190] sm:$0xff]
                %278 = vst [vmem:[%s226 + $0xc8] sm:$0xff] %v277
                %v279 = vld [vmem:[%s225 + $0x1a0] sm:$0xff]
                %280 = vst [vmem:[%s226 + $0xd0] sm:$0xff] %v279
                %v281 = vld [vmem:[%s225 + $0x1b0] sm:$0xff]
                %282 = vst [vmem:[%s226 + $0xd8] sm:$0xff] %v281
                %v283 = vld [vmem:[%s225 + $0x1c0] sm:$0xff]
                %284 = vst [vmem:[%s226 + $0xe0] sm:$0xff] %v283
                %v285 = vld [vmem:[%s225 + $0x1d0] sm:$0xff]
                %286 = vst [vmem:[%s226 + $0xe8] sm:$0xff] %v285
                %v287 = vld [vmem:[%s225 + $0x1e0] sm:$0xff]
                %288 = vst [vmem:[%s226 + $0xf0] sm:$0xff] %v287
                %v289 = vld [vmem:[%s225 + $0x1f0] sm:$0xff]
                %290 = vst [vmem:[%s226 + $0xf8] sm:$0xff] %v289
                %v291 = vld [vmem:[%s225 + $0x200] sm:$0xff]
                %292 = vst [vmem:[%s226 + $0x100] sm:$0xff] %v291
                %v293 = vld [vmem:[%s225 + $0x210] sm:$0xff]
                %294 = vst [vmem:[%s226 + $0x108] sm:$0xff] %v293
                %v295 = vld [vmem:[%s225 + $0x220] sm:$0xff]
                %296 = vst [vmem:[%s226 + $0x110] sm:$0xff] %v295
                %v297 = vld [vmem:[%s225 + $0x230] sm:$0xff]
                %298 = vst [vmem:[%s226 + $0x118] sm:$0xff] %v297
                %v299 = vld [vmem:[%s225 + $0x240] sm:$0xff]
                %300 = vst [vmem:[%s226 + $0x120] sm:$0xff] %v299
                %v301 = vld [vmem:[%s225 + $0x250] sm:$0xff]
                %302 = vst [vmem:[%s226 + $0x128] sm:$0xff] %v301
                %v303 = vld [vmem:[%s225 + $0x260] sm:$0xff]
                %304 = vst [vmem:[%s226 + $0x130] sm:$0xff] %v303
                %v305 = vld [vmem:[%s225 + $0x270] sm:$0xff]
                %306 = vst [vmem:[%s226 + $0x138] sm:$0xff] %v305
                %v307 = vld [vmem:[%s225 + $0x280] sm:$0xff]
                %308 = vst [vmem:[%s226 + $0x140] sm:$0xff] %v307
                %v309 = vld [vmem:[%s225 + $0x290] sm:$0xff]
                %310 = vst [vmem:[%s226 + $0x148] sm:$0xff] %v309
                %v311 = vld [vmem:[%s225 + $0x2a0] sm:$0xff]
                %312 = vst [vmem:[%s226 + $0x150] sm:$0xff] %v311
                %v313 = vld [vmem:[%s225 + $0x2b0] sm:$0xff]
                %314 = vst [vmem:[%s226 + $0x158] sm:$0xff] %v313
                %v315 = vld [vmem:[%s225 + $0x2c0] sm:$0xff]
                %316 = vst [vmem:[%s226 + $0x160] sm:$0xff] %v315
                %v317 = vld [vmem:[%s225 + $0x2d0] sm:$0xff]
                %318 = vst [vmem:[%s226 + $0x168] sm:$0xff] %v317
                %v319 = vld [vmem:[%s225 + $0x2e0] sm:$0xff]
                %320 = vst [vmem:[%s226 + $0x170] sm:$0xff] %v319
                %v321 = vld [vmem:[%s225 + $0x2f0] sm:$0xff]
                %322 = vst [vmem:[%s226 + $0x178] sm:$0xff] %v321
                %v323 = vld [vmem:[%s225 + $0x300] sm:$0xff]
                %324 = vst [vmem:[%s226 + $0x180] sm:$0xff] %v323
                %v325 = vld [vmem:[%s225 + $0x310] sm:$0xff]
                %326 = vst [vmem:[%s226 + $0x188] sm:$0xff] %v325
                %v327 = vld [vmem:[%s225 + $0x320] sm:$0xff]
                %328 = vst [vmem:[%s226 + $0x190] sm:$0xff] %v327
                %v329 = vld [vmem:[%s225 + $0x330] sm:$0xff]
                %330 = vst [vmem:[%s226 + $0x198] sm:$0xff] %v329
                %v331 = vld [vmem:[%s225 + $0x340] sm:$0xff]
                %332 = vst [vmem:[%s226 + $0x1a0] sm:$0xff] %v331
                %v333 = vld [vmem:[%s225 + $0x350] sm:$0xff]
                %334 = vst [vmem:[%s226 + $0x1a8] sm:$0xff] %v333
                %v335 = vld [vmem:[%s225 + $0x360] sm:$0xff]
                %336 = vst [vmem:[%s226 + $0x1b0] sm:$0xff] %v335
                %v337 = vld [vmem:[%s225 + $0x370] sm:$0xff]
                %338 = vst [vmem:[%s226 + $0x1b8] sm:$0xff] %v337
                %v339 = vld [vmem:[%s225 + $0x380] sm:$0xff]
                %340 = vst [vmem:[%s226 + $0x1c0] sm:$0xff] %v339
                %v341 = vld [vmem:[%s225 + $0x390] sm:$0xff]
                %342 = vst [vmem:[%s226 + $0x1c8] sm:$0xff] %v341
                %v343 = vld [vmem:[%s225 + $0x3a0] sm:$0xff]
                %344 = vst [vmem:[%s226 + $0x1d0] sm:$0xff] %v343
                %v345 = vld [vmem:[%s225 + $0x3b0] sm:$0xff]
                %346 = vst [vmem:[%s226 + $0x1d8] sm:$0xff] %v345
                %v347 = vld [vmem:[%s225 + $0x3c0] sm:$0xff]
                %348 = vst [vmem:[%s226 + $0x1e0] sm:$0xff] %v347
                %v349 = vld [vmem:[%s225 + $0x3d0] sm:$0xff]
                %350 = vst [vmem:[%s226 + $0x1e8] sm:$0xff] %v349
                %v351 = vld [vmem:[%s225 + $0x3e0] sm:$0xff]
                %352 = vst [vmem:[%s226 + $0x1f0] sm:$0xff] %v351
                %v353 = vld [vmem:[%s225 + $0x3f0] sm:$0xff]
                %354 = vst [vmem:[%s226 + $0x1f8] sm:$0xff] %v353
              $region41: #{_lambda_.25} parent=35 // loop_footer
                %s224 = sadd.s32 1, %s220
              $region42: #{_lambda_.25} parent=35 // loop_footer_branch
                %219 = sbr.rel target = $region38
              $region43: #{_lambda_.25} parent=35 // loop_exit
                _
            $region36: #{_lambda_.25} parent=27 // pred_fallthru
              _
          $region28: #{_lambda_.25} parent=23 // pred_fallthru
            _
          %495 = vnop
        $region24: #{_lambda_.25} parent=15 // pred_fallthru
          _
        // Predicated region
        $region59: #{_lambda_.25} parent=15 // pred_check
          %p496 = pneg %p105
        $region60: #{_lambda_.25} parent=15 // pred_check_branch
          %498 = sbr.rel (%p496) target = $region62
        $region61: #{_lambda_.25} parent=15 // pred_region
          %s499 = smul.u32 2, %s18
          %p500 = scmp.lt.s32.totalorder %s499, 3
          %s501 = scalar_select %p500, %s499, 3
          %s502 = scalar_lea.vmem %s2, %s501
          %s503 = smul.u32 2, %s18
        $region62: #{_lambda_.25} parent=15 // pred_fallthru
          _
        // Predicated region
        $region63: #{_lambda_.25} parent=15 // pred_check
          %p504 = pneg %p133
        $region64: #{_lambda_.25} parent=15 // pred_check_branch
          %506 = sbr.rel (%p504) target = $region66
        $region65: #{_lambda_.25} parent=15 // pred_region
          %s507 = smul.u32 2, %s18
          %p508 = scmp.lt.s32.totalorder %s17, 0
          %s509 = scalar_select %p508, %s17, 0
          %p510 = scmp.lt.s32.totalorder %s507, 3
          %s511 = scalar_select %p510, %s507, 3
          %s512 = smul.addr %s509, 4
          %s513 = sadd.s32 %s511, %s512
          %s514 = smul.addr %s513, 4
          %s515 = scalar_lea.vmem %s3, %s514
          %s516 = smul.u32 2, %s18
        $region66: #{_lambda_.25} parent=15 // pred_fallthru
          _
      $region16: #{_lambda_.25} parent=5 // pred_fallthru
        _
      %p517 = scmp.le.s32.totalorder 1, %s10
      %p518 = scmp.lt.s32.totalorder %s10, 19
      %p519 = pnand %p517, %p518
      %p520 = pneg %p519
      // Predicated region
      $region67: #{_lambda_.25} parent=5 // pred_check
        _
      $region68: #{_lambda_.25} parent=5 // pred_check_branch
        %522 = sbr.rel (%p519) target = $region70
      $region69: #{_lambda_.25} parent=5 // pred_region
        %s523 = ssub.s32 %s10, 1
        %s524 = sand.u32 %s72, 1
        %s525 = sand.u32 %s72, 1
        %s526 = smul.addr %s525, 512
        %s527 = scalar_lea.vmem [#allocation3], %s526
        // Predicated region
        $region71: #{_lambda_.25} parent=69 // pred_check
          %p528 = pneg %p85
        $region72: #{_lambda_.25} parent=69 // pred_check_branch
          %530 = sbr.rel (%p528) target = $region74
        $region73: #{_lambda_.25} parent=69 // pred_region
          _
        $region74: #{_lambda_.25} parent=69 // pred_fallthru
          _
        %s531 = smul.u32 4, %s22
        %p532 = scmp.lt.s32.totalorder %s20, 0
        %s533 = scalar_select %p532, %s20, 0
        %p534 = scmp.lt.s32.totalorder %s531, 35
        %s535 = scalar_select %p534, %s531, 35
        %s536 = smul.addr %s533, 36
        %s537 = sadd.s32 %s535, %s536
        %s538 = smul.addr %s537, 4
        %s539 = scalar_lea.vmem %s0, %s538
        %p540 = pneg %p57
        %p541 = pneg %p54
        %s542 = sand.u32 %s72, 1
        %s543 = sand.u32 %s72, 1
        %s544 = smul.addr %s543, 512
        %s545 = scalar_lea.vmem [#allocation3], %s544
        %p546 = pneg %p85
        %p547 = pneg %p82
        %s548 = smul.u32 2, %s21
        %p549 = scmp.lt.s32.totalorder %s548, 3
        %s550 = scalar_select %p549, %s548, 3
        %s551 = scalar_lea.vmem %s2, %s550
        %p552 = pneg %p111
        %p553 = pneg %p108
        %s554 = smul.u32 2, %s21
        %p555 = scmp.lt.s32.totalorder %s20, 0
        %s556 = scalar_select %p555, %s20, 0
        %p557 = scmp.lt.s32.totalorder %s554, 3
        %s558 = scalar_select %p557, %s554, 3
        %s559 = smul.addr %s556, 4
        %s560 = sadd.s32 %s558, %s559
        %s561 = smul.addr %s560, 4
        %s562 = scalar_lea.vmem %s3, %s561
        %p563 = pneg %p139
        %p564 = pneg %p136
        %p565 = pneg %p167
        %p566 = pneg %p164
        %s567 = smul.u32 2, %s21
        %p568 = scmp.lt.s32.totalorder %s20, 0
        %s569 = scalar_select %p568, %s20, 0
        %p570 = scmp.lt.s32.totalorder %s567, 3
        %s571 = scalar_select %p570, %s567, 3
        %s572 = smul.addr %s569, 4
        %s573 = sadd.s32 %s571, %s572
        %s574 = smul.addr %s573, 4
        %s575 = scalar_lea.vmem %s4, %s574
        %s576 = smul.u32 4, %s22
        %p577 = scmp.lt.s32.totalorder %s20, 0
        %s578 = scalar_select %p577, %s20, 0
        %p579 = scmp.lt.s32.totalorder %s576, 35
        %s580 = scalar_select %p579, %s576, 35
        %s581 = smul.addr %s578, 36
        %s582 = sadd.s32 %s580, %s581
        %s583 = smul.addr %s582, 4
        %s584 = scalar_lea.vmem %s0, %s583
        %s585 = smul.u32 4, %s22
        %s586 = smul.u32 64, %s22
        %s587 = smul.u32 2, %s21
        %s588 = smul.u32 2, %s21
        %p589 = scmp.lt.s32.totalorder %s588, 3
        %s590 = scalar_select %p589, %s588, 3
        %s591 = scalar_lea.vmem %s2, %s590
        %s592 = smul.u32 2, %s21
        %s593 = smul.u32 2, %s21
        %p594 = scmp.lt.s32.totalorder %s20, 0
        %s595 = scalar_select %p594, %s20, 0
        %p596 = scmp.lt.s32.totalorder %s593, 3
        %s597 = scalar_select %p596, %s593, 3
        %s598 = smul.addr %s595, 4
        %s599 = sadd.s32 %s597, %s598
        %s600 = smul.addr %s599, 4
        %s601 = scalar_lea.vmem %s3, %s600
        %s602 = smul.u32 2, %s21
        %s603 = smul.u32 2, %s21
        %p604 = scmp.lt.s32.totalorder %s20, 0
        %s605 = scalar_select %p604, %s20, 0
        %p606 = scmp.lt.s32.totalorder %s603, 3
        %s607 = scalar_select %p606, %s603, 3
        %s608 = smul.addr %s605, 4
        %s609 = sadd.s32 %s607, %s608
        %s610 = smul.addr %s609, 4
        %s611 = scalar_lea.vmem %s4, %s610
        %s612 = smul.u32 2, %s21
        %p613 = scmp.eq.s32.totalorder %s22, 0
        // Predicated region
        $region75: #{_lambda_.25} parent=69 // pred_check
          %p614 = pneg %p613
        $region76: #{_lambda_.25} parent=69 // pred_check_branch
          %616 = sbr.rel (%p614) target = $region78
        $region77: #{_lambda_.25} parent=69 // pred_region
          %617 = vst [vmem:[#allocation2] sm:$0xff] 0.0
          %618 = vst [vmem:[#allocation2 + $0x8] sm:$0xff] 0.0
        $region78: #{_lambda_.25} parent=69 // pred_fallthru
          _
        %v619 = vld [vmem:[#allocation2] sm:$0xff]
        %v620 = vld [vmem:[#allocation2 + $0x8] sm:$0xff]
        %v621 = vld [vmem:[%s584] sm:$0xff]
        %v622 = vld [vmem:[%s584 + $0x8] sm:$0xff]
        %v623 = vld [vmem:[%s527] sm:$0xff]
        %v624 = vld [vmem:[%s527 + $0x8] sm:$0xff]
        %v625 = vld [vmem:[%s527 + $0x10] sm:$0xff]
        %v626 = vld [vmem:[%s527 + $0x18] sm:$0xff]
        %v627 = vld [vmem:[%s527 + $0x20] sm:$0xff]
        %v628 = vld [vmem:[%s527 + $0x28] sm:$0xff]
        %v629 = vld [vmem:[%s527 + $0x30] sm:$0xff]
        %v630 = vld [vmem:[%s527 + $0x38] sm:$0xff]
        %v631 = vld [vmem:[%s527 + $0x40] sm:$0xff]
        %v632 = vld [vmem:[%s527 + $0x48] sm:$0xff]
        %v633 = vld [vmem:[%s527 + $0x50] sm:$0xff]
        %v634 = vld [vmem:[%s527 + $0x58] sm:$0xff]
        %v635 = vld [vmem:[%s527 + $0x60] sm:$0xff]
        %v636 = vld [vmem:[%s527 + $0x68] sm:$0xff]
        %v637 = vld [vmem:[%s527 + $0x70] sm:$0xff]
        %v638 = vld [vmem:[%s527 + $0x78] sm:$0xff]
        %v639 = vld [vmem:[%s527 + $0x80] sm:$0xff]
        %v640 = vld [vmem:[%s527 + $0x88] sm:$0xff]
        %v641 = vld [vmem:[%s527 + $0x90] sm:$0xff]
        %v642 = vld [vmem:[%s527 + $0x98] sm:$0xff]
        %v643 = vld [vmem:[%s527 + $0xa0] sm:$0xff]
        %v644 = vld [vmem:[%s527 + $0xa8] sm:$0xff]
        %v645 = vld [vmem:[%s527 + $0xb0] sm:$0xff]
        %v646 = vld [vmem:[%s527 + $0xb8] sm:$0xff]
        %v647 = vld [vmem:[%s527 + $0xc0] sm:$0xff]
        %v648 = vld [vmem:[%s527 + $0xc8] sm:$0xff]
        %v649 = vld [vmem:[%s527 + $0xd0] sm:$0xff]
        %v650 = vld [vmem:[%s527 + $0xd8] sm:$0xff]
        %v651 = vld [vmem:[%s527 + $0xe0] sm:$0xff]
        %v652 = vld [vmem:[%s527 + $0xe8] sm:$0xff]
        %v653 = vld [vmem:[%s527 + $0xf0] sm:$0xff]
        %v654 = vld [vmem:[%s527 + $0xf8] sm:$0xff]
        %v655 = vld [vmem:[%s527 + $0x100] sm:$0xff]
        %v656 = vld [vmem:[%s527 + $0x108] sm:$0xff]
        %v657 = vld [vmem:[%s527 + $0x110] sm:$0xff]
        %v658 = vld [vmem:[%s527 + $0x118] sm:$0xff]
        %v659 = vld [vmem:[%s527 + $0x120] sm:$0xff]
        %v660 = vld [vmem:[%s527 + $0x128] sm:$0xff]
        %v661 = vld [vmem:[%s527 + $0x130] sm:$0xff]
        %v662 = vld [vmem:[%s527 + $0x138] sm:$0xff]
        %v663 = vld [vmem:[%s527 + $0x140] sm:$0xff]
        %v664 = vld [vmem:[%s527 + $0x148] sm:$0xff]
        %v665 = vld [vmem:[%s527 + $0x150] sm:$0xff]
        %v666 = vld [vmem:[%s527 + $0x158] sm:$0xff]
        %v667 = vld [vmem:[%s527 + $0x160] sm:$0xff]
        %v668 = vld [vmem:[%s527 + $0x168] sm:$0xff]
        %v669 = vld [vmem:[%s527 + $0x170] sm:$0xff]
        %v670 = vld [vmem:[%s527 + $0x178] sm:$0xff]
        %v671 = vld [vmem:[%s527 + $0x180] sm:$0xff]
        %v672 = vld [vmem:[%s527 + $0x188] sm:$0xff]
        %v673 = vld [vmem:[%s527 + $0x190] sm:$0xff]
        %v674 = vld [vmem:[%s527 + $0x198] sm:$0xff]
        %v675 = vld [vmem:[%s527 + $0x1a0] sm:$0xff]
        %v676 = vld [vmem:[%s527 + $0x1a8] sm:$0xff]
        %v677 = vld [vmem:[%s527 + $0x1b0] sm:$0xff]
        %v678 = vld [vmem:[%s527 + $0x1b8] sm:$0xff]
        %v679 = vld [vmem:[%s527 + $0x1c0] sm:$0xff]
        %v680 = vld [vmem:[%s527 + $0x1c8] sm:$0xff]
        %v681 = vld [vmem:[%s527 + $0x1d0] sm:$0xff]
        %v682 = vld [vmem:[%s527 + $0x1d8] sm:$0xff]
        %v683 = vld [vmem:[%s527 + $0x1e0] sm:$0xff]
        %v684 = vld [vmem:[%s527 + $0x1e8] sm:$0xff]
        %v685 = vld [vmem:[%s527 + $0x1f0] sm:$0xff]
        %v686 = vld [vmem:[%s527 + $0x1f8] sm:$0xff]
        %v689 = vunpack.c.l.b16 %v621
        %v690 = vunpack.c.h.b16 %v621
        %v691 = vunpack.c.l.b16 %v622
        %v692 = vunpack.c.h.b16 %v622
        %v693 = vpack.c.b16 %v689, %v689
        %v694 = vpack.c.b16 %v690, %v690
        %v695 = vpack.c.b16 %v691, %v691
        %v696 = vpack.c.b16 %v692, %v692
        %v765 = vunpack.c.l.b16 %v623
        %v766 = vunpack.c.h.b16 %v623
        %v767 = vunpack.c.l.b16 %v624
        %v768 = vunpack.c.h.b16 %v624
        %v769 = vunpack.c.l.b16 %v625
        %v770 = vunpack.c.h.b16 %v625
        %v771 = vunpack.c.l.b16 %v626
        %v772 = vunpack.c.h.b16 %v626
        %v773 = vunpack.c.l.b16 %v627
        %v774 = vunpack.c.h.b16 %v627
        %v775 = vunpack.c.l.b16 %v628
        %v776 = vunpack.c.h.b16 %v628
        %v777 = vunpack.c.l.b16 %v629
        %v778 = vunpack.c.h.b16 %v629
        %v779 = vunpack.c.l.b16 %v630
        %v780 = vunpack.c.h.b16 %v630
        %v781 = vunpack.c.l.b16 %v631
        %v782 = vunpack.c.h.b16 %v631
        %v783 = vunpack.c.l.b16 %v632
        %v784 = vunpack.c.h.b16 %v632
        %v785 = vunpack.c.l.b16 %v633
        %v786 = vunpack.c.h.b16 %v633
        %v787 = vunpack.c.l.b16 %v634
        %v788 = vunpack.c.h.b16 %v634
        %v789 = vunpack.c.l.b16 %v635
        %v790 = vunpack.c.h.b16 %v635
        %v791 = vunpack.c.l.b16 %v636
        %v792 = vunpack.c.h.b16 %v636
        %v793 = vunpack.c.l.b16 %v637
        %v794 = vunpack.c.h.b16 %v637
        %v795 = vunpack.c.l.b16 %v638
        %v796 = vunpack.c.h.b16 %v638
        %v797 = vunpack.c.l.b16 %v639
        %v798 = vunpack.c.h.b16 %v639
        %v799 = vunpack.c.l.b16 %v640
        %v800 = vunpack.c.h.b16 %v640
        %v801 = vunpack.c.l.b16 %v641
        %v802 = vunpack.c.h.b16 %v641
        %v803 = vunpack.c.l.b16 %v642
        %v804 = vunpack.c.h.b16 %v642
        %v805 = vunpack.c.l.b16 %v643
        %v806 = vunpack.c.h.b16 %v643
        %v807 = vunpack.c.l.b16 %v644
        %v808 = vunpack.c.h.b16 %v644
        %v809 = vunpack.c.l.b16 %v645
        %v810 = vunpack.c.h.b16 %v645
        %v811 = vunpack.c.l.b16 %v646
        %v812 = vunpack.c.h.b16 %v646
        %v813 = vunpack.c.l.b16 %v647
        %v814 = vunpack.c.h.b16 %v647
        %v815 = vunpack.c.l.b16 %v648
        %v816 = vunpack.c.h.b16 %v648
        %v817 = vunpack.c.l.b16 %v649
        %v818 = vunpack.c.h.b16 %v649
        %v819 = vunpack.c.l.b16 %v650
        %v820 = vunpack.c.h.b16 %v650
        %v821 = vunpack.c.l.b16 %v651
        %v822 = vunpack.c.h.b16 %v651
        %v823 = vunpack.c.l.b16 %v652
        %v824 = vunpack.c.h.b16 %v652
        %v825 = vunpack.c.l.b16 %v653
        %v826 = vunpack.c.h.b16 %v653
        %v827 = vunpack.c.l.b16 %v654
        %v828 = vunpack.c.h.b16 %v654
        %v829 = vunpack.c.l.b16 %v655
        %v830 = vunpack.c.h.b16 %v655
        %v831 = vunpack.c.l.b16 %v656
        %v832 = vunpack.c.h.b16 %v656
        %v833 = vunpack.c.l.b16 %v657
        %v834 = vunpack.c.h.b16 %v657
        %v835 = vunpack.c.l.b16 %v658
        %v836 = vunpack.c.h.b16 %v658
        %v837 = vunpack.c.l.b16 %v659
        %v838 = vunpack.c.h.b16 %v659
        %v839 = vunpack.c.l.b16 %v660
        %v840 = vunpack.c.h.b16 %v660
        %v841 = vunpack.c.l.b16 %v661
        %v842 = vunpack.c.h.b16 %v661
        %v843 = vunpack.c.l.b16 %v662
        %v844 = vunpack.c.h.b16 %v662
        %v845 = vunpack.c.l.b16 %v663
        %v846 = vunpack.c.h.b16 %v663
        %v847 = vunpack.c.l.b16 %v664
        %v848 = vunpack.c.h.b16 %v664
        %v849 = vunpack.c.l.b16 %v665
        %v850 = vunpack.c.h.b16 %v665
        %v851 = vunpack.c.l.b16 %v666
        %v852 = vunpack.c.h.b16 %v666
        %v853 = vunpack.c.l.b16 %v667
        %v854 = vunpack.c.h.b16 %v667
        %v855 = vunpack.c.l.b16 %v668
        %v856 = vunpack.c.h.b16 %v668
        %v857 = vunpack.c.l.b16 %v669
        %v858 = vunpack.c.h.b16 %v669
        %v859 = vunpack.c.l.b16 %v670
        %v860 = vunpack.c.h.b16 %v670
        %v861 = vunpack.c.l.b16 %v671
        %v862 = vunpack.c.h.b16 %v671
        %v863 = vunpack.c.l.b16 %v672
        %v864 = vunpack.c.h.b16 %v672
        %v865 = vunpack.c.l.b16 %v673
        %v866 = vunpack.c.h.b16 %v673
        %v867 = vunpack.c.l.b16 %v674
        %v868 = vunpack.c.h.b16 %v674
        %v869 = vunpack.c.l.b16 %v675
        %v870 = vunpack.c.h.b16 %v675
        %v871 = vunpack.c.l.b16 %v676
        %v872 = vunpack.c.h.b16 %v676
        %v873 = vunpack.c.l.b16 %v677
        %v874 = vunpack.c.h.b16 %v677
        %v875 = vunpack.c.l.b16 %v678
        %v876 = vunpack.c.h.b16 %v678
        %v877 = vunpack.c.l.b16 %v679
        %v878 = vunpack.c.h.b16 %v679
        %v879 = vunpack.c.l.b16 %v680
        %v880 = vunpack.c.h.b16 %v680
        %v881 = vunpack.c.l.b16 %v681
        %v882 = vunpack.c.h.b16 %v681
        %v883 = vunpack.c.l.b16 %v682
        %v884 = vunpack.c.h.b16 %v682
        %v885 = vunpack.c.l.b16 %v683
        %v886 = vunpack.c.h.b16 %v683
        %v887 = vunpack.c.l.b16 %v684
        %v888 = vunpack.c.h.b16 %v684
        %v889 = vunpack.c.l.b16 %v685
        %v890 = vunpack.c.h.b16 %v685
        %v891 = vunpack.c.l.b16 %v686
        %v892 = vunpack.c.h.b16 %v686
        %v893 = vpack.c.b16 %v767, %v765
        %v894 = vpack.c.b16 %v768, %v766
        %v895 = vpack.c.b16 %v771, %v769
        %v896 = vpack.c.b16 %v772, %v770
        %v897 = vpack.c.b16 %v775, %v773
        %v898 = vpack.c.b16 %v776, %v774
        %v899 = vpack.c.b16 %v779, %v777
        %v900 = vpack.c.b16 %v780, %v778
        %v901 = vpack.c.b16 %v783, %v781
        %v902 = vpack.c.b16 %v784, %v782
        %v903 = vpack.c.b16 %v787, %v785
        %v904 = vpack.c.b16 %v788, %v786
        %v905 = vpack.c.b16 %v791, %v789
        %v906 = vpack.c.b16 %v792, %v790
        %v907 = vpack.c.b16 %v795, %v793
        %v908 = vpack.c.b16 %v796, %v794
        %v909 = vpack.c.b16 %v799, %v797
        %v910 = vpack.c.b16 %v800, %v798
        %v911 = vpack.c.b16 %v803, %v801
        %v912 = vpack.c.b16 %v804, %v802
        %v913 = vpack.c.b16 %v807, %v805
        %v914 = vpack.c.b16 %v808, %v806
        %v915 = vpack.c.b16 %v811, %v809
        %v916 = vpack.c.b16 %v812, %v810
        %v917 = vpack.c.b16 %v815, %v813
        %v918 = vpack.c.b16 %v816, %v814
        %v919 = vpack.c.b16 %v819, %v817
        %v920 = vpack.c.b16 %v820, %v818
        %v921 = vpack.c.b16 %v823, %v821
        %v922 = vpack.c.b16 %v824, %v822
        %v923 = vpack.c.b16 %v827, %v825
        %v924 = vpack.c.b16 %v828, %v826
        %v925 = vpack.c.b16 %v831, %v829
        %v926 = vpack.c.b16 %v832, %v830
        %v927 = vpack.c.b16 %v835, %v833
        %v928 = vpack.c.b16 %v836, %v834
        %v929 = vpack.c.b16 %v839, %v837
        %v930 = vpack.c.b16 %v840, %v838
        %v931 = vpack.c.b16 %v843, %v841
        %v932 = vpack.c.b16 %v844, %v842
        %v933 = vpack.c.b16 %v847, %v845
        %v934 = vpack.c.b16 %v848, %v846
        %v935 = vpack.c.b16 %v851, %v849
        %v936 = vpack.c.b16 %v852, %v850
        %v937 = vpack.c.b16 %v855, %v853
        %v938 = vpack.c.b16 %v856, %v854
        %v939 = vpack.c.b16 %v859, %v857
        %v940 = vpack.c.b16 %v860, %v858
        %v941 = vpack.c.b16 %v863, %v861
        %v942 = vpack.c.b16 %v864, %v862
        %v943 = vpack.c.b16 %v867, %v865
        %v944 = vpack.c.b16 %v868, %v866
        %v945 = vpack.c.b16 %v871, %v869
        %v946 = vpack.c.b16 %v872, %v870
        %v947 = vpack.c.b16 %v875, %v873
        %v948 = vpack.c.b16 %v876, %v874
        %v949 = vpack.c.b16 %v879, %v877
        %v950 = vpack.c.b16 %v880, %v878
        %v951 = vpack.c.b16 %v883, %v881
        %v952 = vpack.c.b16 %v884, %v882
        %v953 = vpack.c.b16 %v887, %v885
        %v954 = vpack.c.b16 %v888, %v886
        %v955 = vpack.c.b16 %v891, %v889
        %v956 = vpack.c.b16 %v892, %v890
        %1021 = vmatprep.subr.bf16.mxu0 %v894
        %1022 = vmatpush1.bf16.msra.mxu0 %v893
        %1023 = vmatprep.subr.bf16.mxu0 %v896
        %1024 = vmatpush1.bf16.msra.mxu0 %v895
        %1025 = vmatprep.subr.bf16.mxu0 %v898
        %1026 = vmatpush1.bf16.msra.mxu0 %v897
        %1027 = vmatprep.subr.bf16.mxu0 %v900
        %1028 = vmatpush1.bf16.msra.mxu0 %v899
        %1029 = vmatprep.subr.bf16.mxu0 %v902
        %1030 = vmatpush1.bf16.msra.mxu0 %v901
        %1031 = vmatprep.subr.bf16.mxu0 %v904
        %1032 = vmatpush1.bf16.msra.mxu0 %v903
        %1033 = vmatprep.subr.bf16.mxu0 %v906
        %1034 = vmatpush1.bf16.msra.mxu0 %v905
        %1035 = vmatprep.subr.bf16.mxu0 %v908
        %1036 = vmatpush1.bf16.msra.mxu0 %v907
        %1037 = vmatprep.subr.bf16.mxu0 %v910
        %1038 = vmatpush1.bf16.msra.mxu0 %v909
        %1039 = vmatprep.subr.bf16.mxu0 %v912
        %1040 = vmatpush1.bf16.msra.mxu0 %v911
        %1041 = vmatprep.subr.bf16.mxu0 %v914
        %1042 = vmatpush1.bf16.msra.mxu0 %v913
        %1043 = vmatprep.subr.bf16.mxu0 %v916
        %1044 = vmatpush1.bf16.msra.mxu0 %v915
        %1045 = vmatprep.subr.bf16.mxu0 %v918
        %1046 = vmatpush1.bf16.msra.mxu0 %v917
        %1047 = vmatprep.subr.bf16.mxu0 %v920
        %1048 = vmatpush1.bf16.msra.mxu0 %v919
        %1049 = vmatprep.subr.bf16.mxu0 %v922
        %1050 = vmatpush1.bf16.msra.mxu0 %v921
        %1051 = vmatprep.subr.bf16.mxu0 %v924
        %1052 = vmatpush1.bf16.msra.mxu0 %v923
        %1053 = vmatprep.mubr.bf16.mxu0 %v694
        %1054 = vmatmul.mubr.bf16.gmra.mrb[0].mxu0 %v693
        %v1055 = vpop.f32.mrb[0].mxu0
        %v1056 = vadd.f32 0.0, %v1055
        %v1057 = vpop.f32.mrb[0].mxu0
        %v1058 = vadd.f32 0.0, %v1057
        %v1059 = vpop.f32.mrb[0].mxu0
        %v1060 = vpop.f32.mrb[0].mxu0
        %1061 = vdwg.mxu0
        %1062 = vmatprep.subr.bf16.mxu0 %v926
        %1063 = vmatpush1.bf16.msra.mxu0 %v925
        %1064 = vmatprep.subr.bf16.mxu0 %v928
        %1065 = vmatpush1.bf16.msra.mxu0 %v927
        %1066 = vmatprep.subr.bf16.mxu0 %v930
        %1067 = vmatpush1.bf16.msra.mxu0 %v929
        %1068 = vmatprep.subr.bf16.mxu0 %v932
        %1069 = vmatpush1.bf16.msra.mxu0 %v931
        %1070 = vmatprep.subr.bf16.mxu0 %v934
        %1071 = vmatpush1.bf16.msra.mxu0 %v933
        %1072 = vmatprep.subr.bf16.mxu0 %v936
        %1073 = vmatpush1.bf16.msra.mxu0 %v935
        %1074 = vmatprep.subr.bf16.mxu0 %v938
        %1075 = vmatpush1.bf16.msra.mxu0 %v937
        %1076 = vmatprep.subr.bf16.mxu0 %v940
        %1077 = vmatpush1.bf16.msra.mxu0 %v939
        %1078 = vmatprep.subr.bf16.mxu0 %v942
        %1079 = vmatpush1.bf16.msra.mxu0 %v941
        %1080 = vmatprep.subr.bf16.mxu0 %v944
        %1081 = vmatpush1.bf16.msra.mxu0 %v943
        %1082 = vmatprep.subr.bf16.mxu0 %v946
        %1083 = vmatpush1.bf16.msra.mxu0 %v945
        %1084 = vmatprep.subr.bf16.mxu0 %v948
        %1085 = vmatpush1.bf16.msra.mxu0 %v947
        %1086 = vmatprep.subr.bf16.mxu0 %v950
        %1087 = vmatpush1.bf16.msra.mxu0 %v949
        %1088 = vmatprep.subr.bf16.mxu0 %v952
        %1089 = vmatpush1.bf16.msra.mxu0 %v951
        %1090 = vmatprep.subr.bf16.mxu0 %v954
        %1091 = vmatpush1.bf16.msra.mxu0 %v953
        %1092 = vmatprep.subr.bf16.mxu0 %v956
        %1093 = vmatpush1.bf16.msra.mxu0 %v955
        %1094 = vmatprep.mubr.bf16.mxu0 %v696
        %1095 = vmatmul.mubr.bf16.gmra.mrb[0].mxu0 %v695
        %v1096 = vpop.f32.mrb[0].mxu0
        %v1097 = vadd.f32 %v1056, %v1096
        %v1098 = vpop.f32.mrb[0].mxu0
        %v1099 = vadd.f32 %v1058, %v1098
        %v1100 = vpop.f32.mrb[0].mxu0
        %v1101 = vpop.f32.mrb[0].mxu0
        %1102 = vdwg.mxu0
        %v1103 = vadd.f32 %v619, %v1097
        %v1104 = vadd.f32 %v620, %v1099
        %1105 = vst [vmem:[#allocation2] sm:$0xff] %v1103
        %1106 = vst [vmem:[#allocation2 + $0x8] sm:$0xff] %v1104
        %p1107 = scmp.eq.s32.totalorder %s22, 8
        // Predicated region
        $region79: #{_lambda_.25} parent=69 // pred_check
          %p1108 = pneg %p1107
        $region80: #{_lambda_.25} parent=69 // pred_check_branch
          %1110 = sbr.rel (%p1108) target = $region82
        $region81: #{_lambda_.25} parent=69 // pred_region
          %v1111 = vld [vmem:[#allocation2] sm:$0xff]
          %v1112 = vld [vmem:[#allocation2 + $0x8] sm:$0xff]
          %v1113 = vld [vmem:[%s591] sm:$0x3]
          %v1115 = vlaneseq
          %v1116 = vshrl.u32 %v1115, 7
          %v1117 = vsub.s32 0, %v1116
          %v1118 = vrot.slane %v1113, %v1117
          %v1119 = vlaneseq
          %v1120 = vshrl.u32 %v1119, 7
          %v1121 = vsub.s32 1, %v1120
          %v1122 = vrot.slane %v1113, %v1121
          %v1125 = vadd.f32 %v1111, %v1118
          %v1126 = vadd.f32 %v1112, %v1122
          %v1127 = vld [vmem:[%s601] sm:$0xff]
          %v1128 = vunpack.c.l.bf16 %v1127
          %v1129 = vunpack.c.h.bf16 %v1127
          %v1130 = vadd.f32 %v1125, %v1128
          %v1131 = vadd.f32 %v1126, %v1129
          %v1132 = vmax.f32 %v1130, 0.0
          %v1133 = vmax.f32 %v1131, 0.0
          %v1134 = vpack.c.bf16 %v1132, %v1132
          %v1135 = vpack.c.bf16 %v1133, %v1133
          %v1138 = vunpack.c.l.b16 %v1134
          %v1139 = vunpack.c.l.b16 %v1135
          %v1140 = vpack.c.b16 %v1139, %v1138
          %1142 = vst [vmem:[%s611] sm:$0xff] %v1140
        $region82: #{_lambda_.25} parent=69 // pred_fallthru
          _
        %s1143 = smul.u32 2, %s21
        %p1144 = scmp.lt.s32.totalorder %s20, 0
        %s1145 = scalar_select %p1144, %s20, 0
        %p1146 = scmp.lt.s32.totalorder %s1143, 3
        %s1147 = scalar_select %p1146, %s1143, 3
        %s1148 = smul.addr %s1145, 4
        %s1149 = sadd.s32 %s1147, %s1148
        %s1150 = smul.addr %s1149, 4
        %s1151 = scalar_lea.vmem %s4, %s1150
        // Predicated region
        $region83: #{_lambda_.25} parent=69 // pred_check
          %p1152 = pneg %p164
        $region84: #{_lambda_.25} parent=69 // pred_check_branch
          %1154 = sbr.rel (%p1152) target = $region86
        $region85: #{_lambda_.25} parent=69 // pred_region
          %s1155 = smul.u32 2, %s21
        $region86: #{_lambda_.25} parent=69 // pred_fallthru
          _
      $region70: #{_lambda_.25} parent=5 // pred_fallthru
        _
      %p1156 = scmp.le.s32.totalorder 2, %s10
      // Predicated region
      $region87: #{_lambda_.25} parent=5 // pred_check
        %p1157 = pneg %p1156
      $region88: #{_lambda_.25} parent=5 // pred_check_branch
        %1159 = sbr.rel (%p1157) target = $region90
      $region89: #{_lambda_.25} parent=5 // pred_region
        %s1160 = ssub.s32 %s10, 2
        // Predicated region
        $region91: #{_lambda_.25} parent=89 // pred_check
          %p1161 = pneg %p170
        $region92: #{_lambda_.25} parent=89 // pred_check_branch
          %1163 = sbr.rel (%p1161) target = $region94
        $region93: #{_lambda_.25} parent=89 // pred_region
          %s1164 = smul.u32 2, %s24
          %p1165 = scmp.lt.s32.totalorder %s23, 0
          %s1166 = scalar_select %p1165, %s23, 0
          %p1167 = scmp.lt.s32.totalorder %s1164, 3
          %s1168 = scalar_select %p1167, %s1164, 3
          %s1169 = smul.addr %s1166, 4
          %s1170 = sadd.s32 %s1168, %s1169
          %s1171 = smul.addr %s1170, 4
          %s1172 = scalar_lea.vmem %s4, %s1171
        $region94: #{_lambda_.25} parent=89 // pred_fallthru
          _
      $region90: #{_lambda_.25} parent=5 // pred_fallthru
        _
    $region6: #{_lambda_.25} parent=1 // loop_footer
      %s14 = sadd.s32 1, %s10
    $region7: #{_lambda_.25} parent=1 // loop_footer_branch
      %9 = sbr.rel target = $region3
    $region8: #{_lambda_.25} parent=1 // loop_exit
      _

</llo_original>
